<compile_context>
chip_gen: v7x
topology: tpu7x:2x2x1
jax: 0.10.0
libtpu: 0.0.40
codegen_flags: <defaults>
</compile_context>

<pallas_src>
import functools

import jax
import jax.numpy as jnp
from jax.experimental import pallas as pl
from jax.experimental.pallas import tpu as pltpu


# ----------------------------- in-kernel helpers -----------------------------

def _gn(y, gamma, beta, groups, eps, p=None, q=None):
    """GroupNorm on a (HW, C) f32 tile, one-pass statistics.

    Matches torch.nn.functional.group_norm for a single sample.
    gamma/beta: (1, C) f32.  p: (C, G) one-hot group assignment, q = p.T:
    used to group-reduce the per-channel stats when group_size > 1 (both are
    tiny precomputed f32 inputs; nothing is rebuilt per call).
    """
    HW, C = y.shape
    gs = C // groups
    s = jnp.sum(y, axis=0, keepdims=True)            # (1, C)
    ss = jnp.sum(y * y, axis=0, keepdims=True)       # (1, C)
    if gs > 1:
        assert p is not None and q is not None
        st = jnp.concatenate([s, ss], axis=0)        # (2, C)
        st = jnp.dot(jnp.dot(st, p, preferred_element_type=jnp.float32), q,
                     preferred_element_type=jnp.float32)   # (2, C) group sums
        s, ss = st[0:1], st[1:2]
    denom = float(HW * gs)
    mean = s / denom
    # One-pass variance (E[x^2] - mean^2) in f32; inputs here come out of
    # standardized convs / GN so |mean| ~ std and cancellation is benign.
    var = ss / denom - mean * mean
    scale = jax.lax.rsqrt(var + eps) * gamma         # (1, C)
    return (y - mean) * scale + beta


def preact_bottleneck_kernel(H, W, conv2_im2col,
                             x_ref,
                             w1d_ref, g1_ref, b1_ref, gp_ref, bp_ref,
                             w2_ref, g2_ref, b2_ref,
                             w3_ref, g3_ref, b3_ref,
                             pm_ref, qm_ref, po_ref, qo_ref,
                             o_ref,
                             pad_ref, res_ref):
    HW = H * W
    Cmid = w2_ref.shape[-1]
    Cout = w3_ref.shape[1]
    f32 = jnp.float32
    bf16 = jnp.bfloat16

    # Factored GN reduce matrices are only loaded when the group size > 1
    # (static decision: shapes/groups are compile-time constants).
    gs_mid = Cmid // 32
    gs_out = Cout // 32
    pm = pm_ref[...] if gs_mid > 1 else None
    qm = qm_ref[...] if gs_mid > 1 else None
    po = po_ref[...] if gs_out > 1 else None
    qo = qo_ref[...] if gs_out > 1 else None

    # --- conv1 (1x1) and downsample projection (1x1) fused into ONE matmul:
    #     x @ [w1 | wd] -> (HW, Cmid + Cout)   (bf16 MXU, f32 accumulate)
    x1 = x_ref[0]                                                  # (HW, Cin) bf16
    yc = jnp.dot(x1, w1d_ref[...], preferred_element_type=f32)     # (HW, Cmid+Cout)

    # projection residual -> gn_proj (groups=Cout, eps=1e-5); parked in VMEM so
    # its live range does not span the conv2/conv3 computation.
    res_ref[...] = _gn(yc[:, Cmid:], gp_ref[...], bp_ref[...], Cout, 1e-5)

    # main path: gn1 (32 groups, eps=1e-6) + relu
    y1 = jnp.maximum(_gn(yc[:, :Cmid], g1_ref[...], b1_ref[...], 32, 1e-6,
                         pm, qm), 0.0)

    # --- conv2 (3x3, pad=1, stride=1) from a bf16 padded-halo scratch.
    # Only the halo border is re-zeroed each step (interior fully overwritten);
    # a program_id==0 one-time init would be wrong under "parallel" sharding.
    zrow = jnp.zeros((1, W + 2, Cmid), pad_ref.dtype)
    zcol = jnp.zeros((H, 1, Cmid), pad_ref.dtype)
    pad_ref[0:1, :, :] = zrow
    pad_ref[H + 1:H + 2, :, :] = zrow
    pad_ref[1:H + 1, 0:1, :] = zcol
    pad_ref[1:H + 1, W + 1:W + 2, :] = zcol
    pad_ref[1:H + 1, 1:W + 1, :] = y1.astype(bf16).reshape(H, W, Cmid)

    if conv2_im2col:
        # Deep-K (K = 9*Cmid) single-dot variant (v5e/v6e, small Cmid).
        patches = [pad_ref[dy:dy + H, dx:dx + W, :].reshape(HW, Cmid)
                   for dy in range(3) for dx in range(3)]
        y2 = jnp.dot(jnp.concatenate(patches, axis=1),
                     w2_ref[...].reshape(9 * Cmid, Cmid),
                     preferred_element_type=f32)
    else:
        # Default: 9 accumulated matmuls straight from the bf16 halo scratch —
        # no im2col slab, no lane-masked slab stores, minimal VMEM.
        y2 = jnp.zeros((HW, Cmid), f32)
        k = 0
        for dy in range(3):
            for dx in range(3):
                patch = pad_ref[dy:dy + H, dx:dx + W, :].reshape(HW, Cmid)
                y2 = y2 + jnp.dot(patch, w2_ref[k], preferred_element_type=f32)
                k += 1
    y2 = jnp.maximum(_gn(y2, g2_ref[...], b2_ref[...], 32, 1e-6, pm, qm), 0.0)

    # --- conv3 (1x1) -> gn3 (32 groups, eps=1e-6)
    y3 = jnp.dot(y2.astype(bf16), w3_ref[...], preferred_element_type=f32)
    y3 = _gn(y3, g3_ref[...], b3_ref[...], 32, 1e-6, po, qo)

    # --- residual add + relu
    out = jnp.maximum(res_ref[...] + y3, 0.0)
    o_ref[...] = out.reshape(1, HW, Cout).astype(o_ref.dtype)


# ------------------------------- wrappers (JAX) --------------------------------

def preact_bottleneck_nhwc(x_nhwc, params, *, stride=1, conv2_im2col=False):
    """x_nhwc: (N, H, W, Cin); returns (N, H, W, Cout) float32.

    Preferred entry point: avoids the NCHW<->NHWC HBM transpose round trip.
    """
    if stride != 1:
        raise NotImplementedError("fused PreActBottleneck kernel: stride=1 only")

    N, H, W, Cin = x_nhwc.shape
    Cmid = params["w2"].shape[-1]
    Cout = params["w3"].shape[1]
    assert Cmid % 32 == 0 and Cout % 32 == 0, "GroupNorm(32, ...) requires C % 32 == 0"
    HW = H * W

    # bf16 input: MXU operands are bf16 anyway; halves the per-step input DMA.
    x = x_nhwc.astype(jnp.bfloat16).reshape(N, HW, Cin)   # contiguous -> free

    # Factored GroupNorm reduce matrices (built once, O(C*G) bytes).
    def reduce_factors(c, g):
        gs = c // g
        grp = jnp.arange(c, dtype=jnp.int32) // gs
        p = (grp[:, None] == jnp.arange(g, dtype=jnp.int32)[None, :]).astype(jnp.float32)
        return p, p.T                                   # (C, G), (G, C)

    pm, qm = reduce_factors(Cmid, 32)
    po, qo = reduce_factors(Cout, 32)

    def full_spec(shape):
        nd = len(shape)
        return pl.BlockSpec(shape, lambda n, _nd=nd: (0,) * _nd)

    in_specs = [
        pl.BlockSpec((1, HW, Cin), lambda n: (n, 0, 0)),
        full_spec((Cin, Cmid + Cout)),                            # w1d = [w1|wd]
        full_spec((1, Cmid)), full_spec((1, Cmid)),               # g1, b1
        full_spec((1, Cout)), full_spec((1, Cout)),               # gp, bp
        full_spec((9, Cmid, Cmid)),                               # w2 taps
        full_spec((1, Cmid)), full_spec((1, Cmid)),               # g2, b2
        full_spec((Cmid, Cout)),                                  # w3
        full_spec((1, Cout)), full_spec((1, Cout)),               # g3, b3
        full_spec((Cmid, 32)), full_spec((32, Cmid)),             # pm, qm
        full_spec((Cout, 32)), full_spec((32, Cout)),             # po, qo
    ]

    args = (x,
            params["w1d"], params["g1"], params["b1"], params["gp"], params["bp"],
            params["w2"], params["g2"], params["b2"],
            params["w3"], params["g3"], params["b3"],
            pm, qm, po, qo)

    flops = 2 * N * HW * (Cin * (Cmid + Cout) + 9 * Cmid * Cmid + Cmid * Cout)
    bytes_accessed = int(sum(int(a.size) * a.dtype.itemsize for a in args)
                         + N * HW * Cout * 4)
    cost = pl.CostEstimate(flops=int(flops),
                           transcendentals=int(N * 2 * (Cmid + Cout)),
                           bytes_accessed=bytes_accessed)

    out = pl.pallas_call(
        functools.partial(preact_bottleneck_kernel, H, W, conv2_im2col),
        out_shape=jax.ShapeDtypeStruct((N, HW, Cout), jnp.float32),
        grid=(N,),
        in_specs=in_specs,
        out_specs=pl.BlockSpec((1, HW, Cout), lambda n: (n, 0, 0)),
        scratch_shapes=[
            pltpu.VMEM((H + 2, W + 2, Cmid), jnp.bfloat16),   # conv2 halo (bf16)
            pltpu.VMEM((HW, Cout), jnp.float32),              # projection residual
        ],
        compiler_params=pltpu.CompilerParams(
            dimension_semantics=("parallel",),
            vmem_limit_bytes=32 * 1024 * 1024),
        cost_estimate=cost,
    )(*args)

    return out.reshape(N, H, W, Cout)


def preact_bottleneck(x_nchw, params, *, stride=1, conv2_im2col=False):
    """PyTorch-layout convenience wrapper: (N, Cin, H, W) -> (N, Cout, H, W)."""
    x = jnp.transpose(x_nchw, (0, 2, 3, 1))          # NCHW -> NHWC (HBM tax;
    out = preact_bottleneck_nhwc(x, params, stride=stride,
                                 conv2_im2col=conv2_im2col)
    return jnp.transpose(out, (0, 3, 1, 2))


# --------------------------- parameter construction ---------------------------

def _standardize_hwio(w):
    # per-output-channel (last axis) mean/var over (kh, kw, cin), unbiased=False
    m = jnp.mean(w, axis=(0, 1, 2), keepdims=True)
    v = jnp.mean((w - m) ** 2, axis=(0, 1, 2), keepdims=True)
    return (w - m) / jnp.sqrt(v + 1e-5)


def make_params(key, cin, cout, cmid):
    ks = jax.random.split(key, 12)
    w1 = _standardize_hwio(0.1 * jax.random.normal(ks[0], (1, 1, cin, cmid), jnp.float32))
    w2 = _standardize_hwio(0.1 * jax.random.normal(ks[1], (3, 3, cmid, cmid), jnp.float32))
    w3 = _standardize_hwio(0.1 * jax.random.normal(ks[2], (1, 1, cmid, cout), jnp.float32))
    wd = _standardize_hwio(0.1 * jax.random.normal(ks[3], (1, 1, cin, cout), jnp.float32))

    def gn(kg, kb, c):
        g = 1.0 + 0.1 * jax.random.normal(kg, (c,), jnp.float32)
        b = 0.1 * jax.random.normal(kb, (c,), jnp.float32)
        return g, b

    g1, b1 = gn(ks[4], ks[5], cmid)
    g2, b2 = gn(ks[6], ks[7], cmid)
    g3, b3 = gn(ks[8], ks[9], cout)
    gp, bp = gn(ks[10], ks[11], cout)

    bf16 = jnp.bfloat16
    kernel_params = dict(
        # conv1 and downsample weights concatenated along output channels for
        # the fused x @ [w1|wd] matmul; all MXU operands pre-cast to bf16
        # (standardization done in f32 above).
        w1d=jnp.concatenate([w1[0, 0], wd[0, 0]], axis=1).astype(bf16),
        # conv2 HWIO -> (9, cmid, cmid) in (dy, dx) tap-major order.
        w2=w2.reshape(9, cmid, cmid).astype(bf16),
        w3=w3[0, 0].astype(bf16),
        g1=g1.reshape(1, cmid), b1=b1.reshape(1, cmid),
        g2=g2.reshape(1, cmid), b2=b2.reshape(1, cmid),
        g3=g3.reshape(1, cout), b3=b3.reshape(1, cout),
        gp=gp.reshape(1, cout), bp=bp.reshape(1, cout),
    )
    ref_params = dict(w1=w1, w2=w2, w3=w3, wd=wd,
                      g1=g1, b1=b1, g2=g2, b2=b2, g3=g3, b3=b3, gp=gp, bp=bp)
    return kernel_params, ref_params


# ------------------------------ pure-JAX reference -----------------------------

def _ref_gn(x, gamma, beta, groups, eps):
    N, H, W, C = x.shape
    xg = x.reshape(N, H, W, groups, C // groups)
    m = jnp.mean(xg, axis=(1, 2, 4), keepdims=True)
    v = jnp.mean((xg - m) ** 2, axis=(1, 2, 4), keepdims=True)
    xn = ((xg - m) / jnp.sqrt(v + eps)).reshape(N, H, W, C)
    return xn * gamma + beta


def ref_forward(x_nchw, p):
    x = jnp.transpose(x_nchw, (0, 2, 3, 1))
    dn = ("NHWC", "HWIO", "NHWC")
    conv = functools.partial(jax.lax.conv_general_dilated,
                             window_strides=(1, 1), dimension_numbers=dn)
    relu = lambda t: jnp.maximum(t, 0.0)

    residual = _ref_gn(conv(x, p["wd"], padding="VALID"), p["gp"], p["bp"],
                       p["gp"].shape[0], 1e-5)
    y = relu(_ref_gn(conv(x, p["w1"], padding="VALID"), p["g1"], p["b1"], 32, 1e-6))
    y = relu(_ref_gn(conv(y, p["w2"], padding=((1, 1), (1, 1))), p["g2"], p["b2"], 32, 1e-6))
    y = _ref_gn(conv(y, p["w3"], padding="VALID"), p["g3"], p["b3"], 32, 1e-6)
    y = relu(residual + y)
    return jnp.transpose(y, (0, 3, 1, 2))


# ------------------------------------ main -------------------------------------

if __name__ == "__main__":
    N, Cin, H, W = 2, 32, 16, 16
    Cmid, Cout = 32, 64          # cin != cout -> downsample + gn_proj branch

    key = jax.random.PRNGKey(0)
    kx, kp = jax.random.split(key)
    x = jax.random.normal(kx, (N, Cin, H, W), jnp.float32)   # PyTorch-style NCHW

    kernel_params, ref_params = make_params(kp, Cin, Cout, Cmid)

    out = preact_bottleneck(x, kernel_params)
    out = jax.block_until_ready(out)

    ref = jax.block_until_ready(ref_forward(x, ref_params))
    assert out.shape == (N, Cout, H, W), out.shape
    # bf16 MXU operands (f32 accumulation) vs pure-f32 reference -> compare
    # with a scale-relative bound.
    max_err = float(jnp.max(jnp.abs(out - ref)))
    scale = float(jnp.max(jnp.abs(ref))) + 1e-6
    assert max_err / scale < 5e-2, f"rel max error {max_err / scale} (abs {max_err})"

    print("KERNEL_OK")
</pallas_src>

<mosaic_0001>
module attributes {stable_mosaic.version = 11 : i64} {
  func.func @preact_bottleneck_kernel(%arg0: i32, %arg1: memref<1x256x32xbf16, #tpu.memory_space<vmem>>, %arg2: memref<32x96xbf16, #tpu.memory_space<vmem>>, %arg3: memref<1x32xf32, #tpu.memory_space<vmem>>, %arg4: memref<1x32xf32, #tpu.memory_space<vmem>>, %arg5: memref<1x64xf32, #tpu.memory_space<vmem>>, %arg6: memref<1x64xf32, #tpu.memory_space<vmem>>, %arg7: memref<9x32x32xbf16, #tpu.memory_space<vmem>>, %arg8: memref<1x32xf32, #tpu.memory_space<vmem>>, %arg9: memref<1x32xf32, #tpu.memory_space<vmem>>, %arg10: memref<32x64xbf16, #tpu.memory_space<vmem>>, %arg11: memref<1x64xf32, #tpu.memory_space<vmem>>, %arg12: memref<1x64xf32, #tpu.memory_space<vmem>>, %arg13: memref<32x32xf32, #tpu.memory_space<vmem>>, %arg14: memref<32x32xf32, #tpu.memory_space<vmem>>, %arg15: memref<64x32xf32, #tpu.memory_space<vmem>>, %arg16: memref<32x64xf32, #tpu.memory_space<vmem>>, %arg17: memref<1x256x64xf32, #tpu.memory_space<vmem>>, %arg18: memref<18x18x32xbf16, #tpu.memory_space<vmem>>, %arg19: memref<256x64xf32, #tpu.memory_space<vmem>>) attributes {dimension_semantics = [#tpu.dimension_semantics<parallel>], iteration_bounds = array<i64: 2>, scalar_prefetch = 0 : i64, scratch_operands = 2 : i64, tpu.core_type = #tpu.core_type<tc>, window_params = [{transform_indices = @transform_0, window_bounds = array<i64: 1, 256, 32>}, {pipeline_mode = #tpu.pipeline_mode<synchronous>, transform_indices = @transform_1, window_bounds = array<i64: 32, 96>}, {pipeline_mode = #tpu.pipeline_mode<synchronous>, transform_indices = @transform_2, window_bounds = array<i64: 1, 32>}, {pipeline_mode = #tpu.pipeline_mode<synchronous>, transform_indices = @transform_3, window_bounds = array<i64: 1, 32>}, {pipeline_mode = #tpu.pipeline_mode<synchronous>, transform_indices = @transform_4, window_bounds = array<i64: 1, 64>}, {pipeline_mode = #tpu.pipeline_mode<synchronous>, transform_indices = @transform_5, window_bounds = array<i64: 1, 64>}, {pipeline_mode = #tpu.pipeline_mode<synchronous>, transform_indices = @transform_6, window_bounds = array<i64: 9, 32, 32>}, {pipeline_mode = #tpu.pipeline_mode<synchronous>, transform_indices = @transform_7, window_bounds = array<i64: 1, 32>}, {pipeline_mode = #tpu.pipeline_mode<synchronous>, transform_indices = @transform_8, window_bounds = array<i64: 1, 32>}, {pipeline_mode = #tpu.pipeline_mode<synchronous>, transform_indices = @transform_9, window_bounds = array<i64: 32, 64>}, {pipeline_mode = #tpu.pipeline_mode<synchronous>, transform_indices = @transform_10, window_bounds = array<i64: 1, 64>}, {pipeline_mode = #tpu.pipeline_mode<synchronous>, transform_indices = @transform_11, window_bounds = array<i64: 1, 64>}, {pipeline_mode = #tpu.pipeline_mode<synchronous>, transform_indices = @transform_12, window_bounds = array<i64: 32, 32>}, {pipeline_mode = #tpu.pipeline_mode<synchronous>, transform_indices = @transform_13, window_bounds = array<i64: 32, 32>}, {pipeline_mode = #tpu.pipeline_mode<synchronous>, transform_indices = @transform_14, window_bounds = array<i64: 64, 32>}, {pipeline_mode = #tpu.pipeline_mode<synchronous>, transform_indices = @transform_15, window_bounds = array<i64: 32, 64>}, {transform_indices = @transform_16, window_bounds = array<i64: 1, 256, 64>}]} {
    %c0 = arith.constant 0 : index
    %c0_0 = arith.constant 0 : index
    %0 = vector.load %arg15[%c0, %c0_0] : memref<64x32xf32, #tpu.memory_space<vmem>>, vector<64x32xf32>
    %c0_1 = arith.constant 0 : index
    %c0_2 = arith.constant 0 : index
    %1 = vector.load %arg16[%c0_1, %c0_2] : memref<32x64xf32, #tpu.memory_space<vmem>>, vector<32x64xf32>
    %c0_3 = arith.constant 0 : index
    %c0_4 = arith.constant 0 : index
    %c0_5 = arith.constant 0 : index
    %2 = vector.load %arg1[%c0_3, %c0_4, %c0_5] : memref<1x256x32xbf16, #tpu.memory_space<vmem>>, vector<1x256x32xbf16>
    %3 = vector.shape_cast %2 : vector<1x256x32xbf16> to vector<256x32xbf16>
    %c0_6 = arith.constant 0 : index
    %c0_7 = arith.constant 0 : index
    %4 = vector.load %arg2[%c0_6, %c0_7] : memref<32x96xbf16, #tpu.memory_space<vmem>>, vector<32x96xbf16>
    %cst = arith.constant dense<0.000000e+00> : vector<256x96xf32>
    %5 = tpu.matmul %3, %4, %cst {dimension_numbers = #tpu.dot_dimension_numbers<[1], [0], [0], [1], [0, 0, 1, 1], [], []>} : vector<256x32xbf16>, vector<32x96xbf16>, vector<256x96xf32> -> vector<256x96xf32>
    %6 = vector.extract_strided_slice %5 {offsets = [0, 32], sizes = [256, 64], strides = [1, 1]} : vector<256x96xf32> to vector<256x64xf32>
    %c0_8 = arith.constant 0 : index
    %c0_9 = arith.constant 0 : index
    %7 = vector.load %arg5[%c0_8, %c0_9] : memref<1x64xf32, #tpu.memory_space<vmem>>, vector<1x64xf32>
    %c0_10 = arith.constant 0 : index
    %c0_11 = arith.constant 0 : index
    %8 = vector.load %arg6[%c0_10, %c0_11] : memref<1x64xf32, #tpu.memory_space<vmem>>, vector<1x64xf32>
    %cst_12 = arith.constant dense<0.000000e+00> : vector<64xf32>
    %9 = vector.multi_reduction <add>, %6, %cst_12 [0] : vector<256x64xf32> to vector<64xf32>
    %10 = vector.shape_cast %9 : vector<64xf32> to vector<1x64xf32>
    %11 = arith.mulf %6, %6 : vector<256x64xf32>
    %cst_13 = arith.constant dense<0.000000e+00> : vector<64xf32>
    %12 = vector.multi_reduction <add>, %11, %cst_13 [0] : vector<256x64xf32> to vector<64xf32>
    %13 = vector.shape_cast %12 : vector<64xf32> to vector<1x64xf32>
    %cst_14 = arith.constant 2.560000e+02 : f32
    %14 = vector.broadcast %cst_14 : f32 to vector<1x64xf32>
    %15 = arith.divf %10, %14 : vector<1x64xf32>
    %cst_15 = arith.constant 2.560000e+02 : f32
    %16 = vector.broadcast %cst_15 : f32 to vector<1x64xf32>
    %17 = arith.divf %13, %16 : vector<1x64xf32>
    %18 = arith.mulf %15, %15 : vector<1x64xf32>
    %19 = arith.subf %17, %18 : vector<1x64xf32>
    %cst_16 = arith.constant 9.99999974E-6 : f32
    %20 = vector.broadcast %cst_16 : f32 to vector<1x64xf32>
    %21 = arith.addf %19, %20 : vector<1x64xf32>
    %22 = math.rsqrt %21 : vector<1x64xf32>
    %23 = arith.mulf %22, %7 : vector<1x64xf32>
    %24 = vector.broadcast %15 : vector<1x64xf32> to vector<256x64xf32>
    %25 = arith.subf %6, %24 : vector<256x64xf32>
    %26 = vector.broadcast %23 : vector<1x64xf32> to vector<256x64xf32>
    %27 = arith.mulf %25, %26 : vector<256x64xf32>
    %28 = vector.broadcast %8 : vector<1x64xf32> to vector<256x64xf32>
    %29 = arith.addf %27, %28 : vector<256x64xf32>
    %c0_17 = arith.constant 0 : index
    %c0_18 = arith.constant 0 : index
    %30 = vector.load %arg19[%c0_17, %c0_18] : memref<256x64xf32, #tpu.memory_space<vmem>>, vector<256x64xf32>
    tpu.vector_store %arg19[%c0_17, %c0_18], %29 {strides = array<i32>} : memref<256x64xf32, #tpu.memory_space<vmem>>, vector<256x64xf32>,
    %31 = vector.extract_strided_slice %5 {offsets = [0, 0], sizes = [256, 32], strides = [1, 1]} : vector<256x96xf32> to vector<256x32xf32>
    %c0_19 = arith.constant 0 : index
    %c0_20 = arith.constant 0 : index
    %32 = vector.load %arg3[%c0_19, %c0_20] : memref<1x32xf32, #tpu.memory_space<vmem>>, vector<1x32xf32>
    %c0_21 = arith.constant 0 : index
    %c0_22 = arith.constant 0 : index
    %33 = vector.load %arg4[%c0_21, %c0_22] : memref<1x32xf32, #tpu.memory_space<vmem>>, vector<1x32xf32>
    %cst_23 = arith.constant dense<0.000000e+00> : vector<32xf32>
    %34 = vector.multi_reduction <add>, %31, %cst_23 [0] : vector<256x32xf32> to vector<32xf32>
    %35 = vector.shape_cast %34 : vector<32xf32> to vector<1x32xf32>
    %36 = arith.mulf %31, %31 : vector<256x32xf32>
    %cst_24 = arith.constant dense<0.000000e+00> : vector<32xf32>
    %37 = vector.multi_reduction <add>, %36, %cst_24 [0] : vector<256x32xf32> to vector<32xf32>
    %38 = vector.shape_cast %37 : vector<32xf32> to vector<1x32xf32>
    %cst_25 = arith.constant 2.560000e+02 : f32
    %39 = vector.broadcast %cst_25 : f32 to vector<1x32xf32>
    %40 = arith.divf %35, %39 : vector<1x32xf32>
    %cst_26 = arith.constant 2.560000e+02 : f32
    %41 = vector.broadcast %cst_26 : f32 to vector<1x32xf32>
    %42 = arith.divf %38, %41 : vector<1x32xf32>
    %43 = arith.mulf %40, %40 : vector<1x32xf32>
    %44 = arith.subf %42, %43 : vector<1x32xf32>
    %cst_27 = arith.constant 9.99999997E-7 : f32
    %45 = vector.broadcast %cst_27 : f32 to vector<1x32xf32>
    %46 = arith.addf %44, %45 : vector<1x32xf32>
    %47 = math.rsqrt %46 : vector<1x32xf32>
    %48 = arith.mulf %47, %32 : vector<1x32xf32>
    %49 = vector.broadcast %40 : vector<1x32xf32> to vector<256x32xf32>
    %50 = arith.subf %31, %49 : vector<256x32xf32>
    %51 = vector.broadcast %48 : vector<1x32xf32> to vector<256x32xf32>
    %52 = arith.mulf %50, %51 : vector<256x32xf32>
    %53 = vector.broadcast %33 : vector<1x32xf32> to vector<256x32xf32>
    %54 = arith.addf %52, %53 : vector<256x32xf32>
    %cst_28 = arith.constant 0.000000e+00 : f32
    %55 = vector.broadcast %cst_28 : f32 to vector<256x32xf32>
    %56 = arith.maximumf %54, %55 : vector<256x32xf32>
    %cst_29 = arith.constant 0.000000e+00 : bf16
    %57 = vector.broadcast %cst_29 : bf16 to vector<1x18x32xbf16>
    %cst_30 = arith.constant 0.000000e+00 : bf16
    %58 = vector.broadcast %cst_30 : bf16 to vector<16x1x32xbf16>
    %c0_31 = arith.constant 0 : index
    %c0_32 = arith.constant 0 : index
    %c0_33 = arith.constant 0 : index
    %59 = vector.load %arg18[%c0_31, %c0_32, %c0_33] : memref<18x18x32xbf16, #tpu.memory_space<vmem>>, vector<1x18x32xbf16>
    tpu.vector_store %arg18[%c0_31, %c0_32, %c0_33], %57 {strides = array<i32>} : memref<18x18x32xbf16, #tpu.memory_space<vmem>>, vector<1x18x32xbf16>,
    %c17 = arith.constant 17 : index
    %c0_34 = arith.constant 0 : index
    %c0_35 = arith.constant 0 : index
    %60 = vector.load %arg18[%c17, %c0_34, %c0_35] : memref<18x18x32xbf16, #tpu.memory_space<vmem>>, vector<1x18x32xbf16>
    tpu.vector_store %arg18[%c17, %c0_34, %c0_35], %57 {strides = array<i32>} : memref<18x18x32xbf16, #tpu.memory_space<vmem>>, vector<1x18x32xbf16>,
    %c1 = arith.constant 1 : index
    %c0_36 = arith.constant 0 : index
    %c0_37 = arith.constant 0 : index
    %61 = vector.load %arg18[%c1, %c0_36, %c0_37] : memref<18x18x32xbf16, #tpu.memory_space<vmem>>, vector<16x1x32xbf16>
    tpu.vector_store %arg18[%c1, %c0_36, %c0_37], %58 {strides = array<i32>} : memref<18x18x32xbf16, #tpu.memory_space<vmem>>, vector<16x1x32xbf16>,
    %c1_38 = arith.constant 1 : index
    %c17_39 = arith.constant 17 : index
    %c0_40 = arith.constant 0 : index
    %62 = vector.load %arg18[%c1_38, %c17_39, %c0_40] : memref<18x18x32xbf16, #tpu.memory_space<vmem>>, vector<16x1x32xbf16>
    tpu.vector_store %arg18[%c1_38, %c17_39, %c0_40], %58 {strides = array<i32>} : memref<18x18x32xbf16, #tpu.memory_space<vmem>>, vector<16x1x32xbf16>,
    %63 = arith.truncf %56 : vector<256x32xf32> to vector<256x32xbf16>
    %64 = vector.shape_cast %63 : vector<256x32xbf16> to vector<16x16x32xbf16>
    %c1_41 = arith.constant 1 : index
    %c1_42 = arith.constant 1 : index
    %c0_43 = arith.constant 0 : index
    %65 = vector.load %arg18[%c1_41, %c1_42, %c0_43] : memref<18x18x32xbf16, #tpu.memory_space<vmem>>, vector<16x16x32xbf16>
    tpu.vector_store %arg18[%c1_41, %c1_42, %c0_43], %64 {strides = array<i32>} : memref<18x18x32xbf16, #tpu.memory_space<vmem>>, vector<16x16x32xbf16>,
    %cst_44 = arith.constant 0.000000e+00 : f32
    %66 = vector.broadcast %cst_44 : f32 to vector<256x32xf32>
    %c0_45 = arith.constant 0 : index
    %c0_46 = arith.constant 0 : index
    %c0_47 = arith.constant 0 : index
    %67 = vector.load %arg18[%c0_45, %c0_46, %c0_47] : memref<18x18x32xbf16, #tpu.memory_space<vmem>>, vector<16x16x32xbf16>
    %68 = vector.shape_cast %67 : vector<16x16x32xbf16> to vector<256x32xbf16>
    %c0_48 = arith.constant 0 : index
    %c0_49 = arith.constant 0 : index
    %c0_50 = arith.constant 0 : index
    %69 = vector.load %arg7[%c0_48, %c0_49, %c0_50] : memref<9x32x32xbf16, #tpu.memory_space<vmem>>, vector<1x32x32xbf16>
    %70 = vector.shape_cast %69 : vector<1x32x32xbf16> to vector<32x32xbf16>
    %cst_51 = arith.constant dense<0.000000e+00> : vector<256x32xf32>
    %71 = tpu.matmul %68, %70, %cst_51 {dimension_numbers = #tpu.dot_dimension_numbers<[1], [0], [0], [1], [0, 0, 1, 1], [], []>} : vector<256x32xbf16>, vector<32x32xbf16>, vector<256x32xf32> -> vector<256x32xf32>
    %72 = arith.addf %66, %71 : vector<256x32xf32>
    %c0_52 = arith.constant 0 : index
    %c1_53 = arith.constant 1 : index
    %c0_54 = arith.constant 0 : index
    %73 = vector.load %arg18[%c0_52, %c1_53, %c0_54] : memref<18x18x32xbf16, #tpu.memory_space<vmem>>, vector<16x16x32xbf16>
    %74 = vector.shape_cast %73 : vector<16x16x32xbf16> to vector<256x32xbf16>
    %c1_55 = arith.constant 1 : index
    %c0_56 = arith.constant 0 : index
    %c0_57 = arith.constant 0 : index
    %75 = vector.load %arg7[%c1_55, %c0_56, %c0_57] : memref<9x32x32xbf16, #tpu.memory_space<vmem>>, vector<1x32x32xbf16>
    %76 = vector.shape_cast %75 : vector<1x32x32xbf16> to vector<32x32xbf16>
    %cst_58 = arith.constant dense<0.000000e+00> : vector<256x32xf32>
    %77 = tpu.matmul %74, %76, %cst_58 {dimension_numbers = #tpu.dot_dimension_numbers<[1], [0], [0], [1], [0, 0, 1, 1], [], []>} : vector<256x32xbf16>, vector<32x32xbf16>, vector<256x32xf32> -> vector<256x32xf32>
    %78 = arith.addf %72, %77 : vector<256x32xf32>
    %c0_59 = arith.constant 0 : index
    %c2 = arith.constant 2 : index
    %c0_60 = arith.constant 0 : index
    %79 = vector.load %arg18[%c0_59, %c2, %c0_60] : memref<18x18x32xbf16, #tpu.memory_space<vmem>>, vector<16x16x32xbf16>
    %80 = vector.shape_cast %79 : vector<16x16x32xbf16> to vector<256x32xbf16>
    %c2_61 = arith.constant 2 : index
    %c0_62 = arith.constant 0 : index
    %c0_63 = arith.constant 0 : index
    %81 = vector.load %arg7[%c2_61, %c0_62, %c0_63] : memref<9x32x32xbf16, #tpu.memory_space<vmem>>, vector<1x32x32xbf16>
    %82 = vector.shape_cast %81 : vector<1x32x32xbf16> to vector<32x32xbf16>
    %cst_64 = arith.constant dense<0.000000e+00> : vector<256x32xf32>
    %83 = tpu.matmul %80, %82, %cst_64 {dimension_numbers = #tpu.dot_dimension_numbers<[1], [0], [0], [1], [0, 0, 1, 1], [], []>} : vector<256x32xbf16>, vector<32x32xbf16>, vector<256x32xf32> -> vector<256x32xf32>
    %84 = arith.addf %78, %83 : vector<256x32xf32>
    %c1_65 = arith.constant 1 : index
    %c0_66 = arith.constant 0 : index
    %c0_67 = arith.constant 0 : index
    %85 = vector.load %arg18[%c1_65, %c0_66, %c0_67] : memref<18x18x32xbf16, #tpu.memory_space<vmem>>, vector<16x16x32xbf16>
    %86 = vector.shape_cast %85 : vector<16x16x32xbf16> to vector<256x32xbf16>
    %c3 = arith.constant 3 : index
    %c0_68 = arith.constant 0 : index
    %c0_69 = arith.constant 0 : index
    %87 = vector.load %arg7[%c3, %c0_68, %c0_69] : memref<9x32x32xbf16, #tpu.memory_space<vmem>>, vector<1x32x32xbf16>
    %88 = vector.shape_cast %87 : vector<1x32x32xbf16> to vector<32x32xbf16>
    %cst_70 = arith.constant dense<0.000000e+00> : vector<256x32xf32>
    %89 = tpu.matmul %86, %88, %cst_70 {dimension_numbers = #tpu.dot_dimension_numbers<[1], [0], [0], [1], [0, 0, 1, 1], [], []>} : vector<256x32xbf16>, vector<32x32xbf16>, vector<256x32xf32> -> vector<256x32xf32>
    %90 = arith.addf %84, %89 : vector<256x32xf32>
    %c1_71 = arith.constant 1 : index
    %c1_72 = arith.constant 1 : index
    %c0_73 = arith.constant 0 : index
    %91 = vector.load %arg18[%c1_71, %c1_72, %c0_73] : memref<18x18x32xbf16, #tpu.memory_space<vmem>>, vector<16x16x32xbf16>
    %92 = vector.shape_cast %91 : vector<16x16x32xbf16> to vector<256x32xbf16>
    %c4 = arith.constant 4 : index
    %c0_74 = arith.constant 0 : index
    %c0_75 = arith.constant 0 : index
    %93 = vector.load %arg7[%c4, %c0_74, %c0_75] : memref<9x32x32xbf16, #tpu.memory_space<vmem>>, vector<1x32x32xbf16>
    %94 = vector.shape_cast %93 : vector<1x32x32xbf16> to vector<32x32xbf16>
    %cst_76 = arith.constant dense<0.000000e+00> : vector<256x32xf32>
    %95 = tpu.matmul %92, %94, %cst_76 {dimension_numbers = #tpu.dot_dimension_numbers<[1], [0], [0], [1], [0, 0, 1, 1], [], []>} : vector<256x32xbf16>, vector<32x32xbf16>, vector<256x32xf32> -> vector<256x32xf32>
    %96 = arith.addf %90, %95 : vector<256x32xf32>
    %c1_77 = arith.constant 1 : index
    %c2_78 = arith.constant 2 : index
    %c0_79 = arith.constant 0 : index
    %97 = vector.load %arg18[%c1_77, %c2_78, %c0_79] : memref<18x18x32xbf16, #tpu.memory_space<vmem>>, vector<16x16x32xbf16>
    %98 = vector.shape_cast %97 : vector<16x16x32xbf16> to vector<256x32xbf16>
    %c5 = arith.constant 5 : index
    %c0_80 = arith.constant 0 : index
    %c0_81 = arith.constant 0 : index
    %99 = vector.load %arg7[%c5, %c0_80, %c0_81] : memref<9x32x32xbf16, #tpu.memory_space<vmem>>, vector<1x32x32xbf16>
    %100 = vector.shape_cast %99 : vector<1x32x32xbf16> to vector<32x32xbf16>
    %cst_82 = arith.constant dense<0.000000e+00> : vector<256x32xf32>
    %101 = tpu.matmul %98, %100, %cst_82 {dimension_numbers = #tpu.dot_dimension_numbers<[1], [0], [0], [1], [0, 0, 1, 1], [], []>} : vector<256x32xbf16>, vector<32x32xbf16>, vector<256x32xf32> -> vector<256x32xf32>
    %102 = arith.addf %96, %101 : vector<256x32xf32>
    %c2_83 = arith.constant 2 : index
    %c0_84 = arith.constant 0 : index
    %c0_85 = arith.constant 0 : index
    %103 = vector.load %arg18[%c2_83, %c0_84, %c0_85] : memref<18x18x32xbf16, #tpu.memory_space<vmem>>, vector<16x16x32xbf16>
    %104 = vector.shape_cast %103 : vector<16x16x32xbf16> to vector<256x32xbf16>
    %c6 = arith.constant 6 : index
    %c0_86 = arith.constant 0 : index
    %c0_87 = arith.constant 0 : index
    %105 = vector.load %arg7[%c6, %c0_86, %c0_87] : memref<9x32x32xbf16, #tpu.memory_space<vmem>>, vector<1x32x32xbf16>
    %106 = vector.shape_cast %105 : vector<1x32x32xbf16> to vector<32x32xbf16>
    %cst_88 = arith.constant dense<0.000000e+00> : vector<256x32xf32>
    %107 = tpu.matmul %104, %106, %cst_88 {dimension_numbers = #tpu.dot_dimension_numbers<[1], [0], [0], [1], [0, 0, 1, 1], [], []>} : vector<256x32xbf16>, vector<32x32xbf16>, vector<256x32xf32> -> vector<256x32xf32>
    %108 = arith.addf %102, %107 : vector<256x32xf32>
    %c2_89 = arith.constant 2 : index
    %c1_90 = arith.constant 1 : index
    %c0_91 = arith.constant 0 : index
    %109 = vector.load %arg18[%c2_89, %c1_90, %c0_91] : memref<18x18x32xbf16, #tpu.memory_space<vmem>>, vector<16x16x32xbf16>
    %110 = vector.shape_cast %109 : vector<16x16x32xbf16> to vector<256x32xbf16>
    %c7 = arith.constant 7 : index
    %c0_92 = arith.constant 0 : index
    %c0_93 = arith.constant 0 : index
    %111 = vector.load %arg7[%c7, %c0_92, %c0_93] : memref<9x32x32xbf16, #tpu.memory_space<vmem>>, vector<1x32x32xbf16>
    %112 = vector.shape_cast %111 : vector<1x32x32xbf16> to vector<32x32xbf16>
    %cst_94 = arith.constant dense<0.000000e+00> : vector<256x32xf32>
    %113 = tpu.matmul %110, %112, %cst_94 {dimension_numbers = #tpu.dot_dimension_numbers<[1], [0], [0], [1], [0, 0, 1, 1], [], []>} : vector<256x32xbf16>, vector<32x32xbf16>, vector<256x32xf32> -> vector<256x32xf32>
    %114 = arith.addf %108, %113 : vector<256x32xf32>
    %c2_95 = arith.constant 2 : index
    %c2_96 = arith.constant 2 : index
    %c0_97 = arith.constant 0 : index
    %115 = vector.load %arg18[%c2_95, %c2_96, %c0_97] : memref<18x18x32xbf16, #tpu.memory_space<vmem>>, vector<16x16x32xbf16>
    %116 = vector.shape_cast %115 : vector<16x16x32xbf16> to vector<256x32xbf16>
    %c8 = arith.constant 8 : index
    %c0_98 = arith.constant 0 : index
    %c0_99 = arith.constant 0 : index
    %117 = vector.load %arg7[%c8, %c0_98, %c0_99] : memref<9x32x32xbf16, #tpu.memory_space<vmem>>, vector<1x32x32xbf16>
    %118 = vector.shape_cast %117 : vector<1x32x32xbf16> to vector<32x32xbf16>
    %cst_100 = arith.constant dense<0.000000e+00> : vector<256x32xf32>
    %119 = tpu.matmul %116, %118, %cst_100 {dimension_numbers = #tpu.dot_dimension_numbers<[1], [0], [0], [1], [0, 0, 1, 1], [], []>} : vector<256x32xbf16>, vector<32x32xbf16>, vector<256x32xf32> -> vector<256x32xf32>
    %120 = arith.addf %114, %119 : vector<256x32xf32>
    %c0_101 = arith.constant 0 : index
    %c0_102 = arith.constant 0 : index
    %121 = vector.load %arg8[%c0_101, %c0_102] : memref<1x32xf32, #tpu.memory_space<vmem>>, vector<1x32xf32>
    %c0_103 = arith.constant 0 : index
    %c0_104 = arith.constant 0 : index
    %122 = vector.load %arg9[%c0_103, %c0_104] : memref<1x32xf32, #tpu.memory_space<vmem>>, vector<1x32xf32>
    %cst_105 = arith.constant dense<0.000000e+00> : vector<32xf32>
    %123 = vector.multi_reduction <add>, %120, %cst_105 [0] : vector<256x32xf32> to vector<32xf32>
    %124 = vector.shape_cast %123 : vector<32xf32> to vector<1x32xf32>
    %125 = arith.mulf %120, %120 : vector<256x32xf32>
    %cst_106 = arith.constant dense<0.000000e+00> : vector<32xf32>
    %126 = vector.multi_reduction <add>, %125, %cst_106 [0] : vector<256x32xf32> to vector<32xf32>
    %127 = vector.shape_cast %126 : vector<32xf32> to vector<1x32xf32>
    %cst_107 = arith.constant 2.560000e+02 : f32
    %128 = vector.broadcast %cst_107 : f32 to vector<1x32xf32>
    %129 = arith.divf %124, %128 : vector<1x32xf32>
    %cst_108 = arith.constant 2.560000e+02 : f32
    %130 = vector.broadcast %cst_108 : f32 to vector<1x32xf32>
    %131 = arith.divf %127, %130 : vector<1x32xf32>
    %132 = arith.mulf %129, %129 : vector<1x32xf32>
    %133 = arith.subf %131, %132 : vector<1x32xf32>
    %cst_109 = arith.constant 9.99999997E-7 : f32
    %134 = vector.broadcast %cst_109 : f32 to vector<1x32xf32>
    %135 = arith.addf %133, %134 : vector<1x32xf32>
    %136 = math.rsqrt %135 : vector<1x32xf32>
    %137 = arith.mulf %136, %121 : vector<1x32xf32>
    %138 = vector.broadcast %129 : vector<1x32xf32> to vector<256x32xf32>
    %139 = arith.subf %120, %138 : vector<256x32xf32>
    %140 = vector.broadcast %137 : vector<1x32xf32> to vector<256x32xf32>
    %141 = arith.mulf %139, %140 : vector<256x32xf32>
    %142 = vector.broadcast %122 : vector<1x32xf32> to vector<256x32xf32>
    %143 = arith.addf %141, %142 : vector<256x32xf32>
    %cst_110 = arith.constant 0.000000e+00 : f32
    %144 = vector.broadcast %cst_110 : f32 to vector<256x32xf32>
    %145 = arith.maximumf %143, %144 : vector<256x32xf32>
    %146 = arith.truncf %145 : vector<256x32xf32> to vector<256x32xbf16>
    %c0_111 = arith.constant 0 : index
    %c0_112 = arith.constant 0 : index
    %147 = vector.load %arg10[%c0_111, %c0_112] : memref<32x64xbf16, #tpu.memory_space<vmem>>, vector<32x64xbf16>
    %cst_113 = arith.constant dense<0.000000e+00> : vector<256x64xf32>
    %148 = tpu.matmul %146, %147, %cst_113 {dimension_numbers = #tpu.dot_dimension_numbers<[1], [0], [0], [1], [0, 0, 1, 1], [], []>} : vector<256x32xbf16>, vector<32x64xbf16>, vector<256x64xf32> -> vector<256x64xf32>
    %c0_114 = arith.constant 0 : index
    %c0_115 = arith.constant 0 : index
    %149 = vector.load %arg11[%c0_114, %c0_115] : memref<1x64xf32, #tpu.memory_space<vmem>>, vector<1x64xf32>
    %c0_116 = arith.constant 0 : index
    %c0_117 = arith.constant 0 : index
    %150 = vector.load %arg12[%c0_116, %c0_117] : memref<1x64xf32, #tpu.memory_space<vmem>>, vector<1x64xf32>
    %cst_118 = arith.constant dense<0.000000e+00> : vector<64xf32>
    %151 = vector.multi_reduction <add>, %148, %cst_118 [0] : vector<256x64xf32> to vector<64xf32>
    %152 = vector.shape_cast %151 : vector<64xf32> to vector<1x64xf32>
    %153 = arith.mulf %148, %148 : vector<256x64xf32>
    %cst_119 = arith.constant dense<0.000000e+00> : vector<64xf32>
    %154 = vector.multi_reduction <add>, %153, %cst_119 [0] : vector<256x64xf32> to vector<64xf32>
    %155 = vector.shape_cast %154 : vector<64xf32> to vector<1x64xf32>
    %156 = tpu.concatenate %152, %155 in 0 : vector<1x64xf32>, vector<1x64xf32> -> vector<2x64xf32>
    %cst_120 = arith.constant dense<0.000000e+00> : vector<2x32xf32>
    %157 = tpu.matmul %156, %0, %cst_120 {dimension_numbers = #tpu.dot_dimension_numbers<[1], [0], [0], [1], [0, 0, 1, 1], [], []>} : vector<2x64xf32>, vector<64x32xf32>, vector<2x32xf32> -> vector<2x32xf32>
    %cst_121 = arith.constant dense<0.000000e+00> : vector<2x64xf32>
    %158 = tpu.matmul %157, %1, %cst_121 {dimension_numbers = #tpu.dot_dimension_numbers<[1], [0], [0], [1], [0, 0, 1, 1], [], []>} : vector<2x32xf32>, vector<32x64xf32>, vector<2x64xf32> -> vector<2x64xf32>
    %159 = vector.extract_strided_slice %158 {offsets = [0, 0], sizes = [1, 64], strides = [1, 1]} : vector<2x64xf32> to vector<1x64xf32>
    %160 = vector.extract_strided_slice %158 {offsets = [1, 0], sizes = [1, 64], strides = [1, 1]} : vector<2x64xf32> to vector<1x64xf32>
    %cst_122 = arith.constant 5.120000e+02 : f32
    %161 = vector.broadcast %cst_122 : f32 to vector<1x64xf32>
    %162 = arith.divf %159, %161 : vector<1x64xf32>
    %cst_123 = arith.constant 5.120000e+02 : f32
    %163 = vector.broadcast %cst_123 : f32 to vector<1x64xf32>
    %164 = arith.divf %160, %163 : vector<1x64xf32>
    %165 = arith.mulf %162, %162 : vector<1x64xf32>
    %166 = arith.subf %164, %165 : vector<1x64xf32>
    %cst_124 = arith.constant 9.99999997E-7 : f32
    %167 = vector.broadcast %cst_124 : f32 to vector<1x64xf32>
    %168 = arith.addf %166, %167 : vector<1x64xf32>
    %169 = math.rsqrt %168 : vector<1x64xf32>
    %170 = arith.mulf %169, %149 : vector<1x64xf32>
    %171 = vector.broadcast %162 : vector<1x64xf32> to vector<256x64xf32>
    %172 = arith.subf %148, %171 : vector<256x64xf32>
    %173 = vector.broadcast %170 : vector<1x64xf32> to vector<256x64xf32>
    %174 = arith.mulf %172, %173 : vector<256x64xf32>
    %175 = vector.broadcast %150 : vector<1x64xf32> to vector<256x64xf32>
    %176 = arith.addf %174, %175 : vector<256x64xf32>
    %c0_125 = arith.constant 0 : index
    %c0_126 = arith.constant 0 : index
    %177 = vector.load %arg19[%c0_125, %c0_126] : memref<256x64xf32, #tpu.memory_space<vmem>>, vector<256x64xf32>
    %178 = arith.addf %177, %176 : vector<256x64xf32>
    %cst_127 = arith.constant 0.000000e+00 : f32
    %179 = vector.broadcast %cst_127 : f32 to vector<256x64xf32>
    %180 = arith.maximumf %178, %179 : vector<256x64xf32>
    %181 = vector.shape_cast %180 : vector<256x64xf32> to vector<1x256x64xf32>
    %c0_128 = arith.constant 0 : index
    %c0_129 = arith.constant 0 : index
    %c0_130 = arith.constant 0 : index
    %182 = vector.load %arg17[%c0_128, %c0_129, %c0_130] : memref<1x256x64xf32, #tpu.memory_space<vmem>>, vector<1x256x64xf32>
    tpu.vector_store %arg17[%c0_128, %c0_129, %c0_130], %181 {strides = array<i32>} : memref<1x256x64xf32, #tpu.memory_space<vmem>>, vector<1x256x64xf32>,
    return
  }
  func.func @transform_0(%arg0: i32) -> (i32, i32, i32) {
    %c0_i32 = arith.constant 0 : i32
    %c0_i32_0 = arith.constant 0 : i32
    %c0_i32_1 = arith.constant 0 : i32
    return %arg0, %c0_i32, %c0_i32_0 : i32, i32, i32
  }
  func.func @transform_1(%arg0: i32) -> (i32, i32) {
    %c0_i32 = arith.constant 0 : i32
    %c0_i32_0 = arith.constant 0 : i32
    %c0_i32_1 = arith.constant 0 : i32
    return %c0_i32, %c0_i32_0 : i32, i32
  }
  func.func @transform_2(%arg0: i32) -> (i32, i32) {
    %c0_i32 = arith.constant 0 : i32
    %c0_i32_0 = arith.constant 0 : i32
    %c0_i32_1 = arith.constant 0 : i32
    return %c0_i32, %c0_i32_0 : i32, i32
  }
  func.func @transform_3(%arg0: i32) -> (i32, i32) {
    %c0_i32 = arith.constant 0 : i32
    %c0_i32_0 = arith.constant 0 : i32
    %c0_i32_1 = arith.constant 0 : i32
    return %c0_i32, %c0_i32_0 : i32, i32
  }
  func.func @transform_4(%arg0: i32) -> (i32, i32) {
    %c0_i32 = arith.constant 0 : i32
    %c0_i32_0 = arith.constant 0 : i32
    %c0_i32_1 = arith.constant 0 : i32
    return %c0_i32, %c0_i32_0 : i32, i32
  }
  func.func @transform_5(%arg0: i32) -> (i32, i32) {
    %c0_i32 = arith.constant 0 : i32
    %c0_i32_0 = arith.constant 0 : i32
    %c0_i32_1 = arith.constant 0 : i32
    return %c0_i32, %c0_i32_0 : i32, i32
  }
  func.func @transform_6(%arg0: i32) -> (i32, i32, i32) {
    %c0_i32 = arith.constant 0 : i32
    %c0_i32_0 = arith.constant 0 : i32
    %c0_i32_1 = arith.constant 0 : i32
    %c0_i32_2 = arith.constant 0 : i32
    return %c0_i32, %c0_i32_0, %c0_i32_1 : i32, i32, i32
  }
  func.func @transform_7(%arg0: i32) -> (i32, i32) {
    %c0_i32 = arith.constant 0 : i32
    %c0_i32_0 = arith.constant 0 : i32
    %c0_i32_1 = arith.constant 0 : i32
    return %c0_i32, %c0_i32_0 : i32, i32
  }
  func.func @transform_8(%arg0: i32) -> (i32, i32) {
    %c0_i32 = arith.constant 0 : i32
    %c0_i32_0 = arith.constant 0 : i32
    %c0_i32_1 = arith.constant 0 : i32
    return %c0_i32, %c0_i32_0 : i32, i32
  }
  func.func @transform_9(%arg0: i32) -> (i32, i32) {
    %c0_i32 = arith.constant 0 : i32
    %c0_i32_0 = arith.constant 0 : i32
    %c0_i32_1 = arith.constant 0 : i32
    return %c0_i32, %c0_i32_0 : i32, i32
  }
  func.func @transform_10(%arg0: i32) -> (i32, i32) {
    %c0_i32 = arith.constant 0 : i32
    %c0_i32_0 = arith.constant 0 : i32
    %c0_i32_1 = arith.constant 0 : i32
    return %c0_i32, %c0_i32_0 : i32, i32
  }
  func.func @transform_11(%arg0: i32) -> (i32, i32) {
    %c0_i32 = arith.constant 0 : i32
    %c0_i32_0 = arith.constant 0 : i32
    %c0_i32_1 = arith.constant 0 : i32
    return %c0_i32, %c0_i32_0 : i32, i32
  }
  func.func @transform_12(%arg0: i32) -> (i32, i32) {
    %c0_i32 = arith.constant 0 : i32
    %c0_i32_0 = arith.constant 0 : i32
    %c0_i32_1 = arith.constant 0 : i32
    return %c0_i32, %c0_i32_0 : i32, i32
  }
  func.func @transform_13(%arg0: i32) -> (i32, i32) {
    %c0_i32 = arith.constant 0 : i32
    %c0_i32_0 = arith.constant 0 : i32
    %c0_i32_1 = arith.constant 0 : i32
    return %c0_i32, %c0_i32_0 : i32, i32
  }
  func.func @transform_14(%arg0: i32) -> (i32, i32) {
    %c0_i32 = arith.constant 0 : i32
    %c0_i32_0 = arith.constant 0 : i32
    %c0_i32_1 = arith.constant 0 : i32
    return %c0_i32, %c0_i32_0 : i32, i32
  }
  func.func @transform_15(%arg0: i32) -> (i32, i32) {
    %c0_i32 = arith.constant 0 : i32
    %c0_i32_0 = arith.constant 0 : i32
    %c0_i32_1 = arith.constant 0 : i32
    return %c0_i32, %c0_i32_0 : i32, i32
  }
  func.func @transform_16(%arg0: i32) -> (i32, i32, i32) {
    %c0_i32 = arith.constant 0 : i32
    %c0_i32_0 = arith.constant 0 : i32
    %c0_i32_1 = arith.constant 0 : i32
    return %arg0, %c0_i32, %c0_i32_0 : i32, i32, i32
  }
}

</mosaic_0001>

<llo_original>
// kernel: tpu_custom_call.1
$region0: #{tpu_custom_call.1}
  #allocation0 [shape = 'u32[]', space=smem, size = 0x4, offset = 0x4, fixed_abs, tag = 'smem constant byte address 0x4 - core index']
  #allocation1 [shape = 'u32[144,128]{1,0:T(1,128)}', space=vmem, size = 0x12000, scoped, tag = 'internal scratch']
  #allocation2 [shape = 'bf16[18,18,32]{2,1,0:T(8,128)(2,1)}', space=vmem, size = 0x1b000, scoped, tag = 'scratch operand']
  #allocation3 [shape = 'f32[256,64]{1,0:T(8,128)}', space=vmem, size = 0x20000, scoped, tag = 'scratch operand']
  %s0 = inlined_call_operand.vmem [shape: bf16[2,256,32], index: 0, kind: input, shape index: {}]
  %s1 = inlined_call_operand.vmem [shape: bf16[32,96], index: 1, kind: input, shape index: {}]
  %s2 = inlined_call_operand.vmem [shape: f32[1,32], index: 2, kind: input, shape index: {}]
  %s3 = inlined_call_operand.vmem [shape: f32[1,32], index: 3, kind: input, shape index: {}]
  %s4 = inlined_call_operand.vmem [shape: f32[1,64], index: 4, kind: input, shape index: {}]
  %s5 = inlined_call_operand.vmem [shape: f32[1,64], index: 5, kind: input, shape index: {}]
  %s6 = inlined_call_operand.vmem [shape: bf16[9,32,32], index: 6, kind: input, shape index: {}]
  %s7 = inlined_call_operand.vmem [shape: f32[1,32], index: 7, kind: input, shape index: {}]
  %s8 = inlined_call_operand.vmem [shape: f32[1,32], index: 8, kind: input, shape index: {}]
  %s9 = inlined_call_operand.vmem [shape: bf16[32,64], index: 9, kind: input, shape index: {}]
  %s10 = inlined_call_operand.vmem [shape: f32[1,64], index: 10, kind: input, shape index: {}]
  %s11 = inlined_call_operand.vmem [shape: f32[1,64], index: 11, kind: input, shape index: {}]
  %s12 = inlined_call_operand.vmem [shape: f32[32,32], index: 12, kind: input, shape index: {}]
  %s13 = inlined_call_operand.vmem [shape: f32[32,32], index: 13, kind: input, shape index: {}]
  %s14 = inlined_call_operand.vmem [shape: f32[64,32], index: 14, kind: input, shape index: {}]
  %s15 = inlined_call_operand.vmem [shape: f32[32,64], index: 15, kind: input, shape index: {}]
  %s16 = inlined_call_operand.vmem [shape: f32[2,256,64], index: 16, kind: output, shape index: {}]
  %s17 = sld [smem:[#allocation0]]
  $region97: #{tpu_custom_call.1} parent=0
    _
  %s19 = ssub.s32 1, %s17
  %s20 = scalar_select 0, %s19, %s17
  loop: start=0, step=1, limit=4
  $region2: #{tpu_custom_call.1} parent=0 // loop_pre_header
    _
  $region3: #{tpu_custom_call.1} parent=0 // loop_header
    %s22 = sphi 0, %s26
    %p23 = scmp.ge.s32.totalorder %s22, 4
    %s32 = sphi 0, %s34
    %s35 = sphi 0, %s32
    %s36 = sphi 0, %s35
    %s52 = sphi 0, %s36
    %s56 = sphi 0, %s56
    %s58 = sphi 0, %s56
    %s59 = sphi 0, %s58
    %s73 = sphi 0, %s59
    %s77 = sphi 0, %s77
    %s79 = sphi 0, %s77
    %s80 = sphi 0, %s79
    %s94 = sphi 0, %s80
    %s98 = sphi 0, %s98
    %s100 = sphi 0, %s98
    %s101 = sphi 0, %s100
    %s115 = sphi 0, %s101
    %s119 = sphi 0, %s119
    %s121 = sphi 0, %s119
    %s122 = sphi 0, %s121
    %s136 = sphi 0, %s122
    %s140 = sphi 0, %s140
    %s142 = sphi 0, %s140
    %s143 = sphi 0, %s142
    %s157 = sphi 0, %s143
    %s161 = sphi 0, %s161
    %s163 = sphi 0, %s161
    %s164 = sphi 0, %s163
    %s178 = sphi 0, %s164
    %s182 = sphi 0, %s182
    %s184 = sphi 0, %s182
    %s185 = sphi 0, %s184
    %s199 = sphi 0, %s185
    %s203 = sphi 0, %s203
    %s205 = sphi 0, %s203
    %s206 = sphi 0, %s205
    %s220 = sphi 0, %s206
    %s224 = sphi 0, %s224
    %s226 = sphi 0, %s224
    %s227 = sphi 0, %s226
    %s241 = sphi 0, %s227
    %s245 = sphi 0, %s245
    %s247 = sphi 0, %s245
    %s248 = sphi 0, %s247
    %s262 = sphi 0, %s248
    %s266 = sphi 0, %s266
    %s268 = sphi 0, %s266
    %s269 = sphi 0, %s268
    %s283 = sphi 0, %s269
    %s287 = sphi 0, %s287
    %s289 = sphi 0, %s287
    %s290 = sphi 0, %s289
    %s304 = sphi 0, %s290
    %s308 = sphi 0, %s308
    %s310 = sphi 0, %s308
    %s311 = sphi 0, %s310
    %s325 = sphi 0, %s311
    %s329 = sphi 0, %s329
    %s331 = sphi 0, %s329
    %s332 = sphi 0, %s331
    %s346 = sphi 0, %s332
    %s350 = sphi 0, %s350
    %s352 = sphi 0, %s350
    %s353 = sphi 0, %s352
    %s367 = sphi 0, %s353
    %s373 = sphi 0, %s375
    %s376 = sphi 0, %s373
    %s377 = sphi 0, %s376
    %s393 = sphi 0, %s377
  $region4: #{tpu_custom_call.1} parent=0 // loop_header_branch
    %25 = sbr.rel (%p23) target = $region8
  $region5: #{tpu_custom_call.1} parent=0 // loop_body
    %s27 = ssub.s32 %s22, 1
    %s28 = ssub.s32 %s22, 2
    %s29 = sadd.s32 %s22, 1
    %s30 = ssub.s32 %s22, %s29
    %p31 = scmp.eq.s32.totalorder %s30, 0
    %s33 = sadd.s32 %s32, 1
    %s34 = scalar_select %p31, %s32, %s33
    %p37 = pneg %p31
    %p38 = scmp.eq.s32.totalorder %s22, 1
    %p39 = por %p37, %p38
    %p40 = scmp.ne.s32.totalorder %s32, %s35
    %p41 = scmp.eq.s32.totalorder %s22, 0
    %p42 = por %p40, %p41
    %p43 = scmp.ne.s32.totalorder %s32, %s35
    %p44 = scmp.eq.s32.totalorder %s27, 1
    %p45 = por %p43, %p44
    %p46 = scmp.ne.s32.totalorder %s35, %s36
    %p47 = scmp.eq.s32.totalorder %s27, 0
    %p48 = por %p46, %p47
    %p49 = scmp.ne.s32.totalorder %s35, %s36
    %p50 = scmp.eq.s32.totalorder %s28, 1
    %p51 = por %p49, %p50
    %p53 = scmp.ne.s32.totalorder %s36, %s52
    %p54 = scmp.eq.s32.totalorder %s28, 0
    %p55 = por %p53, %p54
    %s57 = sadd.s32 %s56, 1
    %p60 = scmp.eq.s32.totalorder %s22, 1
    %p61 = scmp.ne.s32.totalorder %s56, %s58
    %p62 = scmp.eq.s32.totalorder %s22, 0
    %p63 = por %p61, %p62
    %p64 = scmp.ne.s32.totalorder %s56, %s58
    %p65 = scmp.eq.s32.totalorder %s27, 1
    %p66 = por %p64, %p65
    %p67 = scmp.ne.s32.totalorder %s58, %s59
    %p68 = scmp.eq.s32.totalorder %s27, 0
    %p69 = por %p67, %p68
    %p70 = scmp.ne.s32.totalorder %s58, %s59
    %p71 = scmp.eq.s32.totalorder %s28, 1
    %p72 = por %p70, %p71
    %p74 = scmp.ne.s32.totalorder %s59, %s73
    %p75 = scmp.eq.s32.totalorder %s28, 0
    %p76 = por %p74, %p75
    %s78 = sadd.s32 %s77, 1
    %p81 = scmp.eq.s32.totalorder %s22, 1
    %p82 = scmp.ne.s32.totalorder %s77, %s79
    %p83 = scmp.eq.s32.totalorder %s22, 0
    %p84 = por %p82, %p83
    %p85 = scmp.ne.s32.totalorder %s77, %s79
    %p86 = scmp.eq.s32.totalorder %s27, 1
    %p87 = por %p85, %p86
    %p88 = scmp.ne.s32.totalorder %s79, %s80
    %p89 = scmp.eq.s32.totalorder %s27, 0
    %p90 = por %p88, %p89
    %p91 = scmp.ne.s32.totalorder %s79, %s80
    %p92 = scmp.eq.s32.totalorder %s28, 1
    %p93 = por %p91, %p92
    %p95 = scmp.ne.s32.totalorder %s80, %s94
    %p96 = scmp.eq.s32.totalorder %s28, 0
    %p97 = por %p95, %p96
    %s99 = sadd.s32 %s98, 1
    %p102 = scmp.eq.s32.totalorder %s22, 1
    %p103 = scmp.ne.s32.totalorder %s98, %s100
    %p104 = scmp.eq.s32.totalorder %s22, 0
    %p105 = por %p103, %p104
    %p106 = scmp.ne.s32.totalorder %s98, %s100
    %p107 = scmp.eq.s32.totalorder %s27, 1
    %p108 = por %p106, %p107
    %p109 = scmp.ne.s32.totalorder %s100, %s101
    %p110 = scmp.eq.s32.totalorder %s27, 0
    %p111 = por %p109, %p110
    %p112 = scmp.ne.s32.totalorder %s100, %s101
    %p113 = scmp.eq.s32.totalorder %s28, 1
    %p114 = por %p112, %p113
    %p116 = scmp.ne.s32.totalorder %s101, %s115
    %p117 = scmp.eq.s32.totalorder %s28, 0
    %p118 = por %p116, %p117
    %s120 = sadd.s32 %s119, 1
    %p123 = scmp.eq.s32.totalorder %s22, 1
    %p124 = scmp.ne.s32.totalorder %s119, %s121
    %p125 = scmp.eq.s32.totalorder %s22, 0
    %p126 = por %p124, %p125
    %p127 = scmp.ne.s32.totalorder %s119, %s121
    %p128 = scmp.eq.s32.totalorder %s27, 1
    %p129 = por %p127, %p128
    %p130 = scmp.ne.s32.totalorder %s121, %s122
    %p131 = scmp.eq.s32.totalorder %s27, 0
    %p132 = por %p130, %p131
    %p133 = scmp.ne.s32.totalorder %s121, %s122
    %p134 = scmp.eq.s32.totalorder %s28, 1
    %p135 = por %p133, %p134
    %p137 = scmp.ne.s32.totalorder %s122, %s136
    %p138 = scmp.eq.s32.totalorder %s28, 0
    %p139 = por %p137, %p138
    %s141 = sadd.s32 %s140, 1
    %p144 = scmp.eq.s32.totalorder %s22, 1
    %p145 = scmp.ne.s32.totalorder %s140, %s142
    %p146 = scmp.eq.s32.totalorder %s22, 0
    %p147 = por %p145, %p146
    %p148 = scmp.ne.s32.totalorder %s140, %s142
    %p149 = scmp.eq.s32.totalorder %s27, 1
    %p150 = por %p148, %p149
    %p151 = scmp.ne.s32.totalorder %s142, %s143
    %p152 = scmp.eq.s32.totalorder %s27, 0
    %p153 = por %p151, %p152
    %p154 = scmp.ne.s32.totalorder %s142, %s143
    %p155 = scmp.eq.s32.totalorder %s28, 1
    %p156 = por %p154, %p155
    %p158 = scmp.ne.s32.totalorder %s143, %s157
    %p159 = scmp.eq.s32.totalorder %s28, 0
    %p160 = por %p158, %p159
    %s162 = sadd.s32 %s161, 1
    %p165 = scmp.eq.s32.totalorder %s22, 1
    %p166 = scmp.ne.s32.totalorder %s161, %s163
    %p167 = scmp.eq.s32.totalorder %s22, 0
    %p168 = por %p166, %p167
    %p169 = scmp.ne.s32.totalorder %s161, %s163
    %p170 = scmp.eq.s32.totalorder %s27, 1
    %p171 = por %p169, %p170
    %p172 = scmp.ne.s32.totalorder %s163, %s164
    %p173 = scmp.eq.s32.totalorder %s27, 0
    %p174 = por %p172, %p173
    %p175 = scmp.ne.s32.totalorder %s163, %s164
    %p176 = scmp.eq.s32.totalorder %s28, 1
    %p177 = por %p175, %p176
    %p179 = scmp.ne.s32.totalorder %s164, %s178
    %p180 = scmp.eq.s32.totalorder %s28, 0
    %p181 = por %p179, %p180
    %s183 = sadd.s32 %s182, 1
    %p186 = scmp.eq.s32.totalorder %s22, 1
    %p187 = scmp.ne.s32.totalorder %s182, %s184
    %p188 = scmp.eq.s32.totalorder %s22, 0
    %p189 = por %p187, %p188
    %p190 = scmp.ne.s32.totalorder %s182, %s184
    %p191 = scmp.eq.s32.totalorder %s27, 1
    %p192 = por %p190, %p191
    %p193 = scmp.ne.s32.totalorder %s184, %s185
    %p194 = scmp.eq.s32.totalorder %s27, 0
    %p195 = por %p193, %p194
    %p196 = scmp.ne.s32.totalorder %s184, %s185
    %p197 = scmp.eq.s32.totalorder %s28, 1
    %p198 = por %p196, %p197
    %p200 = scmp.ne.s32.totalorder %s185, %s199
    %p201 = scmp.eq.s32.totalorder %s28, 0
    %p202 = por %p200, %p201
    %s204 = sadd.s32 %s203, 1
    %p207 = scmp.eq.s32.totalorder %s22, 1
    %p208 = scmp.ne.s32.totalorder %s203, %s205
    %p209 = scmp.eq.s32.totalorder %s22, 0
    %p210 = por %p208, %p209
    %p211 = scmp.ne.s32.totalorder %s203, %s205
    %p212 = scmp.eq.s32.totalorder %s27, 1
    %p213 = por %p211, %p212
    %p214 = scmp.ne.s32.totalorder %s205, %s206
    %p215 = scmp.eq.s32.totalorder %s27, 0
    %p216 = por %p214, %p215
    %p217 = scmp.ne.s32.totalorder %s205, %s206
    %p218 = scmp.eq.s32.totalorder %s28, 1
    %p219 = por %p217, %p218
    %p221 = scmp.ne.s32.totalorder %s206, %s220
    %p222 = scmp.eq.s32.totalorder %s28, 0
    %p223 = por %p221, %p222
    %s225 = sadd.s32 %s224, 1
    %p228 = scmp.eq.s32.totalorder %s22, 1
    %p229 = scmp.ne.s32.totalorder %s224, %s226
    %p230 = scmp.eq.s32.totalorder %s22, 0
    %p231 = por %p229, %p230
    %p232 = scmp.ne.s32.totalorder %s224, %s226
    %p233 = scmp.eq.s32.totalorder %s27, 1
    %p234 = por %p232, %p233
    %p235 = scmp.ne.s32.totalorder %s226, %s227
    %p236 = scmp.eq.s32.totalorder %s27, 0
    %p237 = por %p235, %p236
    %p238 = scmp.ne.s32.totalorder %s226, %s227
    %p239 = scmp.eq.s32.totalorder %s28, 1
    %p240 = por %p238, %p239
    %p242 = scmp.ne.s32.totalorder %s227, %s241
    %p243 = scmp.eq.s32.totalorder %s28, 0
    %p244 = por %p242, %p243
    %s246 = sadd.s32 %s245, 1
    %p249 = scmp.eq.s32.totalorder %s22, 1
    %p250 = scmp.ne.s32.totalorder %s245, %s247
    %p251 = scmp.eq.s32.totalorder %s22, 0
    %p252 = por %p250, %p251
    %p253 = scmp.ne.s32.totalorder %s245, %s247
    %p254 = scmp.eq.s32.totalorder %s27, 1
    %p255 = por %p253, %p254
    %p256 = scmp.ne.s32.totalorder %s247, %s248
    %p257 = scmp.eq.s32.totalorder %s27, 0
    %p258 = por %p256, %p257
    %p259 = scmp.ne.s32.totalorder %s247, %s248
    %p260 = scmp.eq.s32.totalorder %s28, 1
    %p261 = por %p259, %p260
    %p263 = scmp.ne.s32.totalorder %s248, %s262
    %p264 = scmp.eq.s32.totalorder %s28, 0
    %p265 = por %p263, %p264
    %s267 = sadd.s32 %s266, 1
    %p270 = scmp.eq.s32.totalorder %s22, 1
    %p271 = scmp.ne.s32.totalorder %s266, %s268
    %p272 = scmp.eq.s32.totalorder %s22, 0
    %p273 = por %p271, %p272
    %p274 = scmp.ne.s32.totalorder %s266, %s268
    %p275 = scmp.eq.s32.totalorder %s27, 1
    %p276 = por %p274, %p275
    %p277 = scmp.ne.s32.totalorder %s268, %s269
    %p278 = scmp.eq.s32.totalorder %s27, 0
    %p279 = por %p277, %p278
    %p280 = scmp.ne.s32.totalorder %s268, %s269
    %p281 = scmp.eq.s32.totalorder %s28, 1
    %p282 = por %p280, %p281
    %p284 = scmp.ne.s32.totalorder %s269, %s283
    %p285 = scmp.eq.s32.totalorder %s28, 0
    %p286 = por %p284, %p285
    %s288 = sadd.s32 %s287, 1
    %p291 = scmp.eq.s32.totalorder %s22, 1
    %p292 = scmp.ne.s32.totalorder %s287, %s289
    %p293 = scmp.eq.s32.totalorder %s22, 0
    %p294 = por %p292, %p293
    %p295 = scmp.ne.s32.totalorder %s287, %s289
    %p296 = scmp.eq.s32.totalorder %s27, 1
    %p297 = por %p295, %p296
    %p298 = scmp.ne.s32.totalorder %s289, %s290
    %p299 = scmp.eq.s32.totalorder %s27, 0
    %p300 = por %p298, %p299
    %p301 = scmp.ne.s32.totalorder %s289, %s290
    %p302 = scmp.eq.s32.totalorder %s28, 1
    %p303 = por %p301, %p302
    %p305 = scmp.ne.s32.totalorder %s290, %s304
    %p306 = scmp.eq.s32.totalorder %s28, 0
    %p307 = por %p305, %p306
    %s309 = sadd.s32 %s308, 1
    %p312 = scmp.eq.s32.totalorder %s22, 1
    %p313 = scmp.ne.s32.totalorder %s308, %s310
    %p314 = scmp.eq.s32.totalorder %s22, 0
    %p315 = por %p313, %p314
    %p316 = scmp.ne.s32.totalorder %s308, %s310
    %p317 = scmp.eq.s32.totalorder %s27, 1
    %p318 = por %p316, %p317
    %p319 = scmp.ne.s32.totalorder %s310, %s311
    %p320 = scmp.eq.s32.totalorder %s27, 0
    %p321 = por %p319, %p320
    %p322 = scmp.ne.s32.totalorder %s310, %s311
    %p323 = scmp.eq.s32.totalorder %s28, 1
    %p324 = por %p322, %p323
    %p326 = scmp.ne.s32.totalorder %s311, %s325
    %p327 = scmp.eq.s32.totalorder %s28, 0
    %p328 = por %p326, %p327
    %s330 = sadd.s32 %s329, 1
    %p333 = scmp.eq.s32.totalorder %s22, 1
    %p334 = scmp.ne.s32.totalorder %s329, %s331
    %p335 = scmp.eq.s32.totalorder %s22, 0
    %p336 = por %p334, %p335
    %p337 = scmp.ne.s32.totalorder %s329, %s331
    %p338 = scmp.eq.s32.totalorder %s27, 1
    %p339 = por %p337, %p338
    %p340 = scmp.ne.s32.totalorder %s331, %s332
    %p341 = scmp.eq.s32.totalorder %s27, 0
    %p342 = por %p340, %p341
    %p343 = scmp.ne.s32.totalorder %s331, %s332
    %p344 = scmp.eq.s32.totalorder %s28, 1
    %p345 = por %p343, %p344
    %p347 = scmp.ne.s32.totalorder %s332, %s346
    %p348 = scmp.eq.s32.totalorder %s28, 0
    %p349 = por %p347, %p348
    %s351 = sadd.s32 %s350, 1
    %p354 = scmp.eq.s32.totalorder %s22, 1
    %p355 = scmp.ne.s32.totalorder %s350, %s352
    %p356 = scmp.eq.s32.totalorder %s22, 0
    %p357 = por %p355, %p356
    %p358 = scmp.ne.s32.totalorder %s350, %s352
    %p359 = scmp.eq.s32.totalorder %s27, 1
    %p360 = por %p358, %p359
    %p361 = scmp.ne.s32.totalorder %s352, %s353
    %p362 = scmp.eq.s32.totalorder %s27, 0
    %p363 = por %p361, %p362
    %p364 = scmp.ne.s32.totalorder %s352, %s353
    %p365 = scmp.eq.s32.totalorder %s28, 1
    %p366 = por %p364, %p365
    %p368 = scmp.ne.s32.totalorder %s353, %s367
    %p369 = scmp.eq.s32.totalorder %s28, 0
    %p370 = por %p368, %p369
    %s371 = ssub.s32 %s22, %s29
    %p372 = scmp.eq.s32.totalorder %s371, 0
    %s374 = sadd.s32 %s373, 1
    %s375 = scalar_select %p372, %s373, %s374
    %p378 = pneg %p372
    %p379 = scmp.eq.s32.totalorder %s22, 1
    %p380 = por %p378, %p379
    %p381 = scmp.ne.s32.totalorder %s373, %s376
    %p382 = scmp.eq.s32.totalorder %s22, 0
    %p383 = por %p381, %p382
    %p384 = scmp.ne.s32.totalorder %s373, %s376
    %p385 = scmp.eq.s32.totalorder %s27, 1
    %p386 = por %p384, %p385
    %p387 = scmp.ne.s32.totalorder %s376, %s377
    %p388 = scmp.eq.s32.totalorder %s27, 0
    %p389 = por %p387, %p388
    %p390 = scmp.ne.s32.totalorder %s376, %s377
    %p391 = scmp.eq.s32.totalorder %s28, 1
    %p392 = por %p390, %p391
    %p394 = scmp.ne.s32.totalorder %s377, %s393
    %p395 = scmp.eq.s32.totalorder %s28, 0
    %p396 = por %p394, %p395
    %p397 = scmp.le.s32.totalorder 1, %s22
    %p398 = scmp.lt.s32.totalorder %s22, 3
    %p399 = pnand %p397, %p398
    %p400 = pneg %p399
    // Predicated region
    $region9: #{tpu_custom_call.1} parent=5 // pred_check
      _
    $region10: #{tpu_custom_call.1} parent=5 // pred_check_branch
      %402 = sbr.rel (%p399) target = $region12
    $region11: #{tpu_custom_call.1} parent=5 // pred_region
      %s403 = ssub.s32 %s22, 1
      // Predicated region
      $region13: #{tpu_custom_call.1} parent=11 // pred_check
        %p404 = pneg %p69
      $region14: #{tpu_custom_call.1} parent=11 // pred_check_branch
        %406 = sbr.rel (%p404) target = $region16
      $region15: #{tpu_custom_call.1} parent=11 // pred_region
        _
      $region16: #{tpu_custom_call.1} parent=11 // pred_fallthru
        _
      // Predicated region
      $region17: #{tpu_custom_call.1} parent=11 // pred_check
        %p407 = pneg %p90
      $region18: #{tpu_custom_call.1} parent=11 // pred_check_branch
        %409 = sbr.rel (%p407) target = $region20
      $region19: #{tpu_custom_call.1} parent=11 // pred_region
        _
      $region20: #{tpu_custom_call.1} parent=11 // pred_fallthru
        _
      // Predicated region
      $region21: #{tpu_custom_call.1} parent=11 // pred_check
        %p410 = pneg %p111
      $region22: #{tpu_custom_call.1} parent=11 // pred_check_branch
        %412 = sbr.rel (%p410) target = $region24
      $region23: #{tpu_custom_call.1} parent=11 // pred_region
        _
      $region24: #{tpu_custom_call.1} parent=11 // pred_fallthru
        _
      // Predicated region
      $region25: #{tpu_custom_call.1} parent=11 // pred_check
        %p413 = pneg %p132
      $region26: #{tpu_custom_call.1} parent=11 // pred_check_branch
        %415 = sbr.rel (%p413) target = $region28
      $region27: #{tpu_custom_call.1} parent=11 // pred_region
        _
      $region28: #{tpu_custom_call.1} parent=11 // pred_fallthru
        _
      // Predicated region
      $region29: #{tpu_custom_call.1} parent=11 // pred_check
        %p416 = pneg %p153
      $region30: #{tpu_custom_call.1} parent=11 // pred_check_branch
        %418 = sbr.rel (%p416) target = $region32
      $region31: #{tpu_custom_call.1} parent=11 // pred_region
        _
      $region32: #{tpu_custom_call.1} parent=11 // pred_fallthru
        _
      // Predicated region
      $region33: #{tpu_custom_call.1} parent=11 // pred_check
        %p419 = pneg %p174
      $region34: #{tpu_custom_call.1} parent=11 // pred_check_branch
        %421 = sbr.rel (%p419) target = $region36
      $region35: #{tpu_custom_call.1} parent=11 // pred_region
        _
      $region36: #{tpu_custom_call.1} parent=11 // pred_fallthru
        _
      // Predicated region
      $region37: #{tpu_custom_call.1} parent=11 // pred_check
        %p422 = pneg %p195
      $region38: #{tpu_custom_call.1} parent=11 // pred_check_branch
        %424 = sbr.rel (%p422) target = $region40
      $region39: #{tpu_custom_call.1} parent=11 // pred_region
        _
      $region40: #{tpu_custom_call.1} parent=11 // pred_fallthru
        _
      // Predicated region
      $region41: #{tpu_custom_call.1} parent=11 // pred_check
        %p425 = pneg %p216
      $region42: #{tpu_custom_call.1} parent=11 // pred_check_branch
        %427 = sbr.rel (%p425) target = $region44
      $region43: #{tpu_custom_call.1} parent=11 // pred_region
        _
      $region44: #{tpu_custom_call.1} parent=11 // pred_fallthru
        _
      // Predicated region
      $region45: #{tpu_custom_call.1} parent=11 // pred_check
        %p428 = pneg %p237
      $region46: #{tpu_custom_call.1} parent=11 // pred_check_branch
        %430 = sbr.rel (%p428) target = $region48
      $region47: #{tpu_custom_call.1} parent=11 // pred_region
        _
      $region48: #{tpu_custom_call.1} parent=11 // pred_fallthru
        _
      // Predicated region
      $region49: #{tpu_custom_call.1} parent=11 // pred_check
        %p431 = pneg %p258
      $region50: #{tpu_custom_call.1} parent=11 // pred_check_branch
        %433 = sbr.rel (%p431) target = $region52
      $region51: #{tpu_custom_call.1} parent=11 // pred_region
        _
      $region52: #{tpu_custom_call.1} parent=11 // pred_fallthru
        _
      // Predicated region
      $region53: #{tpu_custom_call.1} parent=11 // pred_check
        %p434 = pneg %p279
      $region54: #{tpu_custom_call.1} parent=11 // pred_check_branch
        %436 = sbr.rel (%p434) target = $region56
      $region55: #{tpu_custom_call.1} parent=11 // pred_region
        _
      $region56: #{tpu_custom_call.1} parent=11 // pred_fallthru
        _
      // Predicated region
      $region57: #{tpu_custom_call.1} parent=11 // pred_check
        %p437 = pneg %p300
      $region58: #{tpu_custom_call.1} parent=11 // pred_check_branch
        %439 = sbr.rel (%p437) target = $region60
      $region59: #{tpu_custom_call.1} parent=11 // pred_region
        _
      $region60: #{tpu_custom_call.1} parent=11 // pred_fallthru
        _
      // Predicated region
      $region61: #{tpu_custom_call.1} parent=11 // pred_check
        %p440 = pneg %p321
      $region62: #{tpu_custom_call.1} parent=11 // pred_check_branch
        %442 = sbr.rel (%p440) target = $region64
      $region63: #{tpu_custom_call.1} parent=11 // pred_region
        _
      $region64: #{tpu_custom_call.1} parent=11 // pred_fallthru
        _
      // Predicated region
      $region65: #{tpu_custom_call.1} parent=11 // pred_check
        %p443 = pneg %p342
      $region66: #{tpu_custom_call.1} parent=11 // pred_check_branch
        %445 = sbr.rel (%p443) target = $region68
      $region67: #{tpu_custom_call.1} parent=11 // pred_region
        _
      $region68: #{tpu_custom_call.1} parent=11 // pred_fallthru
        _
      // Predicated region
      $region69: #{tpu_custom_call.1} parent=11 // pred_check
        %p446 = pneg %p363
      $region70: #{tpu_custom_call.1} parent=11 // pred_check_branch
        %448 = sbr.rel (%p446) target = $region72
      $region71: #{tpu_custom_call.1} parent=11 // pred_region
        _
      $region72: #{tpu_custom_call.1} parent=11 // pred_fallthru
        _
    $region12: #{tpu_custom_call.1} parent=5 // pred_fallthru
      _
    %p449 = scmp.lt.s32.totalorder %s22, 2
    // Predicated region
    $region73: #{tpu_custom_call.1} parent=5 // pred_check
      %p450 = pneg %p449
    $region74: #{tpu_custom_call.1} parent=5 // pred_check_branch
      %452 = sbr.rel (%p450) target = $region76
    $region75: #{tpu_custom_call.1} parent=5 // pred_region
      // Predicated region
      $region77: #{tpu_custom_call.1} parent=75 // pred_check
        %p453 = pneg %p42
      $region78: #{tpu_custom_call.1} parent=75 // pred_check_branch
        %455 = sbr.rel (%p453) target = $region80
      $region79: #{tpu_custom_call.1} parent=75 // pred_region
        %p456 = scmp.lt.s32.totalorder %s22, 1
        %s457 = scalar_select %p456, %s22, 1
        %s458 = smul.addr %s457, 32
        %s459 = smul.addr %s458, 4
        %s460 = scalar_lea.vmem %s0, %s459
      $region80: #{tpu_custom_call.1} parent=75 // pred_fallthru
        _
    $region76: #{tpu_custom_call.1} parent=5 // pred_fallthru
      _
    %p461 = scmp.le.s32.totalorder 1, %s22
    %p462 = scmp.lt.s32.totalorder %s22, 3
    %p463 = pnand %p461, %p462
    %p464 = pneg %p463
    // Predicated region
    $region81: #{tpu_custom_call.1} parent=5 // pred_check
      _
    $region82: #{tpu_custom_call.1} parent=5 // pred_check_branch
      %466 = sbr.rel (%p463) target = $region84
    $region83: #{tpu_custom_call.1} parent=5 // pred_region
      %s467 = ssub.s32 %s22, 1
      %p468 = scmp.lt.s32.totalorder %s27, 1
      %s469 = scalar_select %p468, %s27, 1
      %s470 = smul.addr %s469, 32
      %s471 = smul.addr %s470, 4
      %s472 = scalar_lea.vmem %s0, %s471
      %p473 = pneg %p48
      %p474 = pneg %p45
      %p475 = pneg %p69
      %p476 = pneg %p66
      %p477 = pneg %p90
      %p478 = pneg %p87
      %p479 = pneg %p111
      %p480 = pneg %p108
      %p481 = pneg %p132
      %p482 = pneg %p129
      %p483 = pneg %p153
      %p484 = pneg %p150
      %p485 = pneg %p174
      %p486 = pneg %p171
      %p487 = pneg %p195
      %p488 = pneg %p192
      %p489 = pneg %p216
      %p490 = pneg %p213
      %p491 = pneg %p237
      %p492 = pneg %p234
      %p493 = pneg %p258
      %p494 = pneg %p255
      %p495 = pneg %p279
      %p496 = pneg %p276
      %p497 = pneg %p300
      %p498 = pneg %p297
      %p499 = pneg %p321
      %p500 = pneg %p318
      %p501 = pneg %p342
      %p502 = pneg %p339
      %p503 = pneg %p363
      %p504 = pneg %p360
      %p505 = pneg %p389
      %p506 = pneg %p386
      %p507 = scmp.lt.s32.totalorder %s27, 1
      %s508 = scalar_select %p507, %s27, 1
      %s509 = smul.addr %s508, 32
      %s510 = smul.addr %s509, 8
      %s511 = scalar_lea.vmem %s16, %s510
      %p512 = scmp.lt.s32.totalorder %s27, 1
      %s513 = scalar_select %p512, %s27, 1
      %s514 = smul.addr %s513, 32
      %s515 = smul.addr %s514, 4
      %s516 = scalar_lea.vmem %s0, %s515
      %p517 = scmp.lt.s32.totalorder %s27, 1
      %s518 = scalar_select %p517, %s27, 1
      %s519 = smul.addr %s518, 32
      %s520 = smul.addr %s519, 8
      %s521 = scalar_lea.vmem %s16, %s520
      %v523 = vld [vmem:[%s14] sm:$0xff]
      %v524 = vld [vmem:[%s14 + $0x8] sm:$0xff]
      %v525 = vld [vmem:[%s14 + $0x10] sm:$0xff]
      %v526 = vld [vmem:[%s14 + $0x18] sm:$0xff]
      %v527 = vld [vmem:[%s14 + $0x20] sm:$0xff]
      %v528 = vld [vmem:[%s14 + $0x28] sm:$0xff]
      %v529 = vld [vmem:[%s14 + $0x30] sm:$0xff]
      %v530 = vld [vmem:[%s14 + $0x38] sm:$0xff]
      %v531 = vld [vmem:[%s15] sm:$0xff]
      %v532 = vld [vmem:[%s15 + $0x8] sm:$0xff]
      %v533 = vld [vmem:[%s15 + $0x10] sm:$0xff]
      %v534 = vld [vmem:[%s15 + $0x18] sm:$0xff]
      %v535 = vld [vmem:[%s516] sm:$0xf]
      %v536 = vld [vmem:[%s516 + $0x4] sm:$0xf]
      %v537 = vld [vmem:[%s516 + $0x8] sm:$0xf]
      %v538 = vld [vmem:[%s516 + $0xc] sm:$0xf]
      %v539 = vld [vmem:[%s516 + $0x10] sm:$0xf]
      %v540 = vld [vmem:[%s516 + $0x14] sm:$0xf]
      %v541 = vld [vmem:[%s516 + $0x18] sm:$0xf]
      %v542 = vld [vmem:[%s516 + $0x1c] sm:$0xf]
      %v543 = vld [vmem:[%s516 + $0x20] sm:$0xf]
      %v544 = vld [vmem:[%s516 + $0x24] sm:$0xf]
      %v545 = vld [vmem:[%s516 + $0x28] sm:$0xf]
      %v546 = vld [vmem:[%s516 + $0x2c] sm:$0xf]
      %v547 = vld [vmem:[%s516 + $0x30] sm:$0xf]
      %v548 = vld [vmem:[%s516 + $0x34] sm:$0xf]
      %v549 = vld [vmem:[%s516 + $0x38] sm:$0xf]
      %v550 = vld [vmem:[%s516 + $0x3c] sm:$0xf]
      %v551 = vld [vmem:[%s516 + $0x40] sm:$0xf]
      %v552 = vld [vmem:[%s516 + $0x44] sm:$0xf]
      %v553 = vld [vmem:[%s516 + $0x48] sm:$0xf]
      %v554 = vld [vmem:[%s516 + $0x4c] sm:$0xf]
      %v555 = vld [vmem:[%s516 + $0x50] sm:$0xf]
      %v556 = vld [vmem:[%s516 + $0x54] sm:$0xf]
      %v557 = vld [vmem:[%s516 + $0x58] sm:$0xf]
      %v558 = vld [vmem:[%s516 + $0x5c] sm:$0xf]
      %v559 = vld [vmem:[%s516 + $0x60] sm:$0xf]
      %v560 = vld [vmem:[%s516 + $0x64] sm:$0xf]
      %v561 = vld [vmem:[%s516 + $0x68] sm:$0xf]
      %v562 = vld [vmem:[%s516 + $0x6c] sm:$0xf]
      %v563 = vld [vmem:[%s516 + $0x70] sm:$0xf]
      %v564 = vld [vmem:[%s516 + $0x74] sm:$0xf]
      %v565 = vld [vmem:[%s516 + $0x78] sm:$0xf]
      %v566 = vld [vmem:[%s516 + $0x7c] sm:$0xf]
      %v567 = vld [vmem:[%s1] sm:$0xf]
      %v568 = vld [vmem:[%s1 + $0x4] sm:$0xf]
      %v569 = vld [vmem:[%s1 + $0x8] sm:$0xf]
      %v570 = vld [vmem:[%s1 + $0xc] sm:$0xf]
      %v603 = vunpack.c.l.b16 %v535
      %v604 = vunpack.c.l.b16 %v536
      %v605 = vunpack.c.l.b16 %v537
      %v606 = vunpack.c.l.b16 %v538
      %v607 = vunpack.c.l.b16 %v539
      %v608 = vunpack.c.l.b16 %v540
      %v609 = vunpack.c.l.b16 %v541
      %v610 = vunpack.c.l.b16 %v542
      %v611 = vunpack.c.l.b16 %v543
      %v612 = vunpack.c.l.b16 %v544
      %v613 = vunpack.c.l.b16 %v545
      %v614 = vunpack.c.l.b16 %v546
      %v615 = vunpack.c.l.b16 %v547
      %v616 = vunpack.c.l.b16 %v548
      %v617 = vunpack.c.l.b16 %v549
      %v618 = vunpack.c.l.b16 %v550
      %v619 = vunpack.c.l.b16 %v551
      %v620 = vunpack.c.l.b16 %v552
      %v621 = vunpack.c.l.b16 %v553
      %v622 = vunpack.c.l.b16 %v554
      %v623 = vunpack.c.l.b16 %v555
      %v624 = vunpack.c.l.b16 %v556
      %v625 = vunpack.c.l.b16 %v557
      %v626 = vunpack.c.l.b16 %v558
      %v627 = vunpack.c.l.b16 %v559
      %v628 = vunpack.c.l.b16 %v560
      %v629 = vunpack.c.l.b16 %v561
      %v630 = vunpack.c.l.b16 %v562
      %v631 = vunpack.c.l.b16 %v563
      %v632 = vunpack.c.l.b16 %v564
      %v633 = vunpack.c.l.b16 %v565
      %v634 = vunpack.c.l.b16 %v566
      %v635 = vpack.c.b16 %v604, %v603
      %v636 = vpack.c.b16 %v606, %v605
      %v637 = vpack.c.b16 %v608, %v607
      %v638 = vpack.c.b16 %v610, %v609
      %v639 = vpack.c.b16 %v612, %v611
      %v640 = vpack.c.b16 %v614, %v613
      %v641 = vpack.c.b16 %v616, %v615
      %v642 = vpack.c.b16 %v618, %v617
      %v643 = vpack.c.b16 %v620, %v619
      %v644 = vpack.c.b16 %v622, %v621
      %v645 = vpack.c.b16 %v624, %v623
      %v646 = vpack.c.b16 %v626, %v625
      %v647 = vpack.c.b16 %v628, %v627
      %v648 = vpack.c.b16 %v630, %v629
      %v649 = vpack.c.b16 %v632, %v631
      %v650 = vpack.c.b16 %v634, %v633
      %v655 = vunpack.c.l.b16 %v567
      %v656 = vunpack.c.l.b16 %v568
      %v657 = vunpack.c.l.b16 %v569
      %v658 = vunpack.c.l.b16 %v570
      %v659 = vpack.c.b16 %v656, %v655
      %v660 = vpack.c.b16 %v658, %v657
      %vm663 = vcmask 261120
      %v665 = vsel %vm663, %v635, 0
      %v668 = vsel %vm663, %v636, 0
      %v671 = vsel %vm663, %v637, 0
      %v674 = vsel %vm663, %v638, 0
      %v677 = vsel %vm663, %v639, 0
      %v680 = vsel %vm663, %v640, 0
      %v683 = vsel %vm663, %v641, 0
      %v686 = vsel %vm663, %v642, 0
      %v689 = vsel %vm663, %v643, 0
      %v692 = vsel %vm663, %v644, 0
      %v695 = vsel %vm663, %v645, 0
      %v698 = vsel %vm663, %v646, 0
      %v701 = vsel %vm663, %v647, 0
      %v704 = vsel %vm663, %v648, 0
      %v707 = vsel %vm663, %v649, 0
      %v710 = vsel %vm663, %v650, 0
      %712 = vmatprep.subr.bf16.mxu0 0
      %713 = vmatpush1.bf16.msra.mxu0 %v659
      %714 = vmatprep.subr.bf16.mxu0 0
      %715 = vmatpush1.bf16.msra.mxu0 %v660
      %716 = vmatprep.subr.bf16.mxu0 0
      %717 = vmatpush1.bf16.msra.mxu0 0
      %718 = vmatprep.subr.bf16.mxu0 0
      %719 = vmatpush1.bf16.msra.mxu0 0
      %720 = vmatprep.subr.bf16.mxu0 0
      %721 = vmatpush1.bf16.msra.mxu0 0
      %722 = vmatprep.subr.bf16.mxu0 0
      %723 = vmatpush1.bf16.msra.mxu0 0
      %724 = vmatprep.subr.bf16.mxu0 0
      %725 = vmatpush1.bf16.msra.mxu0 0
      %726 = vmatprep.subr.bf16.mxu0 0
      %727 = vmatpush1.bf16.msra.mxu0 0
      %728 = vmatprep.subr.bf16.mxu0 0
      %729 = vmatpush1.bf16.msra.mxu0 0
      %730 = vmatprep.subr.bf16.mxu0 0
      %731 = vmatpush1.bf16.msra.mxu0 0
      %732 = vmatprep.subr.bf16.mxu0 0
      %733 = vmatpush1.bf16.msra.mxu0 0
      %734 = vmatprep.subr.bf16.mxu0 0
      %735 = vmatpush1.bf16.msra.mxu0 0
      %736 = vmatprep.subr.bf16.mxu0 0
      %737 = vmatpush1.bf16.msra.mxu0 0
      %738 = vmatprep.subr.bf16.mxu0 0
      %739 = vmatpush1.bf16.msra.mxu0 0
      %740 = vmatprep.subr.bf16.mxu0 0
      %741 = vmatpush1.bf16.msra.mxu0 0
      %742 = vmatprep.subr.bf16.mxu0 0
      %743 = vmatpush1.bf16.msra.mxu0 0
      %744 = vmatprep.mubr.bf16.mxu0 0
      %745 = vmatmul.mubr.bf16.gmra.mrb[0].mxu0 %v665
      %v746 = vpop.f32.mrb[0].mxu0
      %v747 = vadd.f32 0.0, %v746
      %v748 = vpop.f32.mrb[0].mxu0
      %v749 = vpop.f32.mrb[0].mxu0
      %v750 = vadd.f32 0.0, %v749
      %v751 = vpop.f32.mrb[0].mxu0
      %752 = vmatprep.mubr.bf16.mxu0 0
      %753 = vmatmul.mubr.bf16.gmra.mrb[0].mxu0 %v668
      %v754 = vpop.f32.mrb[0].mxu0
      %v755 = vadd.f32 0.0, %v754
      %v756 = vpop.f32.mrb[0].mxu0
      %v757 = vpop.f32.mrb[0].mxu0
      %v758 = vadd.f32 0.0, %v757
      %v759 = vpop.f32.mrb[0].mxu0
      %760 = vmatprep.mubr.bf16.mxu0 0
      %761 = vmatmul.mubr.bf16.gmra.mrb[0].mxu0 %v671
      %v762 = vpop.f32.mrb[0].mxu0
      %v763 = vadd.f32 0.0, %v762
      %v764 = vpop.f32.mrb[0].mxu0
      %v765 = vpop.f32.mrb[0].mxu0
      %v766 = vadd.f32 0.0, %v765
      %v767 = vpop.f32.mrb[0].mxu0
      %768 = vmatprep.mubr.bf16.mxu0 0
      %769 = vmatmul.mubr.bf16.gmra.mrb[0].mxu0 %v674
      %v770 = vpop.f32.mrb[0].mxu0
      %v771 = vadd.f32 0.0, %v770
      %v772 = vpop.f32.mrb[0].mxu0
      %v773 = vpop.f32.mrb[0].mxu0
      %v774 = vadd.f32 0.0, %v773
      %v775 = vpop.f32.mrb[0].mxu0
      %776 = vmatprep.mubr.bf16.mxu0 0
      %777 = vmatmul.mubr.bf16.gmra.mrb[0].mxu0 %v677
      %v778 = vpop.f32.mrb[0].mxu0
      %v779 = vadd.f32 0.0, %v778
      %v780 = vpop.f32.mrb[0].mxu0
      %v781 = vpop.f32.mrb[0].mxu0
      %v782 = vadd.f32 0.0, %v781
      %v783 = vpop.f32.mrb[0].mxu0
      %784 = vmatprep.mubr.bf16.mxu0 0
      %785 = vmatmul.mubr.bf16.gmra.mrb[0].mxu0 %v680
      %v786 = vpop.f32.mrb[0].mxu0
      %v787 = vadd.f32 0.0, %v786
      %v788 = vpop.f32.mrb[0].mxu0
      %v789 = vpop.f32.mrb[0].mxu0
      %v790 = vadd.f32 0.0, %v789
      %v791 = vpop.f32.mrb[0].mxu0
      %792 = vmatprep.mubr.bf16.mxu0 0
      %793 = vmatmul.mubr.bf16.gmra.mrb[0].mxu0 %v683
      %v794 = vpop.f32.mrb[0].mxu0
      %v795 = vadd.f32 0.0, %v794
      %v796 = vpop.f32.mrb[0].mxu0
      %v797 = vpop.f32.mrb[0].mxu0
      %v798 = vadd.f32 0.0, %v797
      %v799 = vpop.f32.mrb[0].mxu0
      %800 = vmatprep.mubr.bf16.mxu0 0
      %801 = vmatmul.mubr.bf16.gmra.mrb[0].mxu0 %v686
      %v802 = vpop.f32.mrb[0].mxu0
      %v803 = vadd.f32 0.0, %v802
      %v804 = vpop.f32.mrb[0].mxu0
      %v805 = vpop.f32.mrb[0].mxu0
      %v806 = vadd.f32 0.0, %v805
      %v807 = vpop.f32.mrb[0].mxu0
      %808 = vmatprep.mubr.bf16.mxu0 0
      %809 = vmatmul.mubr.bf16.gmra.mrb[0].mxu0 %v689
      %v810 = vpop.f32.mrb[0].mxu0
      %v811 = vadd.f32 0.0, %v810
      %v812 = vpop.f32.mrb[0].mxu0
      %v813 = vpop.f32.mrb[0].mxu0
      %v814 = vadd.f32 0.0, %v813
      %v815 = vpop.f32.mrb[0].mxu0
      %816 = vmatprep.mubr.bf16.mxu0 0
      %817 = vmatmul.mubr.bf16.gmra.mrb[0].mxu0 %v692
      %v818 = vpop.f32.mrb[0].mxu0
      %v819 = vadd.f32 0.0, %v818
      %v820 = vpop.f32.mrb[0].mxu0
      %v821 = vpop.f32.mrb[0].mxu0
      %v822 = vadd.f32 0.0, %v821
      %v823 = vpop.f32.mrb[0].mxu0
      %824 = vmatprep.mubr.bf16.mxu0 0
      %825 = vmatmul.mubr.bf16.gmra.mrb[0].mxu0 %v695
      %v826 = vpop.f32.mrb[0].mxu0
      %v827 = vadd.f32 0.0, %v826
      %v828 = vpop.f32.mrb[0].mxu0
      %v829 = vpop.f32.mrb[0].mxu0
      %v830 = vadd.f32 0.0, %v829
      %v831 = vpop.f32.mrb[0].mxu0
      %832 = vmatprep.mubr.bf16.mxu0 0
      %833 = vmatmul.mubr.bf16.gmra.mrb[0].mxu0 %v698
      %v834 = vpop.f32.mrb[0].mxu0
      %v835 = vadd.f32 0.0, %v834
      %v836 = vpop.f32.mrb[0].mxu0
      %v837 = vpop.f32.mrb[0].mxu0
      %v838 = vadd.f32 0.0, %v837
      %v839 = vpop.f32.mrb[0].mxu0
      %840 = vmatprep.mubr.bf16.mxu0 0
      %841 = vmatmul.mubr.bf16.gmra.mrb[0].mxu0 %v701
      %v842 = vpop.f32.mrb[0].mxu0
      %v843 = vadd.f32 0.0, %v842
      %v844 = vpop.f32.mrb[0].mxu0
      %v845 = vpop.f32.mrb[0].mxu0
      %v846 = vadd.f32 0.0, %v845
      %v847 = vpop.f32.mrb[0].mxu0
      %848 = vmatprep.mubr.bf16.mxu0 0
      %849 = vmatmul.mubr.bf16.gmra.mrb[0].mxu0 %v704
      %v850 = vpop.f32.mrb[0].mxu0
      %v851 = vadd.f32 0.0, %v850
      %v852 = vpop.f32.mrb[0].mxu0
      %v853 = vpop.f32.mrb[0].mxu0
      %v854 = vadd.f32 0.0, %v853
      %v855 = vpop.f32.mrb[0].mxu0
      %856 = vmatprep.mubr.bf16.mxu0 0
      %857 = vmatmul.mubr.bf16.gmra.mrb[0].mxu0 %v707
      %v858 = vpop.f32.mrb[0].mxu0
      %v859 = vadd.f32 0.0, %v858
      %v860 = vpop.f32.mrb[0].mxu0
      %v861 = vpop.f32.mrb[0].mxu0
      %v862 = vadd.f32 0.0, %v861
      %v863 = vpop.f32.mrb[0].mxu0
      %864 = vmatprep.mubr.bf16.mxu0 0
      %865 = vmatmul.mubr.bf16.gmra.mrb[0].mxu0 %v710
      %v866 = vpop.f32.mrb[0].mxu0
      %v867 = vadd.f32 0.0, %v866
      %v868 = vpop.f32.mrb[0].mxu0
      %v869 = vpop.f32.mrb[0].mxu0
      %v870 = vadd.f32 0.0, %v869
      %v871 = vpop.f32.mrb[0].mxu0
      %872 = vdwg.mxu0
      %v873 = vld [vmem:[%s4] sm:$0x1]
      %v874 = vld [vmem:[%s5] sm:$0x1]
      %vm875 = vcmask 785664
      %v876 = vsel %vm875, %v747, 0.0
      %v877 = vsel %vm875, %v750, 0.0
      %v878 = vadd.f32 %v876, %v877
      %v879 = vsel %vm875, %v755, 0.0
      %v880 = vadd.f32 %v878, %v879
      %v881 = vsel %vm875, %v758, 0.0
      %v882 = vadd.f32 %v880, %v881
      %v883 = vsel %vm875, %v763, 0.0
      %v884 = vadd.f32 %v882, %v883
      %v885 = vsel %vm875, %v766, 0.0
      %v886 = vadd.f32 %v884, %v885
      %v887 = vsel %vm875, %v771, 0.0
      %v888 = vadd.f32 %v886, %v887
      %v889 = vsel %vm875, %v774, 0.0
      %v890 = vadd.f32 %v888, %v889
      %v891 = vsel %vm875, %v779, 0.0
      %v892 = vadd.f32 %v890, %v891
      %v893 = vsel %vm875, %v782, 0.0
      %v894 = vadd.f32 %v892, %v893
      %v895 = vsel %vm875, %v787, 0.0
      %v896 = vadd.f32 %v894, %v895
      %v897 = vsel %vm875, %v790, 0.0
      %v898 = vadd.f32 %v896, %v897
      %v899 = vsel %vm875, %v795, 0.0
      %v900 = vadd.f32 %v898, %v899
      %v901 = vsel %vm875, %v798, 0.0
      %v902 = vadd.f32 %v900, %v901
      %v903 = vsel %vm875, %v803, 0.0
      %v904 = vadd.f32 %v902, %v903
      %v905 = vsel %vm875, %v806, 0.0
      %v906 = vadd.f32 %v904, %v905
      %v907 = vsel %vm875, %v811, 0.0
      %v908 = vadd.f32 %v906, %v907
      %v909 = vsel %vm875, %v814, 0.0
      %v910 = vadd.f32 %v908, %v909
      %v911 = vsel %vm875, %v819, 0.0
      %v912 = vadd.f32 %v910, %v911
      %v913 = vsel %vm875, %v822, 0.0
      %v914 = vadd.f32 %v912, %v913
      %v915 = vsel %vm875, %v827, 0.0
      %v916 = vadd.f32 %v914, %v915
      %v917 = vsel %vm875, %v830, 0.0
      %v918 = vadd.f32 %v916, %v917
      %v919 = vsel %vm875, %v835, 0.0
      %v920 = vadd.f32 %v918, %v919
      %v921 = vsel %vm875, %v838, 0.0
      %v922 = vadd.f32 %v920, %v921
      %v923 = vsel %vm875, %v843, 0.0
      %v924 = vadd.f32 %v922, %v923
      %v925 = vsel %vm875, %v846, 0.0
      %v926 = vadd.f32 %v924, %v925
      %v927 = vsel %vm875, %v851, 0.0
      %v928 = vadd.f32 %v926, %v927
      %v929 = vsel %vm875, %v854, 0.0
      %v930 = vadd.f32 %v928, %v929
      %v931 = vsel %vm875, %v859, 0.0
      %v932 = vadd.f32 %v930, %v931
      %v933 = vsel %vm875, %v862, 0.0
      %v934 = vadd.f32 %v932, %v933
      %v935 = vsel %vm875, %v867, 0.0
      %v936 = vadd.f32 %v934, %v935
      %v937 = vsel %vm875, %v870, 0.0
      %v938 = vadd.f32 %v936, %v937
      %v939 = vrot.slane %v938, 4
      %v940 = vadd.f32 %v938, %v939
      %v941 = vrot.slane %v940, 2
      %v942 = vadd.f32 %v940, %v941
      %v943 = vrot.slane %v942, 1
      %v944 = vadd.f32 %v942, %v943
      %v945 = vmul.f32 %v747, %v747
      %v946 = vmul.f32 %v750, %v750
      %v947 = vmul.f32 %v755, %v755
      %v948 = vmul.f32 %v758, %v758
      %v949 = vmul.f32 %v763, %v763
      %v950 = vmul.f32 %v766, %v766
      %v951 = vmul.f32 %v771, %v771
      %v952 = vmul.f32 %v774, %v774
      %v953 = vmul.f32 %v779, %v779
      %v954 = vmul.f32 %v782, %v782
      %v955 = vmul.f32 %v787, %v787
      %v956 = vmul.f32 %v790, %v790
      %v957 = vmul.f32 %v795, %v795
      %v958 = vmul.f32 %v798, %v798
      %v959 = vmul.f32 %v803, %v803
      %v960 = vmul.f32 %v806, %v806
      %v961 = vmul.f32 %v811, %v811
      %v962 = vmul.f32 %v814, %v814
      %v963 = vmul.f32 %v819, %v819
      %v964 = vmul.f32 %v822, %v822
      %v965 = vmul.f32 %v827, %v827
      %v966 = vmul.f32 %v830, %v830
      %v967 = vmul.f32 %v835, %v835
      %v968 = vmul.f32 %v838, %v838
      %v969 = vmul.f32 %v843, %v843
      %v970 = vmul.f32 %v846, %v846
      %v971 = vmul.f32 %v851, %v851
      %v972 = vmul.f32 %v854, %v854
      %v973 = vmul.f32 %v859, %v859
      %v974 = vmul.f32 %v862, %v862
      %v975 = vmul.f32 %v867, %v867
      %v976 = vmul.f32 %v870, %v870
      %v977 = vsel %vm875, %v945, 0.0
      %v978 = vsel %vm875, %v946, 0.0
      %v979 = vadd.f32 %v977, %v978
      %v980 = vsel %vm875, %v947, 0.0
      %v981 = vadd.f32 %v979, %v980
      %v982 = vsel %vm875, %v948, 0.0
      %v983 = vadd.f32 %v981, %v982
      %v984 = vsel %vm875, %v949, 0.0
      %v985 = vadd.f32 %v983, %v984
      %v986 = vsel %vm875, %v950, 0.0
      %v987 = vadd.f32 %v985, %v986
      %v988 = vsel %vm875, %v951, 0.0
      %v989 = vadd.f32 %v987, %v988
      %v990 = vsel %vm875, %v952, 0.0
      %v991 = vadd.f32 %v989, %v990
      %v992 = vsel %vm875, %v953, 0.0
      %v993 = vadd.f32 %v991, %v992
      %v994 = vsel %vm875, %v954, 0.0
      %v995 = vadd.f32 %v993, %v994
      %v996 = vsel %vm875, %v955, 0.0
      %v997 = vadd.f32 %v995, %v996
      %v998 = vsel %vm875, %v956, 0.0
      %v999 = vadd.f32 %v997, %v998
      %v1000 = vsel %vm875, %v957, 0.0
      %v1001 = vadd.f32 %v999, %v1000
      %v1002 = vsel %vm875, %v958, 0.0
      %v1003 = vadd.f32 %v1001, %v1002
      %v1004 = vsel %vm875, %v959, 0.0
      %v1005 = vadd.f32 %v1003, %v1004
      %v1006 = vsel %vm875, %v960, 0.0
      %v1007 = vadd.f32 %v1005, %v1006
      %v1008 = vsel %vm875, %v961, 0.0
      %v1009 = vadd.f32 %v1007, %v1008
      %v1010 = vsel %vm875, %v962, 0.0
      %v1011 = vadd.f32 %v1009, %v1010
      %v1012 = vsel %vm875, %v963, 0.0
      %v1013 = vadd.f32 %v1011, %v1012
      %v1014 = vsel %vm875, %v964, 0.0
      %v1015 = vadd.f32 %v1013, %v1014
      %v1016 = vsel %vm875, %v965, 0.0
      %v1017 = vadd.f32 %v1015, %v1016
      %v1018 = vsel %vm875, %v966, 0.0
      %v1019 = vadd.f32 %v1017, %v1018
      %v1020 = vsel %vm875, %v967, 0.0
      %v1021 = vadd.f32 %v1019, %v1020
      %v1022 = vsel %vm875, %v968, 0.0
      %v1023 = vadd.f32 %v1021, %v1022
      %v1024 = vsel %vm875, %v969, 0.0
      %v1025 = vadd.f32 %v1023, %v1024
      %v1026 = vsel %vm875, %v970, 0.0
      %v1027 = vadd.f32 %v1025, %v1026
      %v1028 = vsel %vm875, %v971, 0.0
      %v1029 = vadd.f32 %v1027, %v1028
      %v1030 = vsel %vm875, %v972, 0.0
      %v1031 = vadd.f32 %v1029, %v1030
      %v1032 = vsel %vm875, %v973, 0.0
      %v1033 = vadd.f32 %v1031, %v1032
      %v1034 = vsel %vm875, %v974, 0.0
      %v1035 = vadd.f32 %v1033, %v1034
      %v1036 = vsel %vm875, %v975, 0.0
      %v1037 = vadd.f32 %v1035, %v1036
      %v1038 = vsel %vm875, %v976, 0.0
      %v1039 = vadd.f32 %v1037, %v1038
      %v1040 = vrot.slane %v1039, 4
      %v1041 = vadd.f32 %v1039, %v1040
      %v1042 = vrot.slane %v1041, 2
      %v1043 = vadd.f32 %v1041, %v1042
      %v1044 = vrot.slane %v1043, 1
      %v1045 = vadd.f32 %v1043, %v1044
      %v1046 = vrcp.pop 256.0
      %v1047 = vmul.f32 %v944, %v1046
      %v1048 = vmul.f32 %v1045, %v1046
      %v1049 = vmul.f32 %v1047, %v1047
      %v1050 = vsub.f32 %v1048, %v1049
      %v1051 = vadd.f32 %v1050, 1e-05
      %v1052 = vrsqrt.pop %v1051
      %v1054 = vlaneseq
      %v1055 = vshrl.u32 %v1054, 7
      %v1056 = vsub.s32 0, %v1055
      %v1057 = vrot.slane %v873, %v1056
      %1058 = vrot.lane.b32.xlu0 %v1057, 32
      %v1059 = vpop.permute.xlu0 %1058
      %v1061 = vmul.f32 %v1052, %v1059
      %v1062 = vsub.f32 %v747, %v1047
      %v1063 = vsub.f32 %v750, %v1047
      %v1064 = vsub.f32 %v755, %v1047
      %v1065 = vsub.f32 %v758, %v1047
      %v1066 = vsub.f32 %v763, %v1047
      %v1067 = vsub.f32 %v766, %v1047
      %v1068 = vsub.f32 %v771, %v1047
      %v1069 = vsub.f32 %v774, %v1047
      %v1070 = vsub.f32 %v779, %v1047
      %v1071 = vsub.f32 %v782, %v1047
      %v1072 = vsub.f32 %v787, %v1047
      %v1073 = vsub.f32 %v790, %v1047
      %v1074 = vsub.f32 %v795, %v1047
      %v1075 = vsub.f32 %v798, %v1047
      %v1076 = vsub.f32 %v803, %v1047
      %v1077 = vsub.f32 %v806, %v1047
      %v1078 = vsub.f32 %v811, %v1047
      %v1079 = vsub.f32 %v814, %v1047
      %v1080 = vsub.f32 %v819, %v1047
      %v1081 = vsub.f32 %v822, %v1047
      %v1082 = vsub.f32 %v827, %v1047
      %v1083 = vsub.f32 %v830, %v1047
      %v1084 = vsub.f32 %v835, %v1047
      %v1085 = vsub.f32 %v838, %v1047
      %v1086 = vsub.f32 %v843, %v1047
      %v1087 = vsub.f32 %v846, %v1047
      %v1088 = vsub.f32 %v851, %v1047
      %v1089 = vsub.f32 %v854, %v1047
      %v1090 = vsub.f32 %v859, %v1047
      %v1091 = vsub.f32 %v862, %v1047
      %v1092 = vsub.f32 %v867, %v1047
      %v1093 = vsub.f32 %v870, %v1047
      %v1094 = vlaneseq
      %v1095 = vshrl.u32 %v1094, 7
      %v1096 = vsub.s32 0, %v1095
      %v1097 = vrot.slane %v1061, %v1096
      %v1098 = vmul.f32 %v1062, %v1097
      %v1099 = vmul.f32 %v1063, %v1097
      %v1100 = vmul.f32 %v1064, %v1097
      %v1101 = vmul.f32 %v1065, %v1097
      %v1102 = vmul.f32 %v1066, %v1097
      %v1103 = vmul.f32 %v1067, %v1097
      %v1104 = vmul.f32 %v1068, %v1097
      %v1105 = vmul.f32 %v1069, %v1097
      %v1106 = vmul.f32 %v1070, %v1097
      %v1107 = vmul.f32 %v1071, %v1097
      %v1108 = vmul.f32 %v1072, %v1097
      %v1109 = vmul.f32 %v1073, %v1097
      %v1110 = vmul.f32 %v1074, %v1097
      %v1111 = vmul.f32 %v1075, %v1097
      %v1112 = vmul.f32 %v1076, %v1097
      %v1113 = vmul.f32 %v1077, %v1097
      %v1114 = vmul.f32 %v1078, %v1097
      %v1115 = vmul.f32 %v1079, %v1097
      %v1116 = vmul.f32 %v1080, %v1097
      %v1117 = vmul.f32 %v1081, %v1097
      %v1118 = vmul.f32 %v1082, %v1097
      %v1119 = vmul.f32 %v1083, %v1097
      %v1120 = vmul.f32 %v1084, %v1097
      %v1121 = vmul.f32 %v1085, %v1097
      %v1122 = vmul.f32 %v1086, %v1097
      %v1123 = vmul.f32 %v1087, %v1097
      %v1124 = vmul.f32 %v1088, %v1097
      %v1125 = vmul.f32 %v1089, %v1097
      %v1126 = vmul.f32 %v1090, %v1097
      %v1127 = vmul.f32 %v1091, %v1097
      %v1128 = vmul.f32 %v1092, %v1097
      %v1129 = vmul.f32 %v1093, %v1097
      %v1131 = vlaneseq
      %v1132 = vshrl.u32 %v1131, 7
      %v1133 = vsub.s32 0, %v1132
      %v1134 = vrot.slane %v874, %v1133
      %1135 = vrot.lane.b32.xlu0 %v1134, 32
      %v1136 = vpop.permute.xlu0 %1135
      %v1138 = vadd.f32 %v1098, %v1136
      %v1139 = vadd.f32 %v1099, %v1136
      %v1140 = vadd.f32 %v1100, %v1136
      %v1141 = vadd.f32 %v1101, %v1136
      %v1142 = vadd.f32 %v1102, %v1136
      %v1143 = vadd.f32 %v1103, %v1136
      %v1144 = vadd.f32 %v1104, %v1136
      %v1145 = vadd.f32 %v1105, %v1136
      %v1146 = vadd.f32 %v1106, %v1136
      %v1147 = vadd.f32 %v1107, %v1136
      %v1148 = vadd.f32 %v1108, %v1136
      %v1149 = vadd.f32 %v1109, %v1136
      %v1150 = vadd.f32 %v1110, %v1136
      %v1151 = vadd.f32 %v1111, %v1136
      %v1152 = vadd.f32 %v1112, %v1136
      %v1153 = vadd.f32 %v1113, %v1136
      %v1154 = vadd.f32 %v1114, %v1136
      %v1155 = vadd.f32 %v1115, %v1136
      %v1156 = vadd.f32 %v1116, %v1136
      %v1157 = vadd.f32 %v1117, %v1136
      %v1158 = vadd.f32 %v1118, %v1136
      %v1159 = vadd.f32 %v1119, %v1136
      %v1160 = vadd.f32 %v1120, %v1136
      %v1161 = vadd.f32 %v1121, %v1136
      %v1162 = vadd.f32 %v1122, %v1136
      %v1163 = vadd.f32 %v1123, %v1136
      %v1164 = vadd.f32 %v1124, %v1136
      %v1165 = vadd.f32 %v1125, %v1136
      %v1166 = vadd.f32 %v1126, %v1136
      %v1167 = vadd.f32 %v1127, %v1136
      %v1168 = vadd.f32 %v1128, %v1136
      %v1169 = vadd.f32 %v1129, %v1136
      %1202 = vrot.lane.b32.xlu0 %v1138, 96
      %v1203 = vpop.permute.xlu0 %1202
      %1204 = vrot.lane.b32.xlu0 %v1139, 96
      %v1205 = vpop.permute.xlu0 %1204
      %1206 = vrot.lane.b32.xlu0 %v1140, 96
      %v1207 = vpop.permute.xlu0 %1206
      %1208 = vrot.lane.b32.xlu0 %v1141, 96
      %v1209 = vpop.permute.xlu0 %1208
      %1210 = vrot.lane.b32.xlu0 %v1142, 96
      %v1211 = vpop.permute.xlu0 %1210
      %1212 = vrot.lane.b32.xlu0 %v1143, 96
      %v1213 = vpop.permute.xlu0 %1212
      %1214 = vrot.lane.b32.xlu0 %v1144, 96
      %v1215 = vpop.permute.xlu0 %1214
      %1216 = vrot.lane.b32.xlu0 %v1145, 96
      %v1217 = vpop.permute.xlu0 %1216
      %1218 = vrot.lane.b32.xlu0 %v1146, 96
      %v1219 = vpop.permute.xlu0 %1218
      %1220 = vrot.lane.b32.xlu0 %v1147, 96
      %v1221 = vpop.permute.xlu0 %1220
      %1222 = vrot.lane.b32.xlu0 %v1148, 96
      %v1223 = vpop.permute.xlu0 %1222
      %1224 = vrot.lane.b32.xlu0 %v1149, 96
      %v1225 = vpop.permute.xlu0 %1224
      %1226 = vrot.lane.b32.xlu0 %v1150, 96
      %v1227 = vpop.permute.xlu0 %1226
      %1228 = vrot.lane.b32.xlu0 %v1151, 96
      %v1229 = vpop.permute.xlu0 %1228
      %1230 = vrot.lane.b32.xlu0 %v1152, 96
      %v1231 = vpop.permute.xlu0 %1230
      %1232 = vrot.lane.b32.xlu0 %v1153, 96
      %v1233 = vpop.permute.xlu0 %1232
      %1234 = vrot.lane.b32.xlu0 %v1154, 96
      %v1235 = vpop.permute.xlu0 %1234
      %1236 = vrot.lane.b32.xlu0 %v1155, 96
      %v1237 = vpop.permute.xlu0 %1236
      %1238 = vrot.lane.b32.xlu0 %v1156, 96
      %v1239 = vpop.permute.xlu0 %1238
      %1240 = vrot.lane.b32.xlu0 %v1157, 96
      %v1241 = vpop.permute.xlu0 %1240
      %1242 = vrot.lane.b32.xlu0 %v1158, 96
      %v1243 = vpop.permute.xlu0 %1242
      %1244 = vrot.lane.b32.xlu0 %v1159, 96
      %v1245 = vpop.permute.xlu0 %1244
      %1246 = vrot.lane.b32.xlu0 %v1160, 96
      %v1247 = vpop.permute.xlu0 %1246
      %1248 = vrot.lane.b32.xlu0 %v1161, 96
      %v1249 = vpop.permute.xlu0 %1248
      %1250 = vrot.lane.b32.xlu0 %v1162, 96
      %v1251 = vpop.permute.xlu0 %1250
      %1252 = vrot.lane.b32.xlu0 %v1163, 96
      %v1253 = vpop.permute.xlu0 %1252
      %1254 = vrot.lane.b32.xlu0 %v1164, 96
      %v1255 = vpop.permute.xlu0 %1254
      %1256 = vrot.lane.b32.xlu0 %v1165, 96
      %v1257 = vpop.permute.xlu0 %1256
      %1258 = vrot.lane.b32.xlu0 %v1166, 96
      %v1259 = vpop.permute.xlu0 %1258
      %1260 = vrot.lane.b32.xlu0 %v1167, 96
      %v1261 = vpop.permute.xlu0 %1260
      %1262 = vrot.lane.b32.xlu0 %v1168, 96
      %v1263 = vpop.permute.xlu0 %1262
      %1264 = vrot.lane.b32.xlu0 %v1169, 96
      %v1265 = vpop.permute.xlu0 %1264
      %vm1298 = vcmask 523264
      %1299 = vst.msk [vmem:[#allocation3] sm:$0xff] %vm1298, %v1203
      %1300 = vst.msk [vmem:[#allocation3 + $0x8] sm:$0xff] %vm1298, %v1205
      %1301 = vst.msk [vmem:[#allocation3 + $0x10] sm:$0xff] %vm1298, %v1207
      %1302 = vst.msk [vmem:[#allocation3 + $0x18] sm:$0xff] %vm1298, %v1209
      %1303 = vst.msk [vmem:[#allocation3 + $0x20] sm:$0xff] %vm1298, %v1211
      %1304 = vst.msk [vmem:[#allocation3 + $0x28] sm:$0xff] %vm1298, %v1213
      %1305 = vst.msk [vmem:[#allocation3 + $0x30] sm:$0xff] %vm1298, %v1215
      %1306 = vst.msk [vmem:[#allocation3 + $0x38] sm:$0xff] %vm1298, %v1217
      %1307 = vst.msk [vmem:[#allocation3 + $0x40] sm:$0xff] %vm1298, %v1219
      %1308 = vst.msk [vmem:[#allocation3 + $0x48] sm:$0xff] %vm1298, %v1221
      %1309 = vst.msk [vmem:[#allocation3 + $0x50] sm:$0xff] %vm1298, %v1223
      %1310 = vst.msk [vmem:[#allocation3 + $0x58] sm:$0xff] %vm1298, %v1225
      %1311 = vst.msk [vmem:[#allocation3 + $0x60] sm:$0xff] %vm1298, %v1227
      %1312 = vst.msk [vmem:[#allocation3 + $0x68] sm:$0xff] %vm1298, %v1229
      %1313 = vst.msk [vmem:[#allocation3 + $0x70] sm:$0xff] %vm1298, %v1231
      %1314 = vst.msk [vmem:[#allocation3 + $0x78] sm:$0xff] %vm1298, %v1233
      %1315 = vst.msk [vmem:[#allocation3 + $0x80] sm:$0xff] %vm1298, %v1235
      %1316 = vst.msk [vmem:[#allocation3 + $0x88] sm:$0xff] %vm1298, %v1237
      %1317 = vst.msk [vmem:[#allocation3 + $0x90] sm:$0xff] %vm1298, %v1239
      %1318 = vst.msk [vmem:[#allocation3 + $0x98] sm:$0xff] %vm1298, %v1241
      %1319 = vst.msk [vmem:[#allocation3 + $0xa0] sm:$0xff] %vm1298, %v1243
      %1320 = vst.msk [vmem:[#allocation3 + $0xa8] sm:$0xff] %vm1298, %v1245
      %1321 = vst.msk [vmem:[#allocation3 + $0xb0] sm:$0xff] %vm1298, %v1247
      %1322 = vst.msk [vmem:[#allocation3 + $0xb8] sm:$0xff] %vm1298, %v1249
      %1323 = vst.msk [vmem:[#allocation3 + $0xc0] sm:$0xff] %vm1298, %v1251
      %1324 = vst.msk [vmem:[#allocation3 + $0xc8] sm:$0xff] %vm1298, %v1253
      %1325 = vst.msk [vmem:[#allocation3 + $0xd0] sm:$0xff] %vm1298, %v1255
      %1326 = vst.msk [vmem:[#allocation3 + $0xd8] sm:$0xff] %vm1298, %v1257
      %1327 = vst.msk [vmem:[#allocation3 + $0xe0] sm:$0xff] %vm1298, %v1259
      %1328 = vst.msk [vmem:[#allocation3 + $0xe8] sm:$0xff] %vm1298, %v1261
      %1329 = vst.msk [vmem:[#allocation3 + $0xf0] sm:$0xff] %vm1298, %v1263
      %1330 = vst.msk [vmem:[#allocation3 + $0xf8] sm:$0xff] %vm1298, %v1265
      %v1331 = vld [vmem:[%s2] sm:$0x1]
      %v1332 = vld [vmem:[%s3] sm:$0x1]
      %v1333 = vsel %vm663, %v747, 0.0
      %v1334 = vsel %vm663, %v750, 0.0
      %v1335 = vadd.f32 %v1333, %v1334
      %v1336 = vsel %vm663, %v755, 0.0
      %v1337 = vadd.f32 %v1335, %v1336
      %v1338 = vsel %vm663, %v758, 0.0
      %v1339 = vadd.f32 %v1337, %v1338
      %v1340 = vsel %vm663, %v763, 0.0
      %v1341 = vadd.f32 %v1339, %v1340
      %v1342 = vsel %vm663, %v766, 0.0
      %v1343 = vadd.f32 %v1341, %v1342
      %v1344 = vsel %vm663, %v771, 0.0
      %v1345 = vadd.f32 %v1343, %v1344
      %v1346 = vsel %vm663, %v774, 0.0
      %v1347 = vadd.f32 %v1345, %v1346
      %v1348 = vsel %vm663, %v779, 0.0
      %v1349 = vadd.f32 %v1347, %v1348
      %v1350 = vsel %vm663, %v782, 0.0
      %v1351 = vadd.f32 %v1349, %v1350
      %v1352 = vsel %vm663, %v787, 0.0
      %v1353 = vadd.f32 %v1351, %v1352
      %v1354 = vsel %vm663, %v790, 0.0
      %v1355 = vadd.f32 %v1353, %v1354
      %v1356 = vsel %vm663, %v795, 0.0
      %v1357 = vadd.f32 %v1355, %v1356
      %v1358 = vsel %vm663, %v798, 0.0
      %v1359 = vadd.f32 %v1357, %v1358
      %v1360 = vsel %vm663, %v803, 0.0
      %v1361 = vadd.f32 %v1359, %v1360
      %v1362 = vsel %vm663, %v806, 0.0
      %v1363 = vadd.f32 %v1361, %v1362
      %v1364 = vsel %vm663, %v811, 0.0
      %v1365 = vadd.f32 %v1363, %v1364
      %v1366 = vsel %vm663, %v814, 0.0
      %v1367 = vadd.f32 %v1365, %v1366
      %v1368 = vsel %vm663, %v819, 0.0
      %v1369 = vadd.f32 %v1367, %v1368
      %v1370 = vsel %vm663, %v822, 0.0
      %v1371 = vadd.f32 %v1369, %v1370
      %v1372 = vsel %vm663, %v827, 0.0
      %v1373 = vadd.f32 %v1371, %v1372
      %v1374 = vsel %vm663, %v830, 0.0
      %v1375 = vadd.f32 %v1373, %v1374
      %v1376 = vsel %vm663, %v835, 0.0
      %v1377 = vadd.f32 %v1375, %v1376
      %v1378 = vsel %vm663, %v838, 0.0
      %v1379 = vadd.f32 %v1377, %v1378
      %v1380 = vsel %vm663, %v843, 0.0
      %v1381 = vadd.f32 %v1379, %v1380
      %v1382 = vsel %vm663, %v846, 0.0
      %v1383 = vadd.f32 %v1381, %v1382
      %v1384 = vsel %vm663, %v851, 0.0
      %v1385 = vadd.f32 %v1383, %v1384
      %v1386 = vsel %vm663, %v854, 0.0
      %v1387 = vadd.f32 %v1385, %v1386
      %v1388 = vsel %vm663, %v859, 0.0
      %v1389 = vadd.f32 %v1387, %v1388
      %v1390 = vsel %vm663, %v862, 0.0
      %v1391 = vadd.f32 %v1389, %v1390
      %v1392 = vsel %vm663, %v867, 0.0
      %v1393 = vadd.f32 %v1391, %v1392
      %v1394 = vsel %vm663, %v870, 0.0
      %v1395 = vadd.f32 %v1393, %v1394
      %v1396 = vrot.slane %v1395, 4
      %v1397 = vadd.f32 %v1395, %v1396
      %v1398 = vrot.slane %v1397, 2
      %v1399 = vadd.f32 %v1397, %v1398
      %v1400 = vrot.slane %v1399, 1
      %v1401 = vadd.f32 %v1399, %v1400
      %v1402 = vsel %vm663, %v945, 0.0
      %v1403 = vsel %vm663, %v946, 0.0
      %v1404 = vadd.f32 %v1402, %v1403
      %v1405 = vsel %vm663, %v947, 0.0
      %v1406 = vadd.f32 %v1404, %v1405
      %v1407 = vsel %vm663, %v948, 0.0
      %v1408 = vadd.f32 %v1406, %v1407
      %v1409 = vsel %vm663, %v949, 0.0
      %v1410 = vadd.f32 %v1408, %v1409
      %v1411 = vsel %vm663, %v950, 0.0
      %v1412 = vadd.f32 %v1410, %v1411
      %v1413 = vsel %vm663, %v951, 0.0
      %v1414 = vadd.f32 %v1412, %v1413
      %v1415 = vsel %vm663, %v952, 0.0
      %v1416 = vadd.f32 %v1414, %v1415
      %v1417 = vsel %vm663, %v953, 0.0
      %v1418 = vadd.f32 %v1416, %v1417
      %v1419 = vsel %vm663, %v954, 0.0
      %v1420 = vadd.f32 %v1418, %v1419
      %v1421 = vsel %vm663, %v955, 0.0
      %v1422 = vadd.f32 %v1420, %v1421
      %v1423 = vsel %vm663, %v956, 0.0
      %v1424 = vadd.f32 %v1422, %v1423
      %v1425 = vsel %vm663, %v957, 0.0
      %v1426 = vadd.f32 %v1424, %v1425
      %v1427 = vsel %vm663, %v958, 0.0
      %v1428 = vadd.f32 %v1426, %v1427
      %v1429 = vsel %vm663, %v959, 0.0
      %v1430 = vadd.f32 %v1428, %v1429
      %v1431 = vsel %vm663, %v960, 0.0
      %v1432 = vadd.f32 %v1430, %v1431
      %v1433 = vsel %vm663, %v961, 0.0
      %v1434 = vadd.f32 %v1432, %v1433
      %v1435 = vsel %vm663, %v962, 0.0
      %v1436 = vadd.f32 %v1434, %v1435
      %v1437 = vsel %vm663, %v963, 0.0
      %v1438 = vadd.f32 %v1436, %v1437
      %v1439 = vsel %vm663, %v964, 0.0
      %v1440 = vadd.f32 %v1438, %v1439
      %v1441 = vsel %vm663, %v965, 0.0
      %v1442 = vadd.f32 %v1440, %v1441
      %v1443 = vsel %vm663, %v966, 0.0
      %v1444 = vadd.f32 %v1442, %v1443
      %v1445 = vsel %vm663, %v967, 0.0
      %v1446 = vadd.f32 %v1444, %v1445
      %v1447 = vsel %vm663, %v968, 0.0
      %v1448 = vadd.f32 %v1446, %v1447
      %v1449 = vsel %vm663, %v969, 0.0
      %v1450 = vadd.f32 %v1448, %v1449
      %v1451 = vsel %vm663, %v970, 0.0
      %v1452 = vadd.f32 %v1450, %v1451
      %v1453 = vsel %vm663, %v971, 0.0
      %v1454 = vadd.f32 %v1452, %v1453
      %v1455 = vsel %vm663, %v972, 0.0
      %v1456 = vadd.f32 %v1454, %v1455
      %v1457 = vsel %vm663, %v973, 0.0
      %v1458 = vadd.f32 %v1456, %v1457
      %v1459 = vsel %vm663, %v974, 0.0
      %v1460 = vadd.f32 %v1458, %v1459
      %v1461 = vsel %vm663, %v975, 0.0
      %v1462 = vadd.f32 %v1460, %v1461
      %v1463 = vsel %vm663, %v976, 0.0
      %v1464 = vadd.f32 %v1462, %v1463
      %v1465 = vrot.slane %v1464, 4
      %v1466 = vadd.f32 %v1464, %v1465
      %v1467 = vrot.slane %v1466, 2
      %v1468 = vadd.f32 %v1466, %v1467
      %v1469 = vrot.slane %v1468, 1
      %v1470 = vadd.f32 %v1468, %v1469
      %v1471 = vmul.f32 %v1401, %v1046
      %v1472 = vmul.f32 %v1470, %v1046
      %v1473 = vmul.f32 %v1471, %v1471
      %v1474 = vsub.f32 %v1472, %v1473
      %v1475 = vadd.f32 %v1474, 1e-06
      %v1476 = vrsqrt.pop %v1475
      %v1477 = vmul.f32 %v1476, %v1331
      %v1478 = vsub.f32 %v747, %v1471
      %v1479 = vsub.f32 %v750, %v1471
      %v1480 = vsub.f32 %v755, %v1471
      %v1481 = vsub.f32 %v758, %v1471
      %v1482 = vsub.f32 %v763, %v1471
      %v1483 = vsub.f32 %v766, %v1471
      %v1484 = vsub.f32 %v771, %v1471
      %v1485 = vsub.f32 %v774, %v1471
      %v1486 = vsub.f32 %v779, %v1471
      %v1487 = vsub.f32 %v782, %v1471
      %v1488 = vsub.f32 %v787, %v1471
      %v1489 = vsub.f32 %v790, %v1471
      %v1490 = vsub.f32 %v795, %v1471
      %v1491 = vsub.f32 %v798, %v1471
      %v1492 = vsub.f32 %v803, %v1471
      %v1493 = vsub.f32 %v806, %v1471
      %v1494 = vsub.f32 %v811, %v1471
      %v1495 = vsub.f32 %v814, %v1471
      %v1496 = vsub.f32 %v819, %v1471
      %v1497 = vsub.f32 %v822, %v1471
      %v1498 = vsub.f32 %v827, %v1471
      %v1499 = vsub.f32 %v830, %v1471
      %v1500 = vsub.f32 %v835, %v1471
      %v1501 = vsub.f32 %v838, %v1471
      %v1502 = vsub.f32 %v843, %v1471
      %v1503 = vsub.f32 %v846, %v1471
      %v1504 = vsub.f32 %v851, %v1471
      %v1505 = vsub.f32 %v854, %v1471
      %v1506 = vsub.f32 %v859, %v1471
      %v1507 = vsub.f32 %v862, %v1471
      %v1508 = vsub.f32 %v867, %v1471
      %v1509 = vsub.f32 %v870, %v1471
      %v1510 = vlaneseq
      %v1511 = vshrl.u32 %v1510, 7
      %v1512 = vsub.s32 0, %v1511
      %v1513 = vrot.slane %v1477, %v1512
      %v1514 = vmul.f32 %v1478, %v1513
      %v1515 = vmul.f32 %v1479, %v1513
      %v1516 = vmul.f32 %v1480, %v1513
      %v1517 = vmul.f32 %v1481, %v1513
      %v1518 = vmul.f32 %v1482, %v1513
      %v1519 = vmul.f32 %v1483, %v1513
      %v1520 = vmul.f32 %v1484, %v1513
      %v1521 = vmul.f32 %v1485, %v1513
      %v1522 = vmul.f32 %v1486, %v1513
      %v1523 = vmul.f32 %v1487, %v1513
      %v1524 = vmul.f32 %v1488, %v1513
      %v1525 = vmul.f32 %v1489, %v1513
      %v1526 = vmul.f32 %v1490, %v1513
      %v1527 = vmul.f32 %v1491, %v1513
      %v1528 = vmul.f32 %v1492, %v1513
      %v1529 = vmul.f32 %v1493, %v1513
      %v1530 = vmul.f32 %v1494, %v1513
      %v1531 = vmul.f32 %v1495, %v1513
      %v1532 = vmul.f32 %v1496, %v1513
      %v1533 = vmul.f32 %v1497, %v1513
      %v1534 = vmul.f32 %v1498, %v1513
      %v1535 = vmul.f32 %v1499, %v1513
      %v1536 = vmul.f32 %v1500, %v1513
      %v1537 = vmul.f32 %v1501, %v1513
      %v1538 = vmul.f32 %v1502, %v1513
      %v1539 = vmul.f32 %v1503, %v1513
      %v1540 = vmul.f32 %v1504, %v1513
      %v1541 = vmul.f32 %v1505, %v1513
      %v1542 = vmul.f32 %v1506, %v1513
      %v1543 = vmul.f32 %v1507, %v1513
      %v1544 = vmul.f32 %v1508, %v1513
      %v1545 = vmul.f32 %v1509, %v1513
      %v1547 = vlaneseq
      %v1548 = vshrl.u32 %v1547, 7
      %v1549 = vsub.s32 0, %v1548
      %v1550 = vrot.slane %v1332, %v1549
      %v1552 = vadd.f32 %v1514, %v1550
      %v1553 = vadd.f32 %v1515, %v1550
      %v1554 = vadd.f32 %v1516, %v1550
      %v1555 = vadd.f32 %v1517, %v1550
      %v1556 = vadd.f32 %v1518, %v1550
      %v1557 = vadd.f32 %v1519, %v1550
      %v1558 = vadd.f32 %v1520, %v1550
      %v1559 = vadd.f32 %v1521, %v1550
      %v1560 = vadd.f32 %v1522, %v1550
      %v1561 = vadd.f32 %v1523, %v1550
      %v1562 = vadd.f32 %v1524, %v1550
      %v1563 = vadd.f32 %v1525, %v1550
      %v1564 = vadd.f32 %v1526, %v1550
      %v1565 = vadd.f32 %v1527, %v1550
      %v1566 = vadd.f32 %v1528, %v1550
      %v1567 = vadd.f32 %v1529, %v1550
      %v1568 = vadd.f32 %v1530, %v1550
      %v1569 = vadd.f32 %v1531, %v1550
      %v1570 = vadd.f32 %v1532, %v1550
      %v1571 = vadd.f32 %v1533, %v1550
      %v1572 = vadd.f32 %v1534, %v1550
      %v1573 = vadd.f32 %v1535, %v1550
      %v1574 = vadd.f32 %v1536, %v1550
      %v1575 = vadd.f32 %v1537, %v1550
      %v1576 = vadd.f32 %v1538, %v1550
      %v1577 = vadd.f32 %v1539, %v1550
      %v1578 = vadd.f32 %v1540, %v1550
      %v1579 = vadd.f32 %v1541, %v1550
      %v1580 = vadd.f32 %v1542, %v1550
      %v1581 = vadd.f32 %v1543, %v1550
      %v1582 = vadd.f32 %v1544, %v1550
      %v1583 = vadd.f32 %v1545, %v1550
      %v1584 = vmax.f32 %v1552, 0.0
      %v1585 = vmax.f32 %v1553, 0.0
      %v1586 = vmax.f32 %v1554, 0.0
      %v1587 = vmax.f32 %v1555, 0.0
      %v1588 = vmax.f32 %v1556, 0.0
      %v1589 = vmax.f32 %v1557, 0.0
      %v1590 = vmax.f32 %v1558, 0.0
      %v1591 = vmax.f32 %v1559, 0.0
      %v1592 = vmax.f32 %v1560, 0.0
      %v1593 = vmax.f32 %v1561, 0.0
      %v1594 = vmax.f32 %v1562, 0.0
      %v1595 = vmax.f32 %v1563, 0.0
      %v1596 = vmax.f32 %v1564, 0.0
      %v1597 = vmax.f32 %v1565, 0.0
      %v1598 = vmax.f32 %v1566, 0.0
      %v1599 = vmax.f32 %v1567, 0.0
      %v1600 = vmax.f32 %v1568, 0.0
      %v1601 = vmax.f32 %v1569, 0.0
      %v1602 = vmax.f32 %v1570, 0.0
      %v1603 = vmax.f32 %v1571, 0.0
      %v1604 = vmax.f32 %v1572, 0.0
      %v1605 = vmax.f32 %v1573, 0.0
      %v1606 = vmax.f32 %v1574, 0.0
      %v1607 = vmax.f32 %v1575, 0.0
      %v1608 = vmax.f32 %v1576, 0.0
      %v1609 = vmax.f32 %v1577, 0.0
      %v1610 = vmax.f32 %v1578, 0.0
      %v1611 = vmax.f32 %v1579, 0.0
      %v1612 = vmax.f32 %v1580, 0.0
      %v1613 = vmax.f32 %v1581, 0.0
      %v1614 = vmax.f32 %v1582, 0.0
      %v1615 = vmax.f32 %v1583, 0.0
      %vm1616 = vcmask 257024
      %1617 = vst.msk [vmem:[#allocation2] sm:$0xf] %vm1616, 0
      %1618 = vst.msk [vmem:[#allocation2 + $0x4] sm:$0xf] %vm1616, 0
      %vm1619 = vcmask 253952
      %1620 = vst.msk [vmem:[#allocation2 + $0x8] sm:$0x1] %vm1619, 0
      %s1621 = scalar_lea.vmem [#allocation2], 204
      %1622 = vst.msk [vmem:[%s1621] sm:$0xf] %vm1616, 0
      %1623 = vst.msk [vmem:[%s1621 + $0x4] sm:$0xf] %vm1616, 0
      %1624 = vst.msk [vmem:[%s1621 + $0x8] sm:$0x1] %vm1619, 0
      %s1625 = scalar_lea.vmem [#allocation2], 12
      %vm1626 = vcmask 253952
      %vm1627 = vsmask.f32 256
      %vm1628 = vmand %vm1626, %vm1627
      %v1629 = vld [vmem:[%s1625] sm:$0x1]
      %v1630 = vsel %vm1628, 0, %v1629
      %1631 = vst [vmem:[%s1625] sm:$0x1] %v1630
      %v1632 = vld [vmem:[%s1625 + $0xc] sm:$0x1]
      %v1633 = vsel %vm1628, 0, %v1632
      %1634 = vst [vmem:[%s1625 + $0xc] sm:$0x1] %v1633
      %v1635 = vld [vmem:[%s1625 + $0x18] sm:$0x1]
      %v1636 = vsel %vm1628, 0, %v1635
      %1637 = vst [vmem:[%s1625 + $0x18] sm:$0x1] %v1636
      %v1638 = vld [vmem:[%s1625 + $0x24] sm:$0x1]
      %v1639 = vsel %vm1628, 0, %v1638
      %1640 = vst [vmem:[%s1625 + $0x24] sm:$0x1] %v1639
      %v1641 = vld [vmem:[%s1625 + $0x30] sm:$0x1]
      %v1642 = vsel %vm1628, 0, %v1641
      %1643 = vst [vmem:[%s1625 + $0x30] sm:$0x1] %v1642
      %v1644 = vld [vmem:[%s1625 + $0x3c] sm:$0x1]
      %v1645 = vsel %vm1628, 0, %v1644
      %1646 = vst [vmem:[%s1625 + $0x3c] sm:$0x1] %v1645
      %v1647 = vld [vmem:[%s1625 + $0x48] sm:$0x1]
      %v1648 = vsel %vm1628, 0, %v1647
      %1649 = vst [vmem:[%s1625 + $0x48] sm:$0x1] %v1648
      %v1650 = vld [vmem:[%s1625 + $0x54] sm:$0x1]
      %v1651 = vsel %vm1628, 0, %v1650
      %1652 = vst [vmem:[%s1625 + $0x54] sm:$0x1] %v1651
      %v1653 = vld [vmem:[%s1625 + $0x60] sm:$0x1]
      %v1654 = vsel %vm1628, 0, %v1653
      %1655 = vst [vmem:[%s1625 + $0x60] sm:$0x1] %v1654
      %v1656 = vld [vmem:[%s1625 + $0x6c] sm:$0x1]
      %v1657 = vsel %vm1628, 0, %v1656
      %1658 = vst [vmem:[%s1625 + $0x6c] sm:$0x1] %v1657
      %v1659 = vld [vmem:[%s1625 + $0x78] sm:$0x1]
      %v1660 = vsel %vm1628, 0, %v1659
      %1661 = vst [vmem:[%s1625 + $0x78] sm:$0x1] %v1660
      %v1662 = vld [vmem:[%s1625 + $0x84] sm:$0x1]
      %v1663 = vsel %vm1628, 0, %v1662
      %1664 = vst [vmem:[%s1625 + $0x84] sm:$0x1] %v1663
      %v1665 = vld [vmem:[%s1625 + $0x90] sm:$0x1]
      %v1666 = vsel %vm1628, 0, %v1665
      %1667 = vst [vmem:[%s1625 + $0x90] sm:$0x1] %v1666
      %v1668 = vld [vmem:[%s1625 + $0x9c] sm:$0x1]
      %v1669 = vsel %vm1628, 0, %v1668
      %1670 = vst [vmem:[%s1625 + $0x9c] sm:$0x1] %v1669
      %v1671 = vld [vmem:[%s1625 + $0xa8] sm:$0x1]
      %v1672 = vsel %vm1628, 0, %v1671
      %1673 = vst [vmem:[%s1625 + $0xa8] sm:$0x1] %v1672
      %v1674 = vld [vmem:[%s1625 + $0xb4] sm:$0x1]
      %v1675 = vsel %vm1628, 0, %v1674
      %1676 = vst [vmem:[%s1625 + $0xb4] sm:$0x1] %v1675
      %vm1677 = vsmask.f32 7938
      %vm1678 = vmand %vm1626, %vm1677
      %v1679 = vld [vmem:[%s1625 + $0x8] sm:$0x1]
      %v1680 = vsel %vm1678, 0, %v1679
      %1681 = vst [vmem:[%s1625 + $0x8] sm:$0x1] %v1680
      %v1682 = vld [vmem:[%s1625 + $0x14] sm:$0x1]
      %v1683 = vsel %vm1678, 0, %v1682
      %1684 = vst [vmem:[%s1625 + $0x14] sm:$0x1] %v1683
      %v1685 = vld [vmem:[%s1625 + $0x20] sm:$0x1]
      %v1686 = vsel %vm1678, 0, %v1685
      %1687 = vst [vmem:[%s1625 + $0x20] sm:$0x1] %v1686
      %v1688 = vld [vmem:[%s1625 + $0x2c] sm:$0x1]
      %v1689 = vsel %vm1678, 0, %v1688
      %1690 = vst [vmem:[%s1625 + $0x2c] sm:$0x1] %v1689
      %v1691 = vld [vmem:[%s1625 + $0x38] sm:$0x1]
      %v1692 = vsel %vm1678, 0, %v1691
      %1693 = vst [vmem:[%s1625 + $0x38] sm:$0x1] %v1692
      %v1694 = vld [vmem:[%s1625 + $0x44] sm:$0x1]
      %v1695 = vsel %vm1678, 0, %v1694
      %1696 = vst [vmem:[%s1625 + $0x44] sm:$0x1] %v1695
      %v1697 = vld [vmem:[%s1625 + $0x50] sm:$0x1]
      %v1698 = vsel %vm1678, 0, %v1697
      %1699 = vst [vmem:[%s1625 + $0x50] sm:$0x1] %v1698
      %v1700 = vld [vmem:[%s1625 + $0x5c] sm:$0x1]
      %v1701 = vsel %vm1678, 0, %v1700
      %1702 = vst [vmem:[%s1625 + $0x5c] sm:$0x1] %v1701
      %v1703 = vld [vmem:[%s1625 + $0x68] sm:$0x1]
      %v1704 = vsel %vm1678, 0, %v1703
      %1705 = vst [vmem:[%s1625 + $0x68] sm:$0x1] %v1704
      %v1706 = vld [vmem:[%s1625 + $0x74] sm:$0x1]
      %v1707 = vsel %vm1678, 0, %v1706
      %1708 = vst [vmem:[%s1625 + $0x74] sm:$0x1] %v1707
      %v1709 = vld [vmem:[%s1625 + $0x80] sm:$0x1]
      %v1710 = vsel %vm1678, 0, %v1709
      %1711 = vst [vmem:[%s1625 + $0x80] sm:$0x1] %v1710
      %v1712 = vld [vmem:[%s1625 + $0x8c] sm:$0x1]
      %v1713 = vsel %vm1678, 0, %v1712
      %1714 = vst [vmem:[%s1625 + $0x8c] sm:$0x1] %v1713
      %v1715 = vld [vmem:[%s1625 + $0x98] sm:$0x1]
      %v1716 = vsel %vm1678, 0, %v1715
      %1717 = vst [vmem:[%s1625 + $0x98] sm:$0x1] %v1716
      %v1718 = vld [vmem:[%s1625 + $0xa4] sm:$0x1]
      %v1719 = vsel %vm1678, 0, %v1718
      %1720 = vst [vmem:[%s1625 + $0xa4] sm:$0x1] %v1719
      %v1721 = vld [vmem:[%s1625 + $0xb0] sm:$0x1]
      %v1722 = vsel %vm1678, 0, %v1721
      %1723 = vst [vmem:[%s1625 + $0xb0] sm:$0x1] %v1722
      %v1724 = vld [vmem:[%s1625 + $0xbc] sm:$0x1]
      %v1725 = vsel %vm1678, 0, %v1724
      %1726 = vst [vmem:[%s1625 + $0xbc] sm:$0x1] %v1725
      %v1727 = vpack.c.bf16 %v1585, %v1584
      %v1728 = vpack.c.bf16 %v1587, %v1586
      %v1729 = vpack.c.bf16 %v1589, %v1588
      %v1730 = vpack.c.bf16 %v1591, %v1590
      %v1731 = vpack.c.bf16 %v1593, %v1592
      %v1732 = vpack.c.bf16 %v1595, %v1594
      %v1733 = vpack.c.bf16 %v1597, %v1596
      %v1734 = vpack.c.bf16 %v1599, %v1598
      %v1735 = vpack.c.bf16 %v1601, %v1600
      %v1736 = vpack.c.bf16 %v1603, %v1602
      %v1737 = vpack.c.bf16 %v1605, %v1604
      %v1738 = vpack.c.bf16 %v1607, %v1606
      %v1739 = vpack.c.bf16 %v1609, %v1608
      %v1740 = vpack.c.bf16 %v1611, %v1610
      %v1741 = vpack.c.bf16 %v1613, %v1612
      %v1742 = vpack.c.bf16 %v1615, %v1614
      %v1759 = vunpack.c.l.b16 %v1727
      %v1760 = vunpack.c.h.b16 %v1727
      %v1761 = vunpack.c.l.b16 %v1728
      %v1762 = vunpack.c.h.b16 %v1728
      %v1763 = vunpack.c.l.b16 %v1729
      %v1764 = vunpack.c.h.b16 %v1729
      %v1765 = vunpack.c.l.b16 %v1730
      %v1766 = vunpack.c.h.b16 %v1730
      %v1767 = vunpack.c.l.b16 %v1731
      %v1768 = vunpack.c.h.b16 %v1731
      %v1769 = vunpack.c.l.b16 %v1732
      %v1770 = vunpack.c.h.b16 %v1732
      %v1771 = vunpack.c.l.b16 %v1733
      %v1772 = vunpack.c.h.b16 %v1733
      %v1773 = vunpack.c.l.b16 %v1734
      %v1774 = vunpack.c.h.b16 %v1734
      %v1775 = vunpack.c.l.b16 %v1735
      %v1776 = vunpack.c.h.b16 %v1735
      %v1777 = vunpack.c.l.b16 %v1736
      %v1778 = vunpack.c.h.b16 %v1736
      %v1779 = vunpack.c.l.b16 %v1737
      %v1780 = vunpack.c.h.b16 %v1737
      %v1781 = vunpack.c.l.b16 %v1738
      %v1782 = vunpack.c.h.b16 %v1738
      %v1783 = vunpack.c.l.b16 %v1739
      %v1784 = vunpack.c.h.b16 %v1739
      %v1785 = vunpack.c.l.b16 %v1740
      %v1786 = vunpack.c.h.b16 %v1740
      %v1787 = vunpack.c.l.b16 %v1741
      %v1788 = vunpack.c.h.b16 %v1741
      %v1789 = vunpack.c.l.b16 %v1742
      %v1790 = vunpack.c.h.b16 %v1742
      %v1791 = vpack.c.b16 %v1759, %v1759
      %v1792 = vpack.c.b16 %v1760, %v1760
      %v1793 = vpack.c.b16 %v1761, %v1761
      %v1794 = vpack.c.b16 %v1762, %v1762
      %v1795 = vpack.c.b16 %v1763, %v1763
      %v1796 = vpack.c.b16 %v1764, %v1764
      %v1797 = vpack.c.b16 %v1765, %v1765
      %v1798 = vpack.c.b16 %v1766, %v1766
      %v1799 = vpack.c.b16 %v1767, %v1767
      %v1800 = vpack.c.b16 %v1768, %v1768
      %v1801 = vpack.c.b16 %v1769, %v1769
      %v1802 = vpack.c.b16 %v1770, %v1770
      %v1803 = vpack.c.b16 %v1771, %v1771
      %v1804 = vpack.c.b16 %v1772, %v1772
      %v1805 = vpack.c.b16 %v1773, %v1773
      %v1806 = vpack.c.b16 %v1774, %v1774
      %v1807 = vpack.c.b16 %v1775, %v1775
      %v1808 = vpack.c.b16 %v1776, %v1776
      %v1809 = vpack.c.b16 %v1777, %v1777
      %v1810 = vpack.c.b16 %v1778, %v1778
      %v1811 = vpack.c.b16 %v1779, %v1779
      %v1812 = vpack.c.b16 %v1780, %v1780
      %v1813 = vpack.c.b16 %v1781, %v1781
      %v1814 = vpack.c.b16 %v1782, %v1782
      %v1815 = vpack.c.b16 %v1783, %v1783
      %v1816 = vpack.c.b16 %v1784, %v1784
      %v1817 = vpack.c.b16 %v1785, %v1785
      %v1818 = vpack.c.b16 %v1786, %v1786
      %v1819 = vpack.c.b16 %v1787, %v1787
      %v1820 = vpack.c.b16 %v1788, %v1788
      %v1821 = vpack.c.b16 %v1789, %v1789
      %v1822 = vpack.c.b16 %v1790, %v1790
      %vm1823 = vsmask.f32 4368
      %vm1824 = vmor %vm1627, %vm1823
      %v1826 = vshrl.u32 %v1791, 16
      %v1828 = vrot.slane %v1826, 7
      %v1829 = vshll.u32 %v1791, 16
      %v1831 = vor.u32 %v1828, %v1829
      %v1832 = vrot.slane %v1828, 4
      %v1834 = vshrl.u32 %v1792, 16
      %v1836 = vrot.slane %v1834, 7
      %v1837 = vshll.u32 %v1792, 16
      %v1839 = vor.u32 %v1836, %v1837
      %v1840 = vsel %vm1824, %v1832, %v1839
      %v1841 = vrot.slane %v1836, 4
      %v1843 = vshrl.u32 %v1793, 16
      %v1845 = vrot.slane %v1843, 7
      %v1846 = vshll.u32 %v1793, 16
      %v1848 = vor.u32 %v1845, %v1846
      %v1849 = vrot.slane %v1845, 4
      %v1851 = vshrl.u32 %v1794, 16
      %v1853 = vrot.slane %v1851, 7
      %v1854 = vshll.u32 %v1794, 16
      %v1856 = vor.u32 %v1853, %v1854
      %v1857 = vsel %vm1824, %v1849, %v1856
      %v1858 = vrot.slane %v1853, 4
      %v1860 = vshrl.u32 %v1795, 16
      %v1862 = vrot.slane %v1860, 7
      %v1863 = vshll.u32 %v1795, 16
      %v1865 = vor.u32 %v1862, %v1863
      %v1866 = vrot.slane %v1862, 4
      %v1868 = vshrl.u32 %v1796, 16
      %v1870 = vrot.slane %v1868, 7
      %v1871 = vshll.u32 %v1796, 16
      %v1873 = vor.u32 %v1870, %v1871
      %v1874 = vsel %vm1824, %v1866, %v1873
      %v1875 = vrot.slane %v1870, 4
      %v1877 = vshrl.u32 %v1797, 16
      %v1879 = vrot.slane %v1877, 7
      %v1880 = vshll.u32 %v1797, 16
      %v1882 = vor.u32 %v1879, %v1880
      %v1883 = vrot.slane %v1879, 4
      %v1885 = vshrl.u32 %v1798, 16
      %v1887 = vrot.slane %v1885, 7
      %v1888 = vshll.u32 %v1798, 16
      %v1890 = vor.u32 %v1887, %v1888
      %v1891 = vsel %vm1824, %v1883, %v1890
      %v1892 = vrot.slane %v1887, 4
      %v1894 = vshrl.u32 %v1799, 16
      %v1896 = vrot.slane %v1894, 7
      %v1897 = vshll.u32 %v1799, 16
      %v1899 = vor.u32 %v1896, %v1897
      %v1900 = vrot.slane %v1896, 4
      %v1902 = vshrl.u32 %v1800, 16
      %v1904 = vrot.slane %v1902, 7
      %v1905 = vshll.u32 %v1800, 16
      %v1907 = vor.u32 %v1904, %v1905
      %v1908 = vsel %vm1824, %v1900, %v1907
      %v1909 = vrot.slane %v1904, 4
      %v1911 = vshrl.u32 %v1801, 16
      %v1913 = vrot.slane %v1911, 7
      %v1914 = vshll.u32 %v1801, 16
      %v1916 = vor.u32 %v1913, %v1914
      %v1917 = vrot.slane %v1913, 4
      %v1919 = vshrl.u32 %v1802, 16
      %v1921 = vrot.slane %v1919, 7
      %v1922 = vshll.u32 %v1802, 16
      %v1924 = vor.u32 %v1921, %v1922
      %v1925 = vsel %vm1824, %v1917, %v1924
      %v1926 = vrot.slane %v1921, 4
      %v1928 = vshrl.u32 %v1803, 16
      %v1930 = vrot.slane %v1928, 7
      %v1931 = vshll.u32 %v1803, 16
      %v1933 = vor.u32 %v1930, %v1931
      %v1934 = vrot.slane %v1930, 4
      %v1936 = vshrl.u32 %v1804, 16
      %v1938 = vrot.slane %v1936, 7
      %v1939 = vshll.u32 %v1804, 16
      %v1941 = vor.u32 %v1938, %v1939
      %v1942 = vsel %vm1824, %v1934, %v1941
      %v1943 = vrot.slane %v1938, 4
      %v1945 = vshrl.u32 %v1805, 16
      %v1947 = vrot.slane %v1945, 7
      %v1948 = vshll.u32 %v1805, 16
      %v1950 = vor.u32 %v1947, %v1948
      %v1951 = vrot.slane %v1947, 4
      %v1953 = vshrl.u32 %v1806, 16
      %v1955 = vrot.slane %v1953, 7
      %v1956 = vshll.u32 %v1806, 16
      %v1958 = vor.u32 %v1955, %v1956
      %v1959 = vsel %vm1824, %v1951, %v1958
      %v1960 = vrot.slane %v1955, 4
      %v1962 = vshrl.u32 %v1807, 16
      %v1964 = vrot.slane %v1962, 7
      %v1965 = vshll.u32 %v1807, 16
      %v1967 = vor.u32 %v1964, %v1965
      %v1968 = vrot.slane %v1964, 4
      %v1970 = vshrl.u32 %v1808, 16
      %v1972 = vrot.slane %v1970, 7
      %v1973 = vshll.u32 %v1808, 16
      %v1975 = vor.u32 %v1972, %v1973
      %v1976 = vsel %vm1824, %v1968, %v1975
      %v1977 = vrot.slane %v1972, 4
      %v1979 = vshrl.u32 %v1809, 16
      %v1981 = vrot.slane %v1979, 7
      %v1982 = vshll.u32 %v1809, 16
      %v1984 = vor.u32 %v1981, %v1982
      %v1985 = vrot.slane %v1981, 4
      %v1987 = vshrl.u32 %v1810, 16
      %v1989 = vrot.slane %v1987, 7
      %v1990 = vshll.u32 %v1810, 16
      %v1992 = vor.u32 %v1989, %v1990
      %v1993 = vsel %vm1824, %v1985, %v1992
      %v1994 = vrot.slane %v1989, 4
      %v1996 = vshrl.u32 %v1811, 16
      %v1998 = vrot.slane %v1996, 7
      %v1999 = vshll.u32 %v1811, 16
      %v2001 = vor.u32 %v1998, %v1999
      %v2002 = vrot.slane %v1998, 4
      %v2004 = vshrl.u32 %v1812, 16
      %v2006 = vrot.slane %v2004, 7
      %v2007 = vshll.u32 %v1812, 16
      %v2009 = vor.u32 %v2006, %v2007
      %v2010 = vsel %vm1824, %v2002, %v2009
      %v2011 = vrot.slane %v2006, 4
      %v2013 = vshrl.u32 %v1813, 16
      %v2015 = vrot.slane %v2013, 7
      %v2016 = vshll.u32 %v1813, 16
      %v2018 = vor.u32 %v2015, %v2016
      %v2019 = vrot.slane %v2015, 4
      %v2021 = vshrl.u32 %v1814, 16
      %v2023 = vrot.slane %v2021, 7
      %v2024 = vshll.u32 %v1814, 16
      %v2026 = vor.u32 %v2023, %v2024
      %v2027 = vsel %vm1824, %v2019, %v2026
      %v2028 = vrot.slane %v2023, 4
      %v2030 = vshrl.u32 %v1815, 16
      %v2032 = vrot.slane %v2030, 7
      %v2033 = vshll.u32 %v1815, 16
      %v2035 = vor.u32 %v2032, %v2033
      %v2036 = vrot.slane %v2032, 4
      %v2038 = vshrl.u32 %v1816, 16
      %v2040 = vrot.slane %v2038, 7
      %v2041 = vshll.u32 %v1816, 16
      %v2043 = vor.u32 %v2040, %v2041
      %v2044 = vsel %vm1824, %v2036, %v2043
      %v2045 = vrot.slane %v2040, 4
      %v2047 = vshrl.u32 %v1817, 16
      %v2049 = vrot.slane %v2047, 7
      %v2050 = vshll.u32 %v1817, 16
      %v2052 = vor.u32 %v2049, %v2050
      %v2053 = vrot.slane %v2049, 4
      %v2055 = vshrl.u32 %v1818, 16
      %v2057 = vrot.slane %v2055, 7
      %v2058 = vshll.u32 %v1818, 16
      %v2060 = vor.u32 %v2057, %v2058
      %v2061 = vsel %vm1824, %v2053, %v2060
      %v2062 = vrot.slane %v2057, 4
      %v2064 = vshrl.u32 %v1819, 16
      %v2066 = vrot.slane %v2064, 7
      %v2067 = vshll.u32 %v1819, 16
      %v2069 = vor.u32 %v2066, %v2067
      %v2070 = vrot.slane %v2066, 4
      %v2072 = vshrl.u32 %v1820, 16
      %v2074 = vrot.slane %v2072, 7
      %v2075 = vshll.u32 %v1820, 16
      %v2077 = vor.u32 %v2074, %v2075
      %v2078 = vsel %vm1824, %v2070, %v2077
      %v2079 = vrot.slane %v2074, 4
      %v2081 = vshrl.u32 %v1821, 16
      %v2083 = vrot.slane %v2081, 7
      %v2084 = vshll.u32 %v1821, 16
      %v2086 = vor.u32 %v2083, %v2084
      %v2087 = vrot.slane %v2083, 4
      %v2089 = vshrl.u32 %v1822, 16
      %v2091 = vrot.slane %v2089, 7
      %v2092 = vshll.u32 %v1822, 16
      %v2094 = vor.u32 %v2091, %v2092
      %v2095 = vsel %vm1824, %v2087, %v2094
      %v2096 = vrot.slane %v2091, 4
      %vm2145 = vcmask 257024
      %vm2146 = vmand %vm2145, %vm1677
      %v2147 = vld [vmem:[%s1625] sm:$0xf]
      %v2148 = vsel %vm2146, %v1831, %v2147
      %2149 = vst [vmem:[%s1625] sm:$0xf] %v2148
      %2150 = vst.msk [vmem:[%s1625 + $0x4] sm:$0xf] %vm1616, %v1840
      %v2151 = vld [vmem:[%s1625 + $0x8] sm:$0x1]
      %v2152 = vsel %vm1628, %v1841, %v2151
      %2153 = vst [vmem:[%s1625 + $0x8] sm:$0x1] %v2152
      %v2154 = vld [vmem:[%s1625 + $0xc] sm:$0xf]
      %v2155 = vsel %vm2146, %v1848, %v2154
      %2156 = vst [vmem:[%s1625 + $0xc] sm:$0xf] %v2155
      %2157 = vst.msk [vmem:[%s1625 + $0x10] sm:$0xf] %vm1616, %v1857
      %v2158 = vld [vmem:[%s1625 + $0x14] sm:$0x1]
      %v2159 = vsel %vm1628, %v1858, %v2158
      %2160 = vst [vmem:[%s1625 + $0x14] sm:$0x1] %v2159
      %v2161 = vld [vmem:[%s1625 + $0x18] sm:$0xf]
      %v2162 = vsel %vm2146, %v1865, %v2161
      %2163 = vst [vmem:[%s1625 + $0x18] sm:$0xf] %v2162
      %2164 = vst.msk [vmem:[%s1625 + $0x1c] sm:$0xf] %vm1616, %v1874
      %v2165 = vld [vmem:[%s1625 + $0x20] sm:$0x1]
      %v2166 = vsel %vm1628, %v1875, %v2165
      %2167 = vst [vmem:[%s1625 + $0x20] sm:$0x1] %v2166
      %v2168 = vld [vmem:[%s1625 + $0x24] sm:$0xf]
      %v2169 = vsel %vm2146, %v1882, %v2168
      %2170 = vst [vmem:[%s1625 + $0x24] sm:$0xf] %v2169
      %2171 = vst.msk [vmem:[%s1625 + $0x28] sm:$0xf] %vm1616, %v1891
      %v2172 = vld [vmem:[%s1625 + $0x2c] sm:$0x1]
      %v2173 = vsel %vm1628, %v1892, %v2172
      %2174 = vst [vmem:[%s1625 + $0x2c] sm:$0x1] %v2173
      %v2175 = vld [vmem:[%s1625 + $0x30] sm:$0xf]
      %v2176 = vsel %vm2146, %v1899, %v2175
      %2177 = vst [vmem:[%s1625 + $0x30] sm:$0xf] %v2176
      %2178 = vst.msk [vmem:[%s1625 + $0x34] sm:$0xf] %vm1616, %v1908
      %v2179 = vld [vmem:[%s1625 + $0x38] sm:$0x1]
      %v2180 = vsel %vm1628, %v1909, %v2179
      %2181 = vst [vmem:[%s1625 + $0x38] sm:$0x1] %v2180
      %v2182 = vld [vmem:[%s1625 + $0x3c] sm:$0xf]
      %v2183 = vsel %vm2146, %v1916, %v2182
      %2184 = vst [vmem:[%s1625 + $0x3c] sm:$0xf] %v2183
      %2185 = vst.msk [vmem:[%s1625 + $0x40] sm:$0xf] %vm1616, %v1925
      %v2186 = vld [vmem:[%s1625 + $0x44] sm:$0x1]
      %v2187 = vsel %vm1628, %v1926, %v2186
      %2188 = vst [vmem:[%s1625 + $0x44] sm:$0x1] %v2187
      %v2189 = vld [vmem:[%s1625 + $0x48] sm:$0xf]
      %v2190 = vsel %vm2146, %v1933, %v2189
      %2191 = vst [vmem:[%s1625 + $0x48] sm:$0xf] %v2190
      %2192 = vst.msk [vmem:[%s1625 + $0x4c] sm:$0xf] %vm1616, %v1942
      %v2193 = vld [vmem:[%s1625 + $0x50] sm:$0x1]
      %v2194 = vsel %vm1628, %v1943, %v2193
      %2195 = vst [vmem:[%s1625 + $0x50] sm:$0x1] %v2194
      %v2196 = vld [vmem:[%s1625 + $0x54] sm:$0xf]
      %v2197 = vsel %vm2146, %v1950, %v2196
      %2198 = vst [vmem:[%s1625 + $0x54] sm:$0xf] %v2197
      %2199 = vst.msk [vmem:[%s1625 + $0x58] sm:$0xf] %vm1616, %v1959
      %v2200 = vld [vmem:[%s1625 + $0x5c] sm:$0x1]
      %v2201 = vsel %vm1628, %v1960, %v2200
      %2202 = vst [vmem:[%s1625 + $0x5c] sm:$0x1] %v2201
      %v2203 = vld [vmem:[%s1625 + $0x60] sm:$0xf]
      %v2204 = vsel %vm2146, %v1967, %v2203
      %2205 = vst [vmem:[%s1625 + $0x60] sm:$0xf] %v2204
      %2206 = vst.msk [vmem:[%s1625 + $0x64] sm:$0xf] %vm1616, %v1976
      %v2207 = vld [vmem:[%s1625 + $0x68] sm:$0x1]
      %v2208 = vsel %vm1628, %v1977, %v2207
      %2209 = vst [vmem:[%s1625 + $0x68] sm:$0x1] %v2208
      %v2210 = vld [vmem:[%s1625 + $0x6c] sm:$0xf]
      %v2211 = vsel %vm2146, %v1984, %v2210
      %2212 = vst [vmem:[%s1625 + $0x6c] sm:$0xf] %v2211
      %2213 = vst.msk [vmem:[%s1625 + $0x70] sm:$0xf] %vm1616, %v1993
      %v2214 = vld [vmem:[%s1625 + $0x74] sm:$0x1]
      %v2215 = vsel %vm1628, %v1994, %v2214
      %2216 = vst [vmem:[%s1625 + $0x74] sm:$0x1] %v2215
      %v2217 = vld [vmem:[%s1625 + $0x78] sm:$0xf]
      %v2218 = vsel %vm2146, %v2001, %v2217
      %2219 = vst [vmem:[%s1625 + $0x78] sm:$0xf] %v2218
      %2220 = vst.msk [vmem:[%s1625 + $0x7c] sm:$0xf] %vm1616, %v2010
      %v2221 = vld [vmem:[%s1625 + $0x80] sm:$0x1]
      %v2222 = vsel %vm1628, %v2011, %v2221
      %2223 = vst [vmem:[%s1625 + $0x80] sm:$0x1] %v2222
      %v2224 = vld [vmem:[%s1625 + $0x84] sm:$0xf]
      %v2225 = vsel %vm2146, %v2018, %v2224
      %2226 = vst [vmem:[%s1625 + $0x84] sm:$0xf] %v2225
      %2227 = vst.msk [vmem:[%s1625 + $0x88] sm:$0xf] %vm1616, %v2027
      %v2228 = vld [vmem:[%s1625 + $0x8c] sm:$0x1]
      %v2229 = vsel %vm1628, %v2028, %v2228
      %2230 = vst [vmem:[%s1625 + $0x8c] sm:$0x1] %v2229
      %v2231 = vld [vmem:[%s1625 + $0x90] sm:$0xf]
      %v2232 = vsel %vm2146, %v2035, %v2231
      %2233 = vst [vmem:[%s1625 + $0x90] sm:$0xf] %v2232
      %2234 = vst.msk [vmem:[%s1625 + $0x94] sm:$0xf] %vm1616, %v2044
      %v2235 = vld [vmem:[%s1625 + $0x98] sm:$0x1]
      %v2236 = vsel %vm1628, %v2045, %v2235
      %2237 = vst [vmem:[%s1625 + $0x98] sm:$0x1] %v2236
      %v2238 = vld [vmem:[%s1625 + $0x9c] sm:$0xf]
      %v2239 = vsel %vm2146, %v2052, %v2238
      %2240 = vst [vmem:[%s1625 + $0x9c] sm:$0xf] %v2239
      %2241 = vst.msk [vmem:[%s1625 + $0xa0] sm:$0xf] %vm1616, %v2061
      %v2242 = vld [vmem:[%s1625 + $0xa4] sm:$0x1]
      %v2243 = vsel %vm1628, %v2062, %v2242
      %2244 = vst [vmem:[%s1625 + $0xa4] sm:$0x1] %v2243
      %v2245 = vld [vmem:[%s1625 + $0xa8] sm:$0xf]
      %v2246 = vsel %vm2146, %v2069, %v2245
      %2247 = vst [vmem:[%s1625 + $0xa8] sm:$0xf] %v2246
      %2248 = vst.msk [vmem:[%s1625 + $0xac] sm:$0xf] %vm1616, %v2078
      %v2249 = vld [vmem:[%s1625 + $0xb0] sm:$0x1]
      %v2250 = vsel %vm1628, %v2079, %v2249
      %2251 = vst [vmem:[%s1625 + $0xb0] sm:$0x1] %v2250
      %v2252 = vld [vmem:[%s1625 + $0xb4] sm:$0xf]
      %v2253 = vsel %vm2146, %v2086, %v2252
      %2254 = vst [vmem:[%s1625 + $0xb4] sm:$0xf] %v2253
      %2255 = vst.msk [vmem:[%s1625 + $0xb8] sm:$0xf] %vm1616, %v2095
      %v2256 = vld [vmem:[%s1625 + $0xbc] sm:$0x1]
      %v2257 = vsel %vm1628, %v2096, %v2256
      %2258 = vst [vmem:[%s1625 + $0xbc] sm:$0x1] %v2257
      %v2259 = vld [vmem:[#allocation2] sm:$0xf]
      %v2260 = vld [vmem:[#allocation2 + $0x4] sm:$0xf]
      %v2261 = vld [vmem:[#allocation2 + $0xc] sm:$0xf]
      %v2262 = vld [vmem:[#allocation2 + $0x10] sm:$0xf]
      %v2263 = vld [vmem:[#allocation2 + $0x18] sm:$0xf]
      %v2264 = vld [vmem:[#allocation2 + $0x1c] sm:$0xf]
      %v2265 = vld [vmem:[#allocation2 + $0x24] sm:$0xf]
      %v2266 = vld [vmem:[#allocation2 + $0x28] sm:$0xf]
      %v2267 = vld [vmem:[#allocation2 + $0x30] sm:$0xf]
      %v2268 = vld [vmem:[#allocation2 + $0x34] sm:$0xf]
      %v2269 = vld [vmem:[#allocation2 + $0x3c] sm:$0xf]
      %v2270 = vld [vmem:[#allocation2 + $0x40] sm:$0xf]
      %v2271 = vld [vmem:[#allocation2 + $0x48] sm:$0xf]
      %v2272 = vld [vmem:[#allocation2 + $0x4c] sm:$0xf]
      %v2273 = vld [vmem:[#allocation2 + $0x54] sm:$0xf]
      %v2274 = vld [vmem:[#allocation2 + $0x58] sm:$0xf]
      %v2275 = vld [vmem:[#allocation2 + $0x60] sm:$0xf]
      %v2276 = vld [vmem:[#allocation2 + $0x64] sm:$0xf]
      %v2277 = vld [vmem:[#allocation2 + $0x6c] sm:$0xf]
      %v2278 = vld [vmem:[#allocation2 + $0x70] sm:$0xf]
      %v2279 = vld [vmem:[#allocation2 + $0x78] sm:$0xf]
      %v2280 = vld [vmem:[#allocation2 + $0x7c] sm:$0xf]
      %v2281 = vld [vmem:[#allocation2 + $0x84] sm:$0xf]
      %v2282 = vld [vmem:[#allocation2 + $0x88] sm:$0xf]
      %v2283 = vld [vmem:[#allocation2 + $0x90] sm:$0xf]
      %v2284 = vld [vmem:[#allocation2 + $0x94] sm:$0xf]
      %v2285 = vld [vmem:[#allocation2 + $0x9c] sm:$0xf]
      %v2286 = vld [vmem:[#allocation2 + $0xa0] sm:$0xf]
      %v2287 = vld [vmem:[#allocation2 + $0xa8] sm:$0xf]
      %v2288 = vld [vmem:[#allocation2 + $0xac] sm:$0xf]
      %v2289 = vld [vmem:[#allocation2 + $0xb4] sm:$0xf]
      %v2290 = vld [vmem:[#allocation2 + $0xb8] sm:$0xf]
      %v2291 = vld [vmem:[%s6] sm:$0xf]
      %v2292 = vld [vmem:[%s6 + $0x4] sm:$0xf]
      %v2293 = vld [vmem:[%s6 + $0x8] sm:$0xf]
      %v2294 = vld [vmem:[%s6 + $0xc] sm:$0xf]
      %v2295 = vld [vmem:[#allocation2 + $0x8] sm:$0x1]
      %v2296 = vld [vmem:[#allocation2 + $0x14] sm:$0x1]
      %v2297 = vld [vmem:[#allocation2 + $0x20] sm:$0x1]
      %v2298 = vld [vmem:[#allocation2 + $0x2c] sm:$0x1]
      %v2299 = vld [vmem:[#allocation2 + $0x38] sm:$0x1]
      %v2300 = vld [vmem:[#allocation2 + $0x44] sm:$0x1]
      %v2301 = vld [vmem:[#allocation2 + $0x50] sm:$0x1]
      %v2302 = vld [vmem:[#allocation2 + $0x5c] sm:$0x1]
      %v2303 = vld [vmem:[#allocation2 + $0x68] sm:$0x1]
      %v2304 = vld [vmem:[#allocation2 + $0x74] sm:$0x1]
      %v2305 = vld [vmem:[#allocation2 + $0x80] sm:$0x1]
      %v2306 = vld [vmem:[#allocation2 + $0x8c] sm:$0x1]
      %v2307 = vld [vmem:[#allocation2 + $0x98] sm:$0x1]
      %v2308 = vld [vmem:[#allocation2 + $0xa4] sm:$0x1]
      %v2309 = vld [vmem:[#allocation2 + $0xb0] sm:$0x1]
      %v2310 = vld [vmem:[#allocation2 + $0xbc] sm:$0x1]
      %vm2311 = vsmask.f32 3328
      %vm2312 = vsmask.f32 7440
      %vm2313 = vmor %vm2311, %vm2312
      %v2315 = vshrl.u32 %v2259, 16
      %v2317 = vrot.slane %v2315, 4
      %v2318 = vshll.u32 %v2259, 16
      %v2320 = vrot.slane %v2318, 5
      %v2321 = vor.u32 %v2317, %v2320
      %v2322 = vrot.slane %v2321, 4
      %v2324 = vshll.u32 %v2260, 16
      %v2326 = vrot.slane %v2324, 5
      %v2327 = vsel %vm2313, %v2322, %v2326
      %v2328 = vshrl.u32 %v2260, 16
      %v2330 = vrot.slane %v2328, 4
      %v2331 = vor.u32 %v2330, %v2326
      %v2332 = vrot.slane %v2331, 4
      %v2334 = vshll.u32 %v2295, 16
      %v2336 = vrot.slane %v2334, 5
      %v2337 = vsel %vm2313, %v2332, %v2336
      %v2339 = vshrl.u32 %v2261, 16
      %v2341 = vrot.slane %v2339, 4
      %v2342 = vshll.u32 %v2261, 16
      %v2344 = vrot.slane %v2342, 5
      %v2345 = vor.u32 %v2341, %v2344
      %v2346 = vrot.slane %v2345, 4
      %v2348 = vshll.u32 %v2262, 16
      %v2350 = vrot.slane %v2348, 5
      %v2351 = vsel %vm2313, %v2346, %v2350
      %v2352 = vshrl.u32 %v2262, 16
      %v2354 = vrot.slane %v2352, 4
      %v2355 = vor.u32 %v2354, %v2350
      %v2356 = vrot.slane %v2355, 4
      %v2358 = vshll.u32 %v2296, 16
      %v2360 = vrot.slane %v2358, 5
      %v2361 = vsel %vm2313, %v2356, %v2360
      %v2363 = vshrl.u32 %v2263, 16
      %v2365 = vrot.slane %v2363, 4
      %v2366 = vshll.u32 %v2263, 16
      %v2368 = vrot.slane %v2366, 5
      %v2369 = vor.u32 %v2365, %v2368
      %v2370 = vrot.slane %v2369, 4
      %v2372 = vshll.u32 %v2264, 16
      %v2374 = vrot.slane %v2372, 5
      %v2375 = vsel %vm2313, %v2370, %v2374
      %v2376 = vshrl.u32 %v2264, 16
      %v2378 = vrot.slane %v2376, 4
      %v2379 = vor.u32 %v2378, %v2374
      %v2380 = vrot.slane %v2379, 4
      %v2382 = vshll.u32 %v2297, 16
      %v2384 = vrot.slane %v2382, 5
      %v2385 = vsel %vm2313, %v2380, %v2384
      %v2387 = vshrl.u32 %v2265, 16
      %v2389 = vrot.slane %v2387, 4
      %v2390 = vshll.u32 %v2265, 16
      %v2392 = vrot.slane %v2390, 5
      %v2393 = vor.u32 %v2389, %v2392
      %v2394 = vrot.slane %v2393, 4
      %v2396 = vshll.u32 %v2266, 16
      %v2398 = vrot.slane %v2396, 5
      %v2399 = vsel %vm2313, %v2394, %v2398
      %v2400 = vshrl.u32 %v2266, 16
      %v2402 = vrot.slane %v2400, 4
      %v2403 = vor.u32 %v2402, %v2398
      %v2404 = vrot.slane %v2403, 4
      %v2406 = vshll.u32 %v2298, 16
      %v2408 = vrot.slane %v2406, 5
      %v2409 = vsel %vm2313, %v2404, %v2408
      %v2411 = vshrl.u32 %v2267, 16
      %v2413 = vrot.slane %v2411, 4
      %v2414 = vshll.u32 %v2267, 16
      %v2416 = vrot.slane %v2414, 5
      %v2417 = vor.u32 %v2413, %v2416
      %v2418 = vrot.slane %v2417, 4
      %v2420 = vshll.u32 %v2268, 16
      %v2422 = vrot.slane %v2420, 5
      %v2423 = vsel %vm2313, %v2418, %v2422
      %v2424 = vshrl.u32 %v2268, 16
      %v2426 = vrot.slane %v2424, 4
      %v2427 = vor.u32 %v2426, %v2422
      %v2428 = vrot.slane %v2427, 4
      %v2430 = vshll.u32 %v2299, 16
      %v2432 = vrot.slane %v2430, 5
      %v2433 = vsel %vm2313, %v2428, %v2432
      %v2435 = vshrl.u32 %v2269, 16
      %v2437 = vrot.slane %v2435, 4
      %v2438 = vshll.u32 %v2269, 16
      %v2440 = vrot.slane %v2438, 5
      %v2441 = vor.u32 %v2437, %v2440
      %v2442 = vrot.slane %v2441, 4
      %v2444 = vshll.u32 %v2270, 16
      %v2446 = vrot.slane %v2444, 5
      %v2447 = vsel %vm2313, %v2442, %v2446
      %v2448 = vshrl.u32 %v2270, 16
      %v2450 = vrot.slane %v2448, 4
      %v2451 = vor.u32 %v2450, %v2446
      %v2452 = vrot.slane %v2451, 4
      %v2454 = vshll.u32 %v2300, 16
      %v2456 = vrot.slane %v2454, 5
      %v2457 = vsel %vm2313, %v2452, %v2456
      %v2459 = vshrl.u32 %v2271, 16
      %v2461 = vrot.slane %v2459, 4
      %v2462 = vshll.u32 %v2271, 16
      %v2464 = vrot.slane %v2462, 5
      %v2465 = vor.u32 %v2461, %v2464
      %v2466 = vrot.slane %v2465, 4
      %v2468 = vshll.u32 %v2272, 16
      %v2470 = vrot.slane %v2468, 5
      %v2471 = vsel %vm2313, %v2466, %v2470
      %v2472 = vshrl.u32 %v2272, 16
      %v2474 = vrot.slane %v2472, 4
      %v2475 = vor.u32 %v2474, %v2470
      %v2476 = vrot.slane %v2475, 4
      %v2478 = vshll.u32 %v2301, 16
      %v2480 = vrot.slane %v2478, 5
      %v2481 = vsel %vm2313, %v2476, %v2480
      %v2483 = vshrl.u32 %v2273, 16
      %v2485 = vrot.slane %v2483, 4
      %v2486 = vshll.u32 %v2273, 16
      %v2488 = vrot.slane %v2486, 5
      %v2489 = vor.u32 %v2485, %v2488
      %v2490 = vrot.slane %v2489, 4
      %v2492 = vshll.u32 %v2274, 16
      %v2494 = vrot.slane %v2492, 5
      %v2495 = vsel %vm2313, %v2490, %v2494
      %v2496 = vshrl.u32 %v2274, 16
      %v2498 = vrot.slane %v2496, 4
      %v2499 = vor.u32 %v2498, %v2494
      %v2500 = vrot.slane %v2499, 4
      %v2502 = vshll.u32 %v2302, 16
      %v2504 = vrot.slane %v2502, 5
      %v2505 = vsel %vm2313, %v2500, %v2504
      %v2507 = vshrl.u32 %v2275, 16
      %v2509 = vrot.slane %v2507, 4
      %v2510 = vshll.u32 %v2275, 16
      %v2512 = vrot.slane %v2510, 5
      %v2513 = vor.u32 %v2509, %v2512
      %v2514 = vrot.slane %v2513, 4
      %v2516 = vshll.u32 %v2276, 16
      %v2518 = vrot.slane %v2516, 5
      %v2519 = vsel %vm2313, %v2514, %v2518
      %v2520 = vshrl.u32 %v2276, 16
      %v2522 = vrot.slane %v2520, 4
      %v2523 = vor.u32 %v2522, %v2518
      %v2524 = vrot.slane %v2523, 4
      %v2526 = vshll.u32 %v2303, 16
      %v2528 = vrot.slane %v2526, 5
      %v2529 = vsel %vm2313, %v2524, %v2528
      %v2531 = vshrl.u32 %v2277, 16
      %v2533 = vrot.slane %v2531, 4
      %v2534 = vshll.u32 %v2277, 16
      %v2536 = vrot.slane %v2534, 5
      %v2537 = vor.u32 %v2533, %v2536
      %v2538 = vrot.slane %v2537, 4
      %v2540 = vshll.u32 %v2278, 16
      %v2542 = vrot.slane %v2540, 5
      %v2543 = vsel %vm2313, %v2538, %v2542
      %v2544 = vshrl.u32 %v2278, 16
      %v2546 = vrot.slane %v2544, 4
      %v2547 = vor.u32 %v2546, %v2542
      %v2548 = vrot.slane %v2547, 4
      %v2550 = vshll.u32 %v2304, 16
      %v2552 = vrot.slane %v2550, 5
      %v2553 = vsel %vm2313, %v2548, %v2552
      %v2555 = vshrl.u32 %v2279, 16
      %v2557 = vrot.slane %v2555, 4
      %v2558 = vshll.u32 %v2279, 16
      %v2560 = vrot.slane %v2558, 5
      %v2561 = vor.u32 %v2557, %v2560
      %v2562 = vrot.slane %v2561, 4
      %v2564 = vshll.u32 %v2280, 16
      %v2566 = vrot.slane %v2564, 5
      %v2567 = vsel %vm2313, %v2562, %v2566
      %v2568 = vshrl.u32 %v2280, 16
      %v2570 = vrot.slane %v2568, 4
      %v2571 = vor.u32 %v2570, %v2566
      %v2572 = vrot.slane %v2571, 4
      %v2574 = vshll.u32 %v2305, 16
      %v2576 = vrot.slane %v2574, 5
      %v2577 = vsel %vm2313, %v2572, %v2576
      %v2579 = vshrl.u32 %v2281, 16
      %v2581 = vrot.slane %v2579, 4
      %v2582 = vshll.u32 %v2281, 16
      %v2584 = vrot.slane %v2582, 5
      %v2585 = vor.u32 %v2581, %v2584
      %v2586 = vrot.slane %v2585, 4
      %v2588 = vshll.u32 %v2282, 16
      %v2590 = vrot.slane %v2588, 5
      %v2591 = vsel %vm2313, %v2586, %v2590
      %v2592 = vshrl.u32 %v2282, 16
      %v2594 = vrot.slane %v2592, 4
      %v2595 = vor.u32 %v2594, %v2590
      %v2596 = vrot.slane %v2595, 4
      %v2598 = vshll.u32 %v2306, 16
      %v2600 = vrot.slane %v2598, 5
      %v2601 = vsel %vm2313, %v2596, %v2600
      %v2603 = vshrl.u32 %v2283, 16
      %v2605 = vrot.slane %v2603, 4
      %v2606 = vshll.u32 %v2283, 16
      %v2608 = vrot.slane %v2606, 5
      %v2609 = vor.u32 %v2605, %v2608
      %v2610 = vrot.slane %v2609, 4
      %v2612 = vshll.u32 %v2284, 16
      %v2614 = vrot.slane %v2612, 5
      %v2615 = vsel %vm2313, %v2610, %v2614
      %v2616 = vshrl.u32 %v2284, 16
      %v2618 = vrot.slane %v2616, 4
      %v2619 = vor.u32 %v2618, %v2614
      %v2620 = vrot.slane %v2619, 4
      %v2622 = vshll.u32 %v2307, 16
      %v2624 = vrot.slane %v2622, 5
      %v2625 = vsel %vm2313, %v2620, %v2624
      %v2627 = vshrl.u32 %v2285, 16
      %v2629 = vrot.slane %v2627, 4
      %v2630 = vshll.u32 %v2285, 16
      %v2632 = vrot.slane %v2630, 5
      %v2633 = vor.u32 %v2629, %v2632
      %v2634 = vrot.slane %v2633, 4
      %v2636 = vshll.u32 %v2286, 16
      %v2638 = vrot.slane %v2636, 5
      %v2639 = vsel %vm2313, %v2634, %v2638
      %v2640 = vshrl.u32 %v2286, 16
      %v2642 = vrot.slane %v2640, 4
      %v2643 = vor.u32 %v2642, %v2638
      %v2644 = vrot.slane %v2643, 4
      %v2646 = vshll.u32 %v2308, 16
      %v2648 = vrot.slane %v2646, 5
      %v2649 = vsel %vm2313, %v2644, %v2648
      %v2651 = vshrl.u32 %v2287, 16
      %v2653 = vrot.slane %v2651, 4
      %v2654 = vshll.u32 %v2287, 16
      %v2656 = vrot.slane %v2654, 5
      %v2657 = vor.u32 %v2653, %v2656
      %v2658 = vrot.slane %v2657, 4
      %v2660 = vshll.u32 %v2288, 16
      %v2662 = vrot.slane %v2660, 5
      %v2663 = vsel %vm2313, %v2658, %v2662
      %v2664 = vshrl.u32 %v2288, 16
      %v2666 = vrot.slane %v2664, 4
      %v2667 = vor.u32 %v2666, %v2662
      %v2668 = vrot.slane %v2667, 4
      %v2670 = vshll.u32 %v2309, 16
      %v2672 = vrot.slane %v2670, 5
      %v2673 = vsel %vm2313, %v2668, %v2672
      %v2675 = vshrl.u32 %v2289, 16
      %v2677 = vrot.slane %v2675, 4
      %v2678 = vshll.u32 %v2289, 16
      %v2680 = vrot.slane %v2678, 5
      %v2681 = vor.u32 %v2677, %v2680
      %v2682 = vrot.slane %v2681, 4
      %v2684 = vshll.u32 %v2290, 16
      %v2686 = vrot.slane %v2684, 5
      %v2687 = vsel %vm2313, %v2682, %v2686
      %v2688 = vshrl.u32 %v2290, 16
      %v2690 = vrot.slane %v2688, 4
      %v2691 = vor.u32 %v2690, %v2686
      %v2692 = vrot.slane %v2691, 4
      %v2694 = vshll.u32 %v2310, 16
      %v2696 = vrot.slane %v2694, 5
      %v2697 = vsel %vm2313, %v2692, %v2696
      %s2698 = scalar_lea.vmem %s6, 16
      %v2699 = vld [vmem:[%s2698] sm:$0xf]
      %v2700 = vld [vmem:[%s2698 + $0x4] sm:$0xf]
      %v2701 = vld [vmem:[%s2698 + $0x8] sm:$0xf]
      %v2702 = vld [vmem:[%s2698 + $0xc] sm:$0xf]
      %v2703 = vunpack.c.l.b16 %v2327
      %v2704 = vunpack.c.l.b16 %v2337
      %v2705 = vunpack.c.l.b16 %v2351
      %v2706 = vunpack.c.l.b16 %v2361
      %v2707 = vunpack.c.l.b16 %v2375
      %v2708 = vunpack.c.l.b16 %v2385
      %v2709 = vunpack.c.l.b16 %v2399
      %v2710 = vunpack.c.l.b16 %v2409
      %v2711 = vunpack.c.l.b16 %v2423
      %v2712 = vunpack.c.l.b16 %v2433
      %v2713 = vunpack.c.l.b16 %v2447
      %v2714 = vunpack.c.l.b16 %v2457
      %v2715 = vunpack.c.l.b16 %v2471
      %v2716 = vunpack.c.l.b16 %v2481
      %v2717 = vunpack.c.l.b16 %v2495
      %v2718 = vunpack.c.l.b16 %v2505
      %v2719 = vunpack.c.l.b16 %v2519
      %v2720 = vunpack.c.l.b16 %v2529
      %v2721 = vunpack.c.l.b16 %v2543
      %v2722 = vunpack.c.l.b16 %v2553
      %v2723 = vunpack.c.l.b16 %v2567
      %v2724 = vunpack.c.l.b16 %v2577
      %v2725 = vunpack.c.l.b16 %v2591
      %v2726 = vunpack.c.l.b16 %v2601
      %v2727 = vunpack.c.l.b16 %v2615
      %v2728 = vunpack.c.l.b16 %v2625
      %v2729 = vunpack.c.l.b16 %v2639
      %v2730 = vunpack.c.l.b16 %v2649
      %v2731 = vunpack.c.l.b16 %v2663
      %v2732 = vunpack.c.l.b16 %v2673
      %v2733 = vunpack.c.l.b16 %v2687
      %v2734 = vunpack.c.l.b16 %v2697
      %v2735 = vpack.c.b16 %v2704, %v2703
      %v2736 = vpack.c.b16 %v2706, %v2705
      %v2737 = vpack.c.b16 %v2708, %v2707
      %v2738 = vpack.c.b16 %v2710, %v2709
      %v2739 = vpack.c.b16 %v2712, %v2711
      %v2740 = vpack.c.b16 %v2714, %v2713
      %v2741 = vpack.c.b16 %v2716, %v2715
      %v2742 = vpack.c.b16 %v2718, %v2717
      %v2743 = vpack.c.b16 %v2720, %v2719
      %v2744 = vpack.c.b16 %v2722, %v2721
      %v2745 = vpack.c.b16 %v2724, %v2723
      %v2746 = vpack.c.b16 %v2726, %v2725
      %v2747 = vpack.c.b16 %v2728, %v2727
      %v2748 = vpack.c.b16 %v2730, %v2729
      %v2749 = vpack.c.b16 %v2732, %v2731
      %v2750 = vpack.c.b16 %v2734, %v2733
      %v2755 = vunpack.c.l.b16 %v2699
      %v2756 = vunpack.c.l.b16 %v2700
      %v2757 = vunpack.c.l.b16 %v2701
      %v2758 = vunpack.c.l.b16 %v2702
      %v2759 = vpack.c.b16 %v2756, %v2755
      %v2760 = vpack.c.b16 %v2758, %v2757
      %v2764 = vsel %vm663, %v2735, 0
      %v2767 = vsel %vm663, %v2736, 0
      %v2770 = vsel %vm663, %v2737, 0
      %v2773 = vsel %vm663, %v2738, 0
      %v2776 = vsel %vm663, %v2739, 0
      %v2779 = vsel %vm663, %v2740, 0
      %v2782 = vsel %vm663, %v2741, 0
      %v2785 = vsel %vm663, %v2742, 0
      %v2788 = vsel %vm663, %v2743, 0
      %v2791 = vsel %vm663, %v2744, 0
      %v2794 = vsel %vm663, %v2745, 0
      %v2797 = vsel %vm663, %v2746, 0
      %v2800 = vsel %vm663, %v2747, 0
      %v2803 = vsel %vm663, %v2748, 0
      %v2806 = vsel %vm663, %v2749, 0
      %v2809 = vsel %vm663, %v2750, 0
      %2811 = vmatprep.subr.bf16.mxu0 0
      %2812 = vmatpush1.bf16.msra.mxu0 %v2759
      %2813 = vmatprep.subr.bf16.mxu0 0
      %2814 = vmatpush1.bf16.msra.mxu0 %v2760
      %2815 = vmatprep.subr.bf16.mxu0 0
      %2816 = vmatpush1.bf16.msra.mxu0 0
      %2817 = vmatprep.subr.bf16.mxu0 0
      %2818 = vmatpush1.bf16.msra.mxu0 0
      %2819 = vmatprep.subr.bf16.mxu0 0
      %2820 = vmatpush1.bf16.msra.mxu0 0
      %2821 = vmatprep.subr.bf16.mxu0 0
      %2822 = vmatpush1.bf16.msra.mxu0 0
      %2823 = vmatprep.subr.bf16.mxu0 0
      %2824 = vmatpush1.bf16.msra.mxu0 0
      %2825 = vmatprep.subr.bf16.mxu0 0
      %2826 = vmatpush1.bf16.msra.mxu0 0
      %2827 = vmatprep.subr.bf16.mxu0 0
      %2828 = vmatpush1.bf16.msra.mxu0 0
      %2829 = vmatprep.subr.bf16.mxu0 0
      %2830 = vmatpush1.bf16.msra.mxu0 0
      %2831 = vmatprep.subr.bf16.mxu0 0
      %2832 = vmatpush1.bf16.msra.mxu0 0
      %2833 = vmatprep.subr.bf16.mxu0 0
      %2834 = vmatpush1.bf16.msra.mxu0 0
      %2835 = vmatprep.subr.bf16.mxu0 0
      %2836 = vmatpush1.bf16.msra.mxu0 0
      %2837 = vmatprep.subr.bf16.mxu0 0
      %2838 = vmatpush1.bf16.msra.mxu0 0
      %2839 = vmatprep.subr.bf16.mxu0 0
      %2840 = vmatpush1.bf16.msra.mxu0 0
      %2841 = vmatprep.subr.bf16.mxu0 0
      %2842 = vmatpush1.bf16.msra.mxu0 0
      %2843 = vmatprep.mubr.bf16.mxu0 0
      %2844 = vmatmul.mubr.bf16.gmra.mrb[0].mxu0 %v2764
      %v2845 = vpop.f32.mrb[0].mxu0
      %v2846 = vadd.f32 0.0, %v2845
      %v2847 = vpop.f32.mrb[0].mxu0
      %v2848 = vpop.f32.mrb[0].mxu0
      %v2849 = vadd.f32 0.0, %v2848
      %v2850 = vpop.f32.mrb[0].mxu0
      %2851 = vmatprep.mubr.bf16.mxu0 0
      %2852 = vmatmul.mubr.bf16.gmra.mrb[0].mxu0 %v2767
      %v2853 = vpop.f32.mrb[0].mxu0
      %v2854 = vadd.f32 0.0, %v2853
      %v2855 = vpop.f32.mrb[0].mxu0
      %v2856 = vpop.f32.mrb[0].mxu0
      %v2857 = vadd.f32 0.0, %v2856
      %v2858 = vpop.f32.mrb[0].mxu0
      %2859 = vmatprep.mubr.bf16.mxu0 0
      %2860 = vmatmul.mubr.bf16.gmra.mrb[0].mxu0 %v2770
      %v2861 = vpop.f32.mrb[0].mxu0
      %v2862 = vadd.f32 0.0, %v2861
      %v2863 = vpop.f32.mrb[0].mxu0
      %v2864 = vpop.f32.mrb[0].mxu0
      %v2865 = vadd.f32 0.0, %v2864
      %v2866 = vpop.f32.mrb[0].mxu0
      %2867 = vmatprep.mubr.bf16.mxu0 0
      %2868 = vmatmul.mubr.bf16.gmra.mrb[0].mxu0 %v2773
      %v2869 = vpop.f32.mrb[0].mxu0
      %v2870 = vadd.f32 0.0, %v2869
      %v2871 = vpop.f32.mrb[0].mxu0
      %v2872 = vpop.f32.mrb[0].mxu0
      %v2873 = vadd.f32 0.0, %v2872
      %v2874 = vpop.f32.mrb[0].mxu0
      %2875 = vmatprep.mubr.bf16.mxu0 0
      %2876 = vmatmul.mubr.bf16.gmra.mrb[0].mxu0 %v2776
      %v2877 = vpop.f32.mrb[0].mxu0
      %v2878 = vadd.f32 0.0, %v2877
      %v2879 = vpop.f32.mrb[0].mxu0
      %v2880 = vpop.f32.mrb[0].mxu0
      %v2881 = vadd.f32 0.0, %v2880
      %v2882 = vpop.f32.mrb[0].mxu0
      %2883 = vmatprep.mubr.bf16.mxu0 0
      %2884 = vmatmul.mubr.bf16.gmra.mrb[0].mxu0 %v2779
      %v2885 = vpop.f32.mrb[0].mxu0
      %v2886 = vadd.f32 0.0, %v2885
      %v2887 = vpop.f32.mrb[0].mxu0
      %v2888 = vpop.f32.mrb[0].mxu0
      %v2889 = vadd.f32 0.0, %v2888
      %v2890 = vpop.f32.mrb[0].mxu0
      %2891 = vmatprep.mubr.bf16.mxu0 0
      %2892 = vmatmul.mubr.bf16.gmra.mrb[0].mxu0 %v2782
      %v2893 = vpop.f32.mrb[0].mxu0
      %v2894 = vadd.f32 0.0, %v2893
      %v2895 = vpop.f32.mrb[0].mxu0
      %v2896 = vpop.f32.mrb[0].mxu0
      %v2897 = vadd.f32 0.0, %v2896
      %v2898 = vpop.f32.mrb[0].mxu0
      %2899 = vmatprep.mubr.bf16.mxu0 0
      %2900 = vmatmul.mubr.bf16.gmra.mrb[0].mxu0 %v2785
      %v2901 = vpop.f32.mrb[0].mxu0
      %v2902 = vadd.f32 0.0, %v2901
      %v2903 = vpop.f32.mrb[0].mxu0
      %v2904 = vpop.f32.mrb[0].mxu0
      %v2905 = vadd.f32 0.0, %v2904
      %v2906 = vpop.f32.mrb[0].mxu0
      %2907 = vmatprep.mubr.bf16.mxu0 0
      %2908 = vmatmul.mubr.bf16.gmra.mrb[0].mxu0 %v2788
      %v2909 = vpop.f32.mrb[0].mxu0
      %v2910 = vadd.f32 0.0, %v2909
      %v2911 = vpop.f32.mrb[0].mxu0
      %v2912 = vpop.f32.mrb[0].mxu0
      %v2913 = vadd.f32 0.0, %v2912
      %v2914 = vpop.f32.mrb[0].mxu0
      %2915 = vmatprep.mubr.bf16.mxu0 0
      %2916 = vmatmul.mubr.bf16.gmra.mrb[0].mxu0 %v2791
      %v2917 = vpop.f32.mrb[0].mxu0
      %v2918 = vadd.f32 0.0, %v2917
      %v2919 = vpop.f32.mrb[0].mxu0
      %v2920 = vpop.f32.mrb[0].mxu0
      %v2921 = vadd.f32 0.0, %v2920
      %v2922 = vpop.f32.mrb[0].mxu0
      %2923 = vmatprep.mubr.bf16.mxu0 0
      %2924 = vmatmul.mubr.bf16.gmra.mrb[0].mxu0 %v2794
      %v2925 = vpop.f32.mrb[0].mxu0
      %v2926 = vadd.f32 0.0, %v2925
      %v2927 = vpop.f32.mrb[0].mxu0
      %v2928 = vpop.f32.mrb[0].mxu0
      %v2929 = vadd.f32 0.0, %v2928
      %v2930 = vpop.f32.mrb[0].mxu0
      %2931 = vmatprep.mubr.bf16.mxu0 0
      %2932 = vmatmul.mubr.bf16.gmra.mrb[0].mxu0 %v2797
      %v2933 = vpop.f32.mrb[0].mxu0
      %v2934 = vadd.f32 0.0, %v2933
      %v2935 = vpop.f32.mrb[0].mxu0
      %v2936 = vpop.f32.mrb[0].mxu0
      %v2937 = vadd.f32 0.0, %v2936
      %v2938 = vpop.f32.mrb[0].mxu0
      %2939 = vmatprep.mubr.bf16.mxu0 0
      %2940 = vmatmul.mubr.bf16.gmra.mrb[0].mxu0 %v2800
      %v2941 = vpop.f32.mrb[0].mxu0
      %v2942 = vadd.f32 0.0, %v2941
      %v2943 = vpop.f32.mrb[0].mxu0
      %v2944 = vpop.f32.mrb[0].mxu0
      %v2945 = vadd.f32 0.0, %v2944
      %v2946 = vpop.f32.mrb[0].mxu0
      %2947 = vmatprep.mubr.bf16.mxu0 0
      %2948 = vmatmul.mubr.bf16.gmra.mrb[0].mxu0 %v2803
      %v2949 = vpop.f32.mrb[0].mxu0
      %v2950 = vadd.f32 0.0, %v2949
      %v2951 = vpop.f32.mrb[0].mxu0
      %v2952 = vpop.f32.mrb[0].mxu0
      %v2953 = vadd.f32 0.0, %v2952
      %v2954 = vpop.f32.mrb[0].mxu0
      %2955 = vmatprep.mubr.bf16.mxu0 0
      %2956 = vmatmul.mubr.bf16.gmra.mrb[0].mxu0 %v2806
      %v2957 = vpop.f32.mrb[0].mxu0
      %v2958 = vadd.f32 0.0, %v2957
      %v2959 = vpop.f32.mrb[0].mxu0
      %v2960 = vpop.f32.mrb[0].mxu0
      %v2961 = vadd.f32 0.0, %v2960
      %v2962 = vpop.f32.mrb[0].mxu0
      %2963 = vmatprep.mubr.bf16.mxu0 0
      %2964 = vmatmul.mubr.bf16.gmra.mrb[0].mxu0 %v2809
      %v2965 = vpop.f32.mrb[0].mxu0
      %v2966 = vadd.f32 0.0, %v2965
      %v2967 = vpop.f32.mrb[0].mxu0
      %v2968 = vpop.f32.mrb[0].mxu0
      %v2969 = vadd.f32 0.0, %v2968
      %v2970 = vpop.f32.mrb[0].mxu0
      %2971 = vdwg.mxu0
      %v3004 = vunpack.c.l.b16 %v2259
      %v3005 = vunpack.c.l.b16 %v2260
      %v3006 = vunpack.c.l.b16 %v2261
      %v3007 = vunpack.c.l.b16 %v2262
      %v3008 = vunpack.c.l.b16 %v2263
      %v3009 = vunpack.c.l.b16 %v2264
      %v3010 = vunpack.c.l.b16 %v2265
      %v3011 = vunpack.c.l.b16 %v2266
      %v3012 = vunpack.c.l.b16 %v2267
      %v3013 = vunpack.c.l.b16 %v2268
      %v3014 = vunpack.c.l.b16 %v2269
      %v3015 = vunpack.c.l.b16 %v2270
      %v3016 = vunpack.c.l.b16 %v2271
      %v3017 = vunpack.c.l.b16 %v2272
      %v3018 = vunpack.c.l.b16 %v2273
      %v3019 = vunpack.c.l.b16 %v2274
      %v3020 = vunpack.c.l.b16 %v2275
      %v3021 = vunpack.c.l.b16 %v2276
      %v3022 = vunpack.c.l.b16 %v2277
      %v3023 = vunpack.c.l.b16 %v2278
      %v3024 = vunpack.c.l.b16 %v2279
      %v3025 = vunpack.c.l.b16 %v2280
      %v3026 = vunpack.c.l.b16 %v2281
      %v3027 = vunpack.c.l.b16 %v2282
      %v3028 = vunpack.c.l.b16 %v2283
      %v3029 = vunpack.c.l.b16 %v2284
      %v3030 = vunpack.c.l.b16 %v2285
      %v3031 = vunpack.c.l.b16 %v2286
      %v3032 = vunpack.c.l.b16 %v2287
      %v3033 = vunpack.c.l.b16 %v2288
      %v3034 = vunpack.c.l.b16 %v2289
      %v3035 = vunpack.c.l.b16 %v2290
      %v3036 = vpack.c.b16 %v3005, %v3004
      %v3037 = vpack.c.b16 %v3007, %v3006
      %v3038 = vpack.c.b16 %v3009, %v3008
      %v3039 = vpack.c.b16 %v3011, %v3010
      %v3040 = vpack.c.b16 %v3013, %v3012
      %v3041 = vpack.c.b16 %v3015, %v3014
      %v3042 = vpack.c.b16 %v3017, %v3016
      %v3043 = vpack.c.b16 %v3019, %v3018
      %v3044 = vpack.c.b16 %v3021, %v3020
      %v3045 = vpack.c.b16 %v3023, %v3022
      %v3046 = vpack.c.b16 %v3025, %v3024
      %v3047 = vpack.c.b16 %v3027, %v3026
      %v3048 = vpack.c.b16 %v3029, %v3028
      %v3049 = vpack.c.b16 %v3031, %v3030
      %v3050 = vpack.c.b16 %v3033, %v3032
      %v3051 = vpack.c.b16 %v3035, %v3034
      %v3056 = vunpack.c.l.b16 %v2291
      %v3057 = vunpack.c.l.b16 %v2292
      %v3058 = vunpack.c.l.b16 %v2293
      %v3059 = vunpack.c.l.b16 %v2294
      %v3060 = vpack.c.b16 %v3057, %v3056
      %v3061 = vpack.c.b16 %v3059, %v3058
      %v3065 = vsel %vm663, %v3036, 0
      %v3068 = vsel %vm663, %v3037, 0
      %v3071 = vsel %vm663, %v3038, 0
      %v3074 = vsel %vm663, %v3039, 0
      %v3077 = vsel %vm663, %v3040, 0
      %v3080 = vsel %vm663, %v3041, 0
      %v3083 = vsel %vm663, %v3042, 0
      %v3086 = vsel %vm663, %v3043, 0
      %v3089 = vsel %vm663, %v3044, 0
      %v3092 = vsel %vm663, %v3045, 0
      %v3095 = vsel %vm663, %v3046, 0
      %v3098 = vsel %vm663, %v3047, 0
      %v3101 = vsel %vm663, %v3048, 0
      %v3104 = vsel %vm663, %v3049, 0
      %v3107 = vsel %vm663, %v3050, 0
      %v3110 = vsel %vm663, %v3051, 0
      %3112 = vmatprep.subr.bf16.mxu0 0
      %3113 = vmatpush1.bf16.msra.mxu0 %v3060
      %3114 = vmatprep.subr.bf16.mxu0 0
      %3115 = vmatpush1.bf16.msra.mxu0 %v3061
      %3116 = vmatprep.subr.bf16.mxu0 0
      %3117 = vmatpush1.bf16.msra.mxu0 0
      %3118 = vmatprep.subr.bf16.mxu0 0
      %3119 = vmatpush1.bf16.msra.mxu0 0
      %3120 = vmatprep.subr.bf16.mxu0 0
      %3121 = vmatpush1.bf16.msra.mxu0 0
      %3122 = vmatprep.subr.bf16.mxu0 0
      %3123 = vmatpush1.bf16.msra.mxu0 0
      %3124 = vmatprep.subr.bf16.mxu0 0
      %3125 = vmatpush1.bf16.msra.mxu0 0
      %3126 = vmatprep.subr.bf16.mxu0 0
      %3127 = vmatpush1.bf16.msra.mxu0 0
      %3128 = vmatprep.subr.bf16.mxu0 0
      %3129 = vmatpush1.bf16.msra.mxu0 0
      %3130 = vmatprep.subr.bf16.mxu0 0
      %3131 = vmatpush1.bf16.msra.mxu0 0
      %3132 = vmatprep.subr.bf16.mxu0 0
      %3133 = vmatpush1.bf16.msra.mxu0 0
      %3134 = vmatprep.subr.bf16.mxu0 0
      %3135 = vmatpush1.bf16.msra.mxu0 0
      %3136 = vmatprep.subr.bf16.mxu0 0
      %3137 = vmatpush1.bf16.msra.mxu0 0
      %3138 = vmatprep.subr.bf16.mxu0 0
      %3139 = vmatpush1.bf16.msra.mxu0 0
      %3140 = vmatprep.subr.bf16.mxu0 0
      %3141 = vmatpush1.bf16.msra.mxu0 0
      %3142 = vmatprep.subr.bf16.mxu0 0
      %3143 = vmatpush1.bf16.msra.mxu0 0
      %3144 = vmatprep.mubr.bf16.mxu0 0
      %3145 = vmatmul.mubr.bf16.gmra.mrb[0].mxu0 %v3065
      %v3146 = vpop.f32.mrb[0].mxu0
      %v3147 = vadd.f32 %v2846, %v3146
      %v3148 = vpop.f32.mrb[0].mxu0
      %v3149 = vpop.f32.mrb[0].mxu0
      %v3150 = vadd.f32 %v2849, %v3149
      %v3151 = vpop.f32.mrb[0].mxu0
      %3152 = vmatprep.mubr.bf16.mxu0 0
      %3153 = vmatmul.mubr.bf16.gmra.mrb[0].mxu0 %v3068
      %v3154 = vpop.f32.mrb[0].mxu0
      %v3155 = vadd.f32 %v2854, %v3154
      %v3156 = vpop.f32.mrb[0].mxu0
      %v3157 = vpop.f32.mrb[0].mxu0
      %v3158 = vadd.f32 %v2857, %v3157
      %v3159 = vpop.f32.mrb[0].mxu0
      %3160 = vmatprep.mubr.bf16.mxu0 0
      %3161 = vmatmul.mubr.bf16.gmra.mrb[0].mxu0 %v3071
      %v3162 = vpop.f32.mrb[0].mxu0
      %v3163 = vadd.f32 %v2862, %v3162
      %v3164 = vpop.f32.mrb[0].mxu0
      %v3165 = vpop.f32.mrb[0].mxu0
      %v3166 = vadd.f32 %v2865, %v3165
      %v3167 = vpop.f32.mrb[0].mxu0
      %3168 = vmatprep.mubr.bf16.mxu0 0
      %3169 = vmatmul.mubr.bf16.gmra.mrb[0].mxu0 %v3074
      %v3170 = vpop.f32.mrb[0].mxu0
      %v3171 = vadd.f32 %v2870, %v3170
      %v3172 = vpop.f32.mrb[0].mxu0
      %v3173 = vpop.f32.mrb[0].mxu0
      %v3174 = vadd.f32 %v2873, %v3173
      %v3175 = vpop.f32.mrb[0].mxu0
      %3176 = vmatprep.mubr.bf16.mxu0 0
      %3177 = vmatmul.mubr.bf16.gmra.mrb[0].mxu0 %v3077
      %v3178 = vpop.f32.mrb[0].mxu0
      %v3179 = vadd.f32 %v2878, %v3178
      %v3180 = vpop.f32.mrb[0].mxu0
      %v3181 = vpop.f32.mrb[0].mxu0
      %v3182 = vadd.f32 %v2881, %v3181
      %v3183 = vpop.f32.mrb[0].mxu0
      %3184 = vmatprep.mubr.bf16.mxu0 0
      %3185 = vmatmul.mubr.bf16.gmra.mrb[0].mxu0 %v3080
      %v3186 = vpop.f32.mrb[0].mxu0
      %v3187 = vadd.f32 %v2886, %v3186
      %v3188 = vpop.f32.mrb[0].mxu0
      %v3189 = vpop.f32.mrb[0].mxu0
      %v3190 = vadd.f32 %v2889, %v3189
      %v3191 = vpop.f32.mrb[0].mxu0
      %3192 = vmatprep.mubr.bf16.mxu0 0
      %3193 = vmatmul.mubr.bf16.gmra.mrb[0].mxu0 %v3083
      %v3194 = vpop.f32.mrb[0].mxu0
      %v3195 = vadd.f32 %v2894, %v3194
      %v3196 = vpop.f32.mrb[0].mxu0
      %v3197 = vpop.f32.mrb[0].mxu0
      %v3198 = vadd.f32 %v2897, %v3197
      %v3199 = vpop.f32.mrb[0].mxu0
      %3200 = vmatprep.mubr.bf16.mxu0 0
      %3201 = vmatmul.mubr.bf16.gmra.mrb[0].mxu0 %v3086
      %v3202 = vpop.f32.mrb[0].mxu0
      %v3203 = vadd.f32 %v2902, %v3202
      %v3204 = vpop.f32.mrb[0].mxu0
      %v3205 = vpop.f32.mrb[0].mxu0
      %v3206 = vadd.f32 %v2905, %v3205
      %v3207 = vpop.f32.mrb[0].mxu0
      %3208 = vmatprep.mubr.bf16.mxu0 0
      %3209 = vmatmul.mubr.bf16.gmra.mrb[0].mxu0 %v3089
      %v3210 = vpop.f32.mrb[0].mxu0
      %v3211 = vadd.f32 %v2910, %v3210
      %v3212 = vpop.f32.mrb[0].mxu0
      %v3213 = vpop.f32.mrb[0].mxu0
      %v3214 = vadd.f32 %v2913, %v3213
      %v3215 = vpop.f32.mrb[0].mxu0
      %3216 = vmatprep.mubr.bf16.mxu0 0
      %3217 = vmatmul.mubr.bf16.gmra.mrb[0].mxu0 %v3092
      %v3218 = vpop.f32.mrb[0].mxu0
      %v3219 = vadd.f32 %v2918, %v3218
      %v3220 = vpop.f32.mrb[0].mxu0
      %v3221 = vpop.f32.mrb[0].mxu0
      %v3222 = vadd.f32 %v2921, %v3221
      %v3223 = vpop.f32.mrb[0].mxu0
      %3224 = vmatprep.mubr.bf16.mxu0 0
      %3225 = vmatmul.mubr.bf16.gmra.mrb[0].mxu0 %v3095
      %v3226 = vpop.f32.mrb[0].mxu0
      %v3227 = vadd.f32 %v2926, %v3226
      %v3228 = vpop.f32.mrb[0].mxu0
      %v3229 = vpop.f32.mrb[0].mxu0
      %v3230 = vadd.f32 %v2929, %v3229
      %v3231 = vpop.f32.mrb[0].mxu0
      %3232 = vmatprep.mubr.bf16.mxu0 0
      %3233 = vmatmul.mubr.bf16.gmra.mrb[0].mxu0 %v3098
      %v3234 = vpop.f32.mrb[0].mxu0
      %v3235 = vadd.f32 %v2934, %v3234
      %v3236 = vpop.f32.mrb[0].mxu0
      %v3237 = vpop.f32.mrb[0].mxu0
      %v3238 = vadd.f32 %v2937, %v3237
      %v3239 = vpop.f32.mrb[0].mxu0
      %3240 = vmatprep.mubr.bf16.mxu0 0
      %3241 = vmatmul.mubr.bf16.gmra.mrb[0].mxu0 %v3101
      %v3242 = vpop.f32.mrb[0].mxu0
      %v3243 = vadd.f32 %v2942, %v3242
      %v3244 = vpop.f32.mrb[0].mxu0
      %v3245 = vpop.f32.mrb[0].mxu0
      %v3246 = vadd.f32 %v2945, %v3245
      %v3247 = vpop.f32.mrb[0].mxu0
      %3248 = vmatprep.mubr.bf16.mxu0 0
      %3249 = vmatmul.mubr.bf16.gmra.mrb[0].mxu0 %v3104
      %v3250 = vpop.f32.mrb[0].mxu0
      %v3251 = vadd.f32 %v2950, %v3250
      %v3252 = vpop.f32.mrb[0].mxu0
      %v3253 = vpop.f32.mrb[0].mxu0
      %v3254 = vadd.f32 %v2953, %v3253
      %v3255 = vpop.f32.mrb[0].mxu0
      %3256 = vmatprep.mubr.bf16.mxu0 0
      %3257 = vmatmul.mubr.bf16.gmra.mrb[0].mxu0 %v3107
      %v3258 = vpop.f32.mrb[0].mxu0
      %v3259 = vadd.f32 %v2958, %v3258
      %v3260 = vpop.f32.mrb[0].mxu0
      %v3261 = vpop.f32.mrb[0].mxu0
      %v3262 = vadd.f32 %v2961, %v3261
      %v3263 = vpop.f32.mrb[0].mxu0
      %3264 = vmatprep.mubr.bf16.mxu0 0
      %3265 = vmatmul.mubr.bf16.gmra.mrb[0].mxu0 %v3110
      %v3266 = vpop.f32.mrb[0].mxu0
      %v3267 = vadd.f32 %v2966, %v3266
      %v3268 = vpop.f32.mrb[0].mxu0
      %v3269 = vpop.f32.mrb[0].mxu0
      %v3270 = vadd.f32 %v2969, %v3269
      %v3271 = vpop.f32.mrb[0].mxu0
      %3272 = vdwg.mxu0
      %v3273 = vld [vmem:[#allocation2] sm:$0xe]
      %v3274 = vld [vmem:[#allocation2 + $0xc] sm:$0xe]
      %v3275 = vld [vmem:[#allocation2 + $0x18] sm:$0xe]
      %v3276 = vld [vmem:[#allocation2 + $0x24] sm:$0xe]
      %v3277 = vld [vmem:[#allocation2 + $0x30] sm:$0xe]
      %v3278 = vld [vmem:[#allocation2 + $0x3c] sm:$0xe]
      %v3279 = vld [vmem:[#allocation2 + $0x48] sm:$0xe]
      %v3280 = vld [vmem:[#allocation2 + $0x54] sm:$0xe]
      %v3281 = vld [vmem:[#allocation2 + $0x60] sm:$0xe]
      %v3282 = vld [vmem:[#allocation2 + $0x6c] sm:$0xe]
      %v3283 = vld [vmem:[#allocation2 + $0x78] sm:$0xe]
      %v3284 = vld [vmem:[#allocation2 + $0x84] sm:$0xe]
      %v3285 = vld [vmem:[#allocation2 + $0x90] sm:$0xe]
      %v3286 = vld [vmem:[#allocation2 + $0x9c] sm:$0xe]
      %v3287 = vld [vmem:[#allocation2 + $0xa8] sm:$0xe]
      %v3288 = vld [vmem:[#allocation2 + $0xb4] sm:$0xe]
      %vm3321 = vcmask 1042432
      %vm3322 = vcmask 1046532
      %vm3323 = vmor %vm3321, %vm3322
      %v3324 = vrot.slane %v3273, 5
      %v3325 = vrot.slane %v3324, 4
      %v3326 = vrot.slane %v2260, 5
      %v3327 = vsel %vm3323, %v3325, %v3326
      %v3328 = vrot.slane %v3326, 4
      %v3329 = vrot.slane %v2295, 5
      %v3330 = vsel %vm3323, %v3328, %v3329
      %v3331 = vrot.slane %v3274, 5
      %v3332 = vrot.slane %v3331, 4
      %v3333 = vrot.slane %v2262, 5
      %v3334 = vsel %vm3323, %v3332, %v3333
      %v3335 = vrot.slane %v3333, 4
      %v3336 = vrot.slane %v2296, 5
      %v3337 = vsel %vm3323, %v3335, %v3336
      %v3338 = vrot.slane %v3275, 5
      %v3339 = vrot.slane %v3338, 4
      %v3340 = vrot.slane %v2264, 5
      %v3341 = vsel %vm3323, %v3339, %v3340
      %v3342 = vrot.slane %v3340, 4
      %v3343 = vrot.slane %v2297, 5
      %v3344 = vsel %vm3323, %v3342, %v3343
      %v3345 = vrot.slane %v3276, 5
      %v3346 = vrot.slane %v3345, 4
      %v3347 = vrot.slane %v2266, 5
      %v3348 = vsel %vm3323, %v3346, %v3347
      %v3349 = vrot.slane %v3347, 4
      %v3350 = vrot.slane %v2298, 5
      %v3351 = vsel %vm3323, %v3349, %v3350
      %v3352 = vrot.slane %v3277, 5
      %v3353 = vrot.slane %v3352, 4
      %v3354 = vrot.slane %v2268, 5
      %v3355 = vsel %vm3323, %v3353, %v3354
      %v3356 = vrot.slane %v3354, 4
      %v3357 = vrot.slane %v2299, 5
      %v3358 = vsel %vm3323, %v3356, %v3357
      %v3359 = vrot.slane %v3278, 5
      %v3360 = vrot.slane %v3359, 4
      %v3361 = vrot.slane %v2270, 5
      %v3362 = vsel %vm3323, %v3360, %v3361
      %v3363 = vrot.slane %v3361, 4
      %v3364 = vrot.slane %v2300, 5
      %v3365 = vsel %vm3323, %v3363, %v3364
      %v3366 = vrot.slane %v3279, 5
      %v3367 = vrot.slane %v3366, 4
      %v3368 = vrot.slane %v2272, 5
      %v3369 = vsel %vm3323, %v3367, %v3368
      %v3370 = vrot.slane %v3368, 4
      %v3371 = vrot.slane %v2301, 5
      %v3372 = vsel %vm3323, %v3370, %v3371
      %v3373 = vrot.slane %v3280, 5
      %v3374 = vrot.slane %v3373, 4
      %v3375 = vrot.slane %v2274, 5
      %v3376 = vsel %vm3323, %v3374, %v3375
      %v3377 = vrot.slane %v3375, 4
      %v3378 = vrot.slane %v2302, 5
      %v3379 = vsel %vm3323, %v3377, %v3378
      %v3380 = vrot.slane %v3281, 5
      %v3381 = vrot.slane %v3380, 4
      %v3382 = vrot.slane %v2276, 5
      %v3383 = vsel %vm3323, %v3381, %v3382
      %v3384 = vrot.slane %v3382, 4
      %v3385 = vrot.slane %v2303, 5
      %v3386 = vsel %vm3323, %v3384, %v3385
      %v3387 = vrot.slane %v3282, 5
      %v3388 = vrot.slane %v3387, 4
      %v3389 = vrot.slane %v2278, 5
      %v3390 = vsel %vm3323, %v3388, %v3389
      %v3391 = vrot.slane %v3389, 4
      %v3392 = vrot.slane %v2304, 5
      %v3393 = vsel %vm3323, %v3391, %v3392
      %v3394 = vrot.slane %v3283, 5
      %v3395 = vrot.slane %v3394, 4
      %v3396 = vrot.slane %v2280, 5
      %v3397 = vsel %vm3323, %v3395, %v3396
      %v3398 = vrot.slane %v3396, 4
      %v3399 = vrot.slane %v2305, 5
      %v3400 = vsel %vm3323, %v3398, %v3399
      %v3401 = vrot.slane %v3284, 5
      %v3402 = vrot.slane %v3401, 4
      %v3403 = vrot.slane %v2282, 5
      %v3404 = vsel %vm3323, %v3402, %v3403
      %v3405 = vrot.slane %v3403, 4
      %v3406 = vrot.slane %v2306, 5
      %v3407 = vsel %vm3323, %v3405, %v3406
      %v3408 = vrot.slane %v3285, 5
      %v3409 = vrot.slane %v3408, 4
      %v3410 = vrot.slane %v2284, 5
      %v3411 = vsel %vm3323, %v3409, %v3410
      %v3412 = vrot.slane %v3410, 4
      %v3413 = vrot.slane %v2307, 5
      %v3414 = vsel %vm3323, %v3412, %v3413
      %v3415 = vrot.slane %v3286, 5
      %v3416 = vrot.slane %v3415, 4
      %v3417 = vrot.slane %v2286, 5
      %v3418 = vsel %vm3323, %v3416, %v3417
      %v3419 = vrot.slane %v3417, 4
      %v3420 = vrot.slane %v2308, 5
      %v3421 = vsel %vm3323, %v3419, %v3420
      %v3422 = vrot.slane %v3287, 5
      %v3423 = vrot.slane %v3422, 4
      %v3424 = vrot.slane %v2288, 5
      %v3425 = vsel %vm3323, %v3423, %v3424
      %v3426 = vrot.slane %v3424, 4
      %v3427 = vrot.slane %v2309, 5
      %v3428 = vsel %vm3323, %v3426, %v3427
      %v3429 = vrot.slane %v3288, 5
      %v3430 = vrot.slane %v3429, 4
      %v3431 = vrot.slane %v2290, 5
      %v3432 = vsel %vm3323, %v3430, %v3431
      %v3433 = vrot.slane %v3431, 4
      %v3434 = vrot.slane %v2310, 5
      %v3435 = vsel %vm3323, %v3433, %v3434
      %s3436 = scalar_lea.vmem %s6, 32
      %v3437 = vld [vmem:[%s3436] sm:$0xf]
      %v3438 = vld [vmem:[%s3436 + $0x4] sm:$0xf]
      %v3439 = vld [vmem:[%s3436 + $0x8] sm:$0xf]
      %v3440 = vld [vmem:[%s3436 + $0xc] sm:$0xf]
      %v3441 = vunpack.c.l.b16 %v3327
      %v3442 = vunpack.c.l.b16 %v3330
      %v3443 = vunpack.c.l.b16 %v3334
      %v3444 = vunpack.c.l.b16 %v3337
      %v3445 = vunpack.c.l.b16 %v3341
      %v3446 = vunpack.c.l.b16 %v3344
      %v3447 = vunpack.c.l.b16 %v3348
      %v3448 = vunpack.c.l.b16 %v3351
      %v3449 = vunpack.c.l.b16 %v3355
      %v3450 = vunpack.c.l.b16 %v3358
      %v3451 = vunpack.c.l.b16 %v3362
      %v3452 = vunpack.c.l.b16 %v3365
      %v3453 = vunpack.c.l.b16 %v3369
      %v3454 = vunpack.c.l.b16 %v3372
      %v3455 = vunpack.c.l.b16 %v3376
      %v3456 = vunpack.c.l.b16 %v3379
      %v3457 = vunpack.c.l.b16 %v3383
      %v3458 = vunpack.c.l.b16 %v3386
      %v3459 = vunpack.c.l.b16 %v3390
      %v3460 = vunpack.c.l.b16 %v3393
      %v3461 = vunpack.c.l.b16 %v3397
      %v3462 = vunpack.c.l.b16 %v3400
      %v3463 = vunpack.c.l.b16 %v3404
      %v3464 = vunpack.c.l.b16 %v3407
      %v3465 = vunpack.c.l.b16 %v3411
      %v3466 = vunpack.c.l.b16 %v3414
      %v3467 = vunpack.c.l.b16 %v3418
      %v3468 = vunpack.c.l.b16 %v3421
      %v3469 = vunpack.c.l.b16 %v3425
      %v3470 = vunpack.c.l.b16 %v3428
      %v3471 = vunpack.c.l.b16 %v3432
      %v3472 = vunpack.c.l.b16 %v3435
      %v3473 = vpack.c.b16 %v3442, %v3441
      %v3474 = vpack.c.b16 %v3444, %v3443
      %v3475 = vpack.c.b16 %v3446, %v3445
      %v3476 = vpack.c.b16 %v3448, %v3447
      %v3477 = vpack.c.b16 %v3450, %v3449
      %v3478 = vpack.c.b16 %v3452, %v3451
      %v3479 = vpack.c.b16 %v3454, %v3453
      %v3480 = vpack.c.b16 %v3456, %v3455
      %v3481 = vpack.c.b16 %v3458, %v3457
      %v3482 = vpack.c.b16 %v3460, %v3459
      %v3483 = vpack.c.b16 %v3462, %v3461
      %v3484 = vpack.c.b16 %v3464, %v3463
      %v3485 = vpack.c.b16 %v3466, %v3465
      %v3486 = vpack.c.b16 %v3468, %v3467
      %v3487 = vpack.c.b16 %v3470, %v3469
      %v3488 = vpack.c.b16 %v3472, %v3471
      %v3493 = vunpack.c.l.b16 %v3437
      %v3494 = vunpack.c.l.b16 %v3438
      %v3495 = vunpack.c.l.b16 %v3439
      %v3496 = vunpack.c.l.b16 %v3440
      %v3497 = vpack.c.b16 %v3494, %v3493
      %v3498 = vpack.c.b16 %v3496, %v3495
      %v3502 = vsel %vm663, %v3473, 0
      %v3505 = vsel %vm663, %v3474, 0
      %v3508 = vsel %vm663, %v3475, 0
      %v3511 = vsel %vm663, %v3476, 0
      %v3514 = vsel %vm663, %v3477, 0
      %v3517 = vsel %vm663, %v3478, 0
      %v3520 = vsel %vm663, %v3479, 0
      %v3523 = vsel %vm663, %v3480, 0
      %v3526 = vsel %vm663, %v3481, 0
      %v3529 = vsel %vm663, %v3482, 0
      %v3532 = vsel %vm663, %v3483, 0
      %v3535 = vsel %vm663, %v3484, 0
      %v3538 = vsel %vm663, %v3485, 0
      %v3541 = vsel %vm663, %v3486, 0
      %v3544 = vsel %vm663, %v3487, 0
      %v3547 = vsel %vm663, %v3488, 0
      %3549 = vmatprep.subr.bf16.mxu0 0
      %3550 = vmatpush1.bf16.msra.mxu0 %v3497
      %3551 = vmatprep.subr.bf16.mxu0 0
      %3552 = vmatpush1.bf16.msra.mxu0 %v3498
      %3553 = vmatprep.subr.bf16.mxu0 0
      %3554 = vmatpush1.bf16.msra.mxu0 0
      %3555 = vmatprep.subr.bf16.mxu0 0
      %3556 = vmatpush1.bf16.msra.mxu0 0
      %3557 = vmatprep.subr.bf16.mxu0 0
      %3558 = vmatpush1.bf16.msra.mxu0 0
      %3559 = vmatprep.subr.bf16.mxu0 0
      %3560 = vmatpush1.bf16.msra.mxu0 0
      %3561 = vmatprep.subr.bf16.mxu0 0
      %3562 = vmatpush1.bf16.msra.mxu0 0
      %3563 = vmatprep.subr.bf16.mxu0 0
      %3564 = vmatpush1.bf16.msra.mxu0 0
      %3565 = vmatprep.subr.bf16.mxu0 0
      %3566 = vmatpush1.bf16.msra.mxu0 0
      %3567 = vmatprep.subr.bf16.mxu0 0
      %3568 = vmatpush1.bf16.msra.mxu0 0
      %3569 = vmatprep.subr.bf16.mxu0 0
      %3570 = vmatpush1.bf16.msra.mxu0 0
      %3571 = vmatprep.subr.bf16.mxu0 0
      %3572 = vmatpush1.bf16.msra.mxu0 0
      %3573 = vmatprep.subr.bf16.mxu0 0
      %3574 = vmatpush1.bf16.msra.mxu0 0
      %3575 = vmatprep.subr.bf16.mxu0 0
      %3576 = vmatpush1.bf16.msra.mxu0 0
      %3577 = vmatprep.subr.bf16.mxu0 0
      %3578 = vmatpush1.bf16.msra.mxu0 0
      %3579 = vmatprep.subr.bf16.mxu0 0
      %3580 = vmatpush1.bf16.msra.mxu0 0
      %3581 = vmatprep.mubr.bf16.mxu0 0
      %3582 = vmatmul.mubr.bf16.gmra.mrb[0].mxu0 %v3502
      %v3583 = vpop.f32.mrb[0].mxu0
      %v3584 = vadd.f32 0.0, %v3583
      %v3585 = vpop.f32.mrb[0].mxu0
      %v3586 = vpop.f32.mrb[0].mxu0
      %v3587 = vadd.f32 0.0, %v3586
      %v3588 = vpop.f32.mrb[0].mxu0
      %3589 = vmatprep.mubr.bf16.mxu0 0
      %3590 = vmatmul.mubr.bf16.gmra.mrb[0].mxu0 %v3505
      %v3591 = vpop.f32.mrb[0].mxu0
      %v3592 = vadd.f32 0.0, %v3591
      %v3593 = vpop.f32.mrb[0].mxu0
      %v3594 = vpop.f32.mrb[0].mxu0
      %v3595 = vadd.f32 0.0, %v3594
      %v3596 = vpop.f32.mrb[0].mxu0
      %3597 = vmatprep.mubr.bf16.mxu0 0
      %3598 = vmatmul.mubr.bf16.gmra.mrb[0].mxu0 %v3508
      %v3599 = vpop.f32.mrb[0].mxu0
      %v3600 = vadd.f32 0.0, %v3599
      %v3601 = vpop.f32.mrb[0].mxu0
      %v3602 = vpop.f32.mrb[0].mxu0
      %v3603 = vadd.f32 0.0, %v3602
      %v3604 = vpop.f32.mrb[0].mxu0
      %3605 = vmatprep.mubr.bf16.mxu0 0
      %3606 = vmatmul.mubr.bf16.gmra.mrb[0].mxu0 %v3511
      %v3607 = vpop.f32.mrb[0].mxu0
      %v3608 = vadd.f32 0.0, %v3607
      %v3609 = vpop.f32.mrb[0].mxu0
      %v3610 = vpop.f32.mrb[0].mxu0
      %v3611 = vadd.f32 0.0, %v3610
      %v3612 = vpop.f32.mrb[0].mxu0
      %3613 = vmatprep.mubr.bf16.mxu0 0
      %3614 = vmatmul.mubr.bf16.gmra.mrb[0].mxu0 %v3514
      %v3615 = vpop.f32.mrb[0].mxu0
      %v3616 = vadd.f32 0.0, %v3615
      %v3617 = vpop.f32.mrb[0].mxu0
      %v3618 = vpop.f32.mrb[0].mxu0
      %v3619 = vadd.f32 0.0, %v3618
      %v3620 = vpop.f32.mrb[0].mxu0
      %3621 = vmatprep.mubr.bf16.mxu0 0
      %3622 = vmatmul.mubr.bf16.gmra.mrb[0].mxu0 %v3517
      %v3623 = vpop.f32.mrb[0].mxu0
      %v3624 = vadd.f32 0.0, %v3623
      %v3625 = vpop.f32.mrb[0].mxu0
      %v3626 = vpop.f32.mrb[0].mxu0
      %v3627 = vadd.f32 0.0, %v3626
      %v3628 = vpop.f32.mrb[0].mxu0
      %3629 = vmatprep.mubr.bf16.mxu0 0
      %3630 = vmatmul.mubr.bf16.gmra.mrb[0].mxu0 %v3520
      %v3631 = vpop.f32.mrb[0].mxu0
      %v3632 = vadd.f32 0.0, %v3631
      %v3633 = vpop.f32.mrb[0].mxu0
      %v3634 = vpop.f32.mrb[0].mxu0
      %v3635 = vadd.f32 0.0, %v3634
      %v3636 = vpop.f32.mrb[0].mxu0
      %3637 = vmatprep.mubr.bf16.mxu0 0
      %3638 = vmatmul.mubr.bf16.gmra.mrb[0].mxu0 %v3523
      %v3639 = vpop.f32.mrb[0].mxu0
      %v3640 = vadd.f32 0.0, %v3639
      %v3641 = vpop.f32.mrb[0].mxu0
      %v3642 = vpop.f32.mrb[0].mxu0
      %v3643 = vadd.f32 0.0, %v3642
      %v3644 = vpop.f32.mrb[0].mxu0
      %3645 = vmatprep.mubr.bf16.mxu0 0
      %3646 = vmatmul.mubr.bf16.gmra.mrb[0].mxu0 %v3526
      %v3647 = vpop.f32.mrb[0].mxu0
      %v3648 = vadd.f32 0.0, %v3647
      %v3649 = vpop.f32.mrb[0].mxu0
      %v3650 = vpop.f32.mrb[0].mxu0
      %v3651 = vadd.f32 0.0, %v3650
      %v3652 = vpop.f32.mrb[0].mxu0
      %3653 = vmatprep.mubr.bf16.mxu0 0
      %3654 = vmatmul.mubr.bf16.gmra.mrb[0].mxu0 %v3529
      %v3655 = vpop.f32.mrb[0].mxu0
      %v3656 = vadd.f32 0.0, %v3655
      %v3657 = vpop.f32.mrb[0].mxu0
      %v3658 = vpop.f32.mrb[0].mxu0
      %v3659 = vadd.f32 0.0, %v3658
      %v3660 = vpop.f32.mrb[0].mxu0
      %3661 = vmatprep.mubr.bf16.mxu0 0
      %3662 = vmatmul.mubr.bf16.gmra.mrb[0].mxu0 %v3532
      %v3663 = vpop.f32.mrb[0].mxu0
      %v3664 = vadd.f32 0.0, %v3663
      %v3665 = vpop.f32.mrb[0].mxu0
      %v3666 = vpop.f32.mrb[0].mxu0
      %v3667 = vadd.f32 0.0, %v3666
      %v3668 = vpop.f32.mrb[0].mxu0
      %3669 = vmatprep.mubr.bf16.mxu0 0
      %3670 = vmatmul.mubr.bf16.gmra.mrb[0].mxu0 %v3535
      %v3671 = vpop.f32.mrb[0].mxu0
      %v3672 = vadd.f32 0.0, %v3671
      %v3673 = vpop.f32.mrb[0].mxu0
      %v3674 = vpop.f32.mrb[0].mxu0
      %v3675 = vadd.f32 0.0, %v3674
      %v3676 = vpop.f32.mrb[0].mxu0
      %3677 = vmatprep.mubr.bf16.mxu0 0
      %3678 = vmatmul.mubr.bf16.gmra.mrb[0].mxu0 %v3538
      %v3679 = vpop.f32.mrb[0].mxu0
      %v3680 = vadd.f32 0.0, %v3679
      %v3681 = vpop.f32.mrb[0].mxu0
      %v3682 = vpop.f32.mrb[0].mxu0
      %v3683 = vadd.f32 0.0, %v3682
      %v3684 = vpop.f32.mrb[0].mxu0
      %3685 = vmatprep.mubr.bf16.mxu0 0
      %3686 = vmatmul.mubr.bf16.gmra.mrb[0].mxu0 %v3541
      %v3687 = vpop.f32.mrb[0].mxu0
      %v3688 = vadd.f32 0.0, %v3687
      %v3689 = vpop.f32.mrb[0].mxu0
      %v3690 = vpop.f32.mrb[0].mxu0
      %v3691 = vadd.f32 0.0, %v3690
      %v3692 = vpop.f32.mrb[0].mxu0
      %3693 = vmatprep.mubr.bf16.mxu0 0
      %3694 = vmatmul.mubr.bf16.gmra.mrb[0].mxu0 %v3544
      %v3695 = vpop.f32.mrb[0].mxu0
      %v3696 = vadd.f32 0.0, %v3695
      %v3697 = vpop.f32.mrb[0].mxu0
      %v3698 = vpop.f32.mrb[0].mxu0
      %v3699 = vadd.f32 0.0, %v3698
      %v3700 = vpop.f32.mrb[0].mxu0
      %3701 = vmatprep.mubr.bf16.mxu0 0
      %3702 = vmatmul.mubr.bf16.gmra.mrb[0].mxu0 %v3547
      %v3703 = vpop.f32.mrb[0].mxu0
      %v3704 = vadd.f32 0.0, %v3703
      %v3705 = vpop.f32.mrb[0].mxu0
      %v3706 = vpop.f32.mrb[0].mxu0
      %v3707 = vadd.f32 0.0, %v3706
      %v3708 = vpop.f32.mrb[0].mxu0
      %3709 = vdwg.mxu0
      %v3710 = vadd.f32 %v3147, %v3584
      %v3711 = vadd.f32 %v3150, %v3587
      %v3712 = vadd.f32 %v3155, %v3592
      %v3713 = vadd.f32 %v3158, %v3595
      %v3714 = vadd.f32 %v3163, %v3600
      %v3715 = vadd.f32 %v3166, %v3603
      %v3716 = vadd.f32 %v3171, %v3608
      %v3717 = vadd.f32 %v3174, %v3611
      %v3718 = vadd.f32 %v3179, %v3616
      %v3719 = vadd.f32 %v3182, %v3619
      %v3720 = vadd.f32 %v3187, %v3624
      %v3721 = vadd.f32 %v3190, %v3627
      %v3722 = vadd.f32 %v3195, %v3632
      %v3723 = vadd.f32 %v3198, %v3635
      %v3724 = vadd.f32 %v3203, %v3640
      %v3725 = vadd.f32 %v3206, %v3643
      %v3726 = vadd.f32 %v3211, %v3648
      %v3727 = vadd.f32 %v3214, %v3651
      %v3728 = vadd.f32 %v3219, %v3656
      %v3729 = vadd.f32 %v3222, %v3659
      %v3730 = vadd.f32 %v3227, %v3664
      %v3731 = vadd.f32 %v3230, %v3667
      %v3732 = vadd.f32 %v3235, %v3672
      %v3733 = vadd.f32 %v3238, %v3675
      %v3734 = vadd.f32 %v3243, %v3680
      %v3735 = vadd.f32 %v3246, %v3683
      %v3736 = vadd.f32 %v3251, %v3688
      %v3737 = vadd.f32 %v3254, %v3691
      %v3738 = vadd.f32 %v3259, %v3696
      %v3739 = vadd.f32 %v3262, %v3699
      %v3740 = vadd.f32 %v3267, %v3704
      %v3741 = vadd.f32 %v3270, %v3707
      %v3742 = vld [vmem:[%s1625] sm:$0xf]
      %v3743 = vld [vmem:[%s1625 + $0x4] sm:$0xf]
      %v3744 = vld [vmem:[%s1625 + $0xc] sm:$0xf]
      %v3745 = vld [vmem:[%s1625 + $0x10] sm:$0xf]
      %v3746 = vld [vmem:[%s1625 + $0x18] sm:$0xf]
      %v3747 = vld [vmem:[%s1625 + $0x1c] sm:$0xf]
      %v3748 = vld [vmem:[%s1625 + $0x24] sm:$0xf]
      %v3749 = vld [vmem:[%s1625 + $0x28] sm:$0xf]
      %v3750 = vld [vmem:[%s1625 + $0x30] sm:$0xf]
      %v3751 = vld [vmem:[%s1625 + $0x34] sm:$0xf]
      %v3752 = vld [vmem:[%s1625 + $0x3c] sm:$0xf]
      %v3753 = vld [vmem:[%s1625 + $0x40] sm:$0xf]
      %v3754 = vld [vmem:[%s1625 + $0x48] sm:$0xf]
      %v3755 = vld [vmem:[%s1625 + $0x4c] sm:$0xf]
      %v3756 = vld [vmem:[%s1625 + $0x54] sm:$0xf]
      %v3757 = vld [vmem:[%s1625 + $0x58] sm:$0xf]
      %v3758 = vld [vmem:[%s1625 + $0x60] sm:$0xf]
      %v3759 = vld [vmem:[%s1625 + $0x64] sm:$0xf]
      %v3760 = vld [vmem:[%s1625 + $0x6c] sm:$0xf]
      %v3761 = vld [vmem:[%s1625 + $0x70] sm:$0xf]
      %v3762 = vld [vmem:[%s1625 + $0x78] sm:$0xf]
      %v3763 = vld [vmem:[%s1625 + $0x7c] sm:$0xf]
      %v3764 = vld [vmem:[%s1625 + $0x84] sm:$0xf]
      %v3765 = vld [vmem:[%s1625 + $0x88] sm:$0xf]
      %v3766 = vld [vmem:[%s1625 + $0x90] sm:$0xf]
      %v3767 = vld [vmem:[%s1625 + $0x94] sm:$0xf]
      %v3768 = vld [vmem:[%s1625 + $0x9c] sm:$0xf]
      %v3769 = vld [vmem:[%s1625 + $0xa0] sm:$0xf]
      %v3770 = vld [vmem:[%s1625 + $0xa8] sm:$0xf]
      %v3771 = vld [vmem:[%s1625 + $0xac] sm:$0xf]
      %v3772 = vld [vmem:[%s1625 + $0xb4] sm:$0xf]
      %v3773 = vld [vmem:[%s1625 + $0xb8] sm:$0xf]
      %s3774 = scalar_lea.vmem %s6, 48
      %v3775 = vld [vmem:[%s3774] sm:$0xf]
      %v3776 = vld [vmem:[%s3774 + $0x4] sm:$0xf]
      %v3777 = vld [vmem:[%s3774 + $0x8] sm:$0xf]
      %v3778 = vld [vmem:[%s3774 + $0xc] sm:$0xf]
      %v3811 = vunpack.c.l.b16 %v3742
      %v3812 = vunpack.c.l.b16 %v3743
      %v3813 = vunpack.c.l.b16 %v3744
      %v3814 = vunpack.c.l.b16 %v3745
      %v3815 = vunpack.c.l.b16 %v3746
      %v3816 = vunpack.c.l.b16 %v3747
      %v3817 = vunpack.c.l.b16 %v3748
      %v3818 = vunpack.c.l.b16 %v3749
      %v3819 = vunpack.c.l.b16 %v3750
      %v3820 = vunpack.c.l.b16 %v3751
      %v3821 = vunpack.c.l.b16 %v3752
      %v3822 = vunpack.c.l.b16 %v3753
      %v3823 = vunpack.c.l.b16 %v3754
      %v3824 = vunpack.c.l.b16 %v3755
      %v3825 = vunpack.c.l.b16 %v3756
      %v3826 = vunpack.c.l.b16 %v3757
      %v3827 = vunpack.c.l.b16 %v3758
      %v3828 = vunpack.c.l.b16 %v3759
      %v3829 = vunpack.c.l.b16 %v3760
      %v3830 = vunpack.c.l.b16 %v3761
      %v3831 = vunpack.c.l.b16 %v3762
      %v3832 = vunpack.c.l.b16 %v3763
      %v3833 = vunpack.c.l.b16 %v3764
      %v3834 = vunpack.c.l.b16 %v3765
      %v3835 = vunpack.c.l.b16 %v3766
      %v3836 = vunpack.c.l.b16 %v3767
      %v3837 = vunpack.c.l.b16 %v3768
      %v3838 = vunpack.c.l.b16 %v3769
      %v3839 = vunpack.c.l.b16 %v3770
      %v3840 = vunpack.c.l.b16 %v3771
      %v3841 = vunpack.c.l.b16 %v3772
      %v3842 = vunpack.c.l.b16 %v3773
      %v3843 = vpack.c.b16 %v3812, %v3811
      %v3844 = vpack.c.b16 %v3814, %v3813
      %v3845 = vpack.c.b16 %v3816, %v3815
      %v3846 = vpack.c.b16 %v3818, %v3817
      %v3847 = vpack.c.b16 %v3820, %v3819
      %v3848 = vpack.c.b16 %v3822, %v3821
      %v3849 = vpack.c.b16 %v3824, %v3823
      %v3850 = vpack.c.b16 %v3826, %v3825
      %v3851 = vpack.c.b16 %v3828, %v3827
      %v3852 = vpack.c.b16 %v3830, %v3829
      %v3853 = vpack.c.b16 %v3832, %v3831
      %v3854 = vpack.c.b16 %v3834, %v3833
      %v3855 = vpack.c.b16 %v3836, %v3835
      %v3856 = vpack.c.b16 %v3838, %v3837
      %v3857 = vpack.c.b16 %v3840, %v3839
      %v3858 = vpack.c.b16 %v3842, %v3841
      %v3863 = vunpack.c.l.b16 %v3775
      %v3864 = vunpack.c.l.b16 %v3776
      %v3865 = vunpack.c.l.b16 %v3777
      %v3866 = vunpack.c.l.b16 %v3778
      %v3867 = vpack.c.b16 %v3864, %v3863
      %v3868 = vpack.c.b16 %v3866, %v3865
      %v3872 = vsel %vm663, %v3843, 0
      %v3875 = vsel %vm663, %v3844, 0
      %v3878 = vsel %vm663, %v3845, 0
      %v3881 = vsel %vm663, %v3846, 0
      %v3884 = vsel %vm663, %v3847, 0
      %v3887 = vsel %vm663, %v3848, 0
      %v3890 = vsel %vm663, %v3849, 0
      %v3893 = vsel %vm663, %v3850, 0
      %v3896 = vsel %vm663, %v3851, 0
      %v3899 = vsel %vm663, %v3852, 0
      %v3902 = vsel %vm663, %v3853, 0
      %v3905 = vsel %vm663, %v3854, 0
      %v3908 = vsel %vm663, %v3855, 0
      %v3911 = vsel %vm663, %v3856, 0
      %v3914 = vsel %vm663, %v3857, 0
      %v3917 = vsel %vm663, %v3858, 0
      %3919 = vmatprep.subr.bf16.mxu0 0
      %3920 = vmatpush1.bf16.msra.mxu0 %v3867
      %3921 = vmatprep.subr.bf16.mxu0 0
      %3922 = vmatpush1.bf16.msra.mxu0 %v3868
      %3923 = vmatprep.subr.bf16.mxu0 0
      %3924 = vmatpush1.bf16.msra.mxu0 0
      %3925 = vmatprep.subr.bf16.mxu0 0
      %3926 = vmatpush1.bf16.msra.mxu0 0
      %3927 = vmatprep.subr.bf16.mxu0 0
      %3928 = vmatpush1.bf16.msra.mxu0 0
      %3929 = vmatprep.subr.bf16.mxu0 0
      %3930 = vmatpush1.bf16.msra.mxu0 0
      %3931 = vmatprep.subr.bf16.mxu0 0
      %3932 = vmatpush1.bf16.msra.mxu0 0
      %3933 = vmatprep.subr.bf16.mxu0 0
      %3934 = vmatpush1.bf16.msra.mxu0 0
      %3935 = vmatprep.subr.bf16.mxu0 0
      %3936 = vmatpush1.bf16.msra.mxu0 0
      %3937 = vmatprep.subr.bf16.mxu0 0
      %3938 = vmatpush1.bf16.msra.mxu0 0
      %3939 = vmatprep.subr.bf16.mxu0 0
      %3940 = vmatpush1.bf16.msra.mxu0 0
      %3941 = vmatprep.subr.bf16.mxu0 0
      %3942 = vmatpush1.bf16.msra.mxu0 0
      %3943 = vmatprep.subr.bf16.mxu0 0
      %3944 = vmatpush1.bf16.msra.mxu0 0
      %3945 = vmatprep.subr.bf16.mxu0 0
      %3946 = vmatpush1.bf16.msra.mxu0 0
      %3947 = vmatprep.subr.bf16.mxu0 0
      %3948 = vmatpush1.bf16.msra.mxu0 0
      %3949 = vmatprep.subr.bf16.mxu0 0
      %3950 = vmatpush1.bf16.msra.mxu0 0
      %3951 = vmatprep.mubr.bf16.mxu0 0
      %3952 = vmatmul.mubr.bf16.gmra.mrb[0].mxu0 %v3872
      %v3953 = vpop.f32.mrb[0].mxu0
      %v3954 = vadd.f32 0.0, %v3953
      %v3955 = vpop.f32.mrb[0].mxu0
      %v3956 = vpop.f32.mrb[0].mxu0
      %v3957 = vadd.f32 0.0, %v3956
      %v3958 = vpop.f32.mrb[0].mxu0
      %3959 = vmatprep.mubr.bf16.mxu0 0
      %3960 = vmatmul.mubr.bf16.gmra.mrb[0].mxu0 %v3875
      %v3961 = vpop.f32.mrb[0].mxu0
      %v3962 = vadd.f32 0.0, %v3961
      %v3963 = vpop.f32.mrb[0].mxu0
      %v3964 = vpop.f32.mrb[0].mxu0
      %v3965 = vadd.f32 0.0, %v3964
      %v3966 = vpop.f32.mrb[0].mxu0
      %3967 = vmatprep.mubr.bf16.mxu0 0
      %3968 = vmatmul.mubr.bf16.gmra.mrb[0].mxu0 %v3878
      %v3969 = vpop.f32.mrb[0].mxu0
      %v3970 = vadd.f32 0.0, %v3969
      %v3971 = vpop.f32.mrb[0].mxu0
      %v3972 = vpop.f32.mrb[0].mxu0
      %v3973 = vadd.f32 0.0, %v3972
      %v3974 = vpop.f32.mrb[0].mxu0
      %3975 = vmatprep.mubr.bf16.mxu0 0
      %3976 = vmatmul.mubr.bf16.gmra.mrb[0].mxu0 %v3881
      %v3977 = vpop.f32.mrb[0].mxu0
      %v3978 = vadd.f32 0.0, %v3977
      %v3979 = vpop.f32.mrb[0].mxu0
      %v3980 = vpop.f32.mrb[0].mxu0
      %v3981 = vadd.f32 0.0, %v3980
      %v3982 = vpop.f32.mrb[0].mxu0
      %3983 = vmatprep.mubr.bf16.mxu0 0
      %3984 = vmatmul.mubr.bf16.gmra.mrb[0].mxu0 %v3884
      %v3985 = vpop.f32.mrb[0].mxu0
      %v3986 = vadd.f32 0.0, %v3985
      %v3987 = vpop.f32.mrb[0].mxu0
      %v3988 = vpop.f32.mrb[0].mxu0
      %v3989 = vadd.f32 0.0, %v3988
      %v3990 = vpop.f32.mrb[0].mxu0
      %3991 = vmatprep.mubr.bf16.mxu0 0
      %3992 = vmatmul.mubr.bf16.gmra.mrb[0].mxu0 %v3887
      %v3993 = vpop.f32.mrb[0].mxu0
      %v3994 = vadd.f32 0.0, %v3993
      %v3995 = vpop.f32.mrb[0].mxu0
      %v3996 = vpop.f32.mrb[0].mxu0
      %v3997 = vadd.f32 0.0, %v3996
      %v3998 = vpop.f32.mrb[0].mxu0
      %3999 = vmatprep.mubr.bf16.mxu0 0
      %4000 = vmatmul.mubr.bf16.gmra.mrb[0].mxu0 %v3890
      %v4001 = vpop.f32.mrb[0].mxu0
      %v4002 = vadd.f32 0.0, %v4001
      %v4003 = vpop.f32.mrb[0].mxu0
      %v4004 = vpop.f32.mrb[0].mxu0
      %v4005 = vadd.f32 0.0, %v4004
      %v4006 = vpop.f32.mrb[0].mxu0
      %4007 = vmatprep.mubr.bf16.mxu0 0
      %4008 = vmatmul.mubr.bf16.gmra.mrb[0].mxu0 %v3893
      %v4009 = vpop.f32.mrb[0].mxu0
      %v4010 = vadd.f32 0.0, %v4009
      %v4011 = vpop.f32.mrb[0].mxu0
      %v4012 = vpop.f32.mrb[0].mxu0
      %v4013 = vadd.f32 0.0, %v4012
      %v4014 = vpop.f32.mrb[0].mxu0
      %4015 = vmatprep.mubr.bf16.mxu0 0
      %4016 = vmatmul.mubr.bf16.gmra.mrb[0].mxu0 %v3896
      %v4017 = vpop.f32.mrb[0].mxu0
      %v4018 = vadd.f32 0.0, %v4017
      %v4019 = vpop.f32.mrb[0].mxu0
      %v4020 = vpop.f32.mrb[0].mxu0
      %v4021 = vadd.f32 0.0, %v4020
      %v4022 = vpop.f32.mrb[0].mxu0
      %4023 = vmatprep.mubr.bf16.mxu0 0
      %4024 = vmatmul.mubr.bf16.gmra.mrb[0].mxu0 %v3899
      %v4025 = vpop.f32.mrb[0].mxu0
      %v4026 = vadd.f32 0.0, %v4025
      %v4027 = vpop.f32.mrb[0].mxu0
      %v4028 = vpop.f32.mrb[0].mxu0
      %v4029 = vadd.f32 0.0, %v4028
      %v4030 = vpop.f32.mrb[0].mxu0
      %4031 = vmatprep.mubr.bf16.mxu0 0
      %4032 = vmatmul.mubr.bf16.gmra.mrb[0].mxu0 %v3902
      %v4033 = vpop.f32.mrb[0].mxu0
      %v4034 = vadd.f32 0.0, %v4033
      %v4035 = vpop.f32.mrb[0].mxu0
      %v4036 = vpop.f32.mrb[0].mxu0
      %v4037 = vadd.f32 0.0, %v4036
      %v4038 = vpop.f32.mrb[0].mxu0
      %4039 = vmatprep.mubr.bf16.mxu0 0
      %4040 = vmatmul.mubr.bf16.gmra.mrb[0].mxu0 %v3905
      %v4041 = vpop.f32.mrb[0].mxu0
      %v4042 = vadd.f32 0.0, %v4041
      %v4043 = vpop.f32.mrb[0].mxu0
      %v4044 = vpop.f32.mrb[0].mxu0
      %v4045 = vadd.f32 0.0, %v4044
      %v4046 = vpop.f32.mrb[0].mxu0
      %4047 = vmatprep.mubr.bf16.mxu0 0
      %4048 = vmatmul.mubr.bf16.gmra.mrb[0].mxu0 %v3908
      %v4049 = vpop.f32.mrb[0].mxu0
      %v4050 = vadd.f32 0.0, %v4049
      %v4051 = vpop.f32.mrb[0].mxu0
      %v4052 = vpop.f32.mrb[0].mxu0
      %v4053 = vadd.f32 0.0, %v4052
      %v4054 = vpop.f32.mrb[0].mxu0
      %4055 = vmatprep.mubr.bf16.mxu0 0
      %4056 = vmatmul.mubr.bf16.gmra.mrb[0].mxu0 %v3911
      %v4057 = vpop.f32.mrb[0].mxu0
      %v4058 = vadd.f32 0.0, %v4057
      %v4059 = vpop.f32.mrb[0].mxu0
      %v4060 = vpop.f32.mrb[0].mxu0
      %v4061 = vadd.f32 0.0, %v4060
      %v4062 = vpop.f32.mrb[0].mxu0
      %4063 = vmatprep.mubr.bf16.mxu0 0
      %4064 = vmatmul.mubr.bf16.gmra.mrb[0].mxu0 %v3914
      %v4065 = vpop.f32.mrb[0].mxu0
      %v4066 = vadd.f32 0.0, %v4065
      %v4067 = vpop.f32.mrb[0].mxu0
      %v4068 = vpop.f32.mrb[0].mxu0
      %v4069 = vadd.f32 0.0, %v4068
      %v4070 = vpop.f32.mrb[0].mxu0
      %4071 = vmatprep.mubr.bf16.mxu0 0
      %4072 = vmatmul.mubr.bf16.gmra.mrb[0].mxu0 %v3917
      %v4073 = vpop.f32.mrb[0].mxu0
      %v4074 = vadd.f32 0.0, %v4073
      %v4075 = vpop.f32.mrb[0].mxu0
      %v4076 = vpop.f32.mrb[0].mxu0
      %v4077 = vadd.f32 0.0, %v4076
      %v4078 = vpop.f32.mrb[0].mxu0
      %4079 = vdwg.mxu0
      %v4080 = vadd.f32 %v3710, %v3954
      %v4081 = vadd.f32 %v3711, %v3957
      %v4082 = vadd.f32 %v3712, %v3962
      %v4083 = vadd.f32 %v3713, %v3965
      %v4084 = vadd.f32 %v3714, %v3970
      %v4085 = vadd.f32 %v3715, %v3973
      %v4086 = vadd.f32 %v3716, %v3978
      %v4087 = vadd.f32 %v3717, %v3981
      %v4088 = vadd.f32 %v3718, %v3986
      %v4089 = vadd.f32 %v3719, %v3989
      %v4090 = vadd.f32 %v3720, %v3994
      %v4091 = vadd.f32 %v3721, %v3997
      %v4092 = vadd.f32 %v3722, %v4002
      %v4093 = vadd.f32 %v3723, %v4005
      %v4094 = vadd.f32 %v3724, %v4010
      %v4095 = vadd.f32 %v3725, %v4013
      %v4096 = vadd.f32 %v3726, %v4018
      %v4097 = vadd.f32 %v3727, %v4021
      %v4098 = vadd.f32 %v3728, %v4026
      %v4099 = vadd.f32 %v3729, %v4029
      %v4100 = vadd.f32 %v3730, %v4034
      %v4101 = vadd.f32 %v3731, %v4037
      %v4102 = vadd.f32 %v3732, %v4042
      %v4103 = vadd.f32 %v3733, %v4045
      %v4104 = vadd.f32 %v3734, %v4050
      %v4105 = vadd.f32 %v3735, %v4053
      %v4106 = vadd.f32 %v3736, %v4058
      %v4107 = vadd.f32 %v3737, %v4061
      %v4108 = vadd.f32 %v3738, %v4066
      %v4109 = vadd.f32 %v3739, %v4069
      %v4110 = vadd.f32 %v3740, %v4074
      %v4111 = vadd.f32 %v3741, %v4077
      %v4112 = vld [vmem:[%s1625] sm:$0xf]
      %v4113 = vld [vmem:[%s1625 + $0x4] sm:$0xf]
      %v4114 = vld [vmem:[%s1625 + $0x8] sm:$0x1]
      %v4115 = vld [vmem:[%s1625 + $0xc] sm:$0xf]
      %v4116 = vld [vmem:[%s1625 + $0x10] sm:$0xf]
      %v4117 = vld [vmem:[%s1625 + $0x14] sm:$0x1]
      %v4118 = vld [vmem:[%s1625 + $0x18] sm:$0xf]
      %v4119 = vld [vmem:[%s1625 + $0x1c] sm:$0xf]
      %v4120 = vld [vmem:[%s1625 + $0x20] sm:$0x1]
      %v4121 = vld [vmem:[%s1625 + $0x24] sm:$0xf]
      %v4122 = vld [vmem:[%s1625 + $0x28] sm:$0xf]
      %v4123 = vld [vmem:[%s1625 + $0x2c] sm:$0x1]
      %v4124 = vld [vmem:[%s1625 + $0x30] sm:$0xf]
      %v4125 = vld [vmem:[%s1625 + $0x34] sm:$0xf]
      %v4126 = vld [vmem:[%s1625 + $0x38] sm:$0x1]
      %v4127 = vld [vmem:[%s1625 + $0x3c] sm:$0xf]
      %v4128 = vld [vmem:[%s1625 + $0x40] sm:$0xf]
      %v4129 = vld [vmem:[%s1625 + $0x44] sm:$0x1]
      %v4130 = vld [vmem:[%s1625 + $0x48] sm:$0xf]
      %v4131 = vld [vmem:[%s1625 + $0x4c] sm:$0xf]
      %v4132 = vld [vmem:[%s1625 + $0x50] sm:$0x1]
      %v4133 = vld [vmem:[%s1625 + $0x54] sm:$0xf]
      %v4134 = vld [vmem:[%s1625 + $0x58] sm:$0xf]
      %v4135 = vld [vmem:[%s1625 + $0x5c] sm:$0x1]
      %v4136 = vld [vmem:[%s1625 + $0x60] sm:$0xf]
      %v4137 = vld [vmem:[%s1625 + $0x64] sm:$0xf]
      %v4138 = vld [vmem:[%s1625 + $0x68] sm:$0x1]
      %v4139 = vld [vmem:[%s1625 + $0x6c] sm:$0xf]
      %v4140 = vld [vmem:[%s1625 + $0x70] sm:$0xf]
      %v4141 = vld [vmem:[%s1625 + $0x74] sm:$0x1]
      %v4142 = vld [vmem:[%s1625 + $0x78] sm:$0xf]
      %v4143 = vld [vmem:[%s1625 + $0x7c] sm:$0xf]
      %v4144 = vld [vmem:[%s1625 + $0x80] sm:$0x1]
      %v4145 = vld [vmem:[%s1625 + $0x84] sm:$0xf]
      %v4146 = vld [vmem:[%s1625 + $0x88] sm:$0xf]
      %v4147 = vld [vmem:[%s1625 + $0x8c] sm:$0x1]
      %v4148 = vld [vmem:[%s1625 + $0x90] sm:$0xf]
      %v4149 = vld [vmem:[%s1625 + $0x94] sm:$0xf]
      %v4150 = vld [vmem:[%s1625 + $0x98] sm:$0x1]
      %v4151 = vld [vmem:[%s1625 + $0x9c] sm:$0xf]
      %v4152 = vld [vmem:[%s1625 + $0xa0] sm:$0xf]
      %v4153 = vld [vmem:[%s1625 + $0xa4] sm:$0x1]
      %v4154 = vld [vmem:[%s1625 + $0xa8] sm:$0xf]
      %v4155 = vld [vmem:[%s1625 + $0xac] sm:$0xf]
      %v4156 = vld [vmem:[%s1625 + $0xb0] sm:$0x1]
      %v4157 = vld [vmem:[%s1625 + $0xb4] sm:$0xf]
      %v4158 = vld [vmem:[%s1625 + $0xb8] sm:$0xf]
      %v4159 = vld [vmem:[%s1625 + $0xbc] sm:$0x1]
      %v4161 = vshrl.u32 %v4112, 16
      %v4163 = vrot.slane %v4161, 4
      %v4164 = vshll.u32 %v4112, 16
      %v4166 = vrot.slane %v4164, 5
      %v4167 = vor.u32 %v4163, %v4166
      %v4168 = vrot.slane %v4167, 4
      %v4170 = vshll.u32 %v4113, 16
      %v4172 = vrot.slane %v4170, 5
      %v4173 = vsel %vm2313, %v4168, %v4172
      %v4174 = vshrl.u32 %v4113, 16
      %v4176 = vrot.slane %v4174, 4
      %v4177 = vor.u32 %v4176, %v4172
      %v4178 = vrot.slane %v4177, 4
      %v4180 = vshll.u32 %v4114, 16
      %v4182 = vrot.slane %v4180, 5
      %v4183 = vsel %vm2313, %v4178, %v4182
      %v4185 = vshrl.u32 %v4115, 16
      %v4187 = vrot.slane %v4185, 4
      %v4188 = vshll.u32 %v4115, 16
      %v4190 = vrot.slane %v4188, 5
      %v4191 = vor.u32 %v4187, %v4190
      %v4192 = vrot.slane %v4191, 4
      %v4194 = vshll.u32 %v4116, 16
      %v4196 = vrot.slane %v4194, 5
      %v4197 = vsel %vm2313, %v4192, %v4196
      %v4198 = vshrl.u32 %v4116, 16
      %v4200 = vrot.slane %v4198, 4
      %v4201 = vor.u32 %v4200, %v4196
      %v4202 = vrot.slane %v4201, 4
      %v4204 = vshll.u32 %v4117, 16
      %v4206 = vrot.slane %v4204, 5
      %v4207 = vsel %vm2313, %v4202, %v4206
      %v4209 = vshrl.u32 %v4118, 16
      %v4211 = vrot.slane %v4209, 4
      %v4212 = vshll.u32 %v4118, 16
      %v4214 = vrot.slane %v4212, 5
      %v4215 = vor.u32 %v4211, %v4214
      %v4216 = vrot.slane %v4215, 4
      %v4218 = vshll.u32 %v4119, 16
      %v4220 = vrot.slane %v4218, 5
      %v4221 = vsel %vm2313, %v4216, %v4220
      %v4222 = vshrl.u32 %v4119, 16
      %v4224 = vrot.slane %v4222, 4
      %v4225 = vor.u32 %v4224, %v4220
      %v4226 = vrot.slane %v4225, 4
      %v4228 = vshll.u32 %v4120, 16
      %v4230 = vrot.slane %v4228, 5
      %v4231 = vsel %vm2313, %v4226, %v4230
      %v4233 = vshrl.u32 %v4121, 16
      %v4235 = vrot.slane %v4233, 4
      %v4236 = vshll.u32 %v4121, 16
      %v4238 = vrot.slane %v4236, 5
      %v4239 = vor.u32 %v4235, %v4238
      %v4240 = vrot.slane %v4239, 4
      %v4242 = vshll.u32 %v4122, 16
      %v4244 = vrot.slane %v4242, 5
      %v4245 = vsel %vm2313, %v4240, %v4244
      %v4246 = vshrl.u32 %v4122, 16
      %v4248 = vrot.slane %v4246, 4
      %v4249 = vor.u32 %v4248, %v4244
      %v4250 = vrot.slane %v4249, 4
      %v4252 = vshll.u32 %v4123, 16
      %v4254 = vrot.slane %v4252, 5
      %v4255 = vsel %vm2313, %v4250, %v4254
      %v4257 = vshrl.u32 %v4124, 16
      %v4259 = vrot.slane %v4257, 4
      %v4260 = vshll.u32 %v4124, 16
      %v4262 = vrot.slane %v4260, 5
      %v4263 = vor.u32 %v4259, %v4262
      %v4264 = vrot.slane %v4263, 4
      %v4266 = vshll.u32 %v4125, 16
      %v4268 = vrot.slane %v4266, 5
      %v4269 = vsel %vm2313, %v4264, %v4268
      %v4270 = vshrl.u32 %v4125, 16
      %v4272 = vrot.slane %v4270, 4
      %v4273 = vor.u32 %v4272, %v4268
      %v4274 = vrot.slane %v4273, 4
      %v4276 = vshll.u32 %v4126, 16
      %v4278 = vrot.slane %v4276, 5
      %v4279 = vsel %vm2313, %v4274, %v4278
      %v4281 = vshrl.u32 %v4127, 16
      %v4283 = vrot.slane %v4281, 4
      %v4284 = vshll.u32 %v4127, 16
      %v4286 = vrot.slane %v4284, 5
      %v4287 = vor.u32 %v4283, %v4286
      %v4288 = vrot.slane %v4287, 4
      %v4290 = vshll.u32 %v4128, 16
      %v4292 = vrot.slane %v4290, 5
      %v4293 = vsel %vm2313, %v4288, %v4292
      %v4294 = vshrl.u32 %v4128, 16
      %v4296 = vrot.slane %v4294, 4
      %v4297 = vor.u32 %v4296, %v4292
      %v4298 = vrot.slane %v4297, 4
      %v4300 = vshll.u32 %v4129, 16
      %v4302 = vrot.slane %v4300, 5
      %v4303 = vsel %vm2313, %v4298, %v4302
      %v4305 = vshrl.u32 %v4130, 16
      %v4307 = vrot.slane %v4305, 4
      %v4308 = vshll.u32 %v4130, 16
      %v4310 = vrot.slane %v4308, 5
      %v4311 = vor.u32 %v4307, %v4310
      %v4312 = vrot.slane %v4311, 4
      %v4314 = vshll.u32 %v4131, 16
      %v4316 = vrot.slane %v4314, 5
      %v4317 = vsel %vm2313, %v4312, %v4316
      %v4318 = vshrl.u32 %v4131, 16
      %v4320 = vrot.slane %v4318, 4
      %v4321 = vor.u32 %v4320, %v4316
      %v4322 = vrot.slane %v4321, 4
      %v4324 = vshll.u32 %v4132, 16
      %v4326 = vrot.slane %v4324, 5
      %v4327 = vsel %vm2313, %v4322, %v4326
      %v4329 = vshrl.u32 %v4133, 16
      %v4331 = vrot.slane %v4329, 4
      %v4332 = vshll.u32 %v4133, 16
      %v4334 = vrot.slane %v4332, 5
      %v4335 = vor.u32 %v4331, %v4334
      %v4336 = vrot.slane %v4335, 4
      %v4338 = vshll.u32 %v4134, 16
      %v4340 = vrot.slane %v4338, 5
      %v4341 = vsel %vm2313, %v4336, %v4340
      %v4342 = vshrl.u32 %v4134, 16
      %v4344 = vrot.slane %v4342, 4
      %v4345 = vor.u32 %v4344, %v4340
      %v4346 = vrot.slane %v4345, 4
      %v4348 = vshll.u32 %v4135, 16
      %v4350 = vrot.slane %v4348, 5
      %v4351 = vsel %vm2313, %v4346, %v4350
      %v4353 = vshrl.u32 %v4136, 16
      %v4355 = vrot.slane %v4353, 4
      %v4356 = vshll.u32 %v4136, 16
      %v4358 = vrot.slane %v4356, 5
      %v4359 = vor.u32 %v4355, %v4358
      %v4360 = vrot.slane %v4359, 4
      %v4362 = vshll.u32 %v4137, 16
      %v4364 = vrot.slane %v4362, 5
      %v4365 = vsel %vm2313, %v4360, %v4364
      %v4366 = vshrl.u32 %v4137, 16
      %v4368 = vrot.slane %v4366, 4
      %v4369 = vor.u32 %v4368, %v4364
      %v4370 = vrot.slane %v4369, 4
      %v4372 = vshll.u32 %v4138, 16
      %v4374 = vrot.slane %v4372, 5
      %v4375 = vsel %vm2313, %v4370, %v4374
      %v4377 = vshrl.u32 %v4139, 16
      %v4379 = vrot.slane %v4377, 4
      %v4380 = vshll.u32 %v4139, 16
      %v4382 = vrot.slane %v4380, 5
      %v4383 = vor.u32 %v4379, %v4382
      %v4384 = vrot.slane %v4383, 4
      %v4386 = vshll.u32 %v4140, 16
      %v4388 = vrot.slane %v4386, 5
      %v4389 = vsel %vm2313, %v4384, %v4388
      %v4390 = vshrl.u32 %v4140, 16
      %v4392 = vrot.slane %v4390, 4
      %v4393 = vor.u32 %v4392, %v4388
      %v4394 = vrot.slane %v4393, 4
      %v4396 = vshll.u32 %v4141, 16
      %v4398 = vrot.slane %v4396, 5
      %v4399 = vsel %vm2313, %v4394, %v4398
      %v4401 = vshrl.u32 %v4142, 16
      %v4403 = vrot.slane %v4401, 4
      %v4404 = vshll.u32 %v4142, 16
      %v4406 = vrot.slane %v4404, 5
      %v4407 = vor.u32 %v4403, %v4406
      %v4408 = vrot.slane %v4407, 4
      %v4410 = vshll.u32 %v4143, 16
      %v4412 = vrot.slane %v4410, 5
      %v4413 = vsel %vm2313, %v4408, %v4412
      %v4414 = vshrl.u32 %v4143, 16
      %v4416 = vrot.slane %v4414, 4
      %v4417 = vor.u32 %v4416, %v4412
      %v4418 = vrot.slane %v4417, 4
      %v4420 = vshll.u32 %v4144, 16
      %v4422 = vrot.slane %v4420, 5
      %v4423 = vsel %vm2313, %v4418, %v4422
      %v4425 = vshrl.u32 %v4145, 16
      %v4427 = vrot.slane %v4425, 4
      %v4428 = vshll.u32 %v4145, 16
      %v4430 = vrot.slane %v4428, 5
      %v4431 = vor.u32 %v4427, %v4430
      %v4432 = vrot.slane %v4431, 4
      %v4434 = vshll.u32 %v4146, 16
      %v4436 = vrot.slane %v4434, 5
      %v4437 = vsel %vm2313, %v4432, %v4436
      %v4438 = vshrl.u32 %v4146, 16
      %v4440 = vrot.slane %v4438, 4
      %v4441 = vor.u32 %v4440, %v4436
      %v4442 = vrot.slane %v4441, 4
      %v4444 = vshll.u32 %v4147, 16
      %v4446 = vrot.slane %v4444, 5
      %v4447 = vsel %vm2313, %v4442, %v4446
      %v4449 = vshrl.u32 %v4148, 16
      %v4451 = vrot.slane %v4449, 4
      %v4452 = vshll.u32 %v4148, 16
      %v4454 = vrot.slane %v4452, 5
      %v4455 = vor.u32 %v4451, %v4454
      %v4456 = vrot.slane %v4455, 4
      %v4458 = vshll.u32 %v4149, 16
      %v4460 = vrot.slane %v4458, 5
      %v4461 = vsel %vm2313, %v4456, %v4460
      %v4462 = vshrl.u32 %v4149, 16
      %v4464 = vrot.slane %v4462, 4
      %v4465 = vor.u32 %v4464, %v4460
      %v4466 = vrot.slane %v4465, 4
      %v4468 = vshll.u32 %v4150, 16
      %v4470 = vrot.slane %v4468, 5
      %v4471 = vsel %vm2313, %v4466, %v4470
      %v4473 = vshrl.u32 %v4151, 16
      %v4475 = vrot.slane %v4473, 4
      %v4476 = vshll.u32 %v4151, 16
      %v4478 = vrot.slane %v4476, 5
      %v4479 = vor.u32 %v4475, %v4478
      %v4480 = vrot.slane %v4479, 4
      %v4482 = vshll.u32 %v4152, 16
      %v4484 = vrot.slane %v4482, 5
      %v4485 = vsel %vm2313, %v4480, %v4484
      %v4486 = vshrl.u32 %v4152, 16
      %v4488 = vrot.slane %v4486, 4
      %v4489 = vor.u32 %v4488, %v4484
      %v4490 = vrot.slane %v4489, 4
      %v4492 = vshll.u32 %v4153, 16
      %v4494 = vrot.slane %v4492, 5
      %v4495 = vsel %vm2313, %v4490, %v4494
      %v4497 = vshrl.u32 %v4154, 16
      %v4499 = vrot.slane %v4497, 4
      %v4500 = vshll.u32 %v4154, 16
      %v4502 = vrot.slane %v4500, 5
      %v4503 = vor.u32 %v4499, %v4502
      %v4504 = vrot.slane %v4503, 4
      %v4506 = vshll.u32 %v4155, 16
      %v4508 = vrot.slane %v4506, 5
      %v4509 = vsel %vm2313, %v4504, %v4508
      %v4510 = vshrl.u32 %v4155, 16
      %v4512 = vrot.slane %v4510, 4
      %v4513 = vor.u32 %v4512, %v4508
      %v4514 = vrot.slane %v4513, 4
      %v4516 = vshll.u32 %v4156, 16
      %v4518 = vrot.slane %v4516, 5
      %v4519 = vsel %vm2313, %v4514, %v4518
      %v4521 = vshrl.u32 %v4157, 16
      %v4523 = vrot.slane %v4521, 4
      %v4524 = vshll.u32 %v4157, 16
      %v4526 = vrot.slane %v4524, 5
      %v4527 = vor.u32 %v4523, %v4526
      %v4528 = vrot.slane %v4527, 4
      %v4530 = vshll.u32 %v4158, 16
      %v4532 = vrot.slane %v4530, 5
      %v4533 = vsel %vm2313, %v4528, %v4532
      %v4534 = vshrl.u32 %v4158, 16
      %v4536 = vrot.slane %v4534, 4
      %v4537 = vor.u32 %v4536, %v4532
      %v4538 = vrot.slane %v4537, 4
      %v4540 = vshll.u32 %v4159, 16
      %v4542 = vrot.slane %v4540, 5
      %v4543 = vsel %vm2313, %v4538, %v4542
      %s4544 = scalar_lea.vmem %s6, 64
      %v4545 = vld [vmem:[%s4544] sm:$0xf]
      %v4546 = vld [vmem:[%s4544 + $0x4] sm:$0xf]
      %v4547 = vld [vmem:[%s4544 + $0x8] sm:$0xf]
      %v4548 = vld [vmem:[%s4544 + $0xc] sm:$0xf]
      %v4549 = vunpack.c.l.b16 %v4173
      %v4550 = vunpack.c.l.b16 %v4183
      %v4551 = vunpack.c.l.b16 %v4197
      %v4552 = vunpack.c.l.b16 %v4207
      %v4553 = vunpack.c.l.b16 %v4221
      %v4554 = vunpack.c.l.b16 %v4231
      %v4555 = vunpack.c.l.b16 %v4245
      %v4556 = vunpack.c.l.b16 %v4255
      %v4557 = vunpack.c.l.b16 %v4269
      %v4558 = vunpack.c.l.b16 %v4279
      %v4559 = vunpack.c.l.b16 %v4293
      %v4560 = vunpack.c.l.b16 %v4303
      %v4561 = vunpack.c.l.b16 %v4317
      %v4562 = vunpack.c.l.b16 %v4327
      %v4563 = vunpack.c.l.b16 %v4341
      %v4564 = vunpack.c.l.b16 %v4351
      %v4565 = vunpack.c.l.b16 %v4365
      %v4566 = vunpack.c.l.b16 %v4375
      %v4567 = vunpack.c.l.b16 %v4389
      %v4568 = vunpack.c.l.b16 %v4399
      %v4569 = vunpack.c.l.b16 %v4413
      %v4570 = vunpack.c.l.b16 %v4423
      %v4571 = vunpack.c.l.b16 %v4437
      %v4572 = vunpack.c.l.b16 %v4447
      %v4573 = vunpack.c.l.b16 %v4461
      %v4574 = vunpack.c.l.b16 %v4471
      %v4575 = vunpack.c.l.b16 %v4485
      %v4576 = vunpack.c.l.b16 %v4495
      %v4577 = vunpack.c.l.b16 %v4509
      %v4578 = vunpack.c.l.b16 %v4519
      %v4579 = vunpack.c.l.b16 %v4533
      %v4580 = vunpack.c.l.b16 %v4543
      %v4581 = vpack.c.b16 %v4550, %v4549
      %v4582 = vpack.c.b16 %v4552, %v4551
      %v4583 = vpack.c.b16 %v4554, %v4553
      %v4584 = vpack.c.b16 %v4556, %v4555
      %v4585 = vpack.c.b16 %v4558, %v4557
      %v4586 = vpack.c.b16 %v4560, %v4559
      %v4587 = vpack.c.b16 %v4562, %v4561
      %v4588 = vpack.c.b16 %v4564, %v4563
      %v4589 = vpack.c.b16 %v4566, %v4565
      %v4590 = vpack.c.b16 %v4568, %v4567
      %v4591 = vpack.c.b16 %v4570, %v4569
      %v4592 = vpack.c.b16 %v4572, %v4571
      %v4593 = vpack.c.b16 %v4574, %v4573
      %v4594 = vpack.c.b16 %v4576, %v4575
      %v4595 = vpack.c.b16 %v4578, %v4577
      %v4596 = vpack.c.b16 %v4580, %v4579
      %v4601 = vunpack.c.l.b16 %v4545
      %v4602 = vunpack.c.l.b16 %v4546
      %v4603 = vunpack.c.l.b16 %v4547
      %v4604 = vunpack.c.l.b16 %v4548
      %v4605 = vpack.c.b16 %v4602, %v4601
      %v4606 = vpack.c.b16 %v4604, %v4603
      %v4610 = vsel %vm663, %v4581, 0
      %v4613 = vsel %vm663, %v4582, 0
      %v4616 = vsel %vm663, %v4583, 0
      %v4619 = vsel %vm663, %v4584, 0
      %v4622 = vsel %vm663, %v4585, 0
      %v4625 = vsel %vm663, %v4586, 0
      %v4628 = vsel %vm663, %v4587, 0
      %v4631 = vsel %vm663, %v4588, 0
      %v4634 = vsel %vm663, %v4589, 0
      %v4637 = vsel %vm663, %v4590, 0
      %v4640 = vsel %vm663, %v4591, 0
      %v4643 = vsel %vm663, %v4592, 0
      %v4646 = vsel %vm663, %v4593, 0
      %v4649 = vsel %vm663, %v4594, 0
      %v4652 = vsel %vm663, %v4595, 0
      %v4655 = vsel %vm663, %v4596, 0
      %4657 = vmatprep.subr.bf16.mxu0 0
      %4658 = vmatpush1.bf16.msra.mxu0 %v4605
      %4659 = vmatprep.subr.bf16.mxu0 0
      %4660 = vmatpush1.bf16.msra.mxu0 %v4606
      %4661 = vmatprep.subr.bf16.mxu0 0
      %4662 = vmatpush1.bf16.msra.mxu0 0
      %4663 = vmatprep.subr.bf16.mxu0 0
      %4664 = vmatpush1.bf16.msra.mxu0 0
      %4665 = vmatprep.subr.bf16.mxu0 0
      %4666 = vmatpush1.bf16.msra.mxu0 0
      %4667 = vmatprep.subr.bf16.mxu0 0
      %4668 = vmatpush1.bf16.msra.mxu0 0
      %4669 = vmatprep.subr.bf16.mxu0 0
      %4670 = vmatpush1.bf16.msra.mxu0 0
      %4671 = vmatprep.subr.bf16.mxu0 0
      %4672 = vmatpush1.bf16.msra.mxu0 0
      %4673 = vmatprep.subr.bf16.mxu0 0
      %4674 = vmatpush1.bf16.msra.mxu0 0
      %4675 = vmatprep.subr.bf16.mxu0 0
      %4676 = vmatpush1.bf16.msra.mxu0 0
      %4677 = vmatprep.subr.bf16.mxu0 0
      %4678 = vmatpush1.bf16.msra.mxu0 0
      %4679 = vmatprep.subr.bf16.mxu0 0
      %4680 = vmatpush1.bf16.msra.mxu0 0
      %4681 = vmatprep.subr.bf16.mxu0 0
      %4682 = vmatpush1.bf16.msra.mxu0 0
      %4683 = vmatprep.subr.bf16.mxu0 0
      %4684 = vmatpush1.bf16.msra.mxu0 0
      %4685 = vmatprep.subr.bf16.mxu0 0
      %4686 = vmatpush1.bf16.msra.mxu0 0
      %4687 = vmatprep.subr.bf16.mxu0 0
      %4688 = vmatpush1.bf16.msra.mxu0 0
      %4689 = vmatprep.mubr.bf16.mxu0 0
      %4690 = vmatmul.mubr.bf16.gmra.mrb[0].mxu0 %v4610
      %v4691 = vpop.f32.mrb[0].mxu0
      %v4692 = vadd.f32 0.0, %v4691
      %v4693 = vpop.f32.mrb[0].mxu0
      %v4694 = vpop.f32.mrb[0].mxu0
      %v4695 = vadd.f32 0.0, %v4694
      %v4696 = vpop.f32.mrb[0].mxu0
      %4697 = vmatprep.mubr.bf16.mxu0 0
      %4698 = vmatmul.mubr.bf16.gmra.mrb[0].mxu0 %v4613
      %v4699 = vpop.f32.mrb[0].mxu0
      %v4700 = vadd.f32 0.0, %v4699
      %v4701 = vpop.f32.mrb[0].mxu0
      %v4702 = vpop.f32.mrb[0].mxu0
      %v4703 = vadd.f32 0.0, %v4702
      %v4704 = vpop.f32.mrb[0].mxu0
      %4705 = vmatprep.mubr.bf16.mxu0 0
      %4706 = vmatmul.mubr.bf16.gmra.mrb[0].mxu0 %v4616
      %v4707 = vpop.f32.mrb[0].mxu0
      %v4708 = vadd.f32 0.0, %v4707
      %v4709 = vpop.f32.mrb[0].mxu0
      %v4710 = vpop.f32.mrb[0].mxu0
      %v4711 = vadd.f32 0.0, %v4710
      %v4712 = vpop.f32.mrb[0].mxu0
      %4713 = vmatprep.mubr.bf16.mxu0 0
      %4714 = vmatmul.mubr.bf16.gmra.mrb[0].mxu0 %v4619
      %v4715 = vpop.f32.mrb[0].mxu0
      %v4716 = vadd.f32 0.0, %v4715
      %v4717 = vpop.f32.mrb[0].mxu0
      %v4718 = vpop.f32.mrb[0].mxu0
      %v4719 = vadd.f32 0.0, %v4718
      %v4720 = vpop.f32.mrb[0].mxu0
      %4721 = vmatprep.mubr.bf16.mxu0 0
      %4722 = vmatmul.mubr.bf16.gmra.mrb[0].mxu0 %v4622
      %v4723 = vpop.f32.mrb[0].mxu0
      %v4724 = vadd.f32 0.0, %v4723
      %v4725 = vpop.f32.mrb[0].mxu0
      %v4726 = vpop.f32.mrb[0].mxu0
      %v4727 = vadd.f32 0.0, %v4726
      %v4728 = vpop.f32.mrb[0].mxu0
      %4729 = vmatprep.mubr.bf16.mxu0 0
      %4730 = vmatmul.mubr.bf16.gmra.mrb[0].mxu0 %v4625
      %v4731 = vpop.f32.mrb[0].mxu0
      %v4732 = vadd.f32 0.0, %v4731
      %v4733 = vpop.f32.mrb[0].mxu0
      %v4734 = vpop.f32.mrb[0].mxu0
      %v4735 = vadd.f32 0.0, %v4734
      %v4736 = vpop.f32.mrb[0].mxu0
      %4737 = vmatprep.mubr.bf16.mxu0 0
      %4738 = vmatmul.mubr.bf16.gmra.mrb[0].mxu0 %v4628
      %v4739 = vpop.f32.mrb[0].mxu0
      %v4740 = vadd.f32 0.0, %v4739
      %v4741 = vpop.f32.mrb[0].mxu0
      %v4742 = vpop.f32.mrb[0].mxu0
      %v4743 = vadd.f32 0.0, %v4742
      %v4744 = vpop.f32.mrb[0].mxu0
      %4745 = vmatprep.mubr.bf16.mxu0 0
      %4746 = vmatmul.mubr.bf16.gmra.mrb[0].mxu0 %v4631
      %v4747 = vpop.f32.mrb[0].mxu0
      %v4748 = vadd.f32 0.0, %v4747
      %v4749 = vpop.f32.mrb[0].mxu0
      %v4750 = vpop.f32.mrb[0].mxu0
      %v4751 = vadd.f32 0.0, %v4750
      %v4752 = vpop.f32.mrb[0].mxu0
      %4753 = vmatprep.mubr.bf16.mxu0 0
      %4754 = vmatmul.mubr.bf16.gmra.mrb[0].mxu0 %v4634
      %v4755 = vpop.f32.mrb[0].mxu0
      %v4756 = vadd.f32 0.0, %v4755
      %v4757 = vpop.f32.mrb[0].mxu0
      %v4758 = vpop.f32.mrb[0].mxu0
      %v4759 = vadd.f32 0.0, %v4758
      %v4760 = vpop.f32.mrb[0].mxu0
      %4761 = vmatprep.mubr.bf16.mxu0 0
      %4762 = vmatmul.mubr.bf16.gmra.mrb[0].mxu0 %v4637
      %v4763 = vpop.f32.mrb[0].mxu0
      %v4764 = vadd.f32 0.0, %v4763
      %v4765 = vpop.f32.mrb[0].mxu0
      %v4766 = vpop.f32.mrb[0].mxu0
      %v4767 = vadd.f32 0.0, %v4766
      %v4768 = vpop.f32.mrb[0].mxu0
      %4769 = vmatprep.mubr.bf16.mxu0 0
      %4770 = vmatmul.mubr.bf16.gmra.mrb[0].mxu0 %v4640
      %v4771 = vpop.f32.mrb[0].mxu0
      %v4772 = vadd.f32 0.0, %v4771
      %v4773 = vpop.f32.mrb[0].mxu0
      %v4774 = vpop.f32.mrb[0].mxu0
      %v4775 = vadd.f32 0.0, %v4774
      %v4776 = vpop.f32.mrb[0].mxu0
      %4777 = vmatprep.mubr.bf16.mxu0 0
      %4778 = vmatmul.mubr.bf16.gmra.mrb[0].mxu0 %v4643
      %v4779 = vpop.f32.mrb[0].mxu0
      %v4780 = vadd.f32 0.0, %v4779
      %v4781 = vpop.f32.mrb[0].mxu0
      %v4782 = vpop.f32.mrb[0].mxu0
      %v4783 = vadd.f32 0.0, %v4782
      %v4784 = vpop.f32.mrb[0].mxu0
      %4785 = vmatprep.mubr.bf16.mxu0 0
      %4786 = vmatmul.mubr.bf16.gmra.mrb[0].mxu0 %v4646
      %v4787 = vpop.f32.mrb[0].mxu0
      %v4788 = vadd.f32 0.0, %v4787
      %v4789 = vpop.f32.mrb[0].mxu0
      %v4790 = vpop.f32.mrb[0].mxu0
      %v4791 = vadd.f32 0.0, %v4790
      %v4792 = vpop.f32.mrb[0].mxu0
      %4793 = vmatprep.mubr.bf16.mxu0 0
      %4794 = vmatmul.mubr.bf16.gmra.mrb[0].mxu0 %v4649
      %v4795 = vpop.f32.mrb[0].mxu0
      %v4796 = vadd.f32 0.0, %v4795
      %v4797 = vpop.f32.mrb[0].mxu0
      %v4798 = vpop.f32.mrb[0].mxu0
      %v4799 = vadd.f32 0.0, %v4798
      %v4800 = vpop.f32.mrb[0].mxu0
      %4801 = vmatprep.mubr.bf16.mxu0 0
      %4802 = vmatmul.mubr.bf16.gmra.mrb[0].mxu0 %v4652
      %v4803 = vpop.f32.mrb[0].mxu0
      %v4804 = vadd.f32 0.0, %v4803
      %v4805 = vpop.f32.mrb[0].mxu0
      %v4806 = vpop.f32.mrb[0].mxu0
      %v4807 = vadd.f32 0.0, %v4806
      %v4808 = vpop.f32.mrb[0].mxu0
      %4809 = vmatprep.mubr.bf16.mxu0 0
      %4810 = vmatmul.mubr.bf16.gmra.mrb[0].mxu0 %v4655
      %v4811 = vpop.f32.mrb[0].mxu0
      %v4812 = vadd.f32 0.0, %v4811
      %v4813 = vpop.f32.mrb[0].mxu0
      %v4814 = vpop.f32.mrb[0].mxu0
      %v4815 = vadd.f32 0.0, %v4814
      %v4816 = vpop.f32.mrb[0].mxu0
      %4817 = vdwg.mxu0
      %v4818 = vadd.f32 %v4080, %v4692
      %v4819 = vadd.f32 %v4081, %v4695
      %v4820 = vadd.f32 %v4082, %v4700
      %v4821 = vadd.f32 %v4083, %v4703
      %v4822 = vadd.f32 %v4084, %v4708
      %v4823 = vadd.f32 %v4085, %v4711
      %v4824 = vadd.f32 %v4086, %v4716
      %v4825 = vadd.f32 %v4087, %v4719
      %v4826 = vadd.f32 %v4088, %v4724
      %v4827 = vadd.f32 %v4089, %v4727
      %v4828 = vadd.f32 %v4090, %v4732
      %v4829 = vadd.f32 %v4091, %v4735
      %v4830 = vadd.f32 %v4092, %v4740
      %v4831 = vadd.f32 %v4093, %v4743
      %v4832 = vadd.f32 %v4094, %v4748
      %v4833 = vadd.f32 %v4095, %v4751
      %v4834 = vadd.f32 %v4096, %v4756
      %v4835 = vadd.f32 %v4097, %v4759
      %v4836 = vadd.f32 %v4098, %v4764
      %v4837 = vadd.f32 %v4099, %v4767
      %v4838 = vadd.f32 %v4100, %v4772
      %v4839 = vadd.f32 %v4101, %v4775
      %v4840 = vadd.f32 %v4102, %v4780
      %v4841 = vadd.f32 %v4103, %v4783
      %v4842 = vadd.f32 %v4104, %v4788
      %v4843 = vadd.f32 %v4105, %v4791
      %v4844 = vadd.f32 %v4106, %v4796
      %v4845 = vadd.f32 %v4107, %v4799
      %v4846 = vadd.f32 %v4108, %v4804
      %v4847 = vadd.f32 %v4109, %v4807
      %v4848 = vadd.f32 %v4110, %v4812
      %v4849 = vadd.f32 %v4111, %v4815
      %v4850 = vld [vmem:[%s1625] sm:$0xe]
      %v4851 = vld [vmem:[%s1625 + $0xc] sm:$0xe]
      %v4852 = vld [vmem:[%s1625 + $0x18] sm:$0xe]
      %v4853 = vld [vmem:[%s1625 + $0x24] sm:$0xe]
      %v4854 = vld [vmem:[%s1625 + $0x30] sm:$0xe]
      %v4855 = vld [vmem:[%s1625 + $0x3c] sm:$0xe]
      %v4856 = vld [vmem:[%s1625 + $0x48] sm:$0xe]
      %v4857 = vld [vmem:[%s1625 + $0x54] sm:$0xe]
      %v4858 = vld [vmem:[%s1625 + $0x60] sm:$0xe]
      %v4859 = vld [vmem:[%s1625 + $0x6c] sm:$0xe]
      %v4860 = vld [vmem:[%s1625 + $0x78] sm:$0xe]
      %v4861 = vld [vmem:[%s1625 + $0x84] sm:$0xe]
      %v4862 = vld [vmem:[%s1625 + $0x90] sm:$0xe]
      %v4863 = vld [vmem:[%s1625 + $0x9c] sm:$0xe]
      %v4864 = vld [vmem:[%s1625 + $0xa8] sm:$0xe]
      %v4865 = vld [vmem:[%s1625 + $0xb4] sm:$0xe]
      %v4914 = vrot.slane %v4850, 5
      %v4915 = vrot.slane %v4914, 4
      %v4916 = vrot.slane %v4113, 5
      %v4917 = vsel %vm3323, %v4915, %v4916
      %v4918 = vrot.slane %v4916, 4
      %v4919 = vrot.slane %v4114, 5
      %v4920 = vsel %vm3323, %v4918, %v4919
      %v4921 = vrot.slane %v4851, 5
      %v4922 = vrot.slane %v4921, 4
      %v4923 = vrot.slane %v4116, 5
      %v4924 = vsel %vm3323, %v4922, %v4923
      %v4925 = vrot.slane %v4923, 4
      %v4926 = vrot.slane %v4117, 5
      %v4927 = vsel %vm3323, %v4925, %v4926
      %v4928 = vrot.slane %v4852, 5
      %v4929 = vrot.slane %v4928, 4
      %v4930 = vrot.slane %v4119, 5
      %v4931 = vsel %vm3323, %v4929, %v4930
      %v4932 = vrot.slane %v4930, 4
      %v4933 = vrot.slane %v4120, 5
      %v4934 = vsel %vm3323, %v4932, %v4933
      %v4935 = vrot.slane %v4853, 5
      %v4936 = vrot.slane %v4935, 4
      %v4937 = vrot.slane %v4122, 5
      %v4938 = vsel %vm3323, %v4936, %v4937
      %v4939 = vrot.slane %v4937, 4
      %v4940 = vrot.slane %v4123, 5
      %v4941 = vsel %vm3323, %v4939, %v4940
      %v4942 = vrot.slane %v4854, 5
      %v4943 = vrot.slane %v4942, 4
      %v4944 = vrot.slane %v4125, 5
      %v4945 = vsel %vm3323, %v4943, %v4944
      %v4946 = vrot.slane %v4944, 4
      %v4947 = vrot.slane %v4126, 5
      %v4948 = vsel %vm3323, %v4946, %v4947
      %v4949 = vrot.slane %v4855, 5
      %v4950 = vrot.slane %v4949, 4
      %v4951 = vrot.slane %v4128, 5
      %v4952 = vsel %vm3323, %v4950, %v4951
      %v4953 = vrot.slane %v4951, 4
      %v4954 = vrot.slane %v4129, 5
      %v4955 = vsel %vm3323, %v4953, %v4954
      %v4956 = vrot.slane %v4856, 5
      %v4957 = vrot.slane %v4956, 4
      %v4958 = vrot.slane %v4131, 5
      %v4959 = vsel %vm3323, %v4957, %v4958
      %v4960 = vrot.slane %v4958, 4
      %v4961 = vrot.slane %v4132, 5
      %v4962 = vsel %vm3323, %v4960, %v4961
      %v4963 = vrot.slane %v4857, 5
      %v4964 = vrot.slane %v4963, 4
      %v4965 = vrot.slane %v4134, 5
      %v4966 = vsel %vm3323, %v4964, %v4965
      %v4967 = vrot.slane %v4965, 4
      %v4968 = vrot.slane %v4135, 5
      %v4969 = vsel %vm3323, %v4967, %v4968
      %v4970 = vrot.slane %v4858, 5
      %v4971 = vrot.slane %v4970, 4
      %v4972 = vrot.slane %v4137, 5
      %v4973 = vsel %vm3323, %v4971, %v4972
      %v4974 = vrot.slane %v4972, 4
      %v4975 = vrot.slane %v4138, 5
      %v4976 = vsel %vm3323, %v4974, %v4975
      %v4977 = vrot.slane %v4859, 5
      %v4978 = vrot.slane %v4977, 4
      %v4979 = vrot.slane %v4140, 5
      %v4980 = vsel %vm3323, %v4978, %v4979
      %v4981 = vrot.slane %v4979, 4
      %v4982 = vrot.slane %v4141, 5
      %v4983 = vsel %vm3323, %v4981, %v4982
      %v4984 = vrot.slane %v4860, 5
      %v4985 = vrot.slane %v4984, 4
      %v4986 = vrot.slane %v4143, 5
      %v4987 = vsel %vm3323, %v4985, %v4986
      %v4988 = vrot.slane %v4986, 4
      %v4989 = vrot.slane %v4144, 5
      %v4990 = vsel %vm3323, %v4988, %v4989
      %v4991 = vrot.slane %v4861, 5
      %v4992 = vrot.slane %v4991, 4
      %v4993 = vrot.slane %v4146, 5
      %v4994 = vsel %vm3323, %v4992, %v4993
      %v4995 = vrot.slane %v4993, 4
      %v4996 = vrot.slane %v4147, 5
      %v4997 = vsel %vm3323, %v4995, %v4996
      %v4998 = vrot.slane %v4862, 5
      %v4999 = vrot.slane %v4998, 4
      %v5000 = vrot.slane %v4149, 5
      %v5001 = vsel %vm3323, %v4999, %v5000
      %v5002 = vrot.slane %v5000, 4
      %v5003 = vrot.slane %v4150, 5
      %v5004 = vsel %vm3323, %v5002, %v5003
      %v5005 = vrot.slane %v4863, 5
      %v5006 = vrot.slane %v5005, 4
      %v5007 = vrot.slane %v4152, 5
      %v5008 = vsel %vm3323, %v5006, %v5007
      %v5009 = vrot.slane %v5007, 4
      %v5010 = vrot.slane %v4153, 5
      %v5011 = vsel %vm3323, %v5009, %v5010
      %v5012 = vrot.slane %v4864, 5
      %v5013 = vrot.slane %v5012, 4
      %v5014 = vrot.slane %v4155, 5
      %v5015 = vsel %vm3323, %v5013, %v5014
      %v5016 = vrot.slane %v5014, 4
      %v5017 = vrot.slane %v4156, 5
      %v5018 = vsel %vm3323, %v5016, %v5017
      %v5019 = vrot.slane %v4865, 5
      %v5020 = vrot.slane %v5019, 4
      %v5021 = vrot.slane %v4158, 5
      %v5022 = vsel %vm3323, %v5020, %v5021
      %v5023 = vrot.slane %v5021, 4
      %v5024 = vrot.slane %v4159, 5
      %v5025 = vsel %vm3323, %v5023, %v5024
      %s5026 = scalar_lea.vmem %s6, 80
      %v5027 = vld [vmem:[%s5026] sm:$0xf]
      %v5028 = vld [vmem:[%s5026 + $0x4] sm:$0xf]
      %v5029 = vld [vmem:[%s5026 + $0x8] sm:$0xf]
      %v5030 = vld [vmem:[%s5026 + $0xc] sm:$0xf]
      %v5031 = vunpack.c.l.b16 %v4917
      %v5032 = vunpack.c.l.b16 %v4920
      %v5033 = vunpack.c.l.b16 %v4924
      %v5034 = vunpack.c.l.b16 %v4927
      %v5035 = vunpack.c.l.b16 %v4931
      %v5036 = vunpack.c.l.b16 %v4934
      %v5037 = vunpack.c.l.b16 %v4938
      %v5038 = vunpack.c.l.b16 %v4941
      %v5039 = vunpack.c.l.b16 %v4945
      %v5040 = vunpack.c.l.b16 %v4948
      %v5041 = vunpack.c.l.b16 %v4952
      %v5042 = vunpack.c.l.b16 %v4955
      %v5043 = vunpack.c.l.b16 %v4959
      %v5044 = vunpack.c.l.b16 %v4962
      %v5045 = vunpack.c.l.b16 %v4966
      %v5046 = vunpack.c.l.b16 %v4969
      %v5047 = vunpack.c.l.b16 %v4973
      %v5048 = vunpack.c.l.b16 %v4976
      %v5049 = vunpack.c.l.b16 %v4980
      %v5050 = vunpack.c.l.b16 %v4983
      %v5051 = vunpack.c.l.b16 %v4987
      %v5052 = vunpack.c.l.b16 %v4990
      %v5053 = vunpack.c.l.b16 %v4994
      %v5054 = vunpack.c.l.b16 %v4997
      %v5055 = vunpack.c.l.b16 %v5001
      %v5056 = vunpack.c.l.b16 %v5004
      %v5057 = vunpack.c.l.b16 %v5008
      %v5058 = vunpack.c.l.b16 %v5011
      %v5059 = vunpack.c.l.b16 %v5015
      %v5060 = vunpack.c.l.b16 %v5018
      %v5061 = vunpack.c.l.b16 %v5022
      %v5062 = vunpack.c.l.b16 %v5025
      %v5063 = vpack.c.b16 %v5032, %v5031
      %v5064 = vpack.c.b16 %v5034, %v5033
      %v5065 = vpack.c.b16 %v5036, %v5035
      %v5066 = vpack.c.b16 %v5038, %v5037
      %v5067 = vpack.c.b16 %v5040, %v5039
      %v5068 = vpack.c.b16 %v5042, %v5041
      %v5069 = vpack.c.b16 %v5044, %v5043
      %v5070 = vpack.c.b16 %v5046, %v5045
      %v5071 = vpack.c.b16 %v5048, %v5047
      %v5072 = vpack.c.b16 %v5050, %v5049
      %v5073 = vpack.c.b16 %v5052, %v5051
      %v5074 = vpack.c.b16 %v5054, %v5053
      %v5075 = vpack.c.b16 %v5056, %v5055
      %v5076 = vpack.c.b16 %v5058, %v5057
      %v5077 = vpack.c.b16 %v5060, %v5059
      %v5078 = vpack.c.b16 %v5062, %v5061
      %v5083 = vunpack.c.l.b16 %v5027
      %v5084 = vunpack.c.l.b16 %v5028
      %v5085 = vunpack.c.l.b16 %v5029
      %v5086 = vunpack.c.l.b16 %v5030
      %v5087 = vpack.c.b16 %v5084, %v5083
      %v5088 = vpack.c.b16 %v5086, %v5085
      %v5092 = vsel %vm663, %v5063, 0
      %v5095 = vsel %vm663, %v5064, 0
      %v5098 = vsel %vm663, %v5065, 0
      %v5101 = vsel %vm663, %v5066, 0
      %v5104 = vsel %vm663, %v5067, 0
      %v5107 = vsel %vm663, %v5068, 0
      %v5110 = vsel %vm663, %v5069, 0
      %v5113 = vsel %vm663, %v5070, 0
      %v5116 = vsel %vm663, %v5071, 0
      %v5119 = vsel %vm663, %v5072, 0
      %v5122 = vsel %vm663, %v5073, 0
      %v5125 = vsel %vm663, %v5074, 0
      %v5128 = vsel %vm663, %v5075, 0
      %v5131 = vsel %vm663, %v5076, 0
      %v5134 = vsel %vm663, %v5077, 0
      %v5137 = vsel %vm663, %v5078, 0
      %5139 = vmatprep.subr.bf16.mxu0 0
      %5140 = vmatpush1.bf16.msra.mxu0 %v5087
      %5141 = vmatprep.subr.bf16.mxu0 0
      %5142 = vmatpush1.bf16.msra.mxu0 %v5088
      %5143 = vmatprep.subr.bf16.mxu0 0
      %5144 = vmatpush1.bf16.msra.mxu0 0
      %5145 = vmatprep.subr.bf16.mxu0 0
      %5146 = vmatpush1.bf16.msra.mxu0 0
      %5147 = vmatprep.subr.bf16.mxu0 0
      %5148 = vmatpush1.bf16.msra.mxu0 0
      %5149 = vmatprep.subr.bf16.mxu0 0
      %5150 = vmatpush1.bf16.msra.mxu0 0
      %5151 = vmatprep.subr.bf16.mxu0 0
      %5152 = vmatpush1.bf16.msra.mxu0 0
      %5153 = vmatprep.subr.bf16.mxu0 0
      %5154 = vmatpush1.bf16.msra.mxu0 0
      %5155 = vmatprep.subr.bf16.mxu0 0
      %5156 = vmatpush1.bf16.msra.mxu0 0
      %5157 = vmatprep.subr.bf16.mxu0 0
      %5158 = vmatpush1.bf16.msra.mxu0 0
      %5159 = vmatprep.subr.bf16.mxu0 0
      %5160 = vmatpush1.bf16.msra.mxu0 0
      %5161 = vmatprep.subr.bf16.mxu0 0
      %5162 = vmatpush1.bf16.msra.mxu0 0
      %5163 = vmatprep.subr.bf16.mxu0 0
      %5164 = vmatpush1.bf16.msra.mxu0 0
      %5165 = vmatprep.subr.bf16.mxu0 0
      %5166 = vmatpush1.bf16.msra.mxu0 0
      %5167 = vmatprep.subr.bf16.mxu0 0
      %5168 = vmatpush1.bf16.msra.mxu0 0
      %5169 = vmatprep.subr.bf16.mxu0 0
      %5170 = vmatpush1.bf16.msra.mxu0 0
      %5171 = vmatprep.mubr.bf16.mxu0 0
      %5172 = vmatmul.mubr.bf16.gmra.mrb[0].mxu0 %v5092
      %v5173 = vpop.f32.mrb[0].mxu0
      %v5174 = vadd.f32 0.0, %v5173
      %v5175 = vpop.f32.mrb[0].mxu0
      %v5176 = vpop.f32.mrb[0].mxu0
      %v5177 = vadd.f32 0.0, %v5176
      %v5178 = vpop.f32.mrb[0].mxu0
      %5179 = vmatprep.mubr.bf16.mxu0 0
      %5180 = vmatmul.mubr.bf16.gmra.mrb[0].mxu0 %v5095
      %v5181 = vpop.f32.mrb[0].mxu0
      %v5182 = vadd.f32 0.0, %v5181
      %v5183 = vpop.f32.mrb[0].mxu0
      %v5184 = vpop.f32.mrb[0].mxu0
      %v5185 = vadd.f32 0.0, %v5184
      %v5186 = vpop.f32.mrb[0].mxu0
      %5187 = vmatprep.mubr.bf16.mxu0 0
      %5188 = vmatmul.mubr.bf16.gmra.mrb[0].mxu0 %v5098
      %v5189 = vpop.f32.mrb[0].mxu0
      %v5190 = vadd.f32 0.0, %v5189
      %v5191 = vpop.f32.mrb[0].mxu0
      %v5192 = vpop.f32.mrb[0].mxu0
      %v5193 = vadd.f32 0.0, %v5192
      %v5194 = vpop.f32.mrb[0].mxu0
      %5195 = vmatprep.mubr.bf16.mxu0 0
      %5196 = vmatmul.mubr.bf16.gmra.mrb[0].mxu0 %v5101
      %v5197 = vpop.f32.mrb[0].mxu0
      %v5198 = vadd.f32 0.0, %v5197
      %v5199 = vpop.f32.mrb[0].mxu0
      %v5200 = vpop.f32.mrb[0].mxu0
      %v5201 = vadd.f32 0.0, %v5200
      %v5202 = vpop.f32.mrb[0].mxu0
      %5203 = vmatprep.mubr.bf16.mxu0 0
      %5204 = vmatmul.mubr.bf16.gmra.mrb[0].mxu0 %v5104
      %v5205 = vpop.f32.mrb[0].mxu0
      %v5206 = vadd.f32 0.0, %v5205
      %v5207 = vpop.f32.mrb[0].mxu0
      %v5208 = vpop.f32.mrb[0].mxu0
      %v5209 = vadd.f32 0.0, %v5208
      %v5210 = vpop.f32.mrb[0].mxu0
      %5211 = vmatprep.mubr.bf16.mxu0 0
      %5212 = vmatmul.mubr.bf16.gmra.mrb[0].mxu0 %v5107
      %v5213 = vpop.f32.mrb[0].mxu0
      %v5214 = vadd.f32 0.0, %v5213
      %v5215 = vpop.f32.mrb[0].mxu0
      %v5216 = vpop.f32.mrb[0].mxu0
      %v5217 = vadd.f32 0.0, %v5216
      %v5218 = vpop.f32.mrb[0].mxu0
      %5219 = vmatprep.mubr.bf16.mxu0 0
      %5220 = vmatmul.mubr.bf16.gmra.mrb[0].mxu0 %v5110
      %v5221 = vpop.f32.mrb[0].mxu0
      %v5222 = vadd.f32 0.0, %v5221
      %v5223 = vpop.f32.mrb[0].mxu0
      %v5224 = vpop.f32.mrb[0].mxu0
      %v5225 = vadd.f32 0.0, %v5224
      %v5226 = vpop.f32.mrb[0].mxu0
      %5227 = vmatprep.mubr.bf16.mxu0 0
      %5228 = vmatmul.mubr.bf16.gmra.mrb[0].mxu0 %v5113
      %v5229 = vpop.f32.mrb[0].mxu0
      %v5230 = vadd.f32 0.0, %v5229
      %v5231 = vpop.f32.mrb[0].mxu0
      %v5232 = vpop.f32.mrb[0].mxu0
      %v5233 = vadd.f32 0.0, %v5232
      %v5234 = vpop.f32.mrb[0].mxu0
      %5235 = vmatprep.mubr.bf16.mxu0 0
      %5236 = vmatmul.mubr.bf16.gmra.mrb[0].mxu0 %v5116
      %v5237 = vpop.f32.mrb[0].mxu0
      %v5238 = vadd.f32 0.0, %v5237
      %v5239 = vpop.f32.mrb[0].mxu0
      %v5240 = vpop.f32.mrb[0].mxu0
      %v5241 = vadd.f32 0.0, %v5240
      %v5242 = vpop.f32.mrb[0].mxu0
      %5243 = vmatprep.mubr.bf16.mxu0 0
      %5244 = vmatmul.mubr.bf16.gmra.mrb[0].mxu0 %v5119
      %v5245 = vpop.f32.mrb[0].mxu0
      %v5246 = vadd.f32 0.0, %v5245
      %v5247 = vpop.f32.mrb[0].mxu0
      %v5248 = vpop.f32.mrb[0].mxu0
      %v5249 = vadd.f32 0.0, %v5248
      %v5250 = vpop.f32.mrb[0].mxu0
      %5251 = vmatprep.mubr.bf16.mxu0 0
      %5252 = vmatmul.mubr.bf16.gmra.mrb[0].mxu0 %v5122
      %v5253 = vpop.f32.mrb[0].mxu0
      %v5254 = vadd.f32 0.0, %v5253
      %v5255 = vpop.f32.mrb[0].mxu0
      %v5256 = vpop.f32.mrb[0].mxu0
      %v5257 = vadd.f32 0.0, %v5256
      %v5258 = vpop.f32.mrb[0].mxu0
      %5259 = vmatprep.mubr.bf16.mxu0 0
      %5260 = vmatmul.mubr.bf16.gmra.mrb[0].mxu0 %v5125
      %v5261 = vpop.f32.mrb[0].mxu0
      %v5262 = vadd.f32 0.0, %v5261
      %v5263 = vpop.f32.mrb[0].mxu0
      %v5264 = vpop.f32.mrb[0].mxu0
      %v5265 = vadd.f32 0.0, %v5264
      %v5266 = vpop.f32.mrb[0].mxu0
      %5267 = vmatprep.mubr.bf16.mxu0 0
      %5268 = vmatmul.mubr.bf16.gmra.mrb[0].mxu0 %v5128
      %v5269 = vpop.f32.mrb[0].mxu0
      %v5270 = vadd.f32 0.0, %v5269
      %v5271 = vpop.f32.mrb[0].mxu0
      %v5272 = vpop.f32.mrb[0].mxu0
      %v5273 = vadd.f32 0.0, %v5272
      %v5274 = vpop.f32.mrb[0].mxu0
      %5275 = vmatprep.mubr.bf16.mxu0 0
      %5276 = vmatmul.mubr.bf16.gmra.mrb[0].mxu0 %v5131
      %v5277 = vpop.f32.mrb[0].mxu0
      %v5278 = vadd.f32 0.0, %v5277
      %v5279 = vpop.f32.mrb[0].mxu0
      %v5280 = vpop.f32.mrb[0].mxu0
      %v5281 = vadd.f32 0.0, %v5280
      %v5282 = vpop.f32.mrb[0].mxu0
      %5283 = vmatprep.mubr.bf16.mxu0 0
      %5284 = vmatmul.mubr.bf16.gmra.mrb[0].mxu0 %v5134
      %v5285 = vpop.f32.mrb[0].mxu0
      %v5286 = vadd.f32 0.0, %v5285
      %v5287 = vpop.f32.mrb[0].mxu0
      %v5288 = vpop.f32.mrb[0].mxu0
      %v5289 = vadd.f32 0.0, %v5288
      %v5290 = vpop.f32.mrb[0].mxu0
      %5291 = vmatprep.mubr.bf16.mxu0 0
      %5292 = vmatmul.mubr.bf16.gmra.mrb[0].mxu0 %v5137
      %v5293 = vpop.f32.mrb[0].mxu0
      %v5294 = vadd.f32 0.0, %v5293
      %v5295 = vpop.f32.mrb[0].mxu0
      %v5296 = vpop.f32.mrb[0].mxu0
      %v5297 = vadd.f32 0.0, %v5296
      %v5298 = vpop.f32.mrb[0].mxu0
      %5299 = vdwg.mxu0
      %v5300 = vadd.f32 %v4818, %v5174
      %v5301 = vadd.f32 %v4819, %v5177
      %v5302 = vadd.f32 %v4820, %v5182
      %v5303 = vadd.f32 %v4821, %v5185
      %v5304 = vadd.f32 %v4822, %v5190
      %v5305 = vadd.f32 %v4823, %v5193
      %v5306 = vadd.f32 %v4824, %v5198
      %v5307 = vadd.f32 %v4825, %v5201
      %v5308 = vadd.f32 %v4826, %v5206
      %v5309 = vadd.f32 %v4827, %v5209
      %v5310 = vadd.f32 %v4828, %v5214
      %v5311 = vadd.f32 %v4829, %v5217
      %v5312 = vadd.f32 %v4830, %v5222
      %v5313 = vadd.f32 %v4831, %v5225
      %v5314 = vadd.f32 %v4832, %v5230
      %v5315 = vadd.f32 %v4833, %v5233
      %v5316 = vadd.f32 %v4834, %v5238
      %v5317 = vadd.f32 %v4835, %v5241
      %v5318 = vadd.f32 %v4836, %v5246
      %v5319 = vadd.f32 %v4837, %v5249
      %v5320 = vadd.f32 %v4838, %v5254
      %v5321 = vadd.f32 %v4839, %v5257
      %v5322 = vadd.f32 %v4840, %v5262
      %v5323 = vadd.f32 %v4841, %v5265
      %v5324 = vadd.f32 %v4842, %v5270
      %v5325 = vadd.f32 %v4843, %v5273
      %v5326 = vadd.f32 %v4844, %v5278
      %v5327 = vadd.f32 %v4845, %v5281
      %v5328 = vadd.f32 %v4846, %v5286
      %v5329 = vadd.f32 %v4847, %v5289
      %v5330 = vadd.f32 %v4848, %v5294
      %v5331 = vadd.f32 %v4849, %v5297
      %s5332 = scalar_lea.vmem [#allocation2], 24
      %v5333 = vld [vmem:[%s5332] sm:$0xf]
      %v5334 = vld [vmem:[%s5332 + $0x4] sm:$0xf]
      %v5335 = vld [vmem:[%s5332 + $0xc] sm:$0xf]
      %v5336 = vld [vmem:[%s5332 + $0x10] sm:$0xf]
      %v5337 = vld [vmem:[%s5332 + $0x18] sm:$0xf]
      %v5338 = vld [vmem:[%s5332 + $0x1c] sm:$0xf]
      %v5339 = vld [vmem:[%s5332 + $0x24] sm:$0xf]
      %v5340 = vld [vmem:[%s5332 + $0x28] sm:$0xf]
      %v5341 = vld [vmem:[%s5332 + $0x30] sm:$0xf]
      %v5342 = vld [vmem:[%s5332 + $0x34] sm:$0xf]
      %v5343 = vld [vmem:[%s5332 + $0x3c] sm:$0xf]
      %v5344 = vld [vmem:[%s5332 + $0x40] sm:$0xf]
      %v5345 = vld [vmem:[%s5332 + $0x48] sm:$0xf]
      %v5346 = vld [vmem:[%s5332 + $0x4c] sm:$0xf]
      %v5347 = vld [vmem:[%s5332 + $0x54] sm:$0xf]
      %v5348 = vld [vmem:[%s5332 + $0x58] sm:$0xf]
      %v5349 = vld [vmem:[%s5332 + $0x60] sm:$0xf]
      %v5350 = vld [vmem:[%s5332 + $0x64] sm:$0xf]
      %v5351 = vld [vmem:[%s5332 + $0x6c] sm:$0xf]
      %v5352 = vld [vmem:[%s5332 + $0x70] sm:$0xf]
      %v5353 = vld [vmem:[%s5332 + $0x78] sm:$0xf]
      %v5354 = vld [vmem:[%s5332 + $0x7c] sm:$0xf]
      %v5355 = vld [vmem:[%s5332 + $0x84] sm:$0xf]
      %v5356 = vld [vmem:[%s5332 + $0x88] sm:$0xf]
      %v5357 = vld [vmem:[%s5332 + $0x90] sm:$0xf]
      %v5358 = vld [vmem:[%s5332 + $0x94] sm:$0xf]
      %v5359 = vld [vmem:[%s5332 + $0x9c] sm:$0xf]
      %v5360 = vld [vmem:[%s5332 + $0xa0] sm:$0xf]
      %v5361 = vld [vmem:[%s5332 + $0xa8] sm:$0xf]
      %v5362 = vld [vmem:[%s5332 + $0xac] sm:$0xf]
      %v5363 = vld [vmem:[%s5332 + $0xb4] sm:$0xf]
      %v5364 = vld [vmem:[%s5332 + $0xb8] sm:$0xf]
      %s5365 = scalar_lea.vmem %s6, 96
      %v5366 = vld [vmem:[%s5365] sm:$0xf]
      %v5367 = vld [vmem:[%s5365 + $0x4] sm:$0xf]
      %v5368 = vld [vmem:[%s5365 + $0x8] sm:$0xf]
      %v5369 = vld [vmem:[%s5365 + $0xc] sm:$0xf]
      %v5402 = vunpack.c.l.b16 %v5333
      %v5403 = vunpack.c.l.b16 %v5334
      %v5404 = vunpack.c.l.b16 %v5335
      %v5405 = vunpack.c.l.b16 %v5336
      %v5406 = vunpack.c.l.b16 %v5337
      %v5407 = vunpack.c.l.b16 %v5338
      %v5408 = vunpack.c.l.b16 %v5339
      %v5409 = vunpack.c.l.b16 %v5340
      %v5410 = vunpack.c.l.b16 %v5341
      %v5411 = vunpack.c.l.b16 %v5342
      %v5412 = vunpack.c.l.b16 %v5343
      %v5413 = vunpack.c.l.b16 %v5344
      %v5414 = vunpack.c.l.b16 %v5345
      %v5415 = vunpack.c.l.b16 %v5346
      %v5416 = vunpack.c.l.b16 %v5347
      %v5417 = vunpack.c.l.b16 %v5348
      %v5418 = vunpack.c.l.b16 %v5349
      %v5419 = vunpack.c.l.b16 %v5350
      %v5420 = vunpack.c.l.b16 %v5351
      %v5421 = vunpack.c.l.b16 %v5352
      %v5422 = vunpack.c.l.b16 %v5353
      %v5423 = vunpack.c.l.b16 %v5354
      %v5424 = vunpack.c.l.b16 %v5355
      %v5425 = vunpack.c.l.b16 %v5356
      %v5426 = vunpack.c.l.b16 %v5357
      %v5427 = vunpack.c.l.b16 %v5358
      %v5428 = vunpack.c.l.b16 %v5359
      %v5429 = vunpack.c.l.b16 %v5360
      %v5430 = vunpack.c.l.b16 %v5361
      %v5431 = vunpack.c.l.b16 %v5362
      %v5432 = vunpack.c.l.b16 %v5363
      %v5433 = vunpack.c.l.b16 %v5364
      %v5434 = vpack.c.b16 %v5403, %v5402
      %v5435 = vpack.c.b16 %v5405, %v5404
      %v5436 = vpack.c.b16 %v5407, %v5406
      %v5437 = vpack.c.b16 %v5409, %v5408
      %v5438 = vpack.c.b16 %v5411, %v5410
      %v5439 = vpack.c.b16 %v5413, %v5412
      %v5440 = vpack.c.b16 %v5415, %v5414
      %v5441 = vpack.c.b16 %v5417, %v5416
      %v5442 = vpack.c.b16 %v5419, %v5418
      %v5443 = vpack.c.b16 %v5421, %v5420
      %v5444 = vpack.c.b16 %v5423, %v5422
      %v5445 = vpack.c.b16 %v5425, %v5424
      %v5446 = vpack.c.b16 %v5427, %v5426
      %v5447 = vpack.c.b16 %v5429, %v5428
      %v5448 = vpack.c.b16 %v5431, %v5430
      %v5449 = vpack.c.b16 %v5433, %v5432
      %v5454 = vunpack.c.l.b16 %v5366
      %v5455 = vunpack.c.l.b16 %v5367
      %v5456 = vunpack.c.l.b16 %v5368
      %v5457 = vunpack.c.l.b16 %v5369
      %v5458 = vpack.c.b16 %v5455, %v5454
      %v5459 = vpack.c.b16 %v5457, %v5456
      %v5463 = vsel %vm663, %v5434, 0
      %v5466 = vsel %vm663, %v5435, 0
      %v5469 = vsel %vm663, %v5436, 0
      %v5472 = vsel %vm663, %v5437, 0
      %v5475 = vsel %vm663, %v5438, 0
      %v5478 = vsel %vm663, %v5439, 0
      %v5481 = vsel %vm663, %v5440, 0
      %v5484 = vsel %vm663, %v5441, 0
      %v5487 = vsel %vm663, %v5442, 0
      %v5490 = vsel %vm663, %v5443, 0
      %v5493 = vsel %vm663, %v5444, 0
      %v5496 = vsel %vm663, %v5445, 0
      %v5499 = vsel %vm663, %v5446, 0
      %v5502 = vsel %vm663, %v5447, 0
      %v5505 = vsel %vm663, %v5448, 0
      %v5508 = vsel %vm663, %v5449, 0
      %5510 = vmatprep.subr.bf16.mxu0 0
      %5511 = vmatpush1.bf16.msra.mxu0 %v5458
      %5512 = vmatprep.subr.bf16.mxu0 0
      %5513 = vmatpush1.bf16.msra.mxu0 %v5459
      %5514 = vmatprep.subr.bf16.mxu0 0
      %5515 = vmatpush1.bf16.msra.mxu0 0
      %5516 = vmatprep.subr.bf16.mxu0 0
      %5517 = vmatpush1.bf16.msra.mxu0 0
      %5518 = vmatprep.subr.bf16.mxu0 0
      %5519 = vmatpush1.bf16.msra.mxu0 0
      %5520 = vmatprep.subr.bf16.mxu0 0
      %5521 = vmatpush1.bf16.msra.mxu0 0
      %5522 = vmatprep.subr.bf16.mxu0 0
      %5523 = vmatpush1.bf16.msra.mxu0 0
      %5524 = vmatprep.subr.bf16.mxu0 0
      %5525 = vmatpush1.bf16.msra.mxu0 0
      %5526 = vmatprep.subr.bf16.mxu0 0
      %5527 = vmatpush1.bf16.msra.mxu0 0
      %5528 = vmatprep.subr.bf16.mxu0 0
      %5529 = vmatpush1.bf16.msra.mxu0 0
      %5530 = vmatprep.subr.bf16.mxu0 0
      %5531 = vmatpush1.bf16.msra.mxu0 0
      %5532 = vmatprep.subr.bf16.mxu0 0
      %5533 = vmatpush1.bf16.msra.mxu0 0
      %5534 = vmatprep.subr.bf16.mxu0 0
      %5535 = vmatpush1.bf16.msra.mxu0 0
      %5536 = vmatprep.subr.bf16.mxu0 0
      %5537 = vmatpush1.bf16.msra.mxu0 0
      %5538 = vmatprep.subr.bf16.mxu0 0
      %5539 = vmatpush1.bf16.msra.mxu0 0
      %5540 = vmatprep.subr.bf16.mxu0 0
      %5541 = vmatpush1.bf16.msra.mxu0 0
      %5542 = vmatprep.mubr.bf16.mxu0 0
      %5543 = vmatmul.mubr.bf16.gmra.mrb[0].mxu0 %v5463
      %v5544 = vpop.f32.mrb[0].mxu0
      %v5545 = vadd.f32 0.0, %v5544
      %v5546 = vpop.f32.mrb[0].mxu0
      %v5547 = vpop.f32.mrb[0].mxu0
      %v5548 = vadd.f32 0.0, %v5547
      %v5549 = vpop.f32.mrb[0].mxu0
      %5550 = vmatprep.mubr.bf16.mxu0 0
      %5551 = vmatmul.mubr.bf16.gmra.mrb[0].mxu0 %v5466
      %v5552 = vpop.f32.mrb[0].mxu0
      %v5553 = vadd.f32 0.0, %v5552
      %v5554 = vpop.f32.mrb[0].mxu0
      %v5555 = vpop.f32.mrb[0].mxu0
      %v5556 = vadd.f32 0.0, %v5555
      %v5557 = vpop.f32.mrb[0].mxu0
      %5558 = vmatprep.mubr.bf16.mxu0 0
      %5559 = vmatmul.mubr.bf16.gmra.mrb[0].mxu0 %v5469
      %v5560 = vpop.f32.mrb[0].mxu0
      %v5561 = vadd.f32 0.0, %v5560
      %v5562 = vpop.f32.mrb[0].mxu0
      %v5563 = vpop.f32.mrb[0].mxu0
      %v5564 = vadd.f32 0.0, %v5563
      %v5565 = vpop.f32.mrb[0].mxu0
      %5566 = vmatprep.mubr.bf16.mxu0 0
      %5567 = vmatmul.mubr.bf16.gmra.mrb[0].mxu0 %v5472
      %v5568 = vpop.f32.mrb[0].mxu0
      %v5569 = vadd.f32 0.0, %v5568
      %v5570 = vpop.f32.mrb[0].mxu0
      %v5571 = vpop.f32.mrb[0].mxu0
      %v5572 = vadd.f32 0.0, %v5571
      %v5573 = vpop.f32.mrb[0].mxu0
      %5574 = vmatprep.mubr.bf16.mxu0 0
      %5575 = vmatmul.mubr.bf16.gmra.mrb[0].mxu0 %v5475
      %v5576 = vpop.f32.mrb[0].mxu0
      %v5577 = vadd.f32 0.0, %v5576
      %v5578 = vpop.f32.mrb[0].mxu0
      %v5579 = vpop.f32.mrb[0].mxu0
      %v5580 = vadd.f32 0.0, %v5579
      %v5581 = vpop.f32.mrb[0].mxu0
      %5582 = vmatprep.mubr.bf16.mxu0 0
      %5583 = vmatmul.mubr.bf16.gmra.mrb[0].mxu0 %v5478
      %v5584 = vpop.f32.mrb[0].mxu0
      %v5585 = vadd.f32 0.0, %v5584
      %v5586 = vpop.f32.mrb[0].mxu0
      %v5587 = vpop.f32.mrb[0].mxu0
      %v5588 = vadd.f32 0.0, %v5587
      %v5589 = vpop.f32.mrb[0].mxu0
      %5590 = vmatprep.mubr.bf16.mxu0 0
      %5591 = vmatmul.mubr.bf16.gmra.mrb[0].mxu0 %v5481
      %v5592 = vpop.f32.mrb[0].mxu0
      %v5593 = vadd.f32 0.0, %v5592
      %v5594 = vpop.f32.mrb[0].mxu0
      %v5595 = vpop.f32.mrb[0].mxu0
      %v5596 = vadd.f32 0.0, %v5595
      %v5597 = vpop.f32.mrb[0].mxu0
      %5598 = vmatprep.mubr.bf16.mxu0 0
      %5599 = vmatmul.mubr.bf16.gmra.mrb[0].mxu0 %v5484
      %v5600 = vpop.f32.mrb[0].mxu0
      %v5601 = vadd.f32 0.0, %v5600
      %v5602 = vpop.f32.mrb[0].mxu0
      %v5603 = vpop.f32.mrb[0].mxu0
      %v5604 = vadd.f32 0.0, %v5603
      %v5605 = vpop.f32.mrb[0].mxu0
      %5606 = vmatprep.mubr.bf16.mxu0 0
      %5607 = vmatmul.mubr.bf16.gmra.mrb[0].mxu0 %v5487
      %v5608 = vpop.f32.mrb[0].mxu0
      %v5609 = vadd.f32 0.0, %v5608
      %v5610 = vpop.f32.mrb[0].mxu0
      %v5611 = vpop.f32.mrb[0].mxu0
      %v5612 = vadd.f32 0.0, %v5611
      %v5613 = vpop.f32.mrb[0].mxu0
      %5614 = vmatprep.mubr.bf16.mxu0 0
      %5615 = vmatmul.mubr.bf16.gmra.mrb[0].mxu0 %v5490
      %v5616 = vpop.f32.mrb[0].mxu0
      %v5617 = vadd.f32 0.0, %v5616
      %v5618 = vpop.f32.mrb[0].mxu0
      %v5619 = vpop.f32.mrb[0].mxu0
      %v5620 = vadd.f32 0.0, %v5619
      %v5621 = vpop.f32.mrb[0].mxu0
      %5622 = vmatprep.mubr.bf16.mxu0 0
      %5623 = vmatmul.mubr.bf16.gmra.mrb[0].mxu0 %v5493
      %v5624 = vpop.f32.mrb[0].mxu0
      %v5625 = vadd.f32 0.0, %v5624
      %v5626 = vpop.f32.mrb[0].mxu0
      %v5627 = vpop.f32.mrb[0].mxu0
      %v5628 = vadd.f32 0.0, %v5627
      %v5629 = vpop.f32.mrb[0].mxu0
      %5630 = vmatprep.mubr.bf16.mxu0 0
      %5631 = vmatmul.mubr.bf16.gmra.mrb[0].mxu0 %v5496
      %v5632 = vpop.f32.mrb[0].mxu0
      %v5633 = vadd.f32 0.0, %v5632
      %v5634 = vpop.f32.mrb[0].mxu0
      %v5635 = vpop.f32.mrb[0].mxu0
      %v5636 = vadd.f32 0.0, %v5635
      %v5637 = vpop.f32.mrb[0].mxu0
      %5638 = vmatprep.mubr.bf16.mxu0 0
      %5639 = vmatmul.mubr.bf16.gmra.mrb[0].mxu0 %v5499
      %v5640 = vpop.f32.mrb[0].mxu0
      %v5641 = vadd.f32 0.0, %v5640
      %v5642 = vpop.f32.mrb[0].mxu0
      %v5643 = vpop.f32.mrb[0].mxu0
      %v5644 = vadd.f32 0.0, %v5643
      %v5645 = vpop.f32.mrb[0].mxu0
      %5646 = vmatprep.mubr.bf16.mxu0 0
      %5647 = vmatmul.mubr.bf16.gmra.mrb[0].mxu0 %v5502
      %v5648 = vpop.f32.mrb[0].mxu0
      %v5649 = vadd.f32 0.0, %v5648
      %v5650 = vpop.f32.mrb[0].mxu0
      %v5651 = vpop.f32.mrb[0].mxu0
      %v5652 = vadd.f32 0.0, %v5651
      %v5653 = vpop.f32.mrb[0].mxu0
      %5654 = vmatprep.mubr.bf16.mxu0 0
      %5655 = vmatmul.mubr.bf16.gmra.mrb[0].mxu0 %v5505
      %v5656 = vpop.f32.mrb[0].mxu0
      %v5657 = vadd.f32 0.0, %v5656
      %v5658 = vpop.f32.mrb[0].mxu0
      %v5659 = vpop.f32.mrb[0].mxu0
      %v5660 = vadd.f32 0.0, %v5659
      %v5661 = vpop.f32.mrb[0].mxu0
      %5662 = vmatprep.mubr.bf16.mxu0 0
      %5663 = vmatmul.mubr.bf16.gmra.mrb[0].mxu0 %v5508
      %v5664 = vpop.f32.mrb[0].mxu0
      %v5665 = vadd.f32 0.0, %v5664
      %v5666 = vpop.f32.mrb[0].mxu0
      %v5667 = vpop.f32.mrb[0].mxu0
      %v5668 = vadd.f32 0.0, %v5667
      %v5669 = vpop.f32.mrb[0].mxu0
      %5670 = vdwg.mxu0
      %v5671 = vadd.f32 %v5300, %v5545
      %v5672 = vadd.f32 %v5301, %v5548
      %v5673 = vadd.f32 %v5302, %v5553
      %v5674 = vadd.f32 %v5303, %v5556
      %v5675 = vadd.f32 %v5304, %v5561
      %v5676 = vadd.f32 %v5305, %v5564
      %v5677 = vadd.f32 %v5306, %v5569
      %v5678 = vadd.f32 %v5307, %v5572
      %v5679 = vadd.f32 %v5308, %v5577
      %v5680 = vadd.f32 %v5309, %v5580
      %v5681 = vadd.f32 %v5310, %v5585
      %v5682 = vadd.f32 %v5311, %v5588
      %v5683 = vadd.f32 %v5312, %v5593
      %v5684 = vadd.f32 %v5313, %v5596
      %v5685 = vadd.f32 %v5314, %v5601
      %v5686 = vadd.f32 %v5315, %v5604
      %v5687 = vadd.f32 %v5316, %v5609
      %v5688 = vadd.f32 %v5317, %v5612
      %v5689 = vadd.f32 %v5318, %v5617
      %v5690 = vadd.f32 %v5319, %v5620
      %v5691 = vadd.f32 %v5320, %v5625
      %v5692 = vadd.f32 %v5321, %v5628
      %v5693 = vadd.f32 %v5322, %v5633
      %v5694 = vadd.f32 %v5323, %v5636
      %v5695 = vadd.f32 %v5324, %v5641
      %v5696 = vadd.f32 %v5325, %v5644
      %v5697 = vadd.f32 %v5326, %v5649
      %v5698 = vadd.f32 %v5327, %v5652
      %v5699 = vadd.f32 %v5328, %v5657
      %v5700 = vadd.f32 %v5329, %v5660
      %v5701 = vadd.f32 %v5330, %v5665
      %v5702 = vadd.f32 %v5331, %v5668
      %v5703 = vld [vmem:[%s5332] sm:$0xf]
      %v5704 = vld [vmem:[%s5332 + $0x4] sm:$0xf]
      %v5705 = vld [vmem:[%s5332 + $0x8] sm:$0x1]
      %v5706 = vld [vmem:[%s5332 + $0xc] sm:$0xf]
      %v5707 = vld [vmem:[%s5332 + $0x10] sm:$0xf]
      %v5708 = vld [vmem:[%s5332 + $0x14] sm:$0x1]
      %v5709 = vld [vmem:[%s5332 + $0x18] sm:$0xf]
      %v5710 = vld [vmem:[%s5332 + $0x1c] sm:$0xf]
      %v5711 = vld [vmem:[%s5332 + $0x20] sm:$0x1]
      %v5712 = vld [vmem:[%s5332 + $0x24] sm:$0xf]
      %v5713 = vld [vmem:[%s5332 + $0x28] sm:$0xf]
      %v5714 = vld [vmem:[%s5332 + $0x2c] sm:$0x1]
      %v5715 = vld [vmem:[%s5332 + $0x30] sm:$0xf]
      %v5716 = vld [vmem:[%s5332 + $0x34] sm:$0xf]
      %v5717 = vld [vmem:[%s5332 + $0x38] sm:$0x1]
      %v5718 = vld [vmem:[%s5332 + $0x3c] sm:$0xf]
      %v5719 = vld [vmem:[%s5332 + $0x40] sm:$0xf]
      %v5720 = vld [vmem:[%s5332 + $0x44] sm:$0x1]
      %v5721 = vld [vmem:[%s5332 + $0x48] sm:$0xf]
      %v5722 = vld [vmem:[%s5332 + $0x4c] sm:$0xf]
      %v5723 = vld [vmem:[%s5332 + $0x50] sm:$0x1]
      %v5724 = vld [vmem:[%s5332 + $0x54] sm:$0xf]
      %v5725 = vld [vmem:[%s5332 + $0x58] sm:$0xf]
      %v5726 = vld [vmem:[%s5332 + $0x5c] sm:$0x1]
      %v5727 = vld [vmem:[%s5332 + $0x60] sm:$0xf]
      %v5728 = vld [vmem:[%s5332 + $0x64] sm:$0xf]
      %v5729 = vld [vmem:[%s5332 + $0x68] sm:$0x1]
      %v5730 = vld [vmem:[%s5332 + $0x6c] sm:$0xf]
      %v5731 = vld [vmem:[%s5332 + $0x70] sm:$0xf]
      %v5732 = vld [vmem:[%s5332 + $0x74] sm:$0x1]
      %v5733 = vld [vmem:[%s5332 + $0x78] sm:$0xf]
      %v5734 = vld [vmem:[%s5332 + $0x7c] sm:$0xf]
      %v5735 = vld [vmem:[%s5332 + $0x80] sm:$0x1]
      %v5736 = vld [vmem:[%s5332 + $0x84] sm:$0xf]
      %v5737 = vld [vmem:[%s5332 + $0x88] sm:$0xf]
      %v5738 = vld [vmem:[%s5332 + $0x8c] sm:$0x1]
      %v5739 = vld [vmem:[%s5332 + $0x90] sm:$0xf]
      %v5740 = vld [vmem:[%s5332 + $0x94] sm:$0xf]
      %v5741 = vld [vmem:[%s5332 + $0x98] sm:$0x1]
      %v5742 = vld [vmem:[%s5332 + $0x9c] sm:$0xf]
      %v5743 = vld [vmem:[%s5332 + $0xa0] sm:$0xf]
      %v5744 = vld [vmem:[%s5332 + $0xa4] sm:$0x1]
      %v5745 = vld [vmem:[%s5332 + $0xa8] sm:$0xf]
      %v5746 = vld [vmem:[%s5332 + $0xac] sm:$0xf]
      %v5747 = vld [vmem:[%s5332 + $0xb0] sm:$0x1]
      %v5748 = vld [vmem:[%s5332 + $0xb4] sm:$0xf]
      %v5749 = vld [vmem:[%s5332 + $0xb8] sm:$0xf]
      %v5750 = vld [vmem:[%s5332 + $0xbc] sm:$0x1]
      %v5752 = vshrl.u32 %v5703, 16
      %v5754 = vrot.slane %v5752, 4
      %v5755 = vshll.u32 %v5703, 16
      %v5757 = vrot.slane %v5755, 5
      %v5758 = vor.u32 %v5754, %v5757
      %v5759 = vrot.slane %v5758, 4
      %v5761 = vshll.u32 %v5704, 16
      %v5763 = vrot.slane %v5761, 5
      %v5764 = vsel %vm2313, %v5759, %v5763
      %v5765 = vshrl.u32 %v5704, 16
      %v5767 = vrot.slane %v5765, 4
      %v5768 = vor.u32 %v5767, %v5763
      %v5769 = vrot.slane %v5768, 4
      %v5771 = vshll.u32 %v5705, 16
      %v5773 = vrot.slane %v5771, 5
      %v5774 = vsel %vm2313, %v5769, %v5773
      %v5776 = vshrl.u32 %v5706, 16
      %v5778 = vrot.slane %v5776, 4
      %v5779 = vshll.u32 %v5706, 16
      %v5781 = vrot.slane %v5779, 5
      %v5782 = vor.u32 %v5778, %v5781
      %v5783 = vrot.slane %v5782, 4
      %v5785 = vshll.u32 %v5707, 16
      %v5787 = vrot.slane %v5785, 5
      %v5788 = vsel %vm2313, %v5783, %v5787
      %v5789 = vshrl.u32 %v5707, 16
      %v5791 = vrot.slane %v5789, 4
      %v5792 = vor.u32 %v5791, %v5787
      %v5793 = vrot.slane %v5792, 4
      %v5795 = vshll.u32 %v5708, 16
      %v5797 = vrot.slane %v5795, 5
      %v5798 = vsel %vm2313, %v5793, %v5797
      %v5800 = vshrl.u32 %v5709, 16
      %v5802 = vrot.slane %v5800, 4
      %v5803 = vshll.u32 %v5709, 16
      %v5805 = vrot.slane %v5803, 5
      %v5806 = vor.u32 %v5802, %v5805
      %v5807 = vrot.slane %v5806, 4
      %v5809 = vshll.u32 %v5710, 16
      %v5811 = vrot.slane %v5809, 5
      %v5812 = vsel %vm2313, %v5807, %v5811
      %v5813 = vshrl.u32 %v5710, 16
      %v5815 = vrot.slane %v5813, 4
      %v5816 = vor.u32 %v5815, %v5811
      %v5817 = vrot.slane %v5816, 4
      %v5819 = vshll.u32 %v5711, 16
      %v5821 = vrot.slane %v5819, 5
      %v5822 = vsel %vm2313, %v5817, %v5821
      %v5824 = vshrl.u32 %v5712, 16
      %v5826 = vrot.slane %v5824, 4
      %v5827 = vshll.u32 %v5712, 16
      %v5829 = vrot.slane %v5827, 5
      %v5830 = vor.u32 %v5826, %v5829
      %v5831 = vrot.slane %v5830, 4
      %v5833 = vshll.u32 %v5713, 16
      %v5835 = vrot.slane %v5833, 5
      %v5836 = vsel %vm2313, %v5831, %v5835
      %v5837 = vshrl.u32 %v5713, 16
      %v5839 = vrot.slane %v5837, 4
      %v5840 = vor.u32 %v5839, %v5835
      %v5841 = vrot.slane %v5840, 4
      %v5843 = vshll.u32 %v5714, 16
      %v5845 = vrot.slane %v5843, 5
      %v5846 = vsel %vm2313, %v5841, %v5845
      %v5848 = vshrl.u32 %v5715, 16
      %v5850 = vrot.slane %v5848, 4
      %v5851 = vshll.u32 %v5715, 16
      %v5853 = vrot.slane %v5851, 5
      %v5854 = vor.u32 %v5850, %v5853
      %v5855 = vrot.slane %v5854, 4
      %v5857 = vshll.u32 %v5716, 16
      %v5859 = vrot.slane %v5857, 5
      %v5860 = vsel %vm2313, %v5855, %v5859
      %v5861 = vshrl.u32 %v5716, 16
      %v5863 = vrot.slane %v5861, 4
      %v5864 = vor.u32 %v5863, %v5859
      %v5865 = vrot.slane %v5864, 4
      %v5867 = vshll.u32 %v5717, 16
      %v5869 = vrot.slane %v5867, 5
      %v5870 = vsel %vm2313, %v5865, %v5869
      %v5872 = vshrl.u32 %v5718, 16
      %v5874 = vrot.slane %v5872, 4
      %v5875 = vshll.u32 %v5718, 16
      %v5877 = vrot.slane %v5875, 5
      %v5878 = vor.u32 %v5874, %v5877
      %v5879 = vrot.slane %v5878, 4
      %v5881 = vshll.u32 %v5719, 16
      %v5883 = vrot.slane %v5881, 5
      %v5884 = vsel %vm2313, %v5879, %v5883
      %v5885 = vshrl.u32 %v5719, 16
      %v5887 = vrot.slane %v5885, 4
      %v5888 = vor.u32 %v5887, %v5883
      %v5889 = vrot.slane %v5888, 4
      %v5891 = vshll.u32 %v5720, 16
      %v5893 = vrot.slane %v5891, 5
      %v5894 = vsel %vm2313, %v5889, %v5893
      %v5896 = vshrl.u32 %v5721, 16
      %v5898 = vrot.slane %v5896, 4
      %v5899 = vshll.u32 %v5721, 16
      %v5901 = vrot.slane %v5899, 5
      %v5902 = vor.u32 %v5898, %v5901
      %v5903 = vrot.slane %v5902, 4
      %v5905 = vshll.u32 %v5722, 16
      %v5907 = vrot.slane %v5905, 5
      %v5908 = vsel %vm2313, %v5903, %v5907
      %v5909 = vshrl.u32 %v5722, 16
      %v5911 = vrot.slane %v5909, 4
      %v5912 = vor.u32 %v5911, %v5907
      %v5913 = vrot.slane %v5912, 4
      %v5915 = vshll.u32 %v5723, 16
      %v5917 = vrot.slane %v5915, 5
      %v5918 = vsel %vm2313, %v5913, %v5917
      %v5920 = vshrl.u32 %v5724, 16
      %v5922 = vrot.slane %v5920, 4
      %v5923 = vshll.u32 %v5724, 16
      %v5925 = vrot.slane %v5923, 5
      %v5926 = vor.u32 %v5922, %v5925
      %v5927 = vrot.slane %v5926, 4
      %v5929 = vshll.u32 %v5725, 16
      %v5931 = vrot.slane %v5929, 5
      %v5932 = vsel %vm2313, %v5927, %v5931
      %v5933 = vshrl.u32 %v5725, 16
      %v5935 = vrot.slane %v5933, 4
      %v5936 = vor.u32 %v5935, %v5931
      %v5937 = vrot.slane %v5936, 4
      %v5939 = vshll.u32 %v5726, 16
      %v5941 = vrot.slane %v5939, 5
      %v5942 = vsel %vm2313, %v5937, %v5941
      %v5944 = vshrl.u32 %v5727, 16
      %v5946 = vrot.slane %v5944, 4
      %v5947 = vshll.u32 %v5727, 16
      %v5949 = vrot.slane %v5947, 5
      %v5950 = vor.u32 %v5946, %v5949
      %v5951 = vrot.slane %v5950, 4
      %v5953 = vshll.u32 %v5728, 16
      %v5955 = vrot.slane %v5953, 5
      %v5956 = vsel %vm2313, %v5951, %v5955
      %v5957 = vshrl.u32 %v5728, 16
      %v5959 = vrot.slane %v5957, 4
      %v5960 = vor.u32 %v5959, %v5955
      %v5961 = vrot.slane %v5960, 4
      %v5963 = vshll.u32 %v5729, 16
      %v5965 = vrot.slane %v5963, 5
      %v5966 = vsel %vm2313, %v5961, %v5965
      %v5968 = vshrl.u32 %v5730, 16
      %v5970 = vrot.slane %v5968, 4
      %v5971 = vshll.u32 %v5730, 16
      %v5973 = vrot.slane %v5971, 5
      %v5974 = vor.u32 %v5970, %v5973
      %v5975 = vrot.slane %v5974, 4
      %v5977 = vshll.u32 %v5731, 16
      %v5979 = vrot.slane %v5977, 5
      %v5980 = vsel %vm2313, %v5975, %v5979
      %v5981 = vshrl.u32 %v5731, 16
      %v5983 = vrot.slane %v5981, 4
      %v5984 = vor.u32 %v5983, %v5979
      %v5985 = vrot.slane %v5984, 4
      %v5987 = vshll.u32 %v5732, 16
      %v5989 = vrot.slane %v5987, 5
      %v5990 = vsel %vm2313, %v5985, %v5989
      %v5992 = vshrl.u32 %v5733, 16
      %v5994 = vrot.slane %v5992, 4
      %v5995 = vshll.u32 %v5733, 16
      %v5997 = vrot.slane %v5995, 5
      %v5998 = vor.u32 %v5994, %v5997
      %v5999 = vrot.slane %v5998, 4
      %v6001 = vshll.u32 %v5734, 16
      %v6003 = vrot.slane %v6001, 5
      %v6004 = vsel %vm2313, %v5999, %v6003
      %v6005 = vshrl.u32 %v5734, 16
      %v6007 = vrot.slane %v6005, 4
      %v6008 = vor.u32 %v6007, %v6003
      %v6009 = vrot.slane %v6008, 4
      %v6011 = vshll.u32 %v5735, 16
      %v6013 = vrot.slane %v6011, 5
      %v6014 = vsel %vm2313, %v6009, %v6013
      %v6016 = vshrl.u32 %v5736, 16
      %v6018 = vrot.slane %v6016, 4
      %v6019 = vshll.u32 %v5736, 16
      %v6021 = vrot.slane %v6019, 5
      %v6022 = vor.u32 %v6018, %v6021
      %v6023 = vrot.slane %v6022, 4
      %v6025 = vshll.u32 %v5737, 16
      %v6027 = vrot.slane %v6025, 5
      %v6028 = vsel %vm2313, %v6023, %v6027
      %v6029 = vshrl.u32 %v5737, 16
      %v6031 = vrot.slane %v6029, 4
      %v6032 = vor.u32 %v6031, %v6027
      %v6033 = vrot.slane %v6032, 4
      %v6035 = vshll.u32 %v5738, 16
      %v6037 = vrot.slane %v6035, 5
      %v6038 = vsel %vm2313, %v6033, %v6037
      %v6040 = vshrl.u32 %v5739, 16
      %v6042 = vrot.slane %v6040, 4
      %v6043 = vshll.u32 %v5739, 16
      %v6045 = vrot.slane %v6043, 5
      %v6046 = vor.u32 %v6042, %v6045
      %v6047 = vrot.slane %v6046, 4
      %v6049 = vshll.u32 %v5740, 16
      %v6051 = vrot.slane %v6049, 5
      %v6052 = vsel %vm2313, %v6047, %v6051
      %v6053 = vshrl.u32 %v5740, 16
      %v6055 = vrot.slane %v6053, 4
      %v6056 = vor.u32 %v6055, %v6051
      %v6057 = vrot.slane %v6056, 4
      %v6059 = vshll.u32 %v5741, 16
      %v6061 = vrot.slane %v6059, 5
      %v6062 = vsel %vm2313, %v6057, %v6061
      %v6064 = vshrl.u32 %v5742, 16
      %v6066 = vrot.slane %v6064, 4
      %v6067 = vshll.u32 %v5742, 16
      %v6069 = vrot.slane %v6067, 5
      %v6070 = vor.u32 %v6066, %v6069
      %v6071 = vrot.slane %v6070, 4
      %v6073 = vshll.u32 %v5743, 16
      %v6075 = vrot.slane %v6073, 5
      %v6076 = vsel %vm2313, %v6071, %v6075
      %v6077 = vshrl.u32 %v5743, 16
      %v6079 = vrot.slane %v6077, 4
      %v6080 = vor.u32 %v6079, %v6075
      %v6081 = vrot.slane %v6080, 4
      %v6083 = vshll.u32 %v5744, 16
      %v6085 = vrot.slane %v6083, 5
      %v6086 = vsel %vm2313, %v6081, %v6085
      %v6088 = vshrl.u32 %v5745, 16
      %v6090 = vrot.slane %v6088, 4
      %v6091 = vshll.u32 %v5745, 16
      %v6093 = vrot.slane %v6091, 5
      %v6094 = vor.u32 %v6090, %v6093
      %v6095 = vrot.slane %v6094, 4
      %v6097 = vshll.u32 %v5746, 16
      %v6099 = vrot.slane %v6097, 5
      %v6100 = vsel %vm2313, %v6095, %v6099
      %v6101 = vshrl.u32 %v5746, 16
      %v6103 = vrot.slane %v6101, 4
      %v6104 = vor.u32 %v6103, %v6099
      %v6105 = vrot.slane %v6104, 4
      %v6107 = vshll.u32 %v5747, 16
      %v6109 = vrot.slane %v6107, 5
      %v6110 = vsel %vm2313, %v6105, %v6109
      %v6112 = vshrl.u32 %v5748, 16
      %v6114 = vrot.slane %v6112, 4
      %v6115 = vshll.u32 %v5748, 16
      %v6117 = vrot.slane %v6115, 5
      %v6118 = vor.u32 %v6114, %v6117
      %v6119 = vrot.slane %v6118, 4
      %v6121 = vshll.u32 %v5749, 16
      %v6123 = vrot.slane %v6121, 5
      %v6124 = vsel %vm2313, %v6119, %v6123
      %v6125 = vshrl.u32 %v5749, 16
      %v6127 = vrot.slane %v6125, 4
      %v6128 = vor.u32 %v6127, %v6123
      %v6129 = vrot.slane %v6128, 4
      %v6131 = vshll.u32 %v5750, 16
      %v6133 = vrot.slane %v6131, 5
      %v6134 = vsel %vm2313, %v6129, %v6133
      %s6135 = scalar_lea.vmem %s6, 112
      %v6136 = vld [vmem:[%s6135] sm:$0xf]
      %v6137 = vld [vmem:[%s6135 + $0x4] sm:$0xf]
      %v6138 = vld [vmem:[%s6135 + $0x8] sm:$0xf]
      %v6139 = vld [vmem:[%s6135 + $0xc] sm:$0xf]
      %v6140 = vunpack.c.l.b16 %v5764
      %v6141 = vunpack.c.l.b16 %v5774
      %v6142 = vunpack.c.l.b16 %v5788
      %v6143 = vunpack.c.l.b16 %v5798
      %v6144 = vunpack.c.l.b16 %v5812
      %v6145 = vunpack.c.l.b16 %v5822
      %v6146 = vunpack.c.l.b16 %v5836
      %v6147 = vunpack.c.l.b16 %v5846
      %v6148 = vunpack.c.l.b16 %v5860
      %v6149 = vunpack.c.l.b16 %v5870
      %v6150 = vunpack.c.l.b16 %v5884
      %v6151 = vunpack.c.l.b16 %v5894
      %v6152 = vunpack.c.l.b16 %v5908
      %v6153 = vunpack.c.l.b16 %v5918
      %v6154 = vunpack.c.l.b16 %v5932
      %v6155 = vunpack.c.l.b16 %v5942
      %v6156 = vunpack.c.l.b16 %v5956
      %v6157 = vunpack.c.l.b16 %v5966
      %v6158 = vunpack.c.l.b16 %v5980
      %v6159 = vunpack.c.l.b16 %v5990
      %v6160 = vunpack.c.l.b16 %v6004
      %v6161 = vunpack.c.l.b16 %v6014
      %v6162 = vunpack.c.l.b16 %v6028
      %v6163 = vunpack.c.l.b16 %v6038
      %v6164 = vunpack.c.l.b16 %v6052
      %v6165 = vunpack.c.l.b16 %v6062
      %v6166 = vunpack.c.l.b16 %v6076
      %v6167 = vunpack.c.l.b16 %v6086
      %v6168 = vunpack.c.l.b16 %v6100
      %v6169 = vunpack.c.l.b16 %v6110
      %v6170 = vunpack.c.l.b16 %v6124
      %v6171 = vunpack.c.l.b16 %v6134
      %v6172 = vpack.c.b16 %v6141, %v6140
      %v6173 = vpack.c.b16 %v6143, %v6142
      %v6174 = vpack.c.b16 %v6145, %v6144
      %v6175 = vpack.c.b16 %v6147, %v6146
      %v6176 = vpack.c.b16 %v6149, %v6148
      %v6177 = vpack.c.b16 %v6151, %v6150
      %v6178 = vpack.c.b16 %v6153, %v6152
      %v6179 = vpack.c.b16 %v6155, %v6154
      %v6180 = vpack.c.b16 %v6157, %v6156
      %v6181 = vpack.c.b16 %v6159, %v6158
      %v6182 = vpack.c.b16 %v6161, %v6160
      %v6183 = vpack.c.b16 %v6163, %v6162
      %v6184 = vpack.c.b16 %v6165, %v6164
      %v6185 = vpack.c.b16 %v6167, %v6166
      %v6186 = vpack.c.b16 %v6169, %v6168
      %v6187 = vpack.c.b16 %v6171, %v6170
      %v6192 = vunpack.c.l.b16 %v6136
      %v6193 = vunpack.c.l.b16 %v6137
      %v6194 = vunpack.c.l.b16 %v6138
      %v6195 = vunpack.c.l.b16 %v6139
      %v6196 = vpack.c.b16 %v6193, %v6192
      %v6197 = vpack.c.b16 %v6195, %v6194
      %v6201 = vsel %vm663, %v6172, 0
      %v6204 = vsel %vm663, %v6173, 0
      %v6207 = vsel %vm663, %v6174, 0
      %v6210 = vsel %vm663, %v6175, 0
      %v6213 = vsel %vm663, %v6176, 0
      %v6216 = vsel %vm663, %v6177, 0
      %v6219 = vsel %vm663, %v6178, 0
      %v6222 = vsel %vm663, %v6179, 0
      %v6225 = vsel %vm663, %v6180, 0
      %v6228 = vsel %vm663, %v6181, 0
      %v6231 = vsel %vm663, %v6182, 0
      %v6234 = vsel %vm663, %v6183, 0
      %v6237 = vsel %vm663, %v6184, 0
      %v6240 = vsel %vm663, %v6185, 0
      %v6243 = vsel %vm663, %v6186, 0
      %v6246 = vsel %vm663, %v6187, 0
      %6248 = vmatprep.subr.bf16.mxu0 0
      %6249 = vmatpush1.bf16.msra.mxu0 %v6196
      %6250 = vmatprep.subr.bf16.mxu0 0
      %6251 = vmatpush1.bf16.msra.mxu0 %v6197
      %6252 = vmatprep.subr.bf16.mxu0 0
      %6253 = vmatpush1.bf16.msra.mxu0 0
      %6254 = vmatprep.subr.bf16.mxu0 0
      %6255 = vmatpush1.bf16.msra.mxu0 0
      %6256 = vmatprep.subr.bf16.mxu0 0
      %6257 = vmatpush1.bf16.msra.mxu0 0
      %6258 = vmatprep.subr.bf16.mxu0 0
      %6259 = vmatpush1.bf16.msra.mxu0 0
      %6260 = vmatprep.subr.bf16.mxu0 0
      %6261 = vmatpush1.bf16.msra.mxu0 0
      %6262 = vmatprep.subr.bf16.mxu0 0
      %6263 = vmatpush1.bf16.msra.mxu0 0
      %6264 = vmatprep.subr.bf16.mxu0 0
      %6265 = vmatpush1.bf16.msra.mxu0 0
      %6266 = vmatprep.subr.bf16.mxu0 0
      %6267 = vmatpush1.bf16.msra.mxu0 0
      %6268 = vmatprep.subr.bf16.mxu0 0
      %6269 = vmatpush1.bf16.msra.mxu0 0
      %6270 = vmatprep.subr.bf16.mxu0 0
      %6271 = vmatpush1.bf16.msra.mxu0 0
      %6272 = vmatprep.subr.bf16.mxu0 0
      %6273 = vmatpush1.bf16.msra.mxu0 0
      %6274 = vmatprep.subr.bf16.mxu0 0
      %6275 = vmatpush1.bf16.msra.mxu0 0
      %6276 = vmatprep.subr.bf16.mxu0 0
      %6277 = vmatpush1.bf16.msra.mxu0 0
      %6278 = vmatprep.subr.bf16.mxu0 0
      %6279 = vmatpush1.bf16.msra.mxu0 0
      %6280 = vmatprep.mubr.bf16.mxu0 0
      %6281 = vmatmul.mubr.bf16.gmra.mrb[0].mxu0 %v6201
      %v6282 = vpop.f32.mrb[0].mxu0
      %v6283 = vadd.f32 0.0, %v6282
      %v6284 = vpop.f32.mrb[0].mxu0
      %v6285 = vpop.f32.mrb[0].mxu0
      %v6286 = vadd.f32 0.0, %v6285
      %v6287 = vpop.f32.mrb[0].mxu0
      %6288 = vmatprep.mubr.bf16.mxu0 0
      %6289 = vmatmul.mubr.bf16.gmra.mrb[0].mxu0 %v6204
      %v6290 = vpop.f32.mrb[0].mxu0
      %v6291 = vadd.f32 0.0, %v6290
      %v6292 = vpop.f32.mrb[0].mxu0
      %v6293 = vpop.f32.mrb[0].mxu0
      %v6294 = vadd.f32 0.0, %v6293
      %v6295 = vpop.f32.mrb[0].mxu0
      %6296 = vmatprep.mubr.bf16.mxu0 0
      %6297 = vmatmul.mubr.bf16.gmra.mrb[0].mxu0 %v6207
      %v6298 = vpop.f32.mrb[0].mxu0
      %v6299 = vadd.f32 0.0, %v6298
      %v6300 = vpop.f32.mrb[0].mxu0
      %v6301 = vpop.f32.mrb[0].mxu0
      %v6302 = vadd.f32 0.0, %v6301
      %v6303 = vpop.f32.mrb[0].mxu0
      %6304 = vmatprep.mubr.bf16.mxu0 0
      %6305 = vmatmul.mubr.bf16.gmra.mrb[0].mxu0 %v6210
      %v6306 = vpop.f32.mrb[0].mxu0
      %v6307 = vadd.f32 0.0, %v6306
      %v6308 = vpop.f32.mrb[0].mxu0
      %v6309 = vpop.f32.mrb[0].mxu0
      %v6310 = vadd.f32 0.0, %v6309
      %v6311 = vpop.f32.mrb[0].mxu0
      %6312 = vmatprep.mubr.bf16.mxu0 0
      %6313 = vmatmul.mubr.bf16.gmra.mrb[0].mxu0 %v6213
      %v6314 = vpop.f32.mrb[0].mxu0
      %v6315 = vadd.f32 0.0, %v6314
      %v6316 = vpop.f32.mrb[0].mxu0
      %v6317 = vpop.f32.mrb[0].mxu0
      %v6318 = vadd.f32 0.0, %v6317
      %v6319 = vpop.f32.mrb[0].mxu0
      %6320 = vmatprep.mubr.bf16.mxu0 0
      %6321 = vmatmul.mubr.bf16.gmra.mrb[0].mxu0 %v6216
      %v6322 = vpop.f32.mrb[0].mxu0
      %v6323 = vadd.f32 0.0, %v6322
      %v6324 = vpop.f32.mrb[0].mxu0
      %v6325 = vpop.f32.mrb[0].mxu0
      %v6326 = vadd.f32 0.0, %v6325
      %v6327 = vpop.f32.mrb[0].mxu0
      %6328 = vmatprep.mubr.bf16.mxu0 0
      %6329 = vmatmul.mubr.bf16.gmra.mrb[0].mxu0 %v6219
      %v6330 = vpop.f32.mrb[0].mxu0
      %v6331 = vadd.f32 0.0, %v6330
      %v6332 = vpop.f32.mrb[0].mxu0
      %v6333 = vpop.f32.mrb[0].mxu0
      %v6334 = vadd.f32 0.0, %v6333
      %v6335 = vpop.f32.mrb[0].mxu0
      %6336 = vmatprep.mubr.bf16.mxu0 0
      %6337 = vmatmul.mubr.bf16.gmra.mrb[0].mxu0 %v6222
      %v6338 = vpop.f32.mrb[0].mxu0
      %v6339 = vadd.f32 0.0, %v6338
      %v6340 = vpop.f32.mrb[0].mxu0
      %v6341 = vpop.f32.mrb[0].mxu0
      %v6342 = vadd.f32 0.0, %v6341
      %v6343 = vpop.f32.mrb[0].mxu0
      %6344 = vmatprep.mubr.bf16.mxu0 0
      %6345 = vmatmul.mubr.bf16.gmra.mrb[0].mxu0 %v6225
      %v6346 = vpop.f32.mrb[0].mxu0
      %v6347 = vadd.f32 0.0, %v6346
      %v6348 = vpop.f32.mrb[0].mxu0
      %v6349 = vpop.f32.mrb[0].mxu0
      %v6350 = vadd.f32 0.0, %v6349
      %v6351 = vpop.f32.mrb[0].mxu0
      %6352 = vmatprep.mubr.bf16.mxu0 0
      %6353 = vmatmul.mubr.bf16.gmra.mrb[0].mxu0 %v6228
      %v6354 = vpop.f32.mrb[0].mxu0
      %v6355 = vadd.f32 0.0, %v6354
      %v6356 = vpop.f32.mrb[0].mxu0
      %v6357 = vpop.f32.mrb[0].mxu0
      %v6358 = vadd.f32 0.0, %v6357
      %v6359 = vpop.f32.mrb[0].mxu0
      %6360 = vmatprep.mubr.bf16.mxu0 0
      %6361 = vmatmul.mubr.bf16.gmra.mrb[0].mxu0 %v6231
      %v6362 = vpop.f32.mrb[0].mxu0
      %v6363 = vadd.f32 0.0, %v6362
      %v6364 = vpop.f32.mrb[0].mxu0
      %v6365 = vpop.f32.mrb[0].mxu0
      %v6366 = vadd.f32 0.0, %v6365
      %v6367 = vpop.f32.mrb[0].mxu0
      %6368 = vmatprep.mubr.bf16.mxu0 0
      %6369 = vmatmul.mubr.bf16.gmra.mrb[0].mxu0 %v6234
      %v6370 = vpop.f32.mrb[0].mxu0
      %v6371 = vadd.f32 0.0, %v6370
      %v6372 = vpop.f32.mrb[0].mxu0
      %v6373 = vpop.f32.mrb[0].mxu0
      %v6374 = vadd.f32 0.0, %v6373
      %v6375 = vpop.f32.mrb[0].mxu0
      %6376 = vmatprep.mubr.bf16.mxu0 0
      %6377 = vmatmul.mubr.bf16.gmra.mrb[0].mxu0 %v6237
      %v6378 = vpop.f32.mrb[0].mxu0
      %v6379 = vadd.f32 0.0, %v6378
      %v6380 = vpop.f32.mrb[0].mxu0
      %v6381 = vpop.f32.mrb[0].mxu0
      %v6382 = vadd.f32 0.0, %v6381
      %v6383 = vpop.f32.mrb[0].mxu0
      %6384 = vmatprep.mubr.bf16.mxu0 0
      %6385 = vmatmul.mubr.bf16.gmra.mrb[0].mxu0 %v6240
      %v6386 = vpop.f32.mrb[0].mxu0
      %v6387 = vadd.f32 0.0, %v6386
      %v6388 = vpop.f32.mrb[0].mxu0
      %v6389 = vpop.f32.mrb[0].mxu0
      %v6390 = vadd.f32 0.0, %v6389
      %v6391 = vpop.f32.mrb[0].mxu0
      %6392 = vmatprep.mubr.bf16.mxu0 0
      %6393 = vmatmul.mubr.bf16.gmra.mrb[0].mxu0 %v6243
      %v6394 = vpop.f32.mrb[0].mxu0
      %v6395 = vadd.f32 0.0, %v6394
      %v6396 = vpop.f32.mrb[0].mxu0
      %v6397 = vpop.f32.mrb[0].mxu0
      %v6398 = vadd.f32 0.0, %v6397
      %v6399 = vpop.f32.mrb[0].mxu0
      %6400 = vmatprep.mubr.bf16.mxu0 0
      %6401 = vmatmul.mubr.bf16.gmra.mrb[0].mxu0 %v6246
      %v6402 = vpop.f32.mrb[0].mxu0
      %v6403 = vadd.f32 0.0, %v6402
      %v6404 = vpop.f32.mrb[0].mxu0
      %v6405 = vpop.f32.mrb[0].mxu0
      %v6406 = vadd.f32 0.0, %v6405
      %v6407 = vpop.f32.mrb[0].mxu0
      %6408 = vdwg.mxu0
      %v6409 = vadd.f32 %v5671, %v6283
      %v6410 = vadd.f32 %v5672, %v6286
      %v6411 = vadd.f32 %v5673, %v6291
      %v6412 = vadd.f32 %v5674, %v6294
      %v6413 = vadd.f32 %v5675, %v6299
      %v6414 = vadd.f32 %v5676, %v6302
      %v6415 = vadd.f32 %v5677, %v6307
      %v6416 = vadd.f32 %v5678, %v6310
      %v6417 = vadd.f32 %v5679, %v6315
      %v6418 = vadd.f32 %v5680, %v6318
      %v6419 = vadd.f32 %v5681, %v6323
      %v6420 = vadd.f32 %v5682, %v6326
      %v6421 = vadd.f32 %v5683, %v6331
      %v6422 = vadd.f32 %v5684, %v6334
      %v6423 = vadd.f32 %v5685, %v6339
      %v6424 = vadd.f32 %v5686, %v6342
      %v6425 = vadd.f32 %v5687, %v6347
      %v6426 = vadd.f32 %v5688, %v6350
      %v6427 = vadd.f32 %v5689, %v6355
      %v6428 = vadd.f32 %v5690, %v6358
      %v6429 = vadd.f32 %v5691, %v6363
      %v6430 = vadd.f32 %v5692, %v6366
      %v6431 = vadd.f32 %v5693, %v6371
      %v6432 = vadd.f32 %v5694, %v6374
      %v6433 = vadd.f32 %v5695, %v6379
      %v6434 = vadd.f32 %v5696, %v6382
      %v6435 = vadd.f32 %v5697, %v6387
      %v6436 = vadd.f32 %v5698, %v6390
      %v6437 = vadd.f32 %v5699, %v6395
      %v6438 = vadd.f32 %v5700, %v6398
      %v6439 = vadd.f32 %v5701, %v6403
      %v6440 = vadd.f32 %v5702, %v6406
      %v6441 = vld [vmem:[%s5332] sm:$0xe]
      %v6442 = vld [vmem:[%s5332 + $0xc] sm:$0xe]
      %v6443 = vld [vmem:[%s5332 + $0x18] sm:$0xe]
      %v6444 = vld [vmem:[%s5332 + $0x24] sm:$0xe]
      %v6445 = vld [vmem:[%s5332 + $0x30] sm:$0xe]
      %v6446 = vld [vmem:[%s5332 + $0x3c] sm:$0xe]
      %v6447 = vld [vmem:[%s5332 + $0x48] sm:$0xe]
      %v6448 = vld [vmem:[%s5332 + $0x54] sm:$0xe]
      %v6449 = vld [vmem:[%s5332 + $0x60] sm:$0xe]
      %v6450 = vld [vmem:[%s5332 + $0x6c] sm:$0xe]
      %v6451 = vld [vmem:[%s5332 + $0x78] sm:$0xe]
      %v6452 = vld [vmem:[%s5332 + $0x84] sm:$0xe]
      %v6453 = vld [vmem:[%s5332 + $0x90] sm:$0xe]
      %v6454 = vld [vmem:[%s5332 + $0x9c] sm:$0xe]
      %v6455 = vld [vmem:[%s5332 + $0xa8] sm:$0xe]
      %v6456 = vld [vmem:[%s5332 + $0xb4] sm:$0xe]
      %v6505 = vrot.slane %v6441, 5
      %v6506 = vrot.slane %v6505, 4
      %v6507 = vrot.slane %v5704, 5
      %v6508 = vsel %vm3323, %v6506, %v6507
      %v6509 = vrot.slane %v6507, 4
      %v6510 = vrot.slane %v5705, 5
      %v6511 = vsel %vm3323, %v6509, %v6510
      %v6512 = vrot.slane %v6442, 5
      %v6513 = vrot.slane %v6512, 4
      %v6514 = vrot.slane %v5707, 5
      %v6515 = vsel %vm3323, %v6513, %v6514
      %v6516 = vrot.slane %v6514, 4
      %v6517 = vrot.slane %v5708, 5
      %v6518 = vsel %vm3323, %v6516, %v6517
      %v6519 = vrot.slane %v6443, 5
      %v6520 = vrot.slane %v6519, 4
      %v6521 = vrot.slane %v5710, 5
      %v6522 = vsel %vm3323, %v6520, %v6521
      %v6523 = vrot.slane %v6521, 4
      %v6524 = vrot.slane %v5711, 5
      %v6525 = vsel %vm3323, %v6523, %v6524
      %v6526 = vrot.slane %v6444, 5
      %v6527 = vrot.slane %v6526, 4
      %v6528 = vrot.slane %v5713, 5
      %v6529 = vsel %vm3323, %v6527, %v6528
      %v6530 = vrot.slane %v6528, 4
      %v6531 = vrot.slane %v5714, 5
      %v6532 = vsel %vm3323, %v6530, %v6531
      %v6533 = vrot.slane %v6445, 5
      %v6534 = vrot.slane %v6533, 4
      %v6535 = vrot.slane %v5716, 5
      %v6536 = vsel %vm3323, %v6534, %v6535
      %v6537 = vrot.slane %v6535, 4
      %v6538 = vrot.slane %v5717, 5
      %v6539 = vsel %vm3323, %v6537, %v6538
      %v6540 = vrot.slane %v6446, 5
      %v6541 = vrot.slane %v6540, 4
      %v6542 = vrot.slane %v5719, 5
      %v6543 = vsel %vm3323, %v6541, %v6542
      %v6544 = vrot.slane %v6542, 4
      %v6545 = vrot.slane %v5720, 5
      %v6546 = vsel %vm3323, %v6544, %v6545
      %v6547 = vrot.slane %v6447, 5
      %v6548 = vrot.slane %v6547, 4
      %v6549 = vrot.slane %v5722, 5
      %v6550 = vsel %vm3323, %v6548, %v6549
      %v6551 = vrot.slane %v6549, 4
      %v6552 = vrot.slane %v5723, 5
      %v6553 = vsel %vm3323, %v6551, %v6552
      %v6554 = vrot.slane %v6448, 5
      %v6555 = vrot.slane %v6554, 4
      %v6556 = vrot.slane %v5725, 5
      %v6557 = vsel %vm3323, %v6555, %v6556
      %v6558 = vrot.slane %v6556, 4
      %v6559 = vrot.slane %v5726, 5
      %v6560 = vsel %vm3323, %v6558, %v6559
      %v6561 = vrot.slane %v6449, 5
      %v6562 = vrot.slane %v6561, 4
      %v6563 = vrot.slane %v5728, 5
      %v6564 = vsel %vm3323, %v6562, %v6563
      %v6565 = vrot.slane %v6563, 4
      %v6566 = vrot.slane %v5729, 5
      %v6567 = vsel %vm3323, %v6565, %v6566
      %v6568 = vrot.slane %v6450, 5
      %v6569 = vrot.slane %v6568, 4
      %v6570 = vrot.slane %v5731, 5
      %v6571 = vsel %vm3323, %v6569, %v6570
      %v6572 = vrot.slane %v6570, 4
      %v6573 = vrot.slane %v5732, 5
      %v6574 = vsel %vm3323, %v6572, %v6573
      %v6575 = vrot.slane %v6451, 5
      %v6576 = vrot.slane %v6575, 4
      %v6577 = vrot.slane %v5734, 5
      %v6578 = vsel %vm3323, %v6576, %v6577
      %v6579 = vrot.slane %v6577, 4
      %v6580 = vrot.slane %v5735, 5
      %v6581 = vsel %vm3323, %v6579, %v6580
      %v6582 = vrot.slane %v6452, 5
      %v6583 = vrot.slane %v6582, 4
      %v6584 = vrot.slane %v5737, 5
      %v6585 = vsel %vm3323, %v6583, %v6584
      %v6586 = vrot.slane %v6584, 4
      %v6587 = vrot.slane %v5738, 5
      %v6588 = vsel %vm3323, %v6586, %v6587
      %v6589 = vrot.slane %v6453, 5
      %v6590 = vrot.slane %v6589, 4
      %v6591 = vrot.slane %v5740, 5
      %v6592 = vsel %vm3323, %v6590, %v6591
      %v6593 = vrot.slane %v6591, 4
      %v6594 = vrot.slane %v5741, 5
      %v6595 = vsel %vm3323, %v6593, %v6594
      %v6596 = vrot.slane %v6454, 5
      %v6597 = vrot.slane %v6596, 4
      %v6598 = vrot.slane %v5743, 5
      %v6599 = vsel %vm3323, %v6597, %v6598
      %v6600 = vrot.slane %v6598, 4
      %v6601 = vrot.slane %v5744, 5
      %v6602 = vsel %vm3323, %v6600, %v6601
      %v6603 = vrot.slane %v6455, 5
      %v6604 = vrot.slane %v6603, 4
      %v6605 = vrot.slane %v5746, 5
      %v6606 = vsel %vm3323, %v6604, %v6605
      %v6607 = vrot.slane %v6605, 4
      %v6608 = vrot.slane %v5747, 5
      %v6609 = vsel %vm3323, %v6607, %v6608
      %v6610 = vrot.slane %v6456, 5
      %v6611 = vrot.slane %v6610, 4
      %v6612 = vrot.slane %v5749, 5
      %v6613 = vsel %vm3323, %v6611, %v6612
      %v6614 = vrot.slane %v6612, 4
      %v6615 = vrot.slane %v5750, 5
      %v6616 = vsel %vm3323, %v6614, %v6615
      %s6617 = scalar_lea.vmem %s6, 128
      %v6618 = vld [vmem:[%s6617] sm:$0xf]
      %v6619 = vld [vmem:[%s6617 + $0x4] sm:$0xf]
      %v6620 = vld [vmem:[%s6617 + $0x8] sm:$0xf]
      %v6621 = vld [vmem:[%s6617 + $0xc] sm:$0xf]
      %v6622 = vunpack.c.l.b16 %v6508
      %v6623 = vunpack.c.l.b16 %v6511
      %v6624 = vunpack.c.l.b16 %v6515
      %v6625 = vunpack.c.l.b16 %v6518
      %v6626 = vunpack.c.l.b16 %v6522
      %v6627 = vunpack.c.l.b16 %v6525
      %v6628 = vunpack.c.l.b16 %v6529
      %v6629 = vunpack.c.l.b16 %v6532
      %v6630 = vunpack.c.l.b16 %v6536
      %v6631 = vunpack.c.l.b16 %v6539
      %v6632 = vunpack.c.l.b16 %v6543
      %v6633 = vunpack.c.l.b16 %v6546
      %v6634 = vunpack.c.l.b16 %v6550
      %v6635 = vunpack.c.l.b16 %v6553
      %v6636 = vunpack.c.l.b16 %v6557
      %v6637 = vunpack.c.l.b16 %v6560
      %v6638 = vunpack.c.l.b16 %v6564
      %v6639 = vunpack.c.l.b16 %v6567
      %v6640 = vunpack.c.l.b16 %v6571
      %v6641 = vunpack.c.l.b16 %v6574
      %v6642 = vunpack.c.l.b16 %v6578
      %v6643 = vunpack.c.l.b16 %v6581
      %v6644 = vunpack.c.l.b16 %v6585
      %v6645 = vunpack.c.l.b16 %v6588
      %v6646 = vunpack.c.l.b16 %v6592
      %v6647 = vunpack.c.l.b16 %v6595
      %v6648 = vunpack.c.l.b16 %v6599
      %v6649 = vunpack.c.l.b16 %v6602
      %v6650 = vunpack.c.l.b16 %v6606
      %v6651 = vunpack.c.l.b16 %v6609
      %v6652 = vunpack.c.l.b16 %v6613
      %v6653 = vunpack.c.l.b16 %v6616
      %v6654 = vpack.c.b16 %v6623, %v6622
      %v6655 = vpack.c.b16 %v6625, %v6624
      %v6656 = vpack.c.b16 %v6627, %v6626
      %v6657 = vpack.c.b16 %v6629, %v6628
      %v6658 = vpack.c.b16 %v6631, %v6630
      %v6659 = vpack.c.b16 %v6633, %v6632
      %v6660 = vpack.c.b16 %v6635, %v6634
      %v6661 = vpack.c.b16 %v6637, %v6636
      %v6662 = vpack.c.b16 %v6639, %v6638
      %v6663 = vpack.c.b16 %v6641, %v6640
      %v6664 = vpack.c.b16 %v6643, %v6642
      %v6665 = vpack.c.b16 %v6645, %v6644
      %v6666 = vpack.c.b16 %v6647, %v6646
      %v6667 = vpack.c.b16 %v6649, %v6648
      %v6668 = vpack.c.b16 %v6651, %v6650
      %v6669 = vpack.c.b16 %v6653, %v6652
      %v6674 = vunpack.c.l.b16 %v6618
      %v6675 = vunpack.c.l.b16 %v6619
      %v6676 = vunpack.c.l.b16 %v6620
      %v6677 = vunpack.c.l.b16 %v6621
      %v6678 = vpack.c.b16 %v6675, %v6674
      %v6679 = vpack.c.b16 %v6677, %v6676
      %v6683 = vsel %vm663, %v6654, 0
      %v6686 = vsel %vm663, %v6655, 0
      %v6689 = vsel %vm663, %v6656, 0
      %v6692 = vsel %vm663, %v6657, 0
      %v6695 = vsel %vm663, %v6658, 0
      %v6698 = vsel %vm663, %v6659, 0
      %v6701 = vsel %vm663, %v6660, 0
      %v6704 = vsel %vm663, %v6661, 0
      %v6707 = vsel %vm663, %v6662, 0
      %v6710 = vsel %vm663, %v6663, 0
      %v6713 = vsel %vm663, %v6664, 0
      %v6716 = vsel %vm663, %v6665, 0
      %v6719 = vsel %vm663, %v6666, 0
      %v6722 = vsel %vm663, %v6667, 0
      %v6725 = vsel %vm663, %v6668, 0
      %v6728 = vsel %vm663, %v6669, 0
      %6730 = vmatprep.subr.bf16.mxu0 0
      %6731 = vmatpush1.bf16.msra.mxu0 %v6678
      %6732 = vmatprep.subr.bf16.mxu0 0
      %6733 = vmatpush1.bf16.msra.mxu0 %v6679
      %6734 = vmatprep.subr.bf16.mxu0 0
      %6735 = vmatpush1.bf16.msra.mxu0 0
      %6736 = vmatprep.subr.bf16.mxu0 0
      %6737 = vmatpush1.bf16.msra.mxu0 0
      %6738 = vmatprep.subr.bf16.mxu0 0
      %6739 = vmatpush1.bf16.msra.mxu0 0
      %6740 = vmatprep.subr.bf16.mxu0 0
      %6741 = vmatpush1.bf16.msra.mxu0 0
      %6742 = vmatprep.subr.bf16.mxu0 0
      %6743 = vmatpush1.bf16.msra.mxu0 0
      %6744 = vmatprep.subr.bf16.mxu0 0
      %6745 = vmatpush1.bf16.msra.mxu0 0
      %6746 = vmatprep.subr.bf16.mxu0 0
      %6747 = vmatpush1.bf16.msra.mxu0 0
      %6748 = vmatprep.subr.bf16.mxu0 0
      %6749 = vmatpush1.bf16.msra.mxu0 0
      %6750 = vmatprep.subr.bf16.mxu0 0
      %6751 = vmatpush1.bf16.msra.mxu0 0
      %6752 = vmatprep.subr.bf16.mxu0 0
      %6753 = vmatpush1.bf16.msra.mxu0 0
      %6754 = vmatprep.subr.bf16.mxu0 0
      %6755 = vmatpush1.bf16.msra.mxu0 0
      %6756 = vmatprep.subr.bf16.mxu0 0
      %6757 = vmatpush1.bf16.msra.mxu0 0
      %6758 = vmatprep.subr.bf16.mxu0 0
      %6759 = vmatpush1.bf16.msra.mxu0 0
      %6760 = vmatprep.subr.bf16.mxu0 0
      %6761 = vmatpush1.bf16.msra.mxu0 0
      %6762 = vmatprep.mubr.bf16.mxu0 0
      %6763 = vmatmul.mubr.bf16.gmra.mrb[0].mxu0 %v6683
      %v6764 = vpop.f32.mrb[0].mxu0
      %v6765 = vadd.f32 0.0, %v6764
      %v6766 = vpop.f32.mrb[0].mxu0
      %v6767 = vpop.f32.mrb[0].mxu0
      %v6768 = vadd.f32 0.0, %v6767
      %v6769 = vpop.f32.mrb[0].mxu0
      %6770 = vmatprep.mubr.bf16.mxu0 0
      %6771 = vmatmul.mubr.bf16.gmra.mrb[0].mxu0 %v6686
      %v6772 = vpop.f32.mrb[0].mxu0
      %v6773 = vadd.f32 0.0, %v6772
      %v6774 = vpop.f32.mrb[0].mxu0
      %v6775 = vpop.f32.mrb[0].mxu0
      %v6776 = vadd.f32 0.0, %v6775
      %v6777 = vpop.f32.mrb[0].mxu0
      %6778 = vmatprep.mubr.bf16.mxu0 0
      %6779 = vmatmul.mubr.bf16.gmra.mrb[0].mxu0 %v6689
      %v6780 = vpop.f32.mrb[0].mxu0
      %v6781 = vadd.f32 0.0, %v6780
      %v6782 = vpop.f32.mrb[0].mxu0
      %v6783 = vpop.f32.mrb[0].mxu0
      %v6784 = vadd.f32 0.0, %v6783
      %v6785 = vpop.f32.mrb[0].mxu0
      %6786 = vmatprep.mubr.bf16.mxu0 0
      %6787 = vmatmul.mubr.bf16.gmra.mrb[0].mxu0 %v6692
      %v6788 = vpop.f32.mrb[0].mxu0
      %v6789 = vadd.f32 0.0, %v6788
      %v6790 = vpop.f32.mrb[0].mxu0
      %v6791 = vpop.f32.mrb[0].mxu0
      %v6792 = vadd.f32 0.0, %v6791
      %v6793 = vpop.f32.mrb[0].mxu0
      %6794 = vmatprep.mubr.bf16.mxu0 0
      %6795 = vmatmul.mubr.bf16.gmra.mrb[0].mxu0 %v6695
      %v6796 = vpop.f32.mrb[0].mxu0
      %v6797 = vadd.f32 0.0, %v6796
      %v6798 = vpop.f32.mrb[0].mxu0
      %v6799 = vpop.f32.mrb[0].mxu0
      %v6800 = vadd.f32 0.0, %v6799
      %v6801 = vpop.f32.mrb[0].mxu0
      %6802 = vmatprep.mubr.bf16.mxu0 0
      %6803 = vmatmul.mubr.bf16.gmra.mrb[0].mxu0 %v6698
      %v6804 = vpop.f32.mrb[0].mxu0
      %v6805 = vadd.f32 0.0, %v6804
      %v6806 = vpop.f32.mrb[0].mxu0
      %v6807 = vpop.f32.mrb[0].mxu0
      %v6808 = vadd.f32 0.0, %v6807
      %v6809 = vpop.f32.mrb[0].mxu0
      %6810 = vmatprep.mubr.bf16.mxu0 0
      %6811 = vmatmul.mubr.bf16.gmra.mrb[0].mxu0 %v6701
      %v6812 = vpop.f32.mrb[0].mxu0
      %v6813 = vadd.f32 0.0, %v6812
      %v6814 = vpop.f32.mrb[0].mxu0
      %v6815 = vpop.f32.mrb[0].mxu0
      %v6816 = vadd.f32 0.0, %v6815
      %v6817 = vpop.f32.mrb[0].mxu0
      %6818 = vmatprep.mubr.bf16.mxu0 0
      %6819 = vmatmul.mubr.bf16.gmra.mrb[0].mxu0 %v6704
      %v6820 = vpop.f32.mrb[0].mxu0
      %v6821 = vadd.f32 0.0, %v6820
      %v6822 = vpop.f32.mrb[0].mxu0
      %v6823 = vpop.f32.mrb[0].mxu0
      %v6824 = vadd.f32 0.0, %v6823
      %v6825 = vpop.f32.mrb[0].mxu0
      %6826 = vmatprep.mubr.bf16.mxu0 0
      %6827 = vmatmul.mubr.bf16.gmra.mrb[0].mxu0 %v6707
      %v6828 = vpop.f32.mrb[0].mxu0
      %v6829 = vadd.f32 0.0, %v6828
      %v6830 = vpop.f32.mrb[0].mxu0
      %v6831 = vpop.f32.mrb[0].mxu0
      %v6832 = vadd.f32 0.0, %v6831
      %v6833 = vpop.f32.mrb[0].mxu0
      %6834 = vmatprep.mubr.bf16.mxu0 0
      %6835 = vmatmul.mubr.bf16.gmra.mrb[0].mxu0 %v6710
      %v6836 = vpop.f32.mrb[0].mxu0
      %v6837 = vadd.f32 0.0, %v6836
      %v6838 = vpop.f32.mrb[0].mxu0
      %v6839 = vpop.f32.mrb[0].mxu0
      %v6840 = vadd.f32 0.0, %v6839
      %v6841 = vpop.f32.mrb[0].mxu0
      %6842 = vmatprep.mubr.bf16.mxu0 0
      %6843 = vmatmul.mubr.bf16.gmra.mrb[0].mxu0 %v6713
      %v6844 = vpop.f32.mrb[0].mxu0
      %v6845 = vadd.f32 0.0, %v6844
      %v6846 = vpop.f32.mrb[0].mxu0
      %v6847 = vpop.f32.mrb[0].mxu0
      %v6848 = vadd.f32 0.0, %v6847
      %v6849 = vpop.f32.mrb[0].mxu0
      %6850 = vmatprep.mubr.bf16.mxu0 0
      %6851 = vmatmul.mubr.bf16.gmra.mrb[0].mxu0 %v6716
      %v6852 = vpop.f32.mrb[0].mxu0
      %v6853 = vadd.f32 0.0, %v6852
      %v6854 = vpop.f32.mrb[0].mxu0
      %v6855 = vpop.f32.mrb[0].mxu0
      %v6856 = vadd.f32 0.0, %v6855
      %v6857 = vpop.f32.mrb[0].mxu0
      %6858 = vmatprep.mubr.bf16.mxu0 0
      %6859 = vmatmul.mubr.bf16.gmra.mrb[0].mxu0 %v6719
      %v6860 = vpop.f32.mrb[0].mxu0
      %v6861 = vadd.f32 0.0, %v6860
      %v6862 = vpop.f32.mrb[0].mxu0
      %v6863 = vpop.f32.mrb[0].mxu0
      %v6864 = vadd.f32 0.0, %v6863
      %v6865 = vpop.f32.mrb[0].mxu0
      %6866 = vmatprep.mubr.bf16.mxu0 0
      %6867 = vmatmul.mubr.bf16.gmra.mrb[0].mxu0 %v6722
      %v6868 = vpop.f32.mrb[0].mxu0
      %v6869 = vadd.f32 0.0, %v6868
      %v6870 = vpop.f32.mrb[0].mxu0
      %v6871 = vpop.f32.mrb[0].mxu0
      %v6872 = vadd.f32 0.0, %v6871
      %v6873 = vpop.f32.mrb[0].mxu0
      %6874 = vmatprep.mubr.bf16.mxu0 0
      %6875 = vmatmul.mubr.bf16.gmra.mrb[0].mxu0 %v6725
      %v6876 = vpop.f32.mrb[0].mxu0
      %v6877 = vadd.f32 0.0, %v6876
      %v6878 = vpop.f32.mrb[0].mxu0
      %v6879 = vpop.f32.mrb[0].mxu0
      %v6880 = vadd.f32 0.0, %v6879
      %v6881 = vpop.f32.mrb[0].mxu0
      %6882 = vmatprep.mubr.bf16.mxu0 0
      %6883 = vmatmul.mubr.bf16.gmra.mrb[0].mxu0 %v6728
      %v6884 = vpop.f32.mrb[0].mxu0
      %v6885 = vadd.f32 0.0, %v6884
      %v6886 = vpop.f32.mrb[0].mxu0
      %v6887 = vpop.f32.mrb[0].mxu0
      %v6888 = vadd.f32 0.0, %v6887
      %v6889 = vpop.f32.mrb[0].mxu0
      %6890 = vdwg.mxu0
      %v6891 = vadd.f32 %v6409, %v6765
      %v6892 = vadd.f32 %v6410, %v6768
      %v6893 = vadd.f32 %v6411, %v6773
      %v6894 = vadd.f32 %v6412, %v6776
      %v6895 = vadd.f32 %v6413, %v6781
      %v6896 = vadd.f32 %v6414, %v6784
      %v6897 = vadd.f32 %v6415, %v6789
      %v6898 = vadd.f32 %v6416, %v6792
      %v6899 = vadd.f32 %v6417, %v6797
      %v6900 = vadd.f32 %v6418, %v6800
      %v6901 = vadd.f32 %v6419, %v6805
      %v6902 = vadd.f32 %v6420, %v6808
      %v6903 = vadd.f32 %v6421, %v6813
      %v6904 = vadd.f32 %v6422, %v6816
      %v6905 = vadd.f32 %v6423, %v6821
      %v6906 = vadd.f32 %v6424, %v6824
      %v6907 = vadd.f32 %v6425, %v6829
      %v6908 = vadd.f32 %v6426, %v6832
      %v6909 = vadd.f32 %v6427, %v6837
      %v6910 = vadd.f32 %v6428, %v6840
      %v6911 = vadd.f32 %v6429, %v6845
      %v6912 = vadd.f32 %v6430, %v6848
      %v6913 = vadd.f32 %v6431, %v6853
      %v6914 = vadd.f32 %v6432, %v6856
      %v6915 = vadd.f32 %v6433, %v6861
      %v6916 = vadd.f32 %v6434, %v6864
      %v6917 = vadd.f32 %v6435, %v6869
      %v6918 = vadd.f32 %v6436, %v6872
      %v6919 = vadd.f32 %v6437, %v6877
      %v6920 = vadd.f32 %v6438, %v6880
      %v6921 = vadd.f32 %v6439, %v6885
      %v6922 = vadd.f32 %v6440, %v6888
      %v6923 = vld [vmem:[%s7] sm:$0x1]
      %v6924 = vld [vmem:[%s8] sm:$0x1]
      %v6925 = vsel %vm663, %v6891, 0.0
      %v6926 = vsel %vm663, %v6892, 0.0
      %v6927 = vadd.f32 %v6925, %v6926
      %v6928 = vsel %vm663, %v6893, 0.0
      %v6929 = vadd.f32 %v6927, %v6928
      %v6930 = vsel %vm663, %v6894, 0.0
      %v6931 = vadd.f32 %v6929, %v6930
      %v6932 = vsel %vm663, %v6895, 0.0
      %v6933 = vadd.f32 %v6931, %v6932
      %v6934 = vsel %vm663, %v6896, 0.0
      %v6935 = vadd.f32 %v6933, %v6934
      %v6936 = vsel %vm663, %v6897, 0.0
      %v6937 = vadd.f32 %v6935, %v6936
      %v6938 = vsel %vm663, %v6898, 0.0
      %v6939 = vadd.f32 %v6937, %v6938
      %v6940 = vsel %vm663, %v6899, 0.0
      %v6941 = vadd.f32 %v6939, %v6940
      %v6942 = vsel %vm663, %v6900, 0.0
      %v6943 = vadd.f32 %v6941, %v6942
      %v6944 = vsel %vm663, %v6901, 0.0
      %v6945 = vadd.f32 %v6943, %v6944
      %v6946 = vsel %vm663, %v6902, 0.0
      %v6947 = vadd.f32 %v6945, %v6946
      %v6948 = vsel %vm663, %v6903, 0.0
      %v6949 = vadd.f32 %v6947, %v6948
      %v6950 = vsel %vm663, %v6904, 0.0
      %v6951 = vadd.f32 %v6949, %v6950
      %v6952 = vsel %vm663, %v6905, 0.0
      %v6953 = vadd.f32 %v6951, %v6952
      %v6954 = vsel %vm663, %v6906, 0.0
      %v6955 = vadd.f32 %v6953, %v6954
      %v6956 = vsel %vm663, %v6907, 0.0
      %v6957 = vadd.f32 %v6955, %v6956
      %v6958 = vsel %vm663, %v6908, 0.0
      %v6959 = vadd.f32 %v6957, %v6958
      %v6960 = vsel %vm663, %v6909, 0.0
      %v6961 = vadd.f32 %v6959, %v6960
      %v6962 = vsel %vm663, %v6910, 0.0
      %v6963 = vadd.f32 %v6961, %v6962
      %v6964 = vsel %vm663, %v6911, 0.0
      %v6965 = vadd.f32 %v6963, %v6964
      %v6966 = vsel %vm663, %v6912, 0.0
      %v6967 = vadd.f32 %v6965, %v6966
      %v6968 = vsel %vm663, %v6913, 0.0
      %v6969 = vadd.f32 %v6967, %v6968
      %v6970 = vsel %vm663, %v6914, 0.0
      %v6971 = vadd.f32 %v6969, %v6970
      %v6972 = vsel %vm663, %v6915, 0.0
      %v6973 = vadd.f32 %v6971, %v6972
      %v6974 = vsel %vm663, %v6916, 0.0
      %v6975 = vadd.f32 %v6973, %v6974
      %v6976 = vsel %vm663, %v6917, 0.0
      %v6977 = vadd.f32 %v6975, %v6976
      %v6978 = vsel %vm663, %v6918, 0.0
      %v6979 = vadd.f32 %v6977, %v6978
      %v6980 = vsel %vm663, %v6919, 0.0
      %v6981 = vadd.f32 %v6979, %v6980
      %v6982 = vsel %vm663, %v6920, 0.0
      %v6983 = vadd.f32 %v6981, %v6982
      %v6984 = vsel %vm663, %v6921, 0.0
      %v6985 = vadd.f32 %v6983, %v6984
      %v6986 = vsel %vm663, %v6922, 0.0
      %v6987 = vadd.f32 %v6985, %v6986
      %v6988 = vrot.slane %v6987, 4
      %v6989 = vadd.f32 %v6987, %v6988
      %v6990 = vrot.slane %v6989, 2
      %v6991 = vadd.f32 %v6989, %v6990
      %v6992 = vrot.slane %v6991, 1
      %v6993 = vadd.f32 %v6991, %v6992
      %v6994 = vmul.f32 %v6891, %v6891
      %v6995 = vmul.f32 %v6892, %v6892
      %v6996 = vmul.f32 %v6893, %v6893
      %v6997 = vmul.f32 %v6894, %v6894
      %v6998 = vmul.f32 %v6895, %v6895
      %v6999 = vmul.f32 %v6896, %v6896
      %v7000 = vmul.f32 %v6897, %v6897
      %v7001 = vmul.f32 %v6898, %v6898
      %v7002 = vmul.f32 %v6899, %v6899
      %v7003 = vmul.f32 %v6900, %v6900
      %v7004 = vmul.f32 %v6901, %v6901
      %v7005 = vmul.f32 %v6902, %v6902
      %v7006 = vmul.f32 %v6903, %v6903
      %v7007 = vmul.f32 %v6904, %v6904
      %v7008 = vmul.f32 %v6905, %v6905
      %v7009 = vmul.f32 %v6906, %v6906
      %v7010 = vmul.f32 %v6907, %v6907
      %v7011 = vmul.f32 %v6908, %v6908
      %v7012 = vmul.f32 %v6909, %v6909
      %v7013 = vmul.f32 %v6910, %v6910
      %v7014 = vmul.f32 %v6911, %v6911
      %v7015 = vmul.f32 %v6912, %v6912
      %v7016 = vmul.f32 %v6913, %v6913
      %v7017 = vmul.f32 %v6914, %v6914
      %v7018 = vmul.f32 %v6915, %v6915
      %v7019 = vmul.f32 %v6916, %v6916
      %v7020 = vmul.f32 %v6917, %v6917
      %v7021 = vmul.f32 %v6918, %v6918
      %v7022 = vmul.f32 %v6919, %v6919
      %v7023 = vmul.f32 %v6920, %v6920
      %v7024 = vmul.f32 %v6921, %v6921
      %v7025 = vmul.f32 %v6922, %v6922
      %v7026 = vsel %vm663, %v6994, 0.0
      %v7027 = vsel %vm663, %v6995, 0.0
      %v7028 = vadd.f32 %v7026, %v7027
      %v7029 = vsel %vm663, %v6996, 0.0
      %v7030 = vadd.f32 %v7028, %v7029
      %v7031 = vsel %vm663, %v6997, 0.0
      %v7032 = vadd.f32 %v7030, %v7031
      %v7033 = vsel %vm663, %v6998, 0.0
      %v7034 = vadd.f32 %v7032, %v7033
      %v7035 = vsel %vm663, %v6999, 0.0
      %v7036 = vadd.f32 %v7034, %v7035
      %v7037 = vsel %vm663, %v7000, 0.0
      %v7038 = vadd.f32 %v7036, %v7037
      %v7039 = vsel %vm663, %v7001, 0.0
      %v7040 = vadd.f32 %v7038, %v7039
      %v7041 = vsel %vm663, %v7002, 0.0
      %v7042 = vadd.f32 %v7040, %v7041
      %v7043 = vsel %vm663, %v7003, 0.0
      %v7044 = vadd.f32 %v7042, %v7043
      %v7045 = vsel %vm663, %v7004, 0.0
      %v7046 = vadd.f32 %v7044, %v7045
      %v7047 = vsel %vm663, %v7005, 0.0
      %v7048 = vadd.f32 %v7046, %v7047
      %v7049 = vsel %vm663, %v7006, 0.0
      %v7050 = vadd.f32 %v7048, %v7049
      %v7051 = vsel %vm663, %v7007, 0.0
      %v7052 = vadd.f32 %v7050, %v7051
      %v7053 = vsel %vm663, %v7008, 0.0
      %v7054 = vadd.f32 %v7052, %v7053
      %v7055 = vsel %vm663, %v7009, 0.0
      %v7056 = vadd.f32 %v7054, %v7055
      %v7057 = vsel %vm663, %v7010, 0.0
      %v7058 = vadd.f32 %v7056, %v7057
      %v7059 = vsel %vm663, %v7011, 0.0
      %v7060 = vadd.f32 %v7058, %v7059
      %v7061 = vsel %vm663, %v7012, 0.0
      %v7062 = vadd.f32 %v7060, %v7061
      %v7063 = vsel %vm663, %v7013, 0.0
      %v7064 = vadd.f32 %v7062, %v7063
      %v7065 = vsel %vm663, %v7014, 0.0
      %v7066 = vadd.f32 %v7064, %v7065
      %v7067 = vsel %vm663, %v7015, 0.0
      %v7068 = vadd.f32 %v7066, %v7067
      %v7069 = vsel %vm663, %v7016, 0.0
      %v7070 = vadd.f32 %v7068, %v7069
      %v7071 = vsel %vm663, %v7017, 0.0
      %v7072 = vadd.f32 %v7070, %v7071
      %v7073 = vsel %vm663, %v7018, 0.0
      %v7074 = vadd.f32 %v7072, %v7073
      %v7075 = vsel %vm663, %v7019, 0.0
      %v7076 = vadd.f32 %v7074, %v7075
      %v7077 = vsel %vm663, %v7020, 0.0
      %v7078 = vadd.f32 %v7076, %v7077
      %v7079 = vsel %vm663, %v7021, 0.0
      %v7080 = vadd.f32 %v7078, %v7079
      %v7081 = vsel %vm663, %v7022, 0.0
      %v7082 = vadd.f32 %v7080, %v7081
      %v7083 = vsel %vm663, %v7023, 0.0
      %v7084 = vadd.f32 %v7082, %v7083
      %v7085 = vsel %vm663, %v7024, 0.0
      %v7086 = vadd.f32 %v7084, %v7085
      %v7087 = vsel %vm663, %v7025, 0.0
      %v7088 = vadd.f32 %v7086, %v7087
      %v7089 = vrot.slane %v7088, 4
      %v7090 = vadd.f32 %v7088, %v7089
      %v7091 = vrot.slane %v7090, 2
      %v7092 = vadd.f32 %v7090, %v7091
      %v7093 = vrot.slane %v7092, 1
      %v7094 = vadd.f32 %v7092, %v7093
      %v7095 = vmul.f32 %v6993, %v1046
      %v7096 = vmul.f32 %v7094, %v1046
      %v7097 = vmul.f32 %v7095, %v7095
      %v7098 = vsub.f32 %v7096, %v7097
      %v7099 = vadd.f32 %v7098, 1e-06
      %v7100 = vrsqrt.pop %v7099
      %v7101 = vmul.f32 %v7100, %v6923
      %v7102 = vsub.f32 %v6891, %v7095
      %v7103 = vsub.f32 %v6892, %v7095
      %v7104 = vsub.f32 %v6893, %v7095
      %v7105 = vsub.f32 %v6894, %v7095
      %v7106 = vsub.f32 %v6895, %v7095
      %v7107 = vsub.f32 %v6896, %v7095
      %v7108 = vsub.f32 %v6897, %v7095
      %v7109 = vsub.f32 %v6898, %v7095
      %v7110 = vsub.f32 %v6899, %v7095
      %v7111 = vsub.f32 %v6900, %v7095
      %v7112 = vsub.f32 %v6901, %v7095
      %v7113 = vsub.f32 %v6902, %v7095
      %v7114 = vsub.f32 %v6903, %v7095
      %v7115 = vsub.f32 %v6904, %v7095
      %v7116 = vsub.f32 %v6905, %v7095
      %v7117 = vsub.f32 %v6906, %v7095
      %v7118 = vsub.f32 %v6907, %v7095
      %v7119 = vsub.f32 %v6908, %v7095
      %v7120 = vsub.f32 %v6909, %v7095
      %v7121 = vsub.f32 %v6910, %v7095
      %v7122 = vsub.f32 %v6911, %v7095
      %v7123 = vsub.f32 %v6912, %v7095
      %v7124 = vsub.f32 %v6913, %v7095
      %v7125 = vsub.f32 %v6914, %v7095
      %v7126 = vsub.f32 %v6915, %v7095
      %v7127 = vsub.f32 %v6916, %v7095
      %v7128 = vsub.f32 %v6917, %v7095
      %v7129 = vsub.f32 %v6918, %v7095
      %v7130 = vsub.f32 %v6919, %v7095
      %v7131 = vsub.f32 %v6920, %v7095
      %v7132 = vsub.f32 %v6921, %v7095
      %v7133 = vsub.f32 %v6922, %v7095
      %v7134 = vlaneseq
      %v7135 = vshrl.u32 %v7134, 7
      %v7136 = vsub.s32 0, %v7135
      %v7137 = vrot.slane %v7101, %v7136
      %v7138 = vmul.f32 %v7102, %v7137
      %v7139 = vmul.f32 %v7103, %v7137
      %v7140 = vmul.f32 %v7104, %v7137
      %v7141 = vmul.f32 %v7105, %v7137
      %v7142 = vmul.f32 %v7106, %v7137
      %v7143 = vmul.f32 %v7107, %v7137
      %v7144 = vmul.f32 %v7108, %v7137
      %v7145 = vmul.f32 %v7109, %v7137
      %v7146 = vmul.f32 %v7110, %v7137
      %v7147 = vmul.f32 %v7111, %v7137
      %v7148 = vmul.f32 %v7112, %v7137
      %v7149 = vmul.f32 %v7113, %v7137
      %v7150 = vmul.f32 %v7114, %v7137
      %v7151 = vmul.f32 %v7115, %v7137
      %v7152 = vmul.f32 %v7116, %v7137
      %v7153 = vmul.f32 %v7117, %v7137
      %v7154 = vmul.f32 %v7118, %v7137
      %v7155 = vmul.f32 %v7119, %v7137
      %v7156 = vmul.f32 %v7120, %v7137
      %v7157 = vmul.f32 %v7121, %v7137
      %v7158 = vmul.f32 %v7122, %v7137
      %v7159 = vmul.f32 %v7123, %v7137
      %v7160 = vmul.f32 %v7124, %v7137
      %v7161 = vmul.f32 %v7125, %v7137
      %v7162 = vmul.f32 %v7126, %v7137
      %v7163 = vmul.f32 %v7127, %v7137
      %v7164 = vmul.f32 %v7128, %v7137
      %v7165 = vmul.f32 %v7129, %v7137
      %v7166 = vmul.f32 %v7130, %v7137
      %v7167 = vmul.f32 %v7131, %v7137
      %v7168 = vmul.f32 %v7132, %v7137
      %v7169 = vmul.f32 %v7133, %v7137
      %v7171 = vlaneseq
      %v7172 = vshrl.u32 %v7171, 7
      %v7173 = vsub.s32 0, %v7172
      %v7174 = vrot.slane %v6924, %v7173
      %v7176 = vadd.f32 %v7138, %v7174
      %v7177 = vadd.f32 %v7139, %v7174
      %v7178 = vadd.f32 %v7140, %v7174
      %v7179 = vadd.f32 %v7141, %v7174
      %v7180 = vadd.f32 %v7142, %v7174
      %v7181 = vadd.f32 %v7143, %v7174
      %v7182 = vadd.f32 %v7144, %v7174
      %v7183 = vadd.f32 %v7145, %v7174
      %v7184 = vadd.f32 %v7146, %v7174
      %v7185 = vadd.f32 %v7147, %v7174
      %v7186 = vadd.f32 %v7148, %v7174
      %v7187 = vadd.f32 %v7149, %v7174
      %v7188 = vadd.f32 %v7150, %v7174
      %v7189 = vadd.f32 %v7151, %v7174
      %v7190 = vadd.f32 %v7152, %v7174
      %v7191 = vadd.f32 %v7153, %v7174
      %v7192 = vadd.f32 %v7154, %v7174
      %v7193 = vadd.f32 %v7155, %v7174
      %v7194 = vadd.f32 %v7156, %v7174
      %v7195 = vadd.f32 %v7157, %v7174
      %v7196 = vadd.f32 %v7158, %v7174
      %v7197 = vadd.f32 %v7159, %v7174
      %v7198 = vadd.f32 %v7160, %v7174
      %v7199 = vadd.f32 %v7161, %v7174
      %v7200 = vadd.f32 %v7162, %v7174
      %v7201 = vadd.f32 %v7163, %v7174
      %v7202 = vadd.f32 %v7164, %v7174
      %v7203 = vadd.f32 %v7165, %v7174
      %v7204 = vadd.f32 %v7166, %v7174
      %v7205 = vadd.f32 %v7167, %v7174
      %v7206 = vadd.f32 %v7168, %v7174
      %v7207 = vadd.f32 %v7169, %v7174
      %v7208 = vmax.f32 %v7176, 0.0
      %v7209 = vmax.f32 %v7177, 0.0
      %v7210 = vmax.f32 %v7178, 0.0
      %v7211 = vmax.f32 %v7179, 0.0
      %v7212 = vmax.f32 %v7180, 0.0
      %v7213 = vmax.f32 %v7181, 0.0
      %v7214 = vmax.f32 %v7182, 0.0
      %v7215 = vmax.f32 %v7183, 0.0
      %v7216 = vmax.f32 %v7184, 0.0
      %v7217 = vmax.f32 %v7185, 0.0
      %v7218 = vmax.f32 %v7186, 0.0
      %v7219 = vmax.f32 %v7187, 0.0
      %v7220 = vmax.f32 %v7188, 0.0
      %v7221 = vmax.f32 %v7189, 0.0
      %v7222 = vmax.f32 %v7190, 0.0
      %v7223 = vmax.f32 %v7191, 0.0
      %v7224 = vmax.f32 %v7192, 0.0
      %v7225 = vmax.f32 %v7193, 0.0
      %v7226 = vmax.f32 %v7194, 0.0
      %v7227 = vmax.f32 %v7195, 0.0
      %v7228 = vmax.f32 %v7196, 0.0
      %v7229 = vmax.f32 %v7197, 0.0
      %v7230 = vmax.f32 %v7198, 0.0
      %v7231 = vmax.f32 %v7199, 0.0
      %v7232 = vmax.f32 %v7200, 0.0
      %v7233 = vmax.f32 %v7201, 0.0
      %v7234 = vmax.f32 %v7202, 0.0
      %v7235 = vmax.f32 %v7203, 0.0
      %v7236 = vmax.f32 %v7204, 0.0
      %v7237 = vmax.f32 %v7205, 0.0
      %v7238 = vmax.f32 %v7206, 0.0
      %v7239 = vmax.f32 %v7207, 0.0
      %v7240 = vpack.c.bf16 %v7209, %v7208
      %v7241 = vpack.c.bf16 %v7211, %v7210
      %v7242 = vpack.c.bf16 %v7213, %v7212
      %v7243 = vpack.c.bf16 %v7215, %v7214
      %v7244 = vpack.c.bf16 %v7217, %v7216
      %v7245 = vpack.c.bf16 %v7219, %v7218
      %v7246 = vpack.c.bf16 %v7221, %v7220
      %v7247 = vpack.c.bf16 %v7223, %v7222
      %v7248 = vpack.c.bf16 %v7225, %v7224
      %v7249 = vpack.c.bf16 %v7227, %v7226
      %v7250 = vpack.c.bf16 %v7229, %v7228
      %v7251 = vpack.c.bf16 %v7231, %v7230
      %v7252 = vpack.c.bf16 %v7233, %v7232
      %v7253 = vpack.c.bf16 %v7235, %v7234
      %v7254 = vpack.c.bf16 %v7237, %v7236
      %v7255 = vpack.c.bf16 %v7239, %v7238
      %v7256 = vld [vmem:[%s9] sm:$0xf]
      %v7257 = vld [vmem:[%s9 + $0x4] sm:$0xf]
      %v7258 = vld [vmem:[%s9 + $0x8] sm:$0xf]
      %v7259 = vld [vmem:[%s9 + $0xc] sm:$0xf]
      %v7264 = vunpack.c.l.b16 %v7256
      %v7265 = vunpack.c.l.b16 %v7257
      %v7266 = vunpack.c.l.b16 %v7258
      %v7267 = vunpack.c.l.b16 %v7259
      %v7268 = vpack.c.b16 %v7265, %v7264
      %v7269 = vpack.c.b16 %v7267, %v7266
      %v7273 = vsel %vm663, %v7240, 0
      %v7276 = vsel %vm663, %v7241, 0
      %v7279 = vsel %vm663, %v7242, 0
      %v7282 = vsel %vm663, %v7243, 0
      %v7285 = vsel %vm663, %v7244, 0
      %v7288 = vsel %vm663, %v7245, 0
      %v7291 = vsel %vm663, %v7246, 0
      %v7294 = vsel %vm663, %v7247, 0
      %v7297 = vsel %vm663, %v7248, 0
      %v7300 = vsel %vm663, %v7249, 0
      %v7303 = vsel %vm663, %v7250, 0
      %v7306 = vsel %vm663, %v7251, 0
      %v7309 = vsel %vm663, %v7252, 0
      %v7312 = vsel %vm663, %v7253, 0
      %v7315 = vsel %vm663, %v7254, 0
      %v7318 = vsel %vm663, %v7255, 0
      %7320 = vmatprep.subr.bf16.mxu0 0
      %7321 = vmatpush1.bf16.msra.mxu0 %v7268
      %7322 = vmatprep.subr.bf16.mxu0 0
      %7323 = vmatpush1.bf16.msra.mxu0 %v7269
      %7324 = vmatprep.subr.bf16.mxu0 0
      %7325 = vmatpush1.bf16.msra.mxu0 0
      %7326 = vmatprep.subr.bf16.mxu0 0
      %7327 = vmatpush1.bf16.msra.mxu0 0
      %7328 = vmatprep.subr.bf16.mxu0 0
      %7329 = vmatpush1.bf16.msra.mxu0 0
      %7330 = vmatprep.subr.bf16.mxu0 0
      %7331 = vmatpush1.bf16.msra.mxu0 0
      %7332 = vmatprep.subr.bf16.mxu0 0
      %7333 = vmatpush1.bf16.msra.mxu0 0
      %7334 = vmatprep.subr.bf16.mxu0 0
      %7335 = vmatpush1.bf16.msra.mxu0 0
      %7336 = vmatprep.subr.bf16.mxu0 0
      %7337 = vmatpush1.bf16.msra.mxu0 0
      %7338 = vmatprep.subr.bf16.mxu0 0
      %7339 = vmatpush1.bf16.msra.mxu0 0
      %7340 = vmatprep.subr.bf16.mxu0 0
      %7341 = vmatpush1.bf16.msra.mxu0 0
      %7342 = vmatprep.subr.bf16.mxu0 0
      %7343 = vmatpush1.bf16.msra.mxu0 0
      %7344 = vmatprep.subr.bf16.mxu0 0
      %7345 = vmatpush1.bf16.msra.mxu0 0
      %7346 = vmatprep.subr.bf16.mxu0 0
      %7347 = vmatpush1.bf16.msra.mxu0 0
      %7348 = vmatprep.subr.bf16.mxu0 0
      %7349 = vmatpush1.bf16.msra.mxu0 0
      %7350 = vmatprep.subr.bf16.mxu0 0
      %7351 = vmatpush1.bf16.msra.mxu0 0
      %7352 = vmatprep.mubr.bf16.mxu0 0
      %7353 = vmatmul.mubr.bf16.gmra.mrb[0].mxu0 %v7273
      %v7354 = vpop.f32.mrb[0].mxu0
      %v7355 = vadd.f32 0.0, %v7354
      %v7356 = vpop.f32.mrb[0].mxu0
      %v7357 = vpop.f32.mrb[0].mxu0
      %v7358 = vadd.f32 0.0, %v7357
      %v7359 = vpop.f32.mrb[0].mxu0
      %7360 = vmatprep.mubr.bf16.mxu0 0
      %7361 = vmatmul.mubr.bf16.gmra.mrb[0].mxu0 %v7276
      %v7362 = vpop.f32.mrb[0].mxu0
      %v7363 = vadd.f32 0.0, %v7362
      %v7364 = vpop.f32.mrb[0].mxu0
      %v7365 = vpop.f32.mrb[0].mxu0
      %v7366 = vadd.f32 0.0, %v7365
      %v7367 = vpop.f32.mrb[0].mxu0
      %7368 = vmatprep.mubr.bf16.mxu0 0
      %7369 = vmatmul.mubr.bf16.gmra.mrb[0].mxu0 %v7279
      %v7370 = vpop.f32.mrb[0].mxu0
      %v7371 = vadd.f32 0.0, %v7370
      %v7372 = vpop.f32.mrb[0].mxu0
      %v7373 = vpop.f32.mrb[0].mxu0
      %v7374 = vadd.f32 0.0, %v7373
      %v7375 = vpop.f32.mrb[0].mxu0
      %7376 = vmatprep.mubr.bf16.mxu0 0
      %7377 = vmatmul.mubr.bf16.gmra.mrb[0].mxu0 %v7282
      %v7378 = vpop.f32.mrb[0].mxu0
      %v7379 = vadd.f32 0.0, %v7378
      %v7380 = vpop.f32.mrb[0].mxu0
      %v7381 = vpop.f32.mrb[0].mxu0
      %v7382 = vadd.f32 0.0, %v7381
      %v7383 = vpop.f32.mrb[0].mxu0
      %7384 = vmatprep.mubr.bf16.mxu0 0
      %7385 = vmatmul.mubr.bf16.gmra.mrb[0].mxu0 %v7285
      %v7386 = vpop.f32.mrb[0].mxu0
      %v7387 = vadd.f32 0.0, %v7386
      %v7388 = vpop.f32.mrb[0].mxu0
      %v7389 = vpop.f32.mrb[0].mxu0
      %v7390 = vadd.f32 0.0, %v7389
      %v7391 = vpop.f32.mrb[0].mxu0
      %7392 = vmatprep.mubr.bf16.mxu0 0
      %7393 = vmatmul.mubr.bf16.gmra.mrb[0].mxu0 %v7288
      %v7394 = vpop.f32.mrb[0].mxu0
      %v7395 = vadd.f32 0.0, %v7394
      %v7396 = vpop.f32.mrb[0].mxu0
      %v7397 = vpop.f32.mrb[0].mxu0
      %v7398 = vadd.f32 0.0, %v7397
      %v7399 = vpop.f32.mrb[0].mxu0
      %7400 = vmatprep.mubr.bf16.mxu0 0
      %7401 = vmatmul.mubr.bf16.gmra.mrb[0].mxu0 %v7291
      %v7402 = vpop.f32.mrb[0].mxu0
      %v7403 = vadd.f32 0.0, %v7402
      %v7404 = vpop.f32.mrb[0].mxu0
      %v7405 = vpop.f32.mrb[0].mxu0
      %v7406 = vadd.f32 0.0, %v7405
      %v7407 = vpop.f32.mrb[0].mxu0
      %7408 = vmatprep.mubr.bf16.mxu0 0
      %7409 = vmatmul.mubr.bf16.gmra.mrb[0].mxu0 %v7294
      %v7410 = vpop.f32.mrb[0].mxu0
      %v7411 = vadd.f32 0.0, %v7410
      %v7412 = vpop.f32.mrb[0].mxu0
      %v7413 = vpop.f32.mrb[0].mxu0
      %v7414 = vadd.f32 0.0, %v7413
      %v7415 = vpop.f32.mrb[0].mxu0
      %7416 = vmatprep.mubr.bf16.mxu0 0
      %7417 = vmatmul.mubr.bf16.gmra.mrb[0].mxu0 %v7297
      %v7418 = vpop.f32.mrb[0].mxu0
      %v7419 = vadd.f32 0.0, %v7418
      %v7420 = vpop.f32.mrb[0].mxu0
      %v7421 = vpop.f32.mrb[0].mxu0
      %v7422 = vadd.f32 0.0, %v7421
      %v7423 = vpop.f32.mrb[0].mxu0
      %7424 = vmatprep.mubr.bf16.mxu0 0
      %7425 = vmatmul.mubr.bf16.gmra.mrb[0].mxu0 %v7300
      %v7426 = vpop.f32.mrb[0].mxu0
      %v7427 = vadd.f32 0.0, %v7426
      %v7428 = vpop.f32.mrb[0].mxu0
      %v7429 = vpop.f32.mrb[0].mxu0
      %v7430 = vadd.f32 0.0, %v7429
      %v7431 = vpop.f32.mrb[0].mxu0
      %7432 = vmatprep.mubr.bf16.mxu0 0
      %7433 = vmatmul.mubr.bf16.gmra.mrb[0].mxu0 %v7303
      %v7434 = vpop.f32.mrb[0].mxu0
      %v7435 = vadd.f32 0.0, %v7434
      %v7436 = vpop.f32.mrb[0].mxu0
      %v7437 = vpop.f32.mrb[0].mxu0
      %v7438 = vadd.f32 0.0, %v7437
      %v7439 = vpop.f32.mrb[0].mxu0
      %7440 = vmatprep.mubr.bf16.mxu0 0
      %7441 = vmatmul.mubr.bf16.gmra.mrb[0].mxu0 %v7306
      %v7442 = vpop.f32.mrb[0].mxu0
      %v7443 = vadd.f32 0.0, %v7442
      %v7444 = vpop.f32.mrb[0].mxu0
      %v7445 = vpop.f32.mrb[0].mxu0
      %v7446 = vadd.f32 0.0, %v7445
      %v7447 = vpop.f32.mrb[0].mxu0
      %7448 = vmatprep.mubr.bf16.mxu0 0
      %7449 = vmatmul.mubr.bf16.gmra.mrb[0].mxu0 %v7309
      %v7450 = vpop.f32.mrb[0].mxu0
      %v7451 = vadd.f32 0.0, %v7450
      %v7452 = vpop.f32.mrb[0].mxu0
      %v7453 = vpop.f32.mrb[0].mxu0
      %v7454 = vadd.f32 0.0, %v7453
      %v7455 = vpop.f32.mrb[0].mxu0
      %7456 = vmatprep.mubr.bf16.mxu0 0
      %7457 = vmatmul.mubr.bf16.gmra.mrb[0].mxu0 %v7312
      %v7458 = vpop.f32.mrb[0].mxu0
      %v7459 = vadd.f32 0.0, %v7458
      %v7460 = vpop.f32.mrb[0].mxu0
      %v7461 = vpop.f32.mrb[0].mxu0
      %v7462 = vadd.f32 0.0, %v7461
      %v7463 = vpop.f32.mrb[0].mxu0
      %7464 = vmatprep.mubr.bf16.mxu0 0
      %7465 = vmatmul.mubr.bf16.gmra.mrb[0].mxu0 %v7315
      %v7466 = vpop.f32.mrb[0].mxu0
      %v7467 = vadd.f32 0.0, %v7466
      %v7468 = vpop.f32.mrb[0].mxu0
      %v7469 = vpop.f32.mrb[0].mxu0
      %v7470 = vadd.f32 0.0, %v7469
      %v7471 = vpop.f32.mrb[0].mxu0
      %7472 = vmatprep.mubr.bf16.mxu0 0
      %7473 = vmatmul.mubr.bf16.gmra.mrb[0].mxu0 %v7318
      %v7474 = vpop.f32.mrb[0].mxu0
      %v7475 = vadd.f32 0.0, %v7474
      %v7476 = vpop.f32.mrb[0].mxu0
      %v7477 = vpop.f32.mrb[0].mxu0
      %v7478 = vadd.f32 0.0, %v7477
      %v7479 = vpop.f32.mrb[0].mxu0
      %7480 = vdwg.mxu0
      %v7481 = vld [vmem:[%s10] sm:$0x1]
      %v7482 = vld [vmem:[%s11] sm:$0x1]
      %v7483 = vsel %vm1298, %v7355, 0.0
      %v7484 = vsel %vm1298, %v7358, 0.0
      %v7485 = vadd.f32 %v7483, %v7484
      %v7486 = vsel %vm1298, %v7363, 0.0
      %v7487 = vadd.f32 %v7485, %v7486
      %v7488 = vsel %vm1298, %v7366, 0.0
      %v7489 = vadd.f32 %v7487, %v7488
      %v7490 = vsel %vm1298, %v7371, 0.0
      %v7491 = vadd.f32 %v7489, %v7490
      %v7492 = vsel %vm1298, %v7374, 0.0
      %v7493 = vadd.f32 %v7491, %v7492
      %v7494 = vsel %vm1298, %v7379, 0.0
      %v7495 = vadd.f32 %v7493, %v7494
      %v7496 = vsel %vm1298, %v7382, 0.0
      %v7497 = vadd.f32 %v7495, %v7496
      %v7498 = vsel %vm1298, %v7387, 0.0
      %v7499 = vadd.f32 %v7497, %v7498
      %v7500 = vsel %vm1298, %v7390, 0.0
      %v7501 = vadd.f32 %v7499, %v7500
      %v7502 = vsel %vm1298, %v7395, 0.0
      %v7503 = vadd.f32 %v7501, %v7502
      %v7504 = vsel %vm1298, %v7398, 0.0
      %v7505 = vadd.f32 %v7503, %v7504
      %v7506 = vsel %vm1298, %v7403, 0.0
      %v7507 = vadd.f32 %v7505, %v7506
      %v7508 = vsel %vm1298, %v7406, 0.0
      %v7509 = vadd.f32 %v7507, %v7508
      %v7510 = vsel %vm1298, %v7411, 0.0
      %v7511 = vadd.f32 %v7509, %v7510
      %v7512 = vsel %vm1298, %v7414, 0.0
      %v7513 = vadd.f32 %v7511, %v7512
      %v7514 = vsel %vm1298, %v7419, 0.0
      %v7515 = vadd.f32 %v7513, %v7514
      %v7516 = vsel %vm1298, %v7422, 0.0
      %v7517 = vadd.f32 %v7515, %v7516
      %v7518 = vsel %vm1298, %v7427, 0.0
      %v7519 = vadd.f32 %v7517, %v7518
      %v7520 = vsel %vm1298, %v7430, 0.0
      %v7521 = vadd.f32 %v7519, %v7520
      %v7522 = vsel %vm1298, %v7435, 0.0
      %v7523 = vadd.f32 %v7521, %v7522
      %v7524 = vsel %vm1298, %v7438, 0.0
      %v7525 = vadd.f32 %v7523, %v7524
      %v7526 = vsel %vm1298, %v7443, 0.0
      %v7527 = vadd.f32 %v7525, %v7526
      %v7528 = vsel %vm1298, %v7446, 0.0
      %v7529 = vadd.f32 %v7527, %v7528
      %v7530 = vsel %vm1298, %v7451, 0.0
      %v7531 = vadd.f32 %v7529, %v7530
      %v7532 = vsel %vm1298, %v7454, 0.0
      %v7533 = vadd.f32 %v7531, %v7532
      %v7534 = vsel %vm1298, %v7459, 0.0
      %v7535 = vadd.f32 %v7533, %v7534
      %v7536 = vsel %vm1298, %v7462, 0.0
      %v7537 = vadd.f32 %v7535, %v7536
      %v7538 = vsel %vm1298, %v7467, 0.0
      %v7539 = vadd.f32 %v7537, %v7538
      %v7540 = vsel %vm1298, %v7470, 0.0
      %v7541 = vadd.f32 %v7539, %v7540
      %v7542 = vsel %vm1298, %v7475, 0.0
      %v7543 = vadd.f32 %v7541, %v7542
      %v7544 = vsel %vm1298, %v7478, 0.0
      %v7545 = vadd.f32 %v7543, %v7544
      %v7546 = vrot.slane %v7545, 4
      %v7547 = vadd.f32 %v7545, %v7546
      %v7548 = vrot.slane %v7547, 2
      %v7549 = vadd.f32 %v7547, %v7548
      %v7550 = vrot.slane %v7549, 1
      %v7551 = vadd.f32 %v7549, %v7550
      %v7552 = vmul.f32 %v7355, %v7355
      %v7553 = vmul.f32 %v7358, %v7358
      %v7554 = vmul.f32 %v7363, %v7363
      %v7555 = vmul.f32 %v7366, %v7366
      %v7556 = vmul.f32 %v7371, %v7371
      %v7557 = vmul.f32 %v7374, %v7374
      %v7558 = vmul.f32 %v7379, %v7379
      %v7559 = vmul.f32 %v7382, %v7382
      %v7560 = vmul.f32 %v7387, %v7387
      %v7561 = vmul.f32 %v7390, %v7390
      %v7562 = vmul.f32 %v7395, %v7395
      %v7563 = vmul.f32 %v7398, %v7398
      %v7564 = vmul.f32 %v7403, %v7403
      %v7565 = vmul.f32 %v7406, %v7406
      %v7566 = vmul.f32 %v7411, %v7411
      %v7567 = vmul.f32 %v7414, %v7414
      %v7568 = vmul.f32 %v7419, %v7419
      %v7569 = vmul.f32 %v7422, %v7422
      %v7570 = vmul.f32 %v7427, %v7427
      %v7571 = vmul.f32 %v7430, %v7430
      %v7572 = vmul.f32 %v7435, %v7435
      %v7573 = vmul.f32 %v7438, %v7438
      %v7574 = vmul.f32 %v7443, %v7443
      %v7575 = vmul.f32 %v7446, %v7446
      %v7576 = vmul.f32 %v7451, %v7451
      %v7577 = vmul.f32 %v7454, %v7454
      %v7578 = vmul.f32 %v7459, %v7459
      %v7579 = vmul.f32 %v7462, %v7462
      %v7580 = vmul.f32 %v7467, %v7467
      %v7581 = vmul.f32 %v7470, %v7470
      %v7582 = vmul.f32 %v7475, %v7475
      %v7583 = vmul.f32 %v7478, %v7478
      %v7584 = vsel %vm1298, %v7552, 0.0
      %v7585 = vsel %vm1298, %v7553, 0.0
      %v7586 = vadd.f32 %v7584, %v7585
      %v7587 = vsel %vm1298, %v7554, 0.0
      %v7588 = vadd.f32 %v7586, %v7587
      %v7589 = vsel %vm1298, %v7555, 0.0
      %v7590 = vadd.f32 %v7588, %v7589
      %v7591 = vsel %vm1298, %v7556, 0.0
      %v7592 = vadd.f32 %v7590, %v7591
      %v7593 = vsel %vm1298, %v7557, 0.0
      %v7594 = vadd.f32 %v7592, %v7593
      %v7595 = vsel %vm1298, %v7558, 0.0
      %v7596 = vadd.f32 %v7594, %v7595
      %v7597 = vsel %vm1298, %v7559, 0.0
      %v7598 = vadd.f32 %v7596, %v7597
      %v7599 = vsel %vm1298, %v7560, 0.0
      %v7600 = vadd.f32 %v7598, %v7599
      %v7601 = vsel %vm1298, %v7561, 0.0
      %v7602 = vadd.f32 %v7600, %v7601
      %v7603 = vsel %vm1298, %v7562, 0.0
      %v7604 = vadd.f32 %v7602, %v7603
      %v7605 = vsel %vm1298, %v7563, 0.0
      %v7606 = vadd.f32 %v7604, %v7605
      %v7607 = vsel %vm1298, %v7564, 0.0
      %v7608 = vadd.f32 %v7606, %v7607
      %v7609 = vsel %vm1298, %v7565, 0.0
      %v7610 = vadd.f32 %v7608, %v7609
      %v7611 = vsel %vm1298, %v7566, 0.0
      %v7612 = vadd.f32 %v7610, %v7611
      %v7613 = vsel %vm1298, %v7567, 0.0
      %v7614 = vadd.f32 %v7612, %v7613
      %v7615 = vsel %vm1298, %v7568, 0.0
      %v7616 = vadd.f32 %v7614, %v7615
      %v7617 = vsel %vm1298, %v7569, 0.0
      %v7618 = vadd.f32 %v7616, %v7617
      %v7619 = vsel %vm1298, %v7570, 0.0
      %v7620 = vadd.f32 %v7618, %v7619
      %v7621 = vsel %vm1298, %v7571, 0.0
      %v7622 = vadd.f32 %v7620, %v7621
      %v7623 = vsel %vm1298, %v7572, 0.0
      %v7624 = vadd.f32 %v7622, %v7623
      %v7625 = vsel %vm1298, %v7573, 0.0
      %v7626 = vadd.f32 %v7624, %v7625
      %v7627 = vsel %vm1298, %v7574, 0.0
      %v7628 = vadd.f32 %v7626, %v7627
      %v7629 = vsel %vm1298, %v7575, 0.0
      %v7630 = vadd.f32 %v7628, %v7629
      %v7631 = vsel %vm1298, %v7576, 0.0
      %v7632 = vadd.f32 %v7630, %v7631
      %v7633 = vsel %vm1298, %v7577, 0.0
      %v7634 = vadd.f32 %v7632, %v7633
      %v7635 = vsel %vm1298, %v7578, 0.0
      %v7636 = vadd.f32 %v7634, %v7635
      %v7637 = vsel %vm1298, %v7579, 0.0
      %v7638 = vadd.f32 %v7636, %v7637
      %v7639 = vsel %vm1298, %v7580, 0.0
      %v7640 = vadd.f32 %v7638, %v7639
      %v7641 = vsel %vm1298, %v7581, 0.0
      %v7642 = vadd.f32 %v7640, %v7641
      %v7643 = vsel %vm1298, %v7582, 0.0
      %v7644 = vadd.f32 %v7642, %v7643
      %v7645 = vsel %vm1298, %v7583, 0.0
      %v7646 = vadd.f32 %v7644, %v7645
      %v7647 = vrot.slane %v7646, 4
      %v7648 = vadd.f32 %v7646, %v7647
      %v7649 = vrot.slane %v7648, 2
      %v7650 = vadd.f32 %v7648, %v7649
      %v7651 = vrot.slane %v7650, 1
      %v7652 = vadd.f32 %v7650, %v7651
      %vm7653 = vcmask 1040384
      %v7654 = vsel %vm7653, %v7551, %v7652
      %v7656 = vsel %vm1298, %v7654, 0
      %7658 = vmatprep.subr.mxu0 0.0
      %7659 = vmatpush1.msra.mxu0 %v523
      %7660 = vmatprep.subr.mxu0 0.0
      %7661 = vmatpush1.msra.mxu0 %v524
      %7662 = vmatprep.subr.mxu0 0.0
      %7663 = vmatpush1.msra.mxu0 %v525
      %7664 = vmatprep.subr.mxu0 0.0
      %7665 = vmatpush1.msra.mxu0 %v526
      %7666 = vmatprep.subr.mxu0 0.0
      %7667 = vmatpush1.msra.mxu0 %v527
      %7668 = vmatprep.subr.mxu0 0.0
      %7669 = vmatpush1.msra.mxu0 %v528
      %7670 = vmatprep.subr.mxu0 0.0
      %7671 = vmatpush1.msra.mxu0 %v529
      %7672 = vmatprep.subr.mxu0 0.0
      %7673 = vmatpush1.msra.mxu0 %v530
      %7674 = vmatprep.subr.mxu0 0.0
      %7675 = vmatpush1.msra.mxu0 0.0
      %7676 = vmatprep.subr.mxu0 0.0
      %7677 = vmatpush1.msra.mxu0 0.0
      %7678 = vmatprep.subr.mxu0 0.0
      %7679 = vmatpush1.msra.mxu0 0.0
      %7680 = vmatprep.subr.mxu0 0.0
      %7681 = vmatpush1.msra.mxu0 0.0
      %7682 = vmatprep.subr.mxu0 0.0
      %7683 = vmatpush1.msra.mxu0 0.0
      %7684 = vmatprep.subr.mxu0 0.0
      %7685 = vmatpush1.msra.mxu0 0.0
      %7686 = vmatprep.subr.mxu0 0.0
      %7687 = vmatpush1.msra.mxu0 0.0
      %7688 = vmatprep.subr.mxu0 0.0
      %7689 = vmatpush1.msra.mxu0 0.0
      %7690 = vmatprep.subr.mxu0 0.0
      %7691 = vmatpush1.msra.mxu0 0.0
      %7692 = vmatprep.subr.mxu0 0.0
      %7693 = vmatpush1.msra.mxu0 0.0
      %7694 = vmatprep.subr.mxu0 0.0
      %7695 = vmatpush1.msra.mxu0 0.0
      %7696 = vmatprep.subr.mxu0 0.0
      %7697 = vmatpush1.msra.mxu0 0.0
      %7698 = vmatprep.subr.mxu0 0.0
      %7699 = vmatpush1.msra.mxu0 0.0
      %7700 = vmatprep.subr.mxu0 0.0
      %7701 = vmatpush1.msra.mxu0 0.0
      %7702 = vmatprep.subr.mxu0 0.0
      %7703 = vmatpush1.msra.mxu0 0.0
      %7704 = vmatprep.subr.mxu0 0.0
      %7705 = vmatpush1.msra.mxu0 0.0
      %7706 = vmatprep.subr.mxu0 0.0
      %7707 = vmatpush1.msra.mxu0 0.0
      %7708 = vmatprep.subr.mxu0 0.0
      %7709 = vmatpush1.msra.mxu0 0.0
      %7710 = vmatprep.subr.mxu0 0.0
      %7711 = vmatpush1.msra.mxu0 0.0
      %7712 = vmatprep.subr.mxu0 0.0
      %7713 = vmatpush1.msra.mxu0 0.0
      %7714 = vmatprep.subr.mxu0 0.0
      %7715 = vmatpush1.msra.mxu0 0.0
      %7716 = vmatprep.subr.mxu0 0.0
      %7717 = vmatpush1.msra.mxu0 0.0
      %7718 = vmatprep.subr.mxu0 0.0
      %7719 = vmatpush1.msra.mxu0 0.0
      %7720 = vmatprep.subr.mxu0 0.0
      %7721 = vmatpush1.msra.mxu0 0.0
      %7722 = vmatprep.mubr.f32.mxu0 0.0
      %7723 = vmatmul.mubr.f32.gmra.mrb[0].mxu0 %v7656
      %v7724 = vpop.f32.mrb[0].mxu0
      %v7725 = vadd.f32 0.0, %v7724
      %v7726 = vpop.f32.mrb[0].mxu0
      %7727 = vdwg.mxu0
      %v7729 = vsel %vm663, %v7725, 0
      %7731 = vmatprep.subr.mxu0 0.0
      %7732 = vmatpush1.msra.mxu0 %v531
      %7733 = vmatprep.subr.mxu0 0.0
      %7734 = vmatpush1.msra.mxu0 %v532
      %7735 = vmatprep.subr.mxu0 0.0
      %7736 = vmatpush1.msra.mxu0 %v533
      %7737 = vmatprep.subr.mxu0 0.0
      %7738 = vmatpush1.msra.mxu0 %v534
      %7739 = vmatprep.subr.mxu0 0.0
      %7740 = vmatpush1.msra.mxu0 0.0
      %7741 = vmatprep.subr.mxu0 0.0
      %7742 = vmatpush1.msra.mxu0 0.0
      %7743 = vmatprep.subr.mxu0 0.0
      %7744 = vmatpush1.msra.mxu0 0.0
      %7745 = vmatprep.subr.mxu0 0.0
      %7746 = vmatpush1.msra.mxu0 0.0
      %7747 = vmatprep.subr.mxu0 0.0
      %7748 = vmatpush1.msra.mxu0 0.0
      %7749 = vmatprep.subr.mxu0 0.0
      %7750 = vmatpush1.msra.mxu0 0.0
      %7751 = vmatprep.subr.mxu0 0.0
      %7752 = vmatpush1.msra.mxu0 0.0
      %7753 = vmatprep.subr.mxu0 0.0
      %7754 = vmatpush1.msra.mxu0 0.0
      %7755 = vmatprep.subr.mxu0 0.0
      %7756 = vmatpush1.msra.mxu0 0.0
      %7757 = vmatprep.subr.mxu0 0.0
      %7758 = vmatpush1.msra.mxu0 0.0
      %7759 = vmatprep.subr.mxu0 0.0
      %7760 = vmatpush1.msra.mxu0 0.0
      %7761 = vmatprep.subr.mxu0 0.0
      %7762 = vmatpush1.msra.mxu0 0.0
      %7763 = vmatprep.subr.mxu0 0.0
      %7764 = vmatpush1.msra.mxu0 0.0
      %7765 = vmatprep.subr.mxu0 0.0
      %7766 = vmatpush1.msra.mxu0 0.0
      %7767 = vmatprep.subr.mxu0 0.0
      %7768 = vmatpush1.msra.mxu0 0.0
      %7769 = vmatprep.subr.mxu0 0.0
      %7770 = vmatpush1.msra.mxu0 0.0
      %7771 = vmatprep.subr.mxu0 0.0
      %7772 = vmatpush1.msra.mxu0 0.0
      %7773 = vmatprep.subr.mxu0 0.0
      %7774 = vmatpush1.msra.mxu0 0.0
      %7775 = vmatprep.subr.mxu0 0.0
      %7776 = vmatpush1.msra.mxu0 0.0
      %7777 = vmatprep.subr.mxu0 0.0
      %7778 = vmatpush1.msra.mxu0 0.0
      %7779 = vmatprep.subr.mxu0 0.0
      %7780 = vmatpush1.msra.mxu0 0.0
      %7781 = vmatprep.subr.mxu0 0.0
      %7782 = vmatpush1.msra.mxu0 0.0
      %7783 = vmatprep.subr.mxu0 0.0
      %7784 = vmatpush1.msra.mxu0 0.0
      %7785 = vmatprep.subr.mxu0 0.0
      %7786 = vmatpush1.msra.mxu0 0.0
      %7787 = vmatprep.subr.mxu0 0.0
      %7788 = vmatpush1.msra.mxu0 0.0
      %7789 = vmatprep.subr.mxu0 0.0
      %7790 = vmatpush1.msra.mxu0 0.0
      %7791 = vmatprep.subr.mxu0 0.0
      %7792 = vmatpush1.msra.mxu0 0.0
      %7793 = vmatprep.subr.mxu0 0.0
      %7794 = vmatpush1.msra.mxu0 0.0
      %7795 = vmatprep.mubr.f32.mxu0 0.0
      %7796 = vmatmul.mubr.f32.gmra.mrb[0].mxu0 %v7729
      %v7797 = vpop.f32.mrb[0].mxu0
      %v7798 = vadd.f32 0.0, %v7797
      %v7799 = vpop.f32.mrb[0].mxu0
      %7800 = vdwg.mxu0
      %v7801 = vrcp.pop 512.0
      %v7802 = vmul.f32 %v7798, %v7801
      %v7803 = vmul.f32 %v7802, %v7802
      %v7805 = vrot.slane %v7803, 7
      %v7807 = vsub.f32 %v7802, %v7805
      %v7808 = vadd.f32 %v7807, 1e-06
      %v7809 = vrsqrt.pop %v7808
      %v7811 = vlaneseq
      %v7812 = vshrl.u32 %v7811, 7
      %v7813 = vsub.s32 0, %v7812
      %v7814 = vrot.slane %v7481, %v7813
      %v7816 = vmul.f32 %v7809, %v7814
      %v7817 = vlaneseq
      %v7818 = vshrl.u32 %v7817, 7
      %v7819 = vsub.s32 0, %v7818
      %v7820 = vrot.slane %v7802, %v7819
      %v7821 = vsub.f32 %v7355, %v7820
      %v7822 = vsub.f32 %v7358, %v7820
      %v7823 = vsub.f32 %v7363, %v7820
      %v7824 = vsub.f32 %v7366, %v7820
      %v7825 = vsub.f32 %v7371, %v7820
      %v7826 = vsub.f32 %v7374, %v7820
      %v7827 = vsub.f32 %v7379, %v7820
      %v7828 = vsub.f32 %v7382, %v7820
      %v7829 = vsub.f32 %v7387, %v7820
      %v7830 = vsub.f32 %v7390, %v7820
      %v7831 = vsub.f32 %v7395, %v7820
      %v7832 = vsub.f32 %v7398, %v7820
      %v7833 = vsub.f32 %v7403, %v7820
      %v7834 = vsub.f32 %v7406, %v7820
      %v7835 = vsub.f32 %v7411, %v7820
      %v7836 = vsub.f32 %v7414, %v7820
      %v7837 = vsub.f32 %v7419, %v7820
      %v7838 = vsub.f32 %v7422, %v7820
      %v7839 = vsub.f32 %v7427, %v7820
      %v7840 = vsub.f32 %v7430, %v7820
      %v7841 = vsub.f32 %v7435, %v7820
      %v7842 = vsub.f32 %v7438, %v7820
      %v7843 = vsub.f32 %v7443, %v7820
      %v7844 = vsub.f32 %v7446, %v7820
      %v7845 = vsub.f32 %v7451, %v7820
      %v7846 = vsub.f32 %v7454, %v7820
      %v7847 = vsub.f32 %v7459, %v7820
      %v7848 = vsub.f32 %v7462, %v7820
      %v7849 = vsub.f32 %v7467, %v7820
      %v7850 = vsub.f32 %v7470, %v7820
      %v7851 = vsub.f32 %v7475, %v7820
      %v7852 = vsub.f32 %v7478, %v7820
      %v7853 = vlaneseq
      %v7854 = vshrl.u32 %v7853, 7
      %v7855 = vsub.s32 1, %v7854
      %v7856 = vrot.slane %v7816, %v7855
      %v7857 = vmul.f32 %v7821, %v7856
      %v7858 = vmul.f32 %v7822, %v7856
      %v7859 = vmul.f32 %v7823, %v7856
      %v7860 = vmul.f32 %v7824, %v7856
      %v7861 = vmul.f32 %v7825, %v7856
      %v7862 = vmul.f32 %v7826, %v7856
      %v7863 = vmul.f32 %v7827, %v7856
      %v7864 = vmul.f32 %v7828, %v7856
      %v7865 = vmul.f32 %v7829, %v7856
      %v7866 = vmul.f32 %v7830, %v7856
      %v7867 = vmul.f32 %v7831, %v7856
      %v7868 = vmul.f32 %v7832, %v7856
      %v7869 = vmul.f32 %v7833, %v7856
      %v7870 = vmul.f32 %v7834, %v7856
      %v7871 = vmul.f32 %v7835, %v7856
      %v7872 = vmul.f32 %v7836, %v7856
      %v7873 = vmul.f32 %v7837, %v7856
      %v7874 = vmul.f32 %v7838, %v7856
      %v7875 = vmul.f32 %v7839, %v7856
      %v7876 = vmul.f32 %v7840, %v7856
      %v7877 = vmul.f32 %v7841, %v7856
      %v7878 = vmul.f32 %v7842, %v7856
      %v7879 = vmul.f32 %v7843, %v7856
      %v7880 = vmul.f32 %v7844, %v7856
      %v7881 = vmul.f32 %v7845, %v7856
      %v7882 = vmul.f32 %v7846, %v7856
      %v7883 = vmul.f32 %v7847, %v7856
      %v7884 = vmul.f32 %v7848, %v7856
      %v7885 = vmul.f32 %v7849, %v7856
      %v7886 = vmul.f32 %v7850, %v7856
      %v7887 = vmul.f32 %v7851, %v7856
      %v7888 = vmul.f32 %v7852, %v7856
      %v7890 = vlaneseq
      %v7891 = vshrl.u32 %v7890, 7
      %v7892 = vsub.s32 0, %v7891
      %v7893 = vrot.slane %v7482, %v7892
      %v7895 = vadd.f32 %v7857, %v7893
      %v7896 = vadd.f32 %v7858, %v7893
      %v7897 = vadd.f32 %v7859, %v7893
      %v7898 = vadd.f32 %v7860, %v7893
      %v7899 = vadd.f32 %v7861, %v7893
      %v7900 = vadd.f32 %v7862, %v7893
      %v7901 = vadd.f32 %v7863, %v7893
      %v7902 = vadd.f32 %v7864, %v7893
      %v7903 = vadd.f32 %v7865, %v7893
      %v7904 = vadd.f32 %v7866, %v7893
      %v7905 = vadd.f32 %v7867, %v7893
      %v7906 = vadd.f32 %v7868, %v7893
      %v7907 = vadd.f32 %v7869, %v7893
      %v7908 = vadd.f32 %v7870, %v7893
      %v7909 = vadd.f32 %v7871, %v7893
      %v7910 = vadd.f32 %v7872, %v7893
      %v7911 = vadd.f32 %v7873, %v7893
      %v7912 = vadd.f32 %v7874, %v7893
      %v7913 = vadd.f32 %v7875, %v7893
      %v7914 = vadd.f32 %v7876, %v7893
      %v7915 = vadd.f32 %v7877, %v7893
      %v7916 = vadd.f32 %v7878, %v7893
      %v7917 = vadd.f32 %v7879, %v7893
      %v7918 = vadd.f32 %v7880, %v7893
      %v7919 = vadd.f32 %v7881, %v7893
      %v7920 = vadd.f32 %v7882, %v7893
      %v7921 = vadd.f32 %v7883, %v7893
      %v7922 = vadd.f32 %v7884, %v7893
      %v7923 = vadd.f32 %v7885, %v7893
      %v7924 = vadd.f32 %v7886, %v7893
      %v7925 = vadd.f32 %v7887, %v7893
      %v7926 = vadd.f32 %v7888, %v7893
      %v7927 = vld [vmem:[#allocation3] sm:$0xff]
      %v7928 = vld [vmem:[#allocation3 + $0x8] sm:$0xff]
      %v7929 = vld [vmem:[#allocation3 + $0x10] sm:$0xff]
      %v7930 = vld [vmem:[#allocation3 + $0x18] sm:$0xff]
      %v7931 = vld [vmem:[#allocation3 + $0x20] sm:$0xff]
      %v7932 = vld [vmem:[#allocation3 + $0x28] sm:$0xff]
      %v7933 = vld [vmem:[#allocation3 + $0x30] sm:$0xff]
      %v7934 = vld [vmem:[#allocation3 + $0x38] sm:$0xff]
      %v7935 = vld [vmem:[#allocation3 + $0x40] sm:$0xff]
      %v7936 = vld [vmem:[#allocation3 + $0x48] sm:$0xff]
      %v7937 = vld [vmem:[#allocation3 + $0x50] sm:$0xff]
      %v7938 = vld [vmem:[#allocation3 + $0x58] sm:$0xff]
      %v7939 = vld [vmem:[#allocation3 + $0x60] sm:$0xff]
      %v7940 = vld [vmem:[#allocation3 + $0x68] sm:$0xff]
      %v7941 = vld [vmem:[#allocation3 + $0x70] sm:$0xff]
      %v7942 = vld [vmem:[#allocation3 + $0x78] sm:$0xff]
      %v7943 = vld [vmem:[#allocation3 + $0x80] sm:$0xff]
      %v7944 = vld [vmem:[#allocation3 + $0x88] sm:$0xff]
      %v7945 = vld [vmem:[#allocation3 + $0x90] sm:$0xff]
      %v7946 = vld [vmem:[#allocation3 + $0x98] sm:$0xff]
      %v7947 = vld [vmem:[#allocation3 + $0xa0] sm:$0xff]
      %v7948 = vld [vmem:[#allocation3 + $0xa8] sm:$0xff]
      %v7949 = vld [vmem:[#allocation3 + $0xb0] sm:$0xff]
      %v7950 = vld [vmem:[#allocation3 + $0xb8] sm:$0xff]
      %v7951 = vld [vmem:[#allocation3 + $0xc0] sm:$0xff]
      %v7952 = vld [vmem:[#allocation3 + $0xc8] sm:$0xff]
      %v7953 = vld [vmem:[#allocation3 + $0xd0] sm:$0xff]
      %v7954 = vld [vmem:[#allocation3 + $0xd8] sm:$0xff]
      %v7955 = vld [vmem:[#allocation3 + $0xe0] sm:$0xff]
      %v7956 = vld [vmem:[#allocation3 + $0xe8] sm:$0xff]
      %v7957 = vld [vmem:[#allocation3 + $0xf0] sm:$0xff]
      %v7958 = vld [vmem:[#allocation3 + $0xf8] sm:$0xff]
      %v7959 = vadd.f32 %v7927, %v7895
      %v7960 = vadd.f32 %v7928, %v7896
      %v7961 = vadd.f32 %v7929, %v7897
      %v7962 = vadd.f32 %v7930, %v7898
      %v7963 = vadd.f32 %v7931, %v7899
      %v7964 = vadd.f32 %v7932, %v7900
      %v7965 = vadd.f32 %v7933, %v7901
      %v7966 = vadd.f32 %v7934, %v7902
      %v7967 = vadd.f32 %v7935, %v7903
      %v7968 = vadd.f32 %v7936, %v7904
      %v7969 = vadd.f32 %v7937, %v7905
      %v7970 = vadd.f32 %v7938, %v7906
      %v7971 = vadd.f32 %v7939, %v7907
      %v7972 = vadd.f32 %v7940, %v7908
      %v7973 = vadd.f32 %v7941, %v7909
      %v7974 = vadd.f32 %v7942, %v7910
      %v7975 = vadd.f32 %v7943, %v7911
      %v7976 = vadd.f32 %v7944, %v7912
      %v7977 = vadd.f32 %v7945, %v7913
      %v7978 = vadd.f32 %v7946, %v7914
      %v7979 = vadd.f32 %v7947, %v7915
      %v7980 = vadd.f32 %v7948, %v7916
      %v7981 = vadd.f32 %v7949, %v7917
      %v7982 = vadd.f32 %v7950, %v7918
      %v7983 = vadd.f32 %v7951, %v7919
      %v7984 = vadd.f32 %v7952, %v7920
      %v7985 = vadd.f32 %v7953, %v7921
      %v7986 = vadd.f32 %v7954, %v7922
      %v7987 = vadd.f32 %v7955, %v7923
      %v7988 = vadd.f32 %v7956, %v7924
      %v7989 = vadd.f32 %v7957, %v7925
      %v7990 = vadd.f32 %v7958, %v7926
      %v7991 = vmax.f32 %v7959, 0.0
      %v7992 = vmax.f32 %v7960, 0.0
      %v7993 = vmax.f32 %v7961, 0.0
      %v7994 = vmax.f32 %v7962, 0.0
      %v7995 = vmax.f32 %v7963, 0.0
      %v7996 = vmax.f32 %v7964, 0.0
      %v7997 = vmax.f32 %v7965, 0.0
      %v7998 = vmax.f32 %v7966, 0.0
      %v7999 = vmax.f32 %v7967, 0.0
      %v8000 = vmax.f32 %v7968, 0.0
      %v8001 = vmax.f32 %v7969, 0.0
      %v8002 = vmax.f32 %v7970, 0.0
      %v8003 = vmax.f32 %v7971, 0.0
      %v8004 = vmax.f32 %v7972, 0.0
      %v8005 = vmax.f32 %v7973, 0.0
      %v8006 = vmax.f32 %v7974, 0.0
      %v8007 = vmax.f32 %v7975, 0.0
      %v8008 = vmax.f32 %v7976, 0.0
      %v8009 = vmax.f32 %v7977, 0.0
      %v8010 = vmax.f32 %v7978, 0.0
      %v8011 = vmax.f32 %v7979, 0.0
      %v8012 = vmax.f32 %v7980, 0.0
      %v8013 = vmax.f32 %v7981, 0.0
      %v8014 = vmax.f32 %v7982, 0.0
      %v8015 = vmax.f32 %v7983, 0.0
      %v8016 = vmax.f32 %v7984, 0.0
      %v8017 = vmax.f32 %v7985, 0.0
      %v8018 = vmax.f32 %v7986, 0.0
      %v8019 = vmax.f32 %v7987, 0.0
      %v8020 = vmax.f32 %v7988, 0.0
      %v8021 = vmax.f32 %v7989, 0.0
      %v8022 = vmax.f32 %v7990, 0.0
      %8023 = vst.msk [vmem:[%s521] sm:$0xff] %vm1298, %v7991
      %8024 = vst.msk [vmem:[%s521 + $0x8] sm:$0xff] %vm1298, %v7992
      %8025 = vst.msk [vmem:[%s521 + $0x10] sm:$0xff] %vm1298, %v7993
      %8026 = vst.msk [vmem:[%s521 + $0x18] sm:$0xff] %vm1298, %v7994
      %8027 = vst.msk [vmem:[%s521 + $0x20] sm:$0xff] %vm1298, %v7995
      %8028 = vst.msk [vmem:[%s521 + $0x28] sm:$0xff] %vm1298, %v7996
      %8029 = vst.msk [vmem:[%s521 + $0x30] sm:$0xff] %vm1298, %v7997
      %8030 = vst.msk [vmem:[%s521 + $0x38] sm:$0xff] %vm1298, %v7998
      %8031 = vst.msk [vmem:[%s521 + $0x40] sm:$0xff] %vm1298, %v7999
      %8032 = vst.msk [vmem:[%s521 + $0x48] sm:$0xff] %vm1298, %v8000
      %8033 = vst.msk [vmem:[%s521 + $0x50] sm:$0xff] %vm1298, %v8001
      %8034 = vst.msk [vmem:[%s521 + $0x58] sm:$0xff] %vm1298, %v8002
      %8035 = vst.msk [vmem:[%s521 + $0x60] sm:$0xff] %vm1298, %v8003
      %8036 = vst.msk [vmem:[%s521 + $0x68] sm:$0xff] %vm1298, %v8004
      %8037 = vst.msk [vmem:[%s521 + $0x70] sm:$0xff] %vm1298, %v8005
      %8038 = vst.msk [vmem:[%s521 + $0x78] sm:$0xff] %vm1298, %v8006
      %8039 = vst.msk [vmem:[%s521 + $0x80] sm:$0xff] %vm1298, %v8007
      %8040 = vst.msk [vmem:[%s521 + $0x88] sm:$0xff] %vm1298, %v8008
      %8041 = vst.msk [vmem:[%s521 + $0x90] sm:$0xff] %vm1298, %v8009
      %8042 = vst.msk [vmem:[%s521 + $0x98] sm:$0xff] %vm1298, %v8010
      %8043 = vst.msk [vmem:[%s521 + $0xa0] sm:$0xff] %vm1298, %v8011
      %8044 = vst.msk [vmem:[%s521 + $0xa8] sm:$0xff] %vm1298, %v8012
      %8045 = vst.msk [vmem:[%s521 + $0xb0] sm:$0xff] %vm1298, %v8013
      %8046 = vst.msk [vmem:[%s521 + $0xb8] sm:$0xff] %vm1298, %v8014
      %8047 = vst.msk [vmem:[%s521 + $0xc0] sm:$0xff] %vm1298, %v8015
      %8048 = vst.msk [vmem:[%s521 + $0xc8] sm:$0xff] %vm1298, %v8016
      %8049 = vst.msk [vmem:[%s521 + $0xd0] sm:$0xff] %vm1298, %v8017
      %8050 = vst.msk [vmem:[%s521 + $0xd8] sm:$0xff] %vm1298, %v8018
      %8051 = vst.msk [vmem:[%s521 + $0xe0] sm:$0xff] %vm1298, %v8019
      %8052 = vst.msk [vmem:[%s521 + $0xe8] sm:$0xff] %vm1298, %v8020
      %8053 = vst.msk [vmem:[%s521 + $0xf0] sm:$0xff] %vm1298, %v8021
      %8054 = vst.msk [vmem:[%s521 + $0xf8] sm:$0xff] %vm1298, %v8022
      %p8055 = scmp.lt.s32.totalorder %s27, 1
      %s8056 = scalar_select %p8055, %s27, 1
      %s8057 = smul.addr %s8056, 32
      %s8058 = smul.addr %s8057, 8
      %s8059 = scalar_lea.vmem %s16, %s8058
      // Predicated region
      $region85: #{tpu_custom_call.1} parent=83 // pred_check
        %p8060 = pneg %p386
      $region86: #{tpu_custom_call.1} parent=83 // pred_check_branch
        %8062 = sbr.rel (%p8060) target = $region88
      $region87: #{tpu_custom_call.1} parent=83 // pred_region
        _
      $region88: #{tpu_custom_call.1} parent=83 // pred_fallthru
        _
    $region84: #{tpu_custom_call.1} parent=5 // pred_fallthru
      _
    %p8063 = scmp.le.s32.totalorder 2, %s22
    // Predicated region
    $region89: #{tpu_custom_call.1} parent=5 // pred_check
      %p8064 = pneg %p8063
    $region90: #{tpu_custom_call.1} parent=5 // pred_check_branch
      %8066 = sbr.rel (%p8064) target = $region92
    $region91: #{tpu_custom_call.1} parent=5 // pred_region
      %s8067 = ssub.s32 %s22, 2
      // Predicated region
      $region93: #{tpu_custom_call.1} parent=91 // pred_check
        %p8068 = pneg %p392
      $region94: #{tpu_custom_call.1} parent=91 // pred_check_branch
        %8070 = sbr.rel (%p8068) target = $region96
      $region95: #{tpu_custom_call.1} parent=91 // pred_region
        %p8071 = scmp.lt.s32.totalorder %s28, 1
        %s8072 = scalar_select %p8071, %s28, 1
        %s8073 = smul.addr %s8072, 32
        %s8074 = smul.addr %s8073, 8
        %s8075 = scalar_lea.vmem %s16, %s8074
      $region96: #{tpu_custom_call.1} parent=91 // pred_fallthru
        _
    $region92: #{tpu_custom_call.1} parent=5 // pred_fallthru
      _
  $region6: #{tpu_custom_call.1} parent=0 // loop_footer
    %s26 = sadd.s32 1, %s22
  $region7: #{tpu_custom_call.1} parent=0 // loop_footer_branch
    %21 = sbr.rel target = $region3
  $region8: #{tpu_custom_call.1} parent=0 // loop_exit
    _

</llo_original>
